<compile_context>
chip_gen: v5e
topology: v5e:2x2
jax: 0.10.0
libtpu: 0.0.40
codegen_flags: <defaults>
</compile_context>

<pallas_src>
import functools

import jax
import jax.numpy as jnp
from jax.experimental import pallas as pl
from jax.experimental.pallas import tpu as pltpu

_BN_EPS = 1e-5
_VMEM_LIMIT = 48 * 1024 * 1024  # well above the demo's needs, < 64 MiB (v7x physical)


def _batchnorm(y, g, be, eps):
    """Training-mode BN over axis 0, one-pass sum/sumsq statistics (f32)."""
    m = y.shape[0]
    s1 = jnp.sum(y, axis=0, keepdims=True)
    s2 = jnp.sum(y * y, axis=0, keepdims=True)
    mean = s1 / m
    var = jnp.maximum(s2 / m - mean * mean, 0.0)
    return (y - mean) * jax.lax.rsqrt(var + eps) * g + be


# ------------------- DownSampleBlock: conv(s2) + bias + ReLU + BN ------------------- #

def _down_kernel(pee_ref, peo_ref, poe_ref, poo_ref, w_ref, b_ref, g_ref, be_ref,
                 o_ref, *, N, Ho, Wo, cin, cdt, eps):
    """o = BN(ReLU(conv3x3_s2(x) + b)).

    p??_ref : (N, Ho+1, Wo+1, Cin) 2x2 phase decomposition of the zero-padded input,
              so every stride-2 tap is a contiguous slice (no strided loads).
    w_ref   : (9, Cin, Cout) tap-major weights (compute dtype).
    """
    M = N * Ho * Wo
    cout = o_ref.shape[-1]
    phases = ((pee_ref, peo_ref), (poe_ref, poo_ref))   # [row parity][col parity]
    acc = jnp.zeros((M, cout), jnp.float32)
    for dy in range(3):
        for dx in range(3):
            ph = phases[dy % 2][dx % 2]
            tap = ph[:, dy // 2:dy // 2 + Ho, dx // 2:dx // 2 + Wo, :]
            tap = tap.reshape(M, cin).astype(cdt)
            acc += jnp.dot(tap, w_ref[dy * 3 + dx],
                           preferred_element_type=jnp.float32)
    y = jnp.maximum(acc + b_ref[...], 0.0)               # conv bias + ReLU
    y = _batchnorm(y, g_ref[...], be_ref[...], eps)      # training-mode BN
    o_ref[...] = y.astype(o_ref.dtype)


def _fused_downsample(x_nhwc, w, b, gamma, beta, *, compute_dtype):
    N, H, W, cin = x_nhwc.shape
    cout = w.shape[-1]
    Ho = (H - 1) // 2 + 1
    Wo = (W - 1) // 2 + 1
    # cheap XLA-side data movement (~1x input bytes): pad + 2x2 phase split.
    xp = jnp.pad(x_nhwc, ((0, 0), (1, 2 * Ho + 1 - H), (1, 2 * Wo + 1 - W), (0, 0)))
    pee = xp[:, 0::2, 0::2, :]
    peo = xp[:, 0::2, 1::2, :]
    poe = xp[:, 1::2, 0::2, :]
    poo = xp[:, 1::2, 1::2, :]
    w9 = w.reshape(9, cin, cout).astype(compute_dtype)
    kern = functools.partial(_down_kernel, N=N, Ho=Ho, Wo=Wo, cin=cin,
                             cdt=compute_dtype, eps=_BN_EPS)
    out = pl.pallas_call(
        kern,
        out_shape=jax.ShapeDtypeStruct((N * Ho * Wo, cout), jnp.float32),
        compiler_params=pltpu.CompilerParams(vmem_limit_bytes=_VMEM_LIMIT),
    )(pee, peo, poe, poo, w9, b.reshape(1, cout),
      gamma.reshape(1, cout), beta.reshape(1, cout))
    return out, Ho, Wo


# -------------------------- keep_res stem: bare conv3x3 + bias ---------------------- #

def _stem_kernel(xp_ref, w_ref, b_ref, o_ref, *, N, H, W, cin, cdt):
    M = N * H * W
    cout = o_ref.shape[-1]
    acc = jnp.zeros((M, cout), jnp.float32)
    for dy in range(3):
        for dx in range(3):
            tap = xp_ref[:, dy:dy + H, dx:dx + W, :].reshape(M, cin).astype(cdt)
            acc += jnp.dot(tap, w_ref[dy * 3 + dx],
                           preferred_element_type=jnp.float32)
    o_ref[...] = (acc + b_ref[...]).astype(o_ref.dtype)


def _fused_stem(x_nhwc, w, b, *, compute_dtype):
    N, H, W, cin = x_nhwc.shape
    cout = w.shape[-1]
    xp = jnp.pad(x_nhwc, ((0, 0), (1, 1), (1, 1), (0, 0)))
    w9 = w.reshape(9, cin, cout).astype(compute_dtype)
    kern = functools.partial(_stem_kernel, N=N, H=H, W=W, cin=cin, cdt=compute_dtype)
    out = pl.pallas_call(
        kern,
        out_shape=jax.ShapeDtypeStruct((N * H * W, cout), jnp.float32),
        compiler_params=pltpu.CompilerParams(vmem_limit_bytes=_VMEM_LIMIT),
    )(xp, w9, b.reshape(1, cout))
    return out, H, W


# ------------------ all `repetitions` of the shared ResBlock in one call ------------ #

def _resblocks_kernel(x_ref, w_ref, b_ref, g_ref, be_ref, o_ref, xp_ref,
                      *, N, H, W, C, eps):
    """grid = (repetitions,): one grid step == one ResBlock application.

    The running activation lives in o_ref (constant block index -> VMEM-resident,
    single HBM writeback at grid end).  Weights/bias/gamma/beta have constant
    block indices and stay resident for the whole call.

    x_ref  : (N*H*W, C) f32   block input (row order (n, y, x)), read at step 0 only
    w_ref  : (3, 9, C, C)     stacked per-stage, tap-major conv weights (compute dtype)
    b/g/be : (3, 1, C) f32
    o_ref  : (N*H*W, C) f32   running activation / final output
    xp_ref : (N, H+2, W+2, C) compute-dtype halo scratch (halo zeroed once)
    """
    M = N * H * W

    @pl.when(pl.program_id(0) == 0)
    def _():
        o_ref[...] = x_ref[...]
        xp_ref[...] = jnp.zeros_like(xp_ref)        # only the 1-px halo must stay 0

    x0 = o_ref[...]                                 # residual source (f32)
    net = x0
    for s in range(3):                              # 3 x conv/BN/ReLU stages
        xp_ref[:, 1:H + 1, 1:W + 1, :] = net.reshape(N, H, W, C).astype(xp_ref.dtype)
        acc = jnp.zeros((M, C), jnp.float32)
        for dy in range(3):                         # per-tap accumulate: no (M,9C) concat
            for dx in range(3):
                tap = xp_ref[:, dy:dy + H, dx:dx + W, :].reshape(M, C)
                acc += jnp.dot(tap, w_ref[s, dy * 3 + dx],
                               preferred_element_type=jnp.float32)
        y = _batchnorm(acc + b_ref[s], g_ref[s], be_ref[s], eps)
        net = jnp.maximum(y, 0.0)

    o_ref[...] = (net + x0).astype(o_ref.dtype)     # residual add (after ReLU)


def _fused_resblocks(x2d, w_all, b_all, g_all, be_all, *,
                     repetitions, N, H, W, C, compute_dtype):
    M = N * H * W
    kern = functools.partial(_resblocks_kernel, N=N, H=H, W=W, C=C, eps=_BN_EPS)
    return pl.pallas_call(
        kern,
        out_shape=jax.ShapeDtypeStruct((M, C), jnp.float32),
        grid=(repetitions,),
        in_specs=[
            pl.BlockSpec((M, C), lambda r: (0, 0)),
            pl.BlockSpec((3, 9, C, C), lambda r: (0, 0, 0, 0)),
            pl.BlockSpec((3, 1, C), lambda r: (0, 0, 0)),
            pl.BlockSpec((3, 1, C), lambda r: (0, 0, 0)),
            pl.BlockSpec((3, 1, C), lambda r: (0, 0, 0)),
        ],
        out_specs=pl.BlockSpec((M, C), lambda r: (0, 0)),
        scratch_shapes=[pltpu.VMEM((N, H + 2, W + 2, C), compute_dtype)],
        input_output_aliases={0: 0},                # merge input / output HBM buffers
        compiler_params=pltpu.CompilerParams(
            dimension_semantics=("arbitrary",),     # sequential data dependence
            vmem_limit_bytes=_VMEM_LIMIT),
    )(x2d, w_all, b_all, g_all, be_all)


# ----------------------------------- SphereFaceBlock -------------------------------- #

@functools.partial(jax.jit, static_argnames=("repetitions", "keep_res", "compute_dtype"))
def sphereface_block(x_nchw, params, repetitions, keep_res=False,
                     compute_dtype=jnp.bfloat16):
    """x_nchw: (N, Cin, H, W) -> (N, Cout, Ho, Wo)."""
    x = jnp.transpose(x_nchw, (0, 2, 3, 1)).astype(jnp.float32)   # NCHW -> NHWC
    N = x.shape[0]

    if not keep_res:
        p = params["down"]
        net, Ho, Wo = _fused_downsample(x, p["w"], p["b"], p["gamma"], p["beta"],
                                        compute_dtype=compute_dtype)
        C = p["w"].shape[-1]
    else:
        p = params["stem"]                          # bare conv3x3 stem (no BN/ReLU)
        net, Ho, Wo = _fused_stem(x, p["w"], p["b"], compute_dtype=compute_dtype)
        C = p["w"].shape[-1]

    rp = params["res"]                              # ONE shared ResBlock param set
    w_all = jnp.stack([rp[f"w{i}"].reshape(9, C, C) for i in (1, 2, 3)]
                      ).astype(compute_dtype)
    b_all = jnp.stack([rp[f"b{i}"].reshape(1, C) for i in (1, 2, 3)])
    g_all = jnp.stack([rp[f"g{i}"].reshape(1, C) for i in (1, 2, 3)])
    be_all = jnp.stack([rp[f"be{i}"].reshape(1, C) for i in (1, 2, 3)])

    if repetitions > 0:
        net = _fused_resblocks(net, w_all, b_all, g_all, be_all,
                               repetitions=repetitions, N=N, H=Ho, W=Wo, C=C,
                               compute_dtype=compute_dtype)

    out = net.reshape(N, Ho, Wo, C)
    return jnp.transpose(out, (0, 3, 1, 2))         # NHWC -> NCHW


# -------------------------------- pure-JAX reference -------------------------------- #

def _reference_forward(x_nchw, params, repetitions, keep_res=False):
    """XLA-only reference of the torch module (for correctness validation)."""
    def conv(x, w, b, stride):
        y = jax.lax.conv_general_dilated(
            x, w, window_strides=(stride, stride), padding=((1, 1), (1, 1)),
            dimension_numbers=("NHWC", "HWIO", "NHWC"))
        return y + b.reshape(1, 1, 1, -1)

    def bn(x, g, be):
        m = jnp.mean(x, axis=(0, 1, 2), keepdims=True)
        v = jnp.mean(jnp.square(x - m), axis=(0, 1, 2), keepdims=True)
        return ((x - m) * jax.lax.rsqrt(v + _BN_EPS) * g.reshape(1, 1, 1, -1)
                + be.reshape(1, 1, 1, -1))

    x = jnp.transpose(x_nchw, (0, 2, 3, 1))
    if not keep_res:
        p = params["down"]
        net = bn(jnp.maximum(conv(x, p["w"], p["b"], 2), 0.0), p["gamma"], p["beta"])
    else:
        p = params["stem"]
        net = conv(x, p["w"], p["b"], 1)
    rp = params["res"]
    for _ in range(repetitions):
        t = net
        for i in (1, 2, 3):
            t = jnp.maximum(bn(conv(t, rp[f"w{i}"], rp[f"b{i}"], 1),
                               rp[f"g{i}"], rp[f"be{i}"]), 0.0)
        net = t + net
    return jnp.transpose(net, (0, 3, 1, 2))


# ----------------------------------- parameter init --------------------------------- #

def init_params(key, cin, cout):
    def conv_init(k, ci, co):
        kw, kb = jax.random.split(k)
        w = jax.random.normal(kw, (3, 3, ci, co), jnp.float32) * 0.1
        b = jax.random.normal(kb, (co,), jnp.float32) * 0.01
        return w, b

    keys = jax.random.split(key, 8)
    dw, db = conv_init(keys[0], cin, cout)
    params = {
        "down": {
            "w": dw, "b": db,
            "gamma": 1.0 + 0.1 * jax.random.normal(keys[1], (cout,), jnp.float32),
            "beta": 0.1 * jax.random.normal(keys[2], (cout,), jnp.float32),
        },
        "stem": dict(zip(("w", "b"), conv_init(keys[6], cin, cout))),
    }
    res = {}
    for i, k in zip((1, 2, 3), (keys[3], keys[4], keys[5])):
        k1, k2, k3 = jax.random.split(k, 3)
        w, b = conv_init(k1, cout, cout)
        res[f"w{i}"] = w
        res[f"b{i}"] = b
        res[f"g{i}"] = 1.0 + 0.1 * jax.random.normal(k2, (cout,), jnp.float32)
        res[f"be{i}"] = 0.1 * jax.random.normal(k3, (cout,), jnp.float32)
    params["res"] = res
    return params


# ----------------------------------------- demo ------------------------------------- #

if __name__ == "__main__":
    key = jax.random.PRNGKey(0)
    kx, kp = jax.random.split(key)

    N, Cin, H, W = 2, 4, 16, 16
    Cout, repetitions = 8, 2

    x = jax.random.normal(kx, (N, Cin, H, W), jnp.float32)
    params = init_params(kp, Cin, Cout)

    ref = _reference_forward(x, params, repetitions, keep_res=False)

    # f32-operand path: correctness check against the XLA reference.
    out_f32 = jax.block_until_ready(
        sphereface_block(x, params, repetitions=repetitions, keep_res=False,
                         compute_dtype=jnp.float32))
    assert out_f32.shape == (N, Cout, H // 2, W // 2), out_f32.shape
    assert bool(jnp.all(jnp.isfinite(out_f32)))
    err = float(jnp.max(jnp.abs(out_f32 - ref)))
    assert bool(jnp.allclose(out_f32, ref, rtol=5e-2, atol=5e-2)), f"max |diff|={err}"

    # default fast path (bf16 MXU operands, f32 accumulation / BN): sanity check.
    out_bf16 = jax.block_until_ready(
        sphereface_block(x, params, repetitions=repetitions, keep_res=False))
    assert out_bf16.shape == (N, Cout, H // 2, W // 2)
    assert bool(jnp.all(jnp.isfinite(out_bf16)))
    assert float(jnp.mean(jnp.abs(out_bf16 - out_f32))) < 1e-1

    print("KERNEL_OK")
</pallas_src>

<mosaic_0001>
module attributes {stable_mosaic.version = 11 : i64} {
  func.func @_down_kernel(%arg0: memref<2x9x9x4xf32, #tpu.memory_space<vmem>>, %arg1: memref<2x9x9x4xf32, #tpu.memory_space<vmem>>, %arg2: memref<2x9x9x4xf32, #tpu.memory_space<vmem>>, %arg3: memref<2x9x9x4xf32, #tpu.memory_space<vmem>>, %arg4: memref<9x4x8xf32, #tpu.memory_space<vmem>>, %arg5: memref<1x8xf32, #tpu.memory_space<vmem>>, %arg6: memref<1x8xf32, #tpu.memory_space<vmem>>, %arg7: memref<1x8xf32, #tpu.memory_space<vmem>>, %arg8: memref<128x8xf32, #tpu.memory_space<vmem>>) attributes {dimension_semantics = [], scalar_prefetch = 0 : i64, scratch_operands = 0 : i64, tpu.core_type = #tpu.core_type<tc>} {
    %cst = arith.constant 0.000000e+00 : f32
    %0 = vector.broadcast %cst : f32 to vector<128x8xf32>
    %c0 = arith.constant 0 : index
    %c0_0 = arith.constant 0 : index
    %c0_1 = arith.constant 0 : index
    %c0_2 = arith.constant 0 : index
    %1 = vector.load %arg0[%c0, %c0_0, %c0_1, %c0_2] : memref<2x9x9x4xf32, #tpu.memory_space<vmem>>, vector<2x8x8x4xf32>
    %2 = vector.shape_cast %1 : vector<2x8x8x4xf32> to vector<128x4xf32>
    %c0_3 = arith.constant 0 : index
    %c0_4 = arith.constant 0 : index
    %c0_5 = arith.constant 0 : index
    %3 = vector.load %arg4[%c0_3, %c0_4, %c0_5] : memref<9x4x8xf32, #tpu.memory_space<vmem>>, vector<1x4x8xf32>
    %4 = vector.shape_cast %3 : vector<1x4x8xf32> to vector<4x8xf32>
    %cst_6 = arith.constant dense<0.000000e+00> : vector<128x8xf32>
    %5 = tpu.matmul %2, %4, %cst_6 {dimension_numbers = #tpu.dot_dimension_numbers<[1], [0], [0], [1], [0, 0, 1, 1], [], []>} : vector<128x4xf32>, vector<4x8xf32>, vector<128x8xf32> -> vector<128x8xf32>
    %6 = arith.addf %0, %5 : vector<128x8xf32>
    %c0_7 = arith.constant 0 : index
    %c0_8 = arith.constant 0 : index
    %c0_9 = arith.constant 0 : index
    %c0_10 = arith.constant 0 : index
    %7 = vector.load %arg1[%c0_7, %c0_8, %c0_9, %c0_10] : memref<2x9x9x4xf32, #tpu.memory_space<vmem>>, vector<2x8x8x4xf32>
    %8 = vector.shape_cast %7 : vector<2x8x8x4xf32> to vector<128x4xf32>
    %c1 = arith.constant 1 : index
    %c0_11 = arith.constant 0 : index
    %c0_12 = arith.constant 0 : index
    %9 = vector.load %arg4[%c1, %c0_11, %c0_12] : memref<9x4x8xf32, #tpu.memory_space<vmem>>, vector<1x4x8xf32>
    %10 = vector.shape_cast %9 : vector<1x4x8xf32> to vector<4x8xf32>
    %cst_13 = arith.constant dense<0.000000e+00> : vector<128x8xf32>
    %11 = tpu.matmul %8, %10, %cst_13 {dimension_numbers = #tpu.dot_dimension_numbers<[1], [0], [0], [1], [0, 0, 1, 1], [], []>} : vector<128x4xf32>, vector<4x8xf32>, vector<128x8xf32> -> vector<128x8xf32>
    %12 = arith.addf %6, %11 : vector<128x8xf32>
    %c0_14 = arith.constant 0 : index
    %c0_15 = arith.constant 0 : index
    %c1_16 = arith.constant 1 : index
    %c0_17 = arith.constant 0 : index
    %13 = vector.load %arg0[%c0_14, %c0_15, %c1_16, %c0_17] : memref<2x9x9x4xf32, #tpu.memory_space<vmem>>, vector<2x8x8x4xf32>
    %14 = vector.shape_cast %13 : vector<2x8x8x4xf32> to vector<128x4xf32>
    %c2 = arith.constant 2 : index
    %c0_18 = arith.constant 0 : index
    %c0_19 = arith.constant 0 : index
    %15 = vector.load %arg4[%c2, %c0_18, %c0_19] : memref<9x4x8xf32, #tpu.memory_space<vmem>>, vector<1x4x8xf32>
    %16 = vector.shape_cast %15 : vector<1x4x8xf32> to vector<4x8xf32>
    %cst_20 = arith.constant dense<0.000000e+00> : vector<128x8xf32>
    %17 = tpu.matmul %14, %16, %cst_20 {dimension_numbers = #tpu.dot_dimension_numbers<[1], [0], [0], [1], [0, 0, 1, 1], [], []>} : vector<128x4xf32>, vector<4x8xf32>, vector<128x8xf32> -> vector<128x8xf32>
    %18 = arith.addf %12, %17 : vector<128x8xf32>
    %c0_21 = arith.constant 0 : index
    %c0_22 = arith.constant 0 : index
    %c0_23 = arith.constant 0 : index
    %c0_24 = arith.constant 0 : index
    %19 = vector.load %arg2[%c0_21, %c0_22, %c0_23, %c0_24] : memref<2x9x9x4xf32, #tpu.memory_space<vmem>>, vector<2x8x8x4xf32>
    %20 = vector.shape_cast %19 : vector<2x8x8x4xf32> to vector<128x4xf32>
    %c3 = arith.constant 3 : index
    %c0_25 = arith.constant 0 : index
    %c0_26 = arith.constant 0 : index
    %21 = vector.load %arg4[%c3, %c0_25, %c0_26] : memref<9x4x8xf32, #tpu.memory_space<vmem>>, vector<1x4x8xf32>
    %22 = vector.shape_cast %21 : vector<1x4x8xf32> to vector<4x8xf32>
    %cst_27 = arith.constant dense<0.000000e+00> : vector<128x8xf32>
    %23 = tpu.matmul %20, %22, %cst_27 {dimension_numbers = #tpu.dot_dimension_numbers<[1], [0], [0], [1], [0, 0, 1, 1], [], []>} : vector<128x4xf32>, vector<4x8xf32>, vector<128x8xf32> -> vector<128x8xf32>
    %24 = arith.addf %18, %23 : vector<128x8xf32>
    %c0_28 = arith.constant 0 : index
    %c0_29 = arith.constant 0 : index
    %c0_30 = arith.constant 0 : index
    %c0_31 = arith.constant 0 : index
    %25 = vector.load %arg3[%c0_28, %c0_29, %c0_30, %c0_31] : memref<2x9x9x4xf32, #tpu.memory_space<vmem>>, vector<2x8x8x4xf32>
    %26 = vector.shape_cast %25 : vector<2x8x8x4xf32> to vector<128x4xf32>
    %c4 = arith.constant 4 : index
    %c0_32 = arith.constant 0 : index
    %c0_33 = arith.constant 0 : index
    %27 = vector.load %arg4[%c4, %c0_32, %c0_33] : memref<9x4x8xf32, #tpu.memory_space<vmem>>, vector<1x4x8xf32>
    %28 = vector.shape_cast %27 : vector<1x4x8xf32> to vector<4x8xf32>
    %cst_34 = arith.constant dense<0.000000e+00> : vector<128x8xf32>
    %29 = tpu.matmul %26, %28, %cst_34 {dimension_numbers = #tpu.dot_dimension_numbers<[1], [0], [0], [1], [0, 0, 1, 1], [], []>} : vector<128x4xf32>, vector<4x8xf32>, vector<128x8xf32> -> vector<128x8xf32>
    %30 = arith.addf %24, %29 : vector<128x8xf32>
    %c0_35 = arith.constant 0 : index
    %c0_36 = arith.constant 0 : index
    %c1_37 = arith.constant 1 : index
    %c0_38 = arith.constant 0 : index
    %31 = vector.load %arg2[%c0_35, %c0_36, %c1_37, %c0_38] : memref<2x9x9x4xf32, #tpu.memory_space<vmem>>, vector<2x8x8x4xf32>
    %32 = vector.shape_cast %31 : vector<2x8x8x4xf32> to vector<128x4xf32>
    %c5 = arith.constant 5 : index
    %c0_39 = arith.constant 0 : index
    %c0_40 = arith.constant 0 : index
    %33 = vector.load %arg4[%c5, %c0_39, %c0_40] : memref<9x4x8xf32, #tpu.memory_space<vmem>>, vector<1x4x8xf32>
    %34 = vector.shape_cast %33 : vector<1x4x8xf32> to vector<4x8xf32>
    %cst_41 = arith.constant dense<0.000000e+00> : vector<128x8xf32>
    %35 = tpu.matmul %32, %34, %cst_41 {dimension_numbers = #tpu.dot_dimension_numbers<[1], [0], [0], [1], [0, 0, 1, 1], [], []>} : vector<128x4xf32>, vector<4x8xf32>, vector<128x8xf32> -> vector<128x8xf32>
    %36 = arith.addf %30, %35 : vector<128x8xf32>
    %c0_42 = arith.constant 0 : index
    %c1_43 = arith.constant 1 : index
    %c0_44 = arith.constant 0 : index
    %c0_45 = arith.constant 0 : index
    %37 = vector.load %arg0[%c0_42, %c1_43, %c0_44, %c0_45] : memref<2x9x9x4xf32, #tpu.memory_space<vmem>>, vector<2x8x8x4xf32>
    %38 = vector.shape_cast %37 : vector<2x8x8x4xf32> to vector<128x4xf32>
    %c6 = arith.constant 6 : index
    %c0_46 = arith.constant 0 : index
    %c0_47 = arith.constant 0 : index
    %39 = vector.load %arg4[%c6, %c0_46, %c0_47] : memref<9x4x8xf32, #tpu.memory_space<vmem>>, vector<1x4x8xf32>
    %40 = vector.shape_cast %39 : vector<1x4x8xf32> to vector<4x8xf32>
    %cst_48 = arith.constant dense<0.000000e+00> : vector<128x8xf32>
    %41 = tpu.matmul %38, %40, %cst_48 {dimension_numbers = #tpu.dot_dimension_numbers<[1], [0], [0], [1], [0, 0, 1, 1], [], []>} : vector<128x4xf32>, vector<4x8xf32>, vector<128x8xf32> -> vector<128x8xf32>
    %42 = arith.addf %36, %41 : vector<128x8xf32>
    %c0_49 = arith.constant 0 : index
    %c1_50 = arith.constant 1 : index
    %c0_51 = arith.constant 0 : index
    %c0_52 = arith.constant 0 : index
    %43 = vector.load %arg1[%c0_49, %c1_50, %c0_51, %c0_52] : memref<2x9x9x4xf32, #tpu.memory_space<vmem>>, vector<2x8x8x4xf32>
    %44 = vector.shape_cast %43 : vector<2x8x8x4xf32> to vector<128x4xf32>
    %c7 = arith.constant 7 : index
    %c0_53 = arith.constant 0 : index
    %c0_54 = arith.constant 0 : index
    %45 = vector.load %arg4[%c7, %c0_53, %c0_54] : memref<9x4x8xf32, #tpu.memory_space<vmem>>, vector<1x4x8xf32>
    %46 = vector.shape_cast %45 : vector<1x4x8xf32> to vector<4x8xf32>
    %cst_55 = arith.constant dense<0.000000e+00> : vector<128x8xf32>
    %47 = tpu.matmul %44, %46, %cst_55 {dimension_numbers = #tpu.dot_dimension_numbers<[1], [0], [0], [1], [0, 0, 1, 1], [], []>} : vector<128x4xf32>, vector<4x8xf32>, vector<128x8xf32> -> vector<128x8xf32>
    %48 = arith.addf %42, %47 : vector<128x8xf32>
    %c0_56 = arith.constant 0 : index
    %c1_57 = arith.constant 1 : index
    %c1_58 = arith.constant 1 : index
    %c0_59 = arith.constant 0 : index
    %49 = vector.load %arg0[%c0_56, %c1_57, %c1_58, %c0_59] : memref<2x9x9x4xf32, #tpu.memory_space<vmem>>, vector<2x8x8x4xf32>
    %50 = vector.shape_cast %49 : vector<2x8x8x4xf32> to vector<128x4xf32>
    %c8 = arith.constant 8 : index
    %c0_60 = arith.constant 0 : index
    %c0_61 = arith.constant 0 : index
    %51 = vector.load %arg4[%c8, %c0_60, %c0_61] : memref<9x4x8xf32, #tpu.memory_space<vmem>>, vector<1x4x8xf32>
    %52 = vector.shape_cast %51 : vector<1x4x8xf32> to vector<4x8xf32>
    %cst_62 = arith.constant dense<0.000000e+00> : vector<128x8xf32>
    %53 = tpu.matmul %50, %52, %cst_62 {dimension_numbers = #tpu.dot_dimension_numbers<[1], [0], [0], [1], [0, 0, 1, 1], [], []>} : vector<128x4xf32>, vector<4x8xf32>, vector<128x8xf32> -> vector<128x8xf32>
    %54 = arith.addf %48, %53 : vector<128x8xf32>
    %c0_63 = arith.constant 0 : index
    %c0_64 = arith.constant 0 : index
    %55 = vector.load %arg5[%c0_63, %c0_64] : memref<1x8xf32, #tpu.memory_space<vmem>>, vector<1x8xf32>
    %56 = vector.broadcast %55 : vector<1x8xf32> to vector<128x8xf32>
    %57 = arith.addf %54, %56 : vector<128x8xf32>
    %cst_65 = arith.constant 0.000000e+00 : f32
    %58 = vector.broadcast %cst_65 : f32 to vector<128x8xf32>
    %59 = arith.maximumf %57, %58 : vector<128x8xf32>
    %c0_66 = arith.constant 0 : index
    %c0_67 = arith.constant 0 : index
    %60 = vector.load %arg6[%c0_66, %c0_67] : memref<1x8xf32, #tpu.memory_space<vmem>>, vector<1x8xf32>
    %c0_68 = arith.constant 0 : index
    %c0_69 = arith.constant 0 : index
    %61 = vector.load %arg7[%c0_68, %c0_69] : memref<1x8xf32, #tpu.memory_space<vmem>>, vector<1x8xf32>
    %cst_70 = arith.constant dense<0.000000e+00> : vector<8xf32>
    %62 = vector.multi_reduction <add>, %59, %cst_70 [0] : vector<128x8xf32> to vector<8xf32>
    %63 = vector.shape_cast %62 : vector<8xf32> to vector<1x8xf32>
    %64 = arith.mulf %59, %59 : vector<128x8xf32>
    %cst_71 = arith.constant dense<0.000000e+00> : vector<8xf32>
    %65 = vector.multi_reduction <add>, %64, %cst_71 [0] : vector<128x8xf32> to vector<8xf32>
    %66 = vector.shape_cast %65 : vector<8xf32> to vector<1x8xf32>
    %cst_72 = arith.constant 1.280000e+02 : f32
    %67 = vector.broadcast %cst_72 : f32 to vector<1x8xf32>
    %68 = arith.divf %63, %67 : vector<1x8xf32>
    %cst_73 = arith.constant 1.280000e+02 : f32
    %69 = vector.broadcast %cst_73 : f32 to vector<1x8xf32>
    %70 = arith.divf %66, %69 : vector<1x8xf32>
    %71 = arith.mulf %68, %68 : vector<1x8xf32>
    %72 = arith.subf %70, %71 : vector<1x8xf32>
    %cst_74 = arith.constant 0.000000e+00 : f32
    %73 = vector.broadcast %cst_74 : f32 to vector<1x8xf32>
    %74 = arith.maximumf %72, %73 : vector<1x8xf32>
    %75 = vector.broadcast %68 : vector<1x8xf32> to vector<128x8xf32>
    %76 = arith.subf %59, %75 : vector<128x8xf32>
    %cst_75 = arith.constant 9.99999974E-6 : f32
    %77 = vector.broadcast %cst_75 : f32 to vector<1x8xf32>
    %78 = arith.addf %74, %77 : vector<1x8xf32>
    %79 = math.rsqrt %78 : vector<1x8xf32>
    %80 = vector.broadcast %79 : vector<1x8xf32> to vector<128x8xf32>
    %81 = arith.mulf %76, %80 : vector<128x8xf32>
    %82 = vector.broadcast %60 : vector<1x8xf32> to vector<128x8xf32>
    %83 = arith.mulf %81, %82 : vector<128x8xf32>
    %84 = vector.broadcast %61 : vector<1x8xf32> to vector<128x8xf32>
    %85 = arith.addf %83, %84 : vector<128x8xf32>
    %c0_76 = arith.constant 0 : index
    %c0_77 = arith.constant 0 : index
    %86 = vector.load %arg8[%c0_76, %c0_77] : memref<128x8xf32, #tpu.memory_space<vmem>>, vector<128x8xf32>
    tpu.vector_store %arg8[%c0_76, %c0_77], %85 {strides = array<i32>} : memref<128x8xf32, #tpu.memory_space<vmem>>, vector<128x8xf32>,
    return
  }
}

module attributes {stable_mosaic.version = 11 : i64} {
  func.func @_resblocks_kernel(%arg0: i32, %arg1: memref<128x8xf32, #tpu.memory_space<vmem>>, %arg2: memref<3x9x8x8xf32, #tpu.memory_space<vmem>>, %arg3: memref<3x1x8xf32, #tpu.memory_space<vmem>>, %arg4: memref<3x1x8xf32, #tpu.memory_space<vmem>>, %arg5: memref<3x1x8xf32, #tpu.memory_space<vmem>>, %arg6: memref<128x8xf32, #tpu.memory_space<vmem>>, %arg7: memref<2x10x10x8xf32, #tpu.memory_space<vmem>>) attributes {dimension_semantics = [#tpu.dimension_semantics<arbitrary>], iteration_bounds = array<i64: 2>, scalar_prefetch = 0 : i64, scratch_operands = 1 : i64, tpu.core_type = #tpu.core_type<tc>, window_params = [{pipeline_mode = #tpu.pipeline_mode<synchronous>, transform_indices = @transform_0, window_bounds = array<i64: 128, 8>}, {pipeline_mode = #tpu.pipeline_mode<synchronous>, transform_indices = @transform_1, window_bounds = array<i64: 3, 9, 8, 8>}, {pipeline_mode = #tpu.pipeline_mode<synchronous>, transform_indices = @transform_2, window_bounds = array<i64: 3, 1, 8>}, {pipeline_mode = #tpu.pipeline_mode<synchronous>, transform_indices = @transform_3, window_bounds = array<i64: 3, 1, 8>}, {pipeline_mode = #tpu.pipeline_mode<synchronous>, transform_indices = @transform_4, window_bounds = array<i64: 3, 1, 8>}, {pipeline_mode = #tpu.pipeline_mode<synchronous>, transform_indices = @transform_5, window_bounds = array<i64: 128, 8>}]} {
    %c0_i32 = arith.constant 0 : i32
    %0 = arith.cmpi eq, %arg0, %c0_i32 : i32
    %1 = arith.extui %0 : i1 to i32
    %c0_i32_0 = arith.constant 0 : i32
    %2 = arith.cmpi ne, %1, %c0_i32_0 : i32
    scf.if %2 {
      %c0_301 = arith.constant 0 : index
      %c0_302 = arith.constant 0 : index
      %279 = vector.load %arg1[%c0_301, %c0_302] : memref<128x8xf32, #tpu.memory_space<vmem>>, vector<128x8xf32>
      %c0_303 = arith.constant 0 : index
      %c0_304 = arith.constant 0 : index
      %280 = vector.load %arg6[%c0_303, %c0_304] : memref<128x8xf32, #tpu.memory_space<vmem>>, vector<128x8xf32>
      tpu.vector_store %arg6[%c0_303, %c0_304], %279 {strides = array<i32>} : memref<128x8xf32, #tpu.memory_space<vmem>>, vector<128x8xf32>,
      %cst_305 = arith.constant 0.000000e+00 : f32
      %281 = vector.broadcast %cst_305 : f32 to vector<2x10x10x8xf32>
      %c0_306 = arith.constant 0 : index
      %c0_307 = arith.constant 0 : index
      %c0_308 = arith.constant 0 : index
      %c0_309 = arith.constant 0 : index
      %282 = vector.load %arg7[%c0_306, %c0_307, %c0_308, %c0_309] : memref<2x10x10x8xf32, #tpu.memory_space<vmem>>, vector<2x10x10x8xf32>
      tpu.vector_store %arg7[%c0_306, %c0_307, %c0_308, %c0_309], %281 {strides = array<i32>} : memref<2x10x10x8xf32, #tpu.memory_space<vmem>>, vector<2x10x10x8xf32>,
    } else {
    }
    %c0 = arith.constant 0 : index
    %c0_1 = arith.constant 0 : index
    %3 = vector.load %arg6[%c0, %c0_1] : memref<128x8xf32, #tpu.memory_space<vmem>>, vector<128x8xf32>
    %4 = vector.shape_cast %3 : vector<128x8xf32> to vector<2x8x8x8xf32>
    %c0_2 = arith.constant 0 : index
    %c1 = arith.constant 1 : index
    %c1_3 = arith.constant 1 : index
    %c0_4 = arith.constant 0 : index
    %5 = vector.load %arg7[%c0_2, %c1, %c1_3, %c0_4] : memref<2x10x10x8xf32, #tpu.memory_space<vmem>>, vector<2x8x8x8xf32>
    tpu.vector_store %arg7[%c0_2, %c1, %c1_3, %c0_4], %4 {strides = array<i32>} : memref<2x10x10x8xf32, #tpu.memory_space<vmem>>, vector<2x8x8x8xf32>,
    %cst = arith.constant 0.000000e+00 : f32
    %6 = vector.broadcast %cst : f32 to vector<128x8xf32>
    %c0_5 = arith.constant 0 : index
    %c0_6 = arith.constant 0 : index
    %c0_7 = arith.constant 0 : index
    %c0_8 = arith.constant 0 : index
    %7 = vector.load %arg7[%c0_5, %c0_6, %c0_7, %c0_8] : memref<2x10x10x8xf32, #tpu.memory_space<vmem>>, vector<2x8x8x8xf32>
    %8 = vector.shape_cast %7 : vector<2x8x8x8xf32> to vector<128x8xf32>
    %c0_9 = arith.constant 0 : index
    %c0_10 = arith.constant 0 : index
    %c0_11 = arith.constant 0 : index
    %c0_12 = arith.constant 0 : index
    %9 = vector.load %arg2[%c0_9, %c0_10, %c0_11, %c0_12] : memref<3x9x8x8xf32, #tpu.memory_space<vmem>>, vector<1x1x8x8xf32>
    %10 = vector.shape_cast %9 : vector<1x1x8x8xf32> to vector<8x8xf32>
    %cst_13 = arith.constant dense<0.000000e+00> : vector<128x8xf32>
    %11 = tpu.matmul %8, %10, %cst_13 {dimension_numbers = #tpu.dot_dimension_numbers<[1], [0], [0], [1], [0, 0, 1, 1], [], []>} : vector<128x8xf32>, vector<8x8xf32>, vector<128x8xf32> -> vector<128x8xf32>
    %12 = arith.addf %6, %11 : vector<128x8xf32>
    %c0_14 = arith.constant 0 : index
    %c0_15 = arith.constant 0 : index
    %c1_16 = arith.constant 1 : index
    %c0_17 = arith.constant 0 : index
    %13 = vector.load %arg7[%c0_14, %c0_15, %c1_16, %c0_17] : memref<2x10x10x8xf32, #tpu.memory_space<vmem>>, vector<2x8x8x8xf32>
    %14 = vector.shape_cast %13 : vector<2x8x8x8xf32> to vector<128x8xf32>
    %c0_18 = arith.constant 0 : index
    %c1_19 = arith.constant 1 : index
    %c0_20 = arith.constant 0 : index
    %c0_21 = arith.constant 0 : index
    %15 = vector.load %arg2[%c0_18, %c1_19, %c0_20, %c0_21] : memref<3x9x8x8xf32, #tpu.memory_space<vmem>>, vector<1x1x8x8xf32>
    %16 = vector.shape_cast %15 : vector<1x1x8x8xf32> to vector<8x8xf32>
    %cst_22 = arith.constant dense<0.000000e+00> : vector<128x8xf32>
    %17 = tpu.matmul %14, %16, %cst_22 {dimension_numbers = #tpu.dot_dimension_numbers<[1], [0], [0], [1], [0, 0, 1, 1], [], []>} : vector<128x8xf32>, vector<8x8xf32>, vector<128x8xf32> -> vector<128x8xf32>
    %18 = arith.addf %12, %17 : vector<128x8xf32>
    %c0_23 = arith.constant 0 : index
    %c0_24 = arith.constant 0 : index
    %c2 = arith.constant 2 : index
    %c0_25 = arith.constant 0 : index
    %19 = vector.load %arg7[%c0_23, %c0_24, %c2, %c0_25] : memref<2x10x10x8xf32, #tpu.memory_space<vmem>>, vector<2x8x8x8xf32>
    %20 = vector.shape_cast %19 : vector<2x8x8x8xf32> to vector<128x8xf32>
    %c0_26 = arith.constant 0 : index
    %c2_27 = arith.constant 2 : index
    %c0_28 = arith.constant 0 : index
    %c0_29 = arith.constant 0 : index
    %21 = vector.load %arg2[%c0_26, %c2_27, %c0_28, %c0_29] : memref<3x9x8x8xf32, #tpu.memory_space<vmem>>, vector<1x1x8x8xf32>
    %22 = vector.shape_cast %21 : vector<1x1x8x8xf32> to vector<8x8xf32>
    %cst_30 = arith.constant dense<0.000000e+00> : vector<128x8xf32>
    %23 = tpu.matmul %20, %22, %cst_30 {dimension_numbers = #tpu.dot_dimension_numbers<[1], [0], [0], [1], [0, 0, 1, 1], [], []>} : vector<128x8xf32>, vector<8x8xf32>, vector<128x8xf32> -> vector<128x8xf32>
    %24 = arith.addf %18, %23 : vector<128x8xf32>
    %c0_31 = arith.constant 0 : index
    %c1_32 = arith.constant 1 : index
    %c0_33 = arith.constant 0 : index
    %c0_34 = arith.constant 0 : index
    %25 = vector.load %arg7[%c0_31, %c1_32, %c0_33, %c0_34] : memref<2x10x10x8xf32, #tpu.memory_space<vmem>>, vector<2x8x8x8xf32>
    %26 = vector.shape_cast %25 : vector<2x8x8x8xf32> to vector<128x8xf32>
    %c0_35 = arith.constant 0 : index
    %c3 = arith.constant 3 : index
    %c0_36 = arith.constant 0 : index
    %c0_37 = arith.constant 0 : index
    %27 = vector.load %arg2[%c0_35, %c3, %c0_36, %c0_37] : memref<3x9x8x8xf32, #tpu.memory_space<vmem>>, vector<1x1x8x8xf32>
    %28 = vector.shape_cast %27 : vector<1x1x8x8xf32> to vector<8x8xf32>
    %cst_38 = arith.constant dense<0.000000e+00> : vector<128x8xf32>
    %29 = tpu.matmul %26, %28, %cst_38 {dimension_numbers = #tpu.dot_dimension_numbers<[1], [0], [0], [1], [0, 0, 1, 1], [], []>} : vector<128x8xf32>, vector<8x8xf32>, vector<128x8xf32> -> vector<128x8xf32>
    %30 = arith.addf %24, %29 : vector<128x8xf32>
    %c0_39 = arith.constant 0 : index
    %c1_40 = arith.constant 1 : index
    %c1_41 = arith.constant 1 : index
    %c0_42 = arith.constant 0 : index
    %31 = vector.load %arg7[%c0_39, %c1_40, %c1_41, %c0_42] : memref<2x10x10x8xf32, #tpu.memory_space<vmem>>, vector<2x8x8x8xf32>
    %32 = vector.shape_cast %31 : vector<2x8x8x8xf32> to vector<128x8xf32>
    %c0_43 = arith.constant 0 : index
    %c4 = arith.constant 4 : index
    %c0_44 = arith.constant 0 : index
    %c0_45 = arith.constant 0 : index
    %33 = vector.load %arg2[%c0_43, %c4, %c0_44, %c0_45] : memref<3x9x8x8xf32, #tpu.memory_space<vmem>>, vector<1x1x8x8xf32>
    %34 = vector.shape_cast %33 : vector<1x1x8x8xf32> to vector<8x8xf32>
    %cst_46 = arith.constant dense<0.000000e+00> : vector<128x8xf32>
    %35 = tpu.matmul %32, %34, %cst_46 {dimension_numbers = #tpu.dot_dimension_numbers<[1], [0], [0], [1], [0, 0, 1, 1], [], []>} : vector<128x8xf32>, vector<8x8xf32>, vector<128x8xf32> -> vector<128x8xf32>
    %36 = arith.addf %30, %35 : vector<128x8xf32>
    %c0_47 = arith.constant 0 : index
    %c1_48 = arith.constant 1 : index
    %c2_49 = arith.constant 2 : index
    %c0_50 = arith.constant 0 : index
    %37 = vector.load %arg7[%c0_47, %c1_48, %c2_49, %c0_50] : memref<2x10x10x8xf32, #tpu.memory_space<vmem>>, vector<2x8x8x8xf32>
    %38 = vector.shape_cast %37 : vector<2x8x8x8xf32> to vector<128x8xf32>
    %c0_51 = arith.constant 0 : index
    %c5 = arith.constant 5 : index
    %c0_52 = arith.constant 0 : index
    %c0_53 = arith.constant 0 : index
    %39 = vector.load %arg2[%c0_51, %c5, %c0_52, %c0_53] : memref<3x9x8x8xf32, #tpu.memory_space<vmem>>, vector<1x1x8x8xf32>
    %40 = vector.shape_cast %39 : vector<1x1x8x8xf32> to vector<8x8xf32>
    %cst_54 = arith.constant dense<0.000000e+00> : vector<128x8xf32>
    %41 = tpu.matmul %38, %40, %cst_54 {dimension_numbers = #tpu.dot_dimension_numbers<[1], [0], [0], [1], [0, 0, 1, 1], [], []>} : vector<128x8xf32>, vector<8x8xf32>, vector<128x8xf32> -> vector<128x8xf32>
    %42 = arith.addf %36, %41 : vector<128x8xf32>
    %c0_55 = arith.constant 0 : index
    %c2_56 = arith.constant 2 : index
    %c0_57 = arith.constant 0 : index
    %c0_58 = arith.constant 0 : index
    %43 = vector.load %arg7[%c0_55, %c2_56, %c0_57, %c0_58] : memref<2x10x10x8xf32, #tpu.memory_space<vmem>>, vector<2x8x8x8xf32>
    %44 = vector.shape_cast %43 : vector<2x8x8x8xf32> to vector<128x8xf32>
    %c0_59 = arith.constant 0 : index
    %c6 = arith.constant 6 : index
    %c0_60 = arith.constant 0 : index
    %c0_61 = arith.constant 0 : index
    %45 = vector.load %arg2[%c0_59, %c6, %c0_60, %c0_61] : memref<3x9x8x8xf32, #tpu.memory_space<vmem>>, vector<1x1x8x8xf32>
    %46 = vector.shape_cast %45 : vector<1x1x8x8xf32> to vector<8x8xf32>
    %cst_62 = arith.constant dense<0.000000e+00> : vector<128x8xf32>
    %47 = tpu.matmul %44, %46, %cst_62 {dimension_numbers = #tpu.dot_dimension_numbers<[1], [0], [0], [1], [0, 0, 1, 1], [], []>} : vector<128x8xf32>, vector<8x8xf32>, vector<128x8xf32> -> vector<128x8xf32>
    %48 = arith.addf %42, %47 : vector<128x8xf32>
    %c0_63 = arith.constant 0 : index
    %c2_64 = arith.constant 2 : index
    %c1_65 = arith.constant 1 : index
    %c0_66 = arith.constant 0 : index
    %49 = vector.load %arg7[%c0_63, %c2_64, %c1_65, %c0_66] : memref<2x10x10x8xf32, #tpu.memory_space<vmem>>, vector<2x8x8x8xf32>
    %50 = vector.shape_cast %49 : vector<2x8x8x8xf32> to vector<128x8xf32>
    %c0_67 = arith.constant 0 : index
    %c7 = arith.constant 7 : index
    %c0_68 = arith.constant 0 : index
    %c0_69 = arith.constant 0 : index
    %51 = vector.load %arg2[%c0_67, %c7, %c0_68, %c0_69] : memref<3x9x8x8xf32, #tpu.memory_space<vmem>>, vector<1x1x8x8xf32>
    %52 = vector.shape_cast %51 : vector<1x1x8x8xf32> to vector<8x8xf32>
    %cst_70 = arith.constant dense<0.000000e+00> : vector<128x8xf32>
    %53 = tpu.matmul %50, %52, %cst_70 {dimension_numbers = #tpu.dot_dimension_numbers<[1], [0], [0], [1], [0, 0, 1, 1], [], []>} : vector<128x8xf32>, vector<8x8xf32>, vector<128x8xf32> -> vector<128x8xf32>
    %54 = arith.addf %48, %53 : vector<128x8xf32>
    %c0_71 = arith.constant 0 : index
    %c2_72 = arith.constant 2 : index
    %c2_73 = arith.constant 2 : index
    %c0_74 = arith.constant 0 : index
    %55 = vector.load %arg7[%c0_71, %c2_72, %c2_73, %c0_74] : memref<2x10x10x8xf32, #tpu.memory_space<vmem>>, vector<2x8x8x8xf32>
    %56 = vector.shape_cast %55 : vector<2x8x8x8xf32> to vector<128x8xf32>
    %c0_75 = arith.constant 0 : index
    %c8 = arith.constant 8 : index
    %c0_76 = arith.constant 0 : index
    %c0_77 = arith.constant 0 : index
    %57 = vector.load %arg2[%c0_75, %c8, %c0_76, %c0_77] : memref<3x9x8x8xf32, #tpu.memory_space<vmem>>, vector<1x1x8x8xf32>
    %58 = vector.shape_cast %57 : vector<1x1x8x8xf32> to vector<8x8xf32>
    %cst_78 = arith.constant dense<0.000000e+00> : vector<128x8xf32>
    %59 = tpu.matmul %56, %58, %cst_78 {dimension_numbers = #tpu.dot_dimension_numbers<[1], [0], [0], [1], [0, 0, 1, 1], [], []>} : vector<128x8xf32>, vector<8x8xf32>, vector<128x8xf32> -> vector<128x8xf32>
    %60 = arith.addf %54, %59 : vector<128x8xf32>
    %c0_79 = arith.constant 0 : index
    %c0_80 = arith.constant 0 : index
    %c0_81 = arith.constant 0 : index
    %61 = vector.load %arg3[%c0_79, %c0_80, %c0_81] : memref<3x1x8xf32, #tpu.memory_space<vmem>>, vector<1x1x8xf32>
    %62 = vector.shape_cast %61 : vector<1x1x8xf32> to vector<1x8xf32>
    %63 = vector.broadcast %62 : vector<1x8xf32> to vector<128x8xf32>
    %64 = arith.addf %60, %63 : vector<128x8xf32>
    %c0_82 = arith.constant 0 : index
    %c0_83 = arith.constant 0 : index
    %c0_84 = arith.constant 0 : index
    %65 = vector.load %arg4[%c0_82, %c0_83, %c0_84] : memref<3x1x8xf32, #tpu.memory_space<vmem>>, vector<1x1x8xf32>
    %66 = vector.shape_cast %65 : vector<1x1x8xf32> to vector<1x8xf32>
    %c0_85 = arith.constant 0 : index
    %c0_86 = arith.constant 0 : index
    %c0_87 = arith.constant 0 : index
    %67 = vector.load %arg5[%c0_85, %c0_86, %c0_87] : memref<3x1x8xf32, #tpu.memory_space<vmem>>, vector<1x1x8xf32>
    %68 = vector.shape_cast %67 : vector<1x1x8xf32> to vector<1x8xf32>
    %cst_88 = arith.constant dense<0.000000e+00> : vector<8xf32>
    %69 = vector.multi_reduction <add>, %64, %cst_88 [0] : vector<128x8xf32> to vector<8xf32>
    %70 = vector.shape_cast %69 : vector<8xf32> to vector<1x8xf32>
    %71 = arith.mulf %64, %64 : vector<128x8xf32>
    %cst_89 = arith.constant dense<0.000000e+00> : vector<8xf32>
    %72 = vector.multi_reduction <add>, %71, %cst_89 [0] : vector<128x8xf32> to vector<8xf32>
    %73 = vector.shape_cast %72 : vector<8xf32> to vector<1x8xf32>
    %cst_90 = arith.constant 1.280000e+02 : f32
    %74 = vector.broadcast %cst_90 : f32 to vector<1x8xf32>
    %75 = arith.divf %70, %74 : vector<1x8xf32>
    %cst_91 = arith.constant 1.280000e+02 : f32
    %76 = vector.broadcast %cst_91 : f32 to vector<1x8xf32>
    %77 = arith.divf %73, %76 : vector<1x8xf32>
    %78 = arith.mulf %75, %75 : vector<1x8xf32>
    %79 = arith.subf %77, %78 : vector<1x8xf32>
    %cst_92 = arith.constant 0.000000e+00 : f32
    %80 = vector.broadcast %cst_92 : f32 to vector<1x8xf32>
    %81 = arith.maximumf %79, %80 : vector<1x8xf32>
    %82 = vector.broadcast %75 : vector<1x8xf32> to vector<128x8xf32>
    %83 = arith.subf %64, %82 : vector<128x8xf32>
    %cst_93 = arith.constant 9.99999974E-6 : f32
    %84 = vector.broadcast %cst_93 : f32 to vector<1x8xf32>
    %85 = arith.addf %81, %84 : vector<1x8xf32>
    %86 = math.rsqrt %85 : vector<1x8xf32>
    %87 = vector.broadcast %86 : vector<1x8xf32> to vector<128x8xf32>
    %88 = arith.mulf %83, %87 : vector<128x8xf32>
    %89 = vector.broadcast %66 : vector<1x8xf32> to vector<128x8xf32>
    %90 = arith.mulf %88, %89 : vector<128x8xf32>
    %91 = vector.broadcast %68 : vector<1x8xf32> to vector<128x8xf32>
    %92 = arith.addf %90, %91 : vector<128x8xf32>
    %cst_94 = arith.constant 0.000000e+00 : f32
    %93 = vector.broadcast %cst_94 : f32 to vector<128x8xf32>
    %94 = arith.maximumf %92, %93 : vector<128x8xf32>
    %95 = vector.shape_cast %94 : vector<128x8xf32> to vector<2x8x8x8xf32>
    %c0_95 = arith.constant 0 : index
    %c1_96 = arith.constant 1 : index
    %c1_97 = arith.constant 1 : index
    %c0_98 = arith.constant 0 : index
    %96 = vector.load %arg7[%c0_95, %c1_96, %c1_97, %c0_98] : memref<2x10x10x8xf32, #tpu.memory_space<vmem>>, vector<2x8x8x8xf32>
    tpu.vector_store %arg7[%c0_95, %c1_96, %c1_97, %c0_98], %95 {strides = array<i32>} : memref<2x10x10x8xf32, #tpu.memory_space<vmem>>, vector<2x8x8x8xf32>,
    %cst_99 = arith.constant 0.000000e+00 : f32
    %97 = vector.broadcast %cst_99 : f32 to vector<128x8xf32>
    %c0_100 = arith.constant 0 : index
    %c0_101 = arith.constant 0 : index
    %c0_102 = arith.constant 0 : index
    %c0_103 = arith.constant 0 : index
    %98 = vector.load %arg7[%c0_100, %c0_101, %c0_102, %c0_103] : memref<2x10x10x8xf32, #tpu.memory_space<vmem>>, vector<2x8x8x8xf32>
    %99 = vector.shape_cast %98 : vector<2x8x8x8xf32> to vector<128x8xf32>
    %c1_104 = arith.constant 1 : index
    %c0_105 = arith.constant 0 : index
    %c0_106 = arith.constant 0 : index
    %c0_107 = arith.constant 0 : index
    %100 = vector.load %arg2[%c1_104, %c0_105, %c0_106, %c0_107] : memref<3x9x8x8xf32, #tpu.memory_space<vmem>>, vector<1x1x8x8xf32>
    %101 = vector.shape_cast %100 : vector<1x1x8x8xf32> to vector<8x8xf32>
    %cst_108 = arith.constant dense<0.000000e+00> : vector<128x8xf32>
    %102 = tpu.matmul %99, %101, %cst_108 {dimension_numbers = #tpu.dot_dimension_numbers<[1], [0], [0], [1], [0, 0, 1, 1], [], []>} : vector<128x8xf32>, vector<8x8xf32>, vector<128x8xf32> -> vector<128x8xf32>
    %103 = arith.addf %97, %102 : vector<128x8xf32>
    %c0_109 = arith.constant 0 : index
    %c0_110 = arith.constant 0 : index
    %c1_111 = arith.constant 1 : index
    %c0_112 = arith.constant 0 : index
    %104 = vector.load %arg7[%c0_109, %c0_110, %c1_111, %c0_112] : memref<2x10x10x8xf32, #tpu.memory_space<vmem>>, vector<2x8x8x8xf32>
    %105 = vector.shape_cast %104 : vector<2x8x8x8xf32> to vector<128x8xf32>
    %c1_113 = arith.constant 1 : index
    %c1_114 = arith.constant 1 : index
    %c0_115 = arith.constant 0 : index
    %c0_116 = arith.constant 0 : index
    %106 = vector.load %arg2[%c1_113, %c1_114, %c0_115, %c0_116] : memref<3x9x8x8xf32, #tpu.memory_space<vmem>>, vector<1x1x8x8xf32>
    %107 = vector.shape_cast %106 : vector<1x1x8x8xf32> to vector<8x8xf32>
    %cst_117 = arith.constant dense<0.000000e+00> : vector<128x8xf32>
    %108 = tpu.matmul %105, %107, %cst_117 {dimension_numbers = #tpu.dot_dimension_numbers<[1], [0], [0], [1], [0, 0, 1, 1], [], []>} : vector<128x8xf32>, vector<8x8xf32>, vector<128x8xf32> -> vector<128x8xf32>
    %109 = arith.addf %103, %108 : vector<128x8xf32>
    %c0_118 = arith.constant 0 : index
    %c0_119 = arith.constant 0 : index
    %c2_120 = arith.constant 2 : index
    %c0_121 = arith.constant 0 : index
    %110 = vector.load %arg7[%c0_118, %c0_119, %c2_120, %c0_121] : memref<2x10x10x8xf32, #tpu.memory_space<vmem>>, vector<2x8x8x8xf32>
    %111 = vector.shape_cast %110 : vector<2x8x8x8xf32> to vector<128x8xf32>
    %c1_122 = arith.constant 1 : index
    %c2_123 = arith.constant 2 : index
    %c0_124 = arith.constant 0 : index
    %c0_125 = arith.constant 0 : index
    %112 = vector.load %arg2[%c1_122, %c2_123, %c0_124, %c0_125] : memref<3x9x8x8xf32, #tpu.memory_space<vmem>>, vector<1x1x8x8xf32>
    %113 = vector.shape_cast %112 : vector<1x1x8x8xf32> to vector<8x8xf32>
    %cst_126 = arith.constant dense<0.000000e+00> : vector<128x8xf32>
    %114 = tpu.matmul %111, %113, %cst_126 {dimension_numbers = #tpu.dot_dimension_numbers<[1], [0], [0], [1], [0, 0, 1, 1], [], []>} : vector<128x8xf32>, vector<8x8xf32>, vector<128x8xf32> -> vector<128x8xf32>
    %115 = arith.addf %109, %114 : vector<128x8xf32>
    %c0_127 = arith.constant 0 : index
    %c1_128 = arith.constant 1 : index
    %c0_129 = arith.constant 0 : index
    %c0_130 = arith.constant 0 : index
    %116 = vector.load %arg7[%c0_127, %c1_128, %c0_129, %c0_130] : memref<2x10x10x8xf32, #tpu.memory_space<vmem>>, vector<2x8x8x8xf32>
    %117 = vector.shape_cast %116 : vector<2x8x8x8xf32> to vector<128x8xf32>
    %c1_131 = arith.constant 1 : index
    %c3_132 = arith.constant 3 : index
    %c0_133 = arith.constant 0 : index
    %c0_134 = arith.constant 0 : index
    %118 = vector.load %arg2[%c1_131, %c3_132, %c0_133, %c0_134] : memref<3x9x8x8xf32, #tpu.memory_space<vmem>>, vector<1x1x8x8xf32>
    %119 = vector.shape_cast %118 : vector<1x1x8x8xf32> to vector<8x8xf32>
    %cst_135 = arith.constant dense<0.000000e+00> : vector<128x8xf32>
    %120 = tpu.matmul %117, %119, %cst_135 {dimension_numbers = #tpu.dot_dimension_numbers<[1], [0], [0], [1], [0, 0, 1, 1], [], []>} : vector<128x8xf32>, vector<8x8xf32>, vector<128x8xf32> -> vector<128x8xf32>
    %121 = arith.addf %115, %120 : vector<128x8xf32>
    %c0_136 = arith.constant 0 : index
    %c1_137 = arith.constant 1 : index
    %c1_138 = arith.constant 1 : index
    %c0_139 = arith.constant 0 : index
    %122 = vector.load %arg7[%c0_136, %c1_137, %c1_138, %c0_139] : memref<2x10x10x8xf32, #tpu.memory_space<vmem>>, vector<2x8x8x8xf32>
    %123 = vector.shape_cast %122 : vector<2x8x8x8xf32> to vector<128x8xf32>
    %c1_140 = arith.constant 1 : index
    %c4_141 = arith.constant 4 : index
    %c0_142 = arith.constant 0 : index
    %c0_143 = arith.constant 0 : index
    %124 = vector.load %arg2[%c1_140, %c4_141, %c0_142, %c0_143] : memref<3x9x8x8xf32, #tpu.memory_space<vmem>>, vector<1x1x8x8xf32>
    %125 = vector.shape_cast %124 : vector<1x1x8x8xf32> to vector<8x8xf32>
    %cst_144 = arith.constant dense<0.000000e+00> : vector<128x8xf32>
    %126 = tpu.matmul %123, %125, %cst_144 {dimension_numbers = #tpu.dot_dimension_numbers<[1], [0], [0], [1], [0, 0, 1, 1], [], []>} : vector<128x8xf32>, vector<8x8xf32>, vector<128x8xf32> -> vector<128x8xf32>
    %127 = arith.addf %121, %126 : vector<128x8xf32>
    %c0_145 = arith.constant 0 : index
    %c1_146 = arith.constant 1 : index
    %c2_147 = arith.constant 2 : index
    %c0_148 = arith.constant 0 : index
    %128 = vector.load %arg7[%c0_145, %c1_146, %c2_147, %c0_148] : memref<2x10x10x8xf32, #tpu.memory_space<vmem>>, vector<2x8x8x8xf32>
    %129 = vector.shape_cast %128 : vector<2x8x8x8xf32> to vector<128x8xf32>
    %c1_149 = arith.constant 1 : index
    %c5_150 = arith.constant 5 : index
    %c0_151 = arith.constant 0 : index
    %c0_152 = arith.constant 0 : index
    %130 = vector.load %arg2[%c1_149, %c5_150, %c0_151, %c0_152] : memref<3x9x8x8xf32, #tpu.memory_space<vmem>>, vector<1x1x8x8xf32>
    %131 = vector.shape_cast %130 : vector<1x1x8x8xf32> to vector<8x8xf32>
    %cst_153 = arith.constant dense<0.000000e+00> : vector<128x8xf32>
    %132 = tpu.matmul %129, %131, %cst_153 {dimension_numbers = #tpu.dot_dimension_numbers<[1], [0], [0], [1], [0, 0, 1, 1], [], []>} : vector<128x8xf32>, vector<8x8xf32>, vector<128x8xf32> -> vector<128x8xf32>
    %133 = arith.addf %127, %132 : vector<128x8xf32>
    %c0_154 = arith.constant 0 : index
    %c2_155 = arith.constant 2 : index
    %c0_156 = arith.constant 0 : index
    %c0_157 = arith.constant 0 : index
    %134 = vector.load %arg7[%c0_154, %c2_155, %c0_156, %c0_157] : memref<2x10x10x8xf32, #tpu.memory_space<vmem>>, vector<2x8x8x8xf32>
    %135 = vector.shape_cast %134 : vector<2x8x8x8xf32> to vector<128x8xf32>
    %c1_158 = arith.constant 1 : index
    %c6_159 = arith.constant 6 : index
    %c0_160 = arith.constant 0 : index
    %c0_161 = arith.constant 0 : index
    %136 = vector.load %arg2[%c1_158, %c6_159, %c0_160, %c0_161] : memref<3x9x8x8xf32, #tpu.memory_space<vmem>>, vector<1x1x8x8xf32>
    %137 = vector.shape_cast %136 : vector<1x1x8x8xf32> to vector<8x8xf32>
    %cst_162 = arith.constant dense<0.000000e+00> : vector<128x8xf32>
    %138 = tpu.matmul %135, %137, %cst_162 {dimension_numbers = #tpu.dot_dimension_numbers<[1], [0], [0], [1], [0, 0, 1, 1], [], []>} : vector<128x8xf32>, vector<8x8xf32>, vector<128x8xf32> -> vector<128x8xf32>
    %139 = arith.addf %133, %138 : vector<128x8xf32>
    %c0_163 = arith.constant 0 : index
    %c2_164 = arith.constant 2 : index
    %c1_165 = arith.constant 1 : index
    %c0_166 = arith.constant 0 : index
    %140 = vector.load %arg7[%c0_163, %c2_164, %c1_165, %c0_166] : memref<2x10x10x8xf32, #tpu.memory_space<vmem>>, vector<2x8x8x8xf32>
    %141 = vector.shape_cast %140 : vector<2x8x8x8xf32> to vector<128x8xf32>
    %c1_167 = arith.constant 1 : index
    %c7_168 = arith.constant 7 : index
    %c0_169 = arith.constant 0 : index
    %c0_170 = arith.constant 0 : index
    %142 = vector.load %arg2[%c1_167, %c7_168, %c0_169, %c0_170] : memref<3x9x8x8xf32, #tpu.memory_space<vmem>>, vector<1x1x8x8xf32>
    %143 = vector.shape_cast %142 : vector<1x1x8x8xf32> to vector<8x8xf32>
    %cst_171 = arith.constant dense<0.000000e+00> : vector<128x8xf32>
    %144 = tpu.matmul %141, %143, %cst_171 {dimension_numbers = #tpu.dot_dimension_numbers<[1], [0], [0], [1], [0, 0, 1, 1], [], []>} : vector<128x8xf32>, vector<8x8xf32>, vector<128x8xf32> -> vector<128x8xf32>
    %145 = arith.addf %139, %144 : vector<128x8xf32>
    %c0_172 = arith.constant 0 : index
    %c2_173 = arith.constant 2 : index
    %c2_174 = arith.constant 2 : index
    %c0_175 = arith.constant 0 : index
    %146 = vector.load %arg7[%c0_172, %c2_173, %c2_174, %c0_175] : memref<2x10x10x8xf32, #tpu.memory_space<vmem>>, vector<2x8x8x8xf32>
    %147 = vector.shape_cast %146 : vector<2x8x8x8xf32> to vector<128x8xf32>
    %c1_176 = arith.constant 1 : index
    %c8_177 = arith.constant 8 : index
    %c0_178 = arith.constant 0 : index
    %c0_179 = arith.constant 0 : index
    %148 = vector.load %arg2[%c1_176, %c8_177, %c0_178, %c0_179] : memref<3x9x8x8xf32, #tpu.memory_space<vmem>>, vector<1x1x8x8xf32>
    %149 = vector.shape_cast %148 : vector<1x1x8x8xf32> to vector<8x8xf32>
    %cst_180 = arith.constant dense<0.000000e+00> : vector<128x8xf32>
    %150 = tpu.matmul %147, %149, %cst_180 {dimension_numbers = #tpu.dot_dimension_numbers<[1], [0], [0], [1], [0, 0, 1, 1], [], []>} : vector<128x8xf32>, vector<8x8xf32>, vector<128x8xf32> -> vector<128x8xf32>
    %151 = arith.addf %145, %150 : vector<128x8xf32>
    %c1_181 = arith.constant 1 : index
    %c0_182 = arith.constant 0 : index
    %c0_183 = arith.constant 0 : index
    %152 = vector.load %arg3[%c1_181, %c0_182, %c0_183] : memref<3x1x8xf32, #tpu.memory_space<vmem>>, vector<1x1x8xf32>
    %153 = vector.shape_cast %152 : vector<1x1x8xf32> to vector<1x8xf32>
    %154 = vector.broadcast %153 : vector<1x8xf32> to vector<128x8xf32>
    %155 = arith.addf %151, %154 : vector<128x8xf32>
    %c1_184 = arith.constant 1 : index
    %c0_185 = arith.constant 0 : index
    %c0_186 = arith.constant 0 : index
    %156 = vector.load %arg4[%c1_184, %c0_185, %c0_186] : memref<3x1x8xf32, #tpu.memory_space<vmem>>, vector<1x1x8xf32>
    %157 = vector.shape_cast %156 : vector<1x1x8xf32> to vector<1x8xf32>
    %c1_187 = arith.constant 1 : index
    %c0_188 = arith.constant 0 : index
    %c0_189 = arith.constant 0 : index
    %158 = vector.load %arg5[%c1_187, %c0_188, %c0_189] : memref<3x1x8xf32, #tpu.memory_space<vmem>>, vector<1x1x8xf32>
    %159 = vector.shape_cast %158 : vector<1x1x8xf32> to vector<1x8xf32>
    %cst_190 = arith.constant dense<0.000000e+00> : vector<8xf32>
    %160 = vector.multi_reduction <add>, %155, %cst_190 [0] : vector<128x8xf32> to vector<8xf32>
    %161 = vector.shape_cast %160 : vector<8xf32> to vector<1x8xf32>
    %162 = arith.mulf %155, %155 : vector<128x8xf32>
    %cst_191 = arith.constant dense<0.000000e+00> : vector<8xf32>
    %163 = vector.multi_reduction <add>, %162, %cst_191 [0] : vector<128x8xf32> to vector<8xf32>
    %164 = vector.shape_cast %163 : vector<8xf32> to vector<1x8xf32>
    %cst_192 = arith.constant 1.280000e+02 : f32
    %165 = vector.broadcast %cst_192 : f32 to vector<1x8xf32>
    %166 = arith.divf %161, %165 : vector<1x8xf32>
    %cst_193 = arith.constant 1.280000e+02 : f32
    %167 = vector.broadcast %cst_193 : f32 to vector<1x8xf32>
    %168 = arith.divf %164, %167 : vector<1x8xf32>
    %169 = arith.mulf %166, %166 : vector<1x8xf32>
    %170 = arith.subf %168, %169 : vector<1x8xf32>
    %cst_194 = arith.constant 0.000000e+00 : f32
    %171 = vector.broadcast %cst_194 : f32 to vector<1x8xf32>
    %172 = arith.maximumf %170, %171 : vector<1x8xf32>
    %173 = vector.broadcast %166 : vector<1x8xf32> to vector<128x8xf32>
    %174 = arith.subf %155, %173 : vector<128x8xf32>
    %cst_195 = arith.constant 9.99999974E-6 : f32
    %175 = vector.broadcast %cst_195 : f32 to vector<1x8xf32>
    %176 = arith.addf %172, %175 : vector<1x8xf32>
    %177 = math.rsqrt %176 : vector<1x8xf32>
    %178 = vector.broadcast %177 : vector<1x8xf32> to vector<128x8xf32>
    %179 = arith.mulf %174, %178 : vector<128x8xf32>
    %180 = vector.broadcast %157 : vector<1x8xf32> to vector<128x8xf32>
    %181 = arith.mulf %179, %180 : vector<128x8xf32>
    %182 = vector.broadcast %159 : vector<1x8xf32> to vector<128x8xf32>
    %183 = arith.addf %181, %182 : vector<128x8xf32>
    %cst_196 = arith.constant 0.000000e+00 : f32
    %184 = vector.broadcast %cst_196 : f32 to vector<128x8xf32>
    %185 = arith.maximumf %183, %184 : vector<128x8xf32>
    %186 = vector.shape_cast %185 : vector<128x8xf32> to vector<2x8x8x8xf32>
    %c0_197 = arith.constant 0 : index
    %c1_198 = arith.constant 1 : index
    %c1_199 = arith.constant 1 : index
    %c0_200 = arith.constant 0 : index
    %187 = vector.load %arg7[%c0_197, %c1_198, %c1_199, %c0_200] : memref<2x10x10x8xf32, #tpu.memory_space<vmem>>, vector<2x8x8x8xf32>
    tpu.vector_store %arg7[%c0_197, %c1_198, %c1_199, %c0_200], %186 {strides = array<i32>} : memref<2x10x10x8xf32, #tpu.memory_space<vmem>>, vector<2x8x8x8xf32>,
    %cst_201 = arith.constant 0.000000e+00 : f32
    %188 = vector.broadcast %cst_201 : f32 to vector<128x8xf32>
    %c0_202 = arith.constant 0 : index
    %c0_203 = arith.constant 0 : index
    %c0_204 = arith.constant 0 : index
    %c0_205 = arith.constant 0 : index
    %189 = vector.load %arg7[%c0_202, %c0_203, %c0_204, %c0_205] : memref<2x10x10x8xf32, #tpu.memory_space<vmem>>, vector<2x8x8x8xf32>
    %190 = vector.shape_cast %189 : vector<2x8x8x8xf32> to vector<128x8xf32>
    %c2_206 = arith.constant 2 : index
    %c0_207 = arith.constant 0 : index
    %c0_208 = arith.constant 0 : index
    %c0_209 = arith.constant 0 : index
    %191 = vector.load %arg2[%c2_206, %c0_207, %c0_208, %c0_209] : memref<3x9x8x8xf32, #tpu.memory_space<vmem>>, vector<1x1x8x8xf32>
    %192 = vector.shape_cast %191 : vector<1x1x8x8xf32> to vector<8x8xf32>
    %cst_210 = arith.constant dense<0.000000e+00> : vector<128x8xf32>
    %193 = tpu.matmul %190, %192, %cst_210 {dimension_numbers = #tpu.dot_dimension_numbers<[1], [0], [0], [1], [0, 0, 1, 1], [], []>} : vector<128x8xf32>, vector<8x8xf32>, vector<128x8xf32> -> vector<128x8xf32>
    %194 = arith.addf %188, %193 : vector<128x8xf32>
    %c0_211 = arith.constant 0 : index
    %c0_212 = arith.constant 0 : index
    %c1_213 = arith.constant 1 : index
    %c0_214 = arith.constant 0 : index
    %195 = vector.load %arg7[%c0_211, %c0_212, %c1_213, %c0_214] : memref<2x10x10x8xf32, #tpu.memory_space<vmem>>, vector<2x8x8x8xf32>
    %196 = vector.shape_cast %195 : vector<2x8x8x8xf32> to vector<128x8xf32>
    %c2_215 = arith.constant 2 : index
    %c1_216 = arith.constant 1 : index
    %c0_217 = arith.constant 0 : index
    %c0_218 = arith.constant 0 : index
    %197 = vector.load %arg2[%c2_215, %c1_216, %c0_217, %c0_218] : memref<3x9x8x8xf32, #tpu.memory_space<vmem>>, vector<1x1x8x8xf32>
    %198 = vector.shape_cast %197 : vector<1x1x8x8xf32> to vector<8x8xf32>
    %cst_219 = arith.constant dense<0.000000e+00> : vector<128x8xf32>
    %199 = tpu.matmul %196, %198, %cst_219 {dimension_numbers = #tpu.dot_dimension_numbers<[1], [0], [0], [1], [0, 0, 1, 1], [], []>} : vector<128x8xf32>, vector<8x8xf32>, vector<128x8xf32> -> vector<128x8xf32>
    %200 = arith.addf %194, %199 : vector<128x8xf32>
    %c0_220 = arith.constant 0 : index
    %c0_221 = arith.constant 0 : index
    %c2_222 = arith.constant 2 : index
    %c0_223 = arith.constant 0 : index
    %201 = vector.load %arg7[%c0_220, %c0_221, %c2_222, %c0_223] : memref<2x10x10x8xf32, #tpu.memory_space<vmem>>, vector<2x8x8x8xf32>
    %202 = vector.shape_cast %201 : vector<2x8x8x8xf32> to vector<128x8xf32>
    %c2_224 = arith.constant 2 : index
    %c2_225 = arith.constant 2 : index
    %c0_226 = arith.constant 0 : index
    %c0_227 = arith.constant 0 : index
    %203 = vector.load %arg2[%c2_224, %c2_225, %c0_226, %c0_227] : memref<3x9x8x8xf32, #tpu.memory_space<vmem>>, vector<1x1x8x8xf32>
    %204 = vector.shape_cast %203 : vector<1x1x8x8xf32> to vector<8x8xf32>
    %cst_228 = arith.constant dense<0.000000e+00> : vector<128x8xf32>
    %205 = tpu.matmul %202, %204, %cst_228 {dimension_numbers = #tpu.dot_dimension_numbers<[1], [0], [0], [1], [0, 0, 1, 1], [], []>} : vector<128x8xf32>, vector<8x8xf32>, vector<128x8xf32> -> vector<128x8xf32>
    %206 = arith.addf %200, %205 : vector<128x8xf32>
    %c0_229 = arith.constant 0 : index
    %c1_230 = arith.constant 1 : index
    %c0_231 = arith.constant 0 : index
    %c0_232 = arith.constant 0 : index
    %207 = vector.load %arg7[%c0_229, %c1_230, %c0_231, %c0_232] : memref<2x10x10x8xf32, #tpu.memory_space<vmem>>, vector<2x8x8x8xf32>
    %208 = vector.shape_cast %207 : vector<2x8x8x8xf32> to vector<128x8xf32>
    %c2_233 = arith.constant 2 : index
    %c3_234 = arith.constant 3 : index
    %c0_235 = arith.constant 0 : index
    %c0_236 = arith.constant 0 : index
    %209 = vector.load %arg2[%c2_233, %c3_234, %c0_235, %c0_236] : memref<3x9x8x8xf32, #tpu.memory_space<vmem>>, vector<1x1x8x8xf32>
    %210 = vector.shape_cast %209 : vector<1x1x8x8xf32> to vector<8x8xf32>
    %cst_237 = arith.constant dense<0.000000e+00> : vector<128x8xf32>
    %211 = tpu.matmul %208, %210, %cst_237 {dimension_numbers = #tpu.dot_dimension_numbers<[1], [0], [0], [1], [0, 0, 1, 1], [], []>} : vector<128x8xf32>, vector<8x8xf32>, vector<128x8xf32> -> vector<128x8xf32>
    %212 = arith.addf %206, %211 : vector<128x8xf32>
    %c0_238 = arith.constant 0 : index
    %c1_239 = arith.constant 1 : index
    %c1_240 = arith.constant 1 : index
    %c0_241 = arith.constant 0 : index
    %213 = vector.load %arg7[%c0_238, %c1_239, %c1_240, %c0_241] : memref<2x10x10x8xf32, #tpu.memory_space<vmem>>, vector<2x8x8x8xf32>
    %214 = vector.shape_cast %213 : vector<2x8x8x8xf32> to vector<128x8xf32>
    %c2_242 = arith.constant 2 : index
    %c4_243 = arith.constant 4 : index
    %c0_244 = arith.constant 0 : index
    %c0_245 = arith.constant 0 : index
    %215 = vector.load %arg2[%c2_242, %c4_243, %c0_244, %c0_245] : memref<3x9x8x8xf32, #tpu.memory_space<vmem>>, vector<1x1x8x8xf32>
    %216 = vector.shape_cast %215 : vector<1x1x8x8xf32> to vector<8x8xf32>
    %cst_246 = arith.constant dense<0.000000e+00> : vector<128x8xf32>
    %217 = tpu.matmul %214, %216, %cst_246 {dimension_numbers = #tpu.dot_dimension_numbers<[1], [0], [0], [1], [0, 0, 1, 1], [], []>} : vector<128x8xf32>, vector<8x8xf32>, vector<128x8xf32> -> vector<128x8xf32>
    %218 = arith.addf %212, %217 : vector<128x8xf32>
    %c0_247 = arith.constant 0 : index
    %c1_248 = arith.constant 1 : index
    %c2_249 = arith.constant 2 : index
    %c0_250 = arith.constant 0 : index
    %219 = vector.load %arg7[%c0_247, %c1_248, %c2_249, %c0_250] : memref<2x10x10x8xf32, #tpu.memory_space<vmem>>, vector<2x8x8x8xf32>
    %220 = vector.shape_cast %219 : vector<2x8x8x8xf32> to vector<128x8xf32>
    %c2_251 = arith.constant 2 : index
    %c5_252 = arith.constant 5 : index
    %c0_253 = arith.constant 0 : index
    %c0_254 = arith.constant 0 : index
    %221 = vector.load %arg2[%c2_251, %c5_252, %c0_253, %c0_254] : memref<3x9x8x8xf32, #tpu.memory_space<vmem>>, vector<1x1x8x8xf32>
    %222 = vector.shape_cast %221 : vector<1x1x8x8xf32> to vector<8x8xf32>
    %cst_255 = arith.constant dense<0.000000e+00> : vector<128x8xf32>
    %223 = tpu.matmul %220, %222, %cst_255 {dimension_numbers = #tpu.dot_dimension_numbers<[1], [0], [0], [1], [0, 0, 1, 1], [], []>} : vector<128x8xf32>, vector<8x8xf32>, vector<128x8xf32> -> vector<128x8xf32>
    %224 = arith.addf %218, %223 : vector<128x8xf32>
    %c0_256 = arith.constant 0 : index
    %c2_257 = arith.constant 2 : index
    %c0_258 = arith.constant 0 : index
    %c0_259 = arith.constant 0 : index
    %225 = vector.load %arg7[%c0_256, %c2_257, %c0_258, %c0_259] : memref<2x10x10x8xf32, #tpu.memory_space<vmem>>, vector<2x8x8x8xf32>
    %226 = vector.shape_cast %225 : vector<2x8x8x8xf32> to vector<128x8xf32>
    %c2_260 = arith.constant 2 : index
    %c6_261 = arith.constant 6 : index
    %c0_262 = arith.constant 0 : index
    %c0_263 = arith.constant 0 : index
    %227 = vector.load %arg2[%c2_260, %c6_261, %c0_262, %c0_263] : memref<3x9x8x8xf32, #tpu.memory_space<vmem>>, vector<1x1x8x8xf32>
    %228 = vector.shape_cast %227 : vector<1x1x8x8xf32> to vector<8x8xf32>
    %cst_264 = arith.constant dense<0.000000e+00> : vector<128x8xf32>
    %229 = tpu.matmul %226, %228, %cst_264 {dimension_numbers = #tpu.dot_dimension_numbers<[1], [0], [0], [1], [0, 0, 1, 1], [], []>} : vector<128x8xf32>, vector<8x8xf32>, vector<128x8xf32> -> vector<128x8xf32>
    %230 = arith.addf %224, %229 : vector<128x8xf32>
    %c0_265 = arith.constant 0 : index
    %c2_266 = arith.constant 2 : index
    %c1_267 = arith.constant 1 : index
    %c0_268 = arith.constant 0 : index
    %231 = vector.load %arg7[%c0_265, %c2_266, %c1_267, %c0_268] : memref<2x10x10x8xf32, #tpu.memory_space<vmem>>, vector<2x8x8x8xf32>
    %232 = vector.shape_cast %231 : vector<2x8x8x8xf32> to vector<128x8xf32>
    %c2_269 = arith.constant 2 : index
    %c7_270 = arith.constant 7 : index
    %c0_271 = arith.constant 0 : index
    %c0_272 = arith.constant 0 : index
    %233 = vector.load %arg2[%c2_269, %c7_270, %c0_271, %c0_272] : memref<3x9x8x8xf32, #tpu.memory_space<vmem>>, vector<1x1x8x8xf32>
    %234 = vector.shape_cast %233 : vector<1x1x8x8xf32> to vector<8x8xf32>
    %cst_273 = arith.constant dense<0.000000e+00> : vector<128x8xf32>
    %235 = tpu.matmul %232, %234, %cst_273 {dimension_numbers = #tpu.dot_dimension_numbers<[1], [0], [0], [1], [0, 0, 1, 1], [], []>} : vector<128x8xf32>, vector<8x8xf32>, vector<128x8xf32> -> vector<128x8xf32>
    %236 = arith.addf %230, %235 : vector<128x8xf32>
    %c0_274 = arith.constant 0 : index
    %c2_275 = arith.constant 2 : index
    %c2_276 = arith.constant 2 : index
    %c0_277 = arith.constant 0 : index
    %237 = vector.load %arg7[%c0_274, %c2_275, %c2_276, %c0_277] : memref<2x10x10x8xf32, #tpu.memory_space<vmem>>, vector<2x8x8x8xf32>
    %238 = vector.shape_cast %237 : vector<2x8x8x8xf32> to vector<128x8xf32>
    %c2_278 = arith.constant 2 : index
    %c8_279 = arith.constant 8 : index
    %c0_280 = arith.constant 0 : index
    %c0_281 = arith.constant 0 : index
    %239 = vector.load %arg2[%c2_278, %c8_279, %c0_280, %c0_281] : memref<3x9x8x8xf32, #tpu.memory_space<vmem>>, vector<1x1x8x8xf32>
    %240 = vector.shape_cast %239 : vector<1x1x8x8xf32> to vector<8x8xf32>
    %cst_282 = arith.constant dense<0.000000e+00> : vector<128x8xf32>
    %241 = tpu.matmul %238, %240, %cst_282 {dimension_numbers = #tpu.dot_dimension_numbers<[1], [0], [0], [1], [0, 0, 1, 1], [], []>} : vector<128x8xf32>, vector<8x8xf32>, vector<128x8xf32> -> vector<128x8xf32>
    %242 = arith.addf %236, %241 : vector<128x8xf32>
    %c2_283 = arith.constant 2 : index
    %c0_284 = arith.constant 0 : index
    %c0_285 = arith.constant 0 : index
    %243 = vector.load %arg3[%c2_283, %c0_284, %c0_285] : memref<3x1x8xf32, #tpu.memory_space<vmem>>, vector<1x1x8xf32>
    %244 = vector.shape_cast %243 : vector<1x1x8xf32> to vector<1x8xf32>
    %245 = vector.broadcast %244 : vector<1x8xf32> to vector<128x8xf32>
    %246 = arith.addf %242, %245 : vector<128x8xf32>
    %c2_286 = arith.constant 2 : index
    %c0_287 = arith.constant 0 : index
    %c0_288 = arith.constant 0 : index
    %247 = vector.load %arg4[%c2_286, %c0_287, %c0_288] : memref<3x1x8xf32, #tpu.memory_space<vmem>>, vector<1x1x8xf32>
    %248 = vector.shape_cast %247 : vector<1x1x8xf32> to vector<1x8xf32>
    %c2_289 = arith.constant 2 : index
    %c0_290 = arith.constant 0 : index
    %c0_291 = arith.constant 0 : index
    %249 = vector.load %arg5[%c2_289, %c0_290, %c0_291] : memref<3x1x8xf32, #tpu.memory_space<vmem>>, vector<1x1x8xf32>
    %250 = vector.shape_cast %249 : vector<1x1x8xf32> to vector<1x8xf32>
    %cst_292 = arith.constant dense<0.000000e+00> : vector<8xf32>
    %251 = vector.multi_reduction <add>, %246, %cst_292 [0] : vector<128x8xf32> to vector<8xf32>
    %252 = vector.shape_cast %251 : vector<8xf32> to vector<1x8xf32>
    %253 = arith.mulf %246, %246 : vector<128x8xf32>
    %cst_293 = arith.constant dense<0.000000e+00> : vector<8xf32>
    %254 = vector.multi_reduction <add>, %253, %cst_293 [0] : vector<128x8xf32> to vector<8xf32>
    %255 = vector.shape_cast %254 : vector<8xf32> to vector<1x8xf32>
    %cst_294 = arith.constant 1.280000e+02 : f32
    %256 = vector.broadcast %cst_294 : f32 to vector<1x8xf32>
    %257 = arith.divf %252, %256 : vector<1x8xf32>
    %cst_295 = arith.constant 1.280000e+02 : f32
    %258 = vector.broadcast %cst_295 : f32 to vector<1x8xf32>
    %259 = arith.divf %255, %258 : vector<1x8xf32>
    %260 = arith.mulf %257, %257 : vector<1x8xf32>
    %261 = arith.subf %259, %260 : vector<1x8xf32>
    %cst_296 = arith.constant 0.000000e+00 : f32
    %262 = vector.broadcast %cst_296 : f32 to vector<1x8xf32>
    %263 = arith.maximumf %261, %262 : vector<1x8xf32>
    %264 = vector.broadcast %257 : vector<1x8xf32> to vector<128x8xf32>
    %265 = arith.subf %246, %264 : vector<128x8xf32>
    %cst_297 = arith.constant 9.99999974E-6 : f32
    %266 = vector.broadcast %cst_297 : f32 to vector<1x8xf32>
    %267 = arith.addf %263, %266 : vector<1x8xf32>
    %268 = math.rsqrt %267 : vector<1x8xf32>
    %269 = vector.broadcast %268 : vector<1x8xf32> to vector<128x8xf32>
    %270 = arith.mulf %265, %269 : vector<128x8xf32>
    %271 = vector.broadcast %248 : vector<1x8xf32> to vector<128x8xf32>
    %272 = arith.mulf %270, %271 : vector<128x8xf32>
    %273 = vector.broadcast %250 : vector<1x8xf32> to vector<128x8xf32>
    %274 = arith.addf %272, %273 : vector<128x8xf32>
    %cst_298 = arith.constant 0.000000e+00 : f32
    %275 = vector.broadcast %cst_298 : f32 to vector<128x8xf32>
    %276 = arith.maximumf %274, %275 : vector<128x8xf32>
    %277 = arith.addf %276, %3 : vector<128x8xf32>
    %c0_299 = arith.constant 0 : index
    %c0_300 = arith.constant 0 : index
    %278 = vector.load %arg6[%c0_299, %c0_300] : memref<128x8xf32, #tpu.memory_space<vmem>>, vector<128x8xf32>
    tpu.vector_store %arg6[%c0_299, %c0_300], %277 {strides = array<i32>} : memref<128x8xf32, #tpu.memory_space<vmem>>, vector<128x8xf32>,
    return
  }
  func.func @transform_0(%arg0: i32) -> (i32, i32) {
    %c0_i32 = arith.constant 0 : i32
    %c0_i32_0 = arith.constant 0 : i32
    %c0_i32_1 = arith.constant 0 : i32
    return %c0_i32, %c0_i32_0 : i32, i32
  }
  func.func @transform_1(%arg0: i32) -> (i32, i32, i32, i32) {
    %c0_i32 = arith.constant 0 : i32
    %c0_i32_0 = arith.constant 0 : i32
    %c0_i32_1 = arith.constant 0 : i32
    %c0_i32_2 = arith.constant 0 : i32
    %c0_i32_3 = arith.constant 0 : i32
    return %c0_i32, %c0_i32_0, %c0_i32_1, %c0_i32_2 : i32, i32, i32, i32
  }
  func.func @transform_2(%arg0: i32) -> (i32, i32, i32) {
    %c0_i32 = arith.constant 0 : i32
    %c0_i32_0 = arith.constant 0 : i32
    %c0_i32_1 = arith.constant 0 : i32
    %c0_i32_2 = arith.constant 0 : i32
    return %c0_i32, %c0_i32_0, %c0_i32_1 : i32, i32, i32
  }
  func.func @transform_3(%arg0: i32) -> (i32, i32, i32) {
    %c0_i32 = arith.constant 0 : i32
    %c0_i32_0 = arith.constant 0 : i32
    %c0_i32_1 = arith.constant 0 : i32
    %c0_i32_2 = arith.constant 0 : i32
    return %c0_i32, %c0_i32_0, %c0_i32_1 : i32, i32, i32
  }
  func.func @transform_4(%arg0: i32) -> (i32, i32, i32) {
    %c0_i32 = arith.constant 0 : i32
    %c0_i32_0 = arith.constant 0 : i32
    %c0_i32_1 = arith.constant 0 : i32
    %c0_i32_2 = arith.constant 0 : i32
    return %c0_i32, %c0_i32_0, %c0_i32_1 : i32, i32, i32
  }
  func.func @transform_5(%arg0: i32) -> (i32, i32) {
    %c0_i32 = arith.constant 0 : i32
    %c0_i32_0 = arith.constant 0 : i32
    %c0_i32_1 = arith.constant 0 : i32
    return %c0_i32, %c0_i32_0 : i32, i32
  }
}

</mosaic_0001>

<llo_original>
// kernel: sphereface_block.2
$region0: #{sphereface_block.2}
  #allocation0 [shape = 'u32[]', space=smem, size = 0x4, offset = 0x4, fixed_abs, tag = 'smem constant byte address 0x4 - core index']
  #allocation1 [shape = 'u32[72,128]{1,0:T(1,128)}', space=vmem, size = 0x9000, scoped, tag = 'internal scratch']
  %s0 = inlined_call_operand.vmem [shape: f32[2,9,9,4], index: 0, kind: input, shape index: {}]
  %s1 = inlined_call_operand.vmem [shape: f32[2,9,9,4], index: 1, kind: input, shape index: {}]
  %s2 = inlined_call_operand.vmem [shape: f32[2,9,9,4], index: 2, kind: input, shape index: {}]
  %s3 = inlined_call_operand.vmem [shape: f32[2,9,9,4], index: 3, kind: input, shape index: {}]
  %s4 = inlined_call_operand.vmem [shape: f32[9,4,8], index: 4, kind: input, shape index: {}]
  %s5 = inlined_call_operand.vmem [shape: f32[1,8], index: 5, kind: input, shape index: {}]
  %s6 = inlined_call_operand.vmem [shape: f32[1,8], index: 6, kind: input, shape index: {}]
  %s7 = inlined_call_operand.vmem [shape: f32[1,8], index: 7, kind: input, shape index: {}]
  %s8 = inlined_call_operand.vmem [shape: f32[128,8], index: 8, kind: output, shape index: {}]
  %s9 = sld [smem:[#allocation0]]
  $region42: #{sphereface_block.2} parent=0
    _
  %s11 = ssub.s32 1, %s9
  %s12 = scalar_select 0, %s11, %s9
  // Predicated region
  $region2: #{sphereface_block.2} parent=0 // pred_check
    _
  $region3: #{sphereface_block.2} parent=0 // pred_check_branch
    %14 = sbr.rel (0) target = $region5
  $region4: #{sphereface_block.2} parent=0 // pred_region
    _
  $region5: #{sphereface_block.2} parent=0 // pred_fallthru
    _
  // Predicated region
  $region6: #{sphereface_block.2} parent=0 // pred_check
    _
  $region7: #{sphereface_block.2} parent=0 // pred_check_branch
    %16 = sbr.rel (0) target = $region9
  $region8: #{sphereface_block.2} parent=0 // pred_region
    _
  $region9: #{sphereface_block.2} parent=0 // pred_fallthru
    _
  // Predicated region
  $region10: #{sphereface_block.2} parent=0 // pred_check
    _
  $region11: #{sphereface_block.2} parent=0 // pred_check_branch
    %18 = sbr.rel (0) target = $region13
  $region12: #{sphereface_block.2} parent=0 // pred_region
    _
  $region13: #{sphereface_block.2} parent=0 // pred_fallthru
    _
  // Predicated region
  $region14: #{sphereface_block.2} parent=0 // pred_check
    _
  $region15: #{sphereface_block.2} parent=0 // pred_check_branch
    %20 = sbr.rel (0) target = $region17
  $region16: #{sphereface_block.2} parent=0 // pred_region
    _
  $region17: #{sphereface_block.2} parent=0 // pred_fallthru
    _
  // Predicated region
  $region18: #{sphereface_block.2} parent=0 // pred_check
    _
  $region19: #{sphereface_block.2} parent=0 // pred_check_branch
    %22 = sbr.rel (0) target = $region21
  $region20: #{sphereface_block.2} parent=0 // pred_region
    _
  $region21: #{sphereface_block.2} parent=0 // pred_fallthru
    _
  // Predicated region
  $region22: #{sphereface_block.2} parent=0 // pred_check
    _
  $region23: #{sphereface_block.2} parent=0 // pred_check_branch
    %24 = sbr.rel (0) target = $region25
  $region24: #{sphereface_block.2} parent=0 // pred_region
    _
  $region25: #{sphereface_block.2} parent=0 // pred_fallthru
    _
  // Predicated region
  $region26: #{sphereface_block.2} parent=0 // pred_check
    _
  $region27: #{sphereface_block.2} parent=0 // pred_check_branch
    %26 = sbr.rel (0) target = $region29
  $region28: #{sphereface_block.2} parent=0 // pred_region
    _
  $region29: #{sphereface_block.2} parent=0 // pred_fallthru
    _
  // Predicated region
  $region30: #{sphereface_block.2} parent=0 // pred_check
    _
  $region31: #{sphereface_block.2} parent=0 // pred_check_branch
    %28 = sbr.rel (0) target = $region33
  $region32: #{sphereface_block.2} parent=0 // pred_region
    _
  $region33: #{sphereface_block.2} parent=0 // pred_fallthru
    _
  %v29 = vld [vmem:[%s0] sm:$0xff]
  %v30 = vld [vmem:[%s0 + $0x10] sm:$0xff]
  %v31 = vld [vmem:[%s0 + $0x20] sm:$0xff]
  %v32 = vld [vmem:[%s0 + $0x30] sm:$0xff]
  %v33 = vld [vmem:[%s0 + $0x40] sm:$0xff]
  %v34 = vld [vmem:[%s0 + $0x50] sm:$0xff]
  %v35 = vld [vmem:[%s0 + $0x60] sm:$0xff]
  %v36 = vld [vmem:[%s0 + $0x70] sm:$0xff]
  %v37 = vld [vmem:[%s0 + $0x90] sm:$0xff]
  %v38 = vld [vmem:[%s0 + $0xa0] sm:$0xff]
  %v39 = vld [vmem:[%s0 + $0xb0] sm:$0xff]
  %v40 = vld [vmem:[%s0 + $0xc0] sm:$0xff]
  %v41 = vld [vmem:[%s0 + $0xd0] sm:$0xff]
  %v42 = vld [vmem:[%s0 + $0xe0] sm:$0xff]
  %v43 = vld [vmem:[%s0 + $0xf0] sm:$0xff]
  %v44 = vld [vmem:[%s0 + $0x100] sm:$0xff]
  %v45 = vld [vmem:[%s4] sm:$0xf]
  %v46 = vld [vmem:[%s1] sm:$0xff]
  %v47 = vld [vmem:[%s1 + $0x10] sm:$0xff]
  %v48 = vld [vmem:[%s1 + $0x20] sm:$0xff]
  %v49 = vld [vmem:[%s1 + $0x30] sm:$0xff]
  %v50 = vld [vmem:[%s1 + $0x40] sm:$0xff]
  %v51 = vld [vmem:[%s1 + $0x50] sm:$0xff]
  %v52 = vld [vmem:[%s1 + $0x60] sm:$0xff]
  %v53 = vld [vmem:[%s1 + $0x70] sm:$0xff]
  %v54 = vld [vmem:[%s1 + $0x90] sm:$0xff]
  %v55 = vld [vmem:[%s1 + $0xa0] sm:$0xff]
  %v56 = vld [vmem:[%s1 + $0xb0] sm:$0xff]
  %v57 = vld [vmem:[%s1 + $0xc0] sm:$0xff]
  %v58 = vld [vmem:[%s1 + $0xd0] sm:$0xff]
  %v59 = vld [vmem:[%s1 + $0xe0] sm:$0xff]
  %v60 = vld [vmem:[%s1 + $0xf0] sm:$0xff]
  %v61 = vld [vmem:[%s1 + $0x100] sm:$0xff]
  %s62 = scalar_lea.vmem %s4, 4
  %v63 = vld [vmem:[%s62] sm:$0xf]
  %vm64 = vcmask 31744
  %v66 = vsel %vm64, %v46, 0
  %v69 = vsel %vm64, %v47, 0
  %v72 = vsel %vm64, %v48, 0
  %v75 = vsel %vm64, %v49, 0
  %v78 = vsel %vm64, %v50, 0
  %v81 = vsel %vm64, %v51, 0
  %v84 = vsel %vm64, %v52, 0
  %v87 = vsel %vm64, %v53, 0
  %v90 = vsel %vm64, %v54, 0
  %v93 = vsel %vm64, %v55, 0
  %v96 = vsel %vm64, %v56, 0
  %v99 = vsel %vm64, %v57, 0
  %v102 = vsel %vm64, %v58, 0
  %v105 = vsel %vm64, %v59, 0
  %v108 = vsel %vm64, %v60, 0
  %v111 = vsel %vm64, %v61, 0
  %vm113 = vcmask 1043456
  %v115 = vsel %vm113, %v63, 0
  %117 = vmatpush.msra.mxu0 0.0
  %118 = vmatpush.msra.mxu0 0.0
  %119 = vmatpush.msra.mxu0 0.0
  %120 = vmatpush.msra.mxu0 0.0
  %121 = vmatpush.msra.mxu0 0.0
  %122 = vmatpush.msra.mxu0 0.0
  %123 = vmatpush.msra.mxu0 0.0
  %124 = vmatpush.msra.mxu0 0.0
  %125 = vmatpush.msra.mxu0 0.0
  %126 = vmatpush.msra.mxu0 0.0
  %127 = vmatpush.msra.mxu0 0.0
  %128 = vmatpush.msra.mxu0 0.0
  %129 = vmatpush.msra.mxu0 0.0
  %130 = vmatpush.msra.mxu0 0.0
  %131 = vmatpush.msra.mxu0 0.0
  %132 = vmatpush.msra.mxu0 %v115
  %133 = vmatmul.f32.gmra.mxu0 %v66
  %v134 = vpop.f32.mrf.mxu0
  %v135 = vadd.f32 0.0, %v134
  %136 = vmatmul.f32.gmra.mxu0 %v69
  %v137 = vpop.f32.mrf.mxu0
  %v138 = vadd.f32 0.0, %v137
  %139 = vmatmul.f32.gmra.mxu0 %v72
  %v140 = vpop.f32.mrf.mxu0
  %v141 = vadd.f32 0.0, %v140
  %142 = vmatmul.f32.gmra.mxu0 %v75
  %v143 = vpop.f32.mrf.mxu0
  %v144 = vadd.f32 0.0, %v143
  %145 = vmatmul.f32.gmra.mxu0 %v78
  %v146 = vpop.f32.mrf.mxu0
  %v147 = vadd.f32 0.0, %v146
  %148 = vmatmul.f32.gmra.mxu0 %v81
  %v149 = vpop.f32.mrf.mxu0
  %v150 = vadd.f32 0.0, %v149
  %151 = vmatmul.f32.gmra.mxu0 %v84
  %v152 = vpop.f32.mrf.mxu0
  %v153 = vadd.f32 0.0, %v152
  %154 = vmatmul.f32.gmra.mxu0 %v87
  %v155 = vpop.f32.mrf.mxu0
  %v156 = vadd.f32 0.0, %v155
  %157 = vmatmul.f32.gmra.mxu0 %v90
  %v158 = vpop.f32.mrf.mxu0
  %v159 = vadd.f32 0.0, %v158
  %160 = vmatmul.f32.gmra.mxu0 %v93
  %v161 = vpop.f32.mrf.mxu0
  %v162 = vadd.f32 0.0, %v161
  %163 = vmatmul.f32.gmra.mxu0 %v96
  %v164 = vpop.f32.mrf.mxu0
  %v165 = vadd.f32 0.0, %v164
  %166 = vmatmul.f32.gmra.mxu0 %v99
  %v167 = vpop.f32.mrf.mxu0
  %v168 = vadd.f32 0.0, %v167
  %169 = vmatmul.f32.gmra.mxu0 %v102
  %v170 = vpop.f32.mrf.mxu0
  %v171 = vadd.f32 0.0, %v170
  %172 = vmatmul.f32.gmra.mxu0 %v105
  %v173 = vpop.f32.mrf.mxu0
  %v174 = vadd.f32 0.0, %v173
  %175 = vmatmul.f32.gmra.mxu0 %v108
  %v176 = vpop.f32.mrf.mxu0
  %v177 = vadd.f32 0.0, %v176
  %178 = vmatmul.f32.gmra.mxu0 %v111
  %v179 = vpop.f32.mrf.mxu0
  %v180 = vadd.f32 0.0, %v179
  %181 = vdwg.mxu0
  %v183 = vsel %vm64, %v29, 0
  %v186 = vsel %vm64, %v30, 0
  %v189 = vsel %vm64, %v31, 0
  %v192 = vsel %vm64, %v32, 0
  %v195 = vsel %vm64, %v33, 0
  %v198 = vsel %vm64, %v34, 0
  %v201 = vsel %vm64, %v35, 0
  %v204 = vsel %vm64, %v36, 0
  %v207 = vsel %vm64, %v37, 0
  %v210 = vsel %vm64, %v38, 0
  %v213 = vsel %vm64, %v39, 0
  %v216 = vsel %vm64, %v40, 0
  %v219 = vsel %vm64, %v41, 0
  %v222 = vsel %vm64, %v42, 0
  %v225 = vsel %vm64, %v43, 0
  %v228 = vsel %vm64, %v44, 0
  %v231 = vsel %vm113, %v45, 0
  %233 = vmatpush.msra.mxu0 0.0
  %234 = vmatpush.msra.mxu0 0.0
  %235 = vmatpush.msra.mxu0 0.0
  %236 = vmatpush.msra.mxu0 0.0
  %237 = vmatpush.msra.mxu0 0.0
  %238 = vmatpush.msra.mxu0 0.0
  %239 = vmatpush.msra.mxu0 0.0
  %240 = vmatpush.msra.mxu0 0.0
  %241 = vmatpush.msra.mxu0 0.0
  %242 = vmatpush.msra.mxu0 0.0
  %243 = vmatpush.msra.mxu0 0.0
  %244 = vmatpush.msra.mxu0 0.0
  %245 = vmatpush.msra.mxu0 0.0
  %246 = vmatpush.msra.mxu0 0.0
  %247 = vmatpush.msra.mxu0 0.0
  %248 = vmatpush.msra.mxu0 %v231
  %249 = vmatmul.f32.gmra.mxu0 %v183
  %v250 = vpop.f32.mrf.mxu0
  %v251 = vadd.f32 %v135, %v250
  %252 = vmatmul.f32.gmra.mxu0 %v186
  %v253 = vpop.f32.mrf.mxu0
  %v254 = vadd.f32 %v138, %v253
  %255 = vmatmul.f32.gmra.mxu0 %v189
  %v256 = vpop.f32.mrf.mxu0
  %v257 = vadd.f32 %v141, %v256
  %258 = vmatmul.f32.gmra.mxu0 %v192
  %v259 = vpop.f32.mrf.mxu0
  %v260 = vadd.f32 %v144, %v259
  %261 = vmatmul.f32.gmra.mxu0 %v195
  %v262 = vpop.f32.mrf.mxu0
  %v263 = vadd.f32 %v147, %v262
  %264 = vmatmul.f32.gmra.mxu0 %v198
  %v265 = vpop.f32.mrf.mxu0
  %v266 = vadd.f32 %v150, %v265
  %267 = vmatmul.f32.gmra.mxu0 %v201
  %v268 = vpop.f32.mrf.mxu0
  %v269 = vadd.f32 %v153, %v268
  %270 = vmatmul.f32.gmra.mxu0 %v204
  %v271 = vpop.f32.mrf.mxu0
  %v272 = vadd.f32 %v156, %v271
  %273 = vmatmul.f32.gmra.mxu0 %v207
  %v274 = vpop.f32.mrf.mxu0
  %v275 = vadd.f32 %v159, %v274
  %276 = vmatmul.f32.gmra.mxu0 %v210
  %v277 = vpop.f32.mrf.mxu0
  %v278 = vadd.f32 %v162, %v277
  %279 = vmatmul.f32.gmra.mxu0 %v213
  %v280 = vpop.f32.mrf.mxu0
  %v281 = vadd.f32 %v165, %v280
  %282 = vmatmul.f32.gmra.mxu0 %v216
  %v283 = vpop.f32.mrf.mxu0
  %v284 = vadd.f32 %v168, %v283
  %285 = vmatmul.f32.gmra.mxu0 %v219
  %v286 = vpop.f32.mrf.mxu0
  %v287 = vadd.f32 %v171, %v286
  %288 = vmatmul.f32.gmra.mxu0 %v222
  %v289 = vpop.f32.mrf.mxu0
  %v290 = vadd.f32 %v174, %v289
  %291 = vmatmul.f32.gmra.mxu0 %v225
  %v292 = vpop.f32.mrf.mxu0
  %v293 = vadd.f32 %v177, %v292
  %294 = vmatmul.f32.gmra.mxu0 %v228
  %v295 = vpop.f32.mrf.mxu0
  %v296 = vadd.f32 %v180, %v295
  %297 = vdwg.mxu0
  %v298 = vld [vmem:[%s0 + $0x1] sm:$0xff]
  %v299 = vld [vmem:[%s0 + $0x11] sm:$0xff]
  %v300 = vld [vmem:[%s0 + $0x21] sm:$0xff]
  %v301 = vld [vmem:[%s0 + $0x31] sm:$0xff]
  %v302 = vld [vmem:[%s0 + $0x41] sm:$0xff]
  %v303 = vld [vmem:[%s0 + $0x51] sm:$0xff]
  %v304 = vld [vmem:[%s0 + $0x61] sm:$0xff]
  %v305 = vld [vmem:[%s0 + $0x71] sm:$0xff]
  %v306 = vld [vmem:[%s0 + $0x91] sm:$0xff]
  %v307 = vld [vmem:[%s0 + $0xa1] sm:$0xff]
  %v308 = vld [vmem:[%s0 + $0xb1] sm:$0xff]
  %v309 = vld [vmem:[%s0 + $0xc1] sm:$0xff]
  %v310 = vld [vmem:[%s0 + $0xd1] sm:$0xff]
  %v311 = vld [vmem:[%s0 + $0xe1] sm:$0xff]
  %v312 = vld [vmem:[%s0 + $0xf1] sm:$0xff]
  %v313 = vld [vmem:[%s0 + $0x101] sm:$0xff]
  %s314 = scalar_lea.vmem %s4, 8
  %v315 = vld [vmem:[%s314] sm:$0xf]
  %v317 = vsel %vm64, %v298, 0
  %v320 = vsel %vm64, %v299, 0
  %v323 = vsel %vm64, %v300, 0
  %v326 = vsel %vm64, %v301, 0
  %v329 = vsel %vm64, %v302, 0
  %v332 = vsel %vm64, %v303, 0
  %v335 = vsel %vm64, %v304, 0
  %v338 = vsel %vm64, %v305, 0
  %v341 = vsel %vm64, %v306, 0
  %v344 = vsel %vm64, %v307, 0
  %v347 = vsel %vm64, %v308, 0
  %v350 = vsel %vm64, %v309, 0
  %v353 = vsel %vm64, %v310, 0
  %v356 = vsel %vm64, %v311, 0
  %v359 = vsel %vm64, %v312, 0
  %v362 = vsel %vm64, %v313, 0
  %v365 = vsel %vm113, %v315, 0
  %367 = vmatpush.msra.mxu0 0.0
  %368 = vmatpush.msra.mxu0 0.0
  %369 = vmatpush.msra.mxu0 0.0
  %370 = vmatpush.msra.mxu0 0.0
  %371 = vmatpush.msra.mxu0 0.0
  %372 = vmatpush.msra.mxu0 0.0
  %373 = vmatpush.msra.mxu0 0.0
  %374 = vmatpush.msra.mxu0 0.0
  %375 = vmatpush.msra.mxu0 0.0
  %376 = vmatpush.msra.mxu0 0.0
  %377 = vmatpush.msra.mxu0 0.0
  %378 = vmatpush.msra.mxu0 0.0
  %379 = vmatpush.msra.mxu0 0.0
  %380 = vmatpush.msra.mxu0 0.0
  %381 = vmatpush.msra.mxu0 0.0
  %382 = vmatpush.msra.mxu0 %v365
  %383 = vmatmul.f32.gmra.mxu0 %v317
  %v384 = vpop.f32.mrf.mxu0
  %v385 = vadd.f32 0.0, %v384
  %386 = vmatmul.f32.gmra.mxu0 %v320
  %v387 = vpop.f32.mrf.mxu0
  %v388 = vadd.f32 0.0, %v387
  %389 = vmatmul.f32.gmra.mxu0 %v323
  %v390 = vpop.f32.mrf.mxu0
  %v391 = vadd.f32 0.0, %v390
  %392 = vmatmul.f32.gmra.mxu0 %v326
  %v393 = vpop.f32.mrf.mxu0
  %v394 = vadd.f32 0.0, %v393
  %395 = vmatmul.f32.gmra.mxu0 %v329
  %v396 = vpop.f32.mrf.mxu0
  %v397 = vadd.f32 0.0, %v396
  %398 = vmatmul.f32.gmra.mxu0 %v332
  %v399 = vpop.f32.mrf.mxu0
  %v400 = vadd.f32 0.0, %v399
  %401 = vmatmul.f32.gmra.mxu0 %v335
  %v402 = vpop.f32.mrf.mxu0
  %v403 = vadd.f32 0.0, %v402
  %404 = vmatmul.f32.gmra.mxu0 %v338
  %v405 = vpop.f32.mrf.mxu0
  %v406 = vadd.f32 0.0, %v405
  %407 = vmatmul.f32.gmra.mxu0 %v341
  %v408 = vpop.f32.mrf.mxu0
  %v409 = vadd.f32 0.0, %v408
  %410 = vmatmul.f32.gmra.mxu0 %v344
  %v411 = vpop.f32.mrf.mxu0
  %v412 = vadd.f32 0.0, %v411
  %413 = vmatmul.f32.gmra.mxu0 %v347
  %v414 = vpop.f32.mrf.mxu0
  %v415 = vadd.f32 0.0, %v414
  %416 = vmatmul.f32.gmra.mxu0 %v350
  %v417 = vpop.f32.mrf.mxu0
  %v418 = vadd.f32 0.0, %v417
  %419 = vmatmul.f32.gmra.mxu0 %v353
  %v420 = vpop.f32.mrf.mxu0
  %v421 = vadd.f32 0.0, %v420
  %422 = vmatmul.f32.gmra.mxu0 %v356
  %v423 = vpop.f32.mrf.mxu0
  %v424 = vadd.f32 0.0, %v423
  %425 = vmatmul.f32.gmra.mxu0 %v359
  %v426 = vpop.f32.mrf.mxu0
  %v427 = vadd.f32 0.0, %v426
  %428 = vmatmul.f32.gmra.mxu0 %v362
  %v429 = vpop.f32.mrf.mxu0
  %v430 = vadd.f32 0.0, %v429
  %431 = vdwg.mxu0
  %v432 = vadd.f32 %v251, %v385
  %v433 = vadd.f32 %v254, %v388
  %v434 = vadd.f32 %v257, %v391
  %v435 = vadd.f32 %v260, %v394
  %v436 = vadd.f32 %v263, %v397
  %v437 = vadd.f32 %v266, %v400
  %v438 = vadd.f32 %v269, %v403
  %v439 = vadd.f32 %v272, %v406
  %v440 = vadd.f32 %v275, %v409
  %v441 = vadd.f32 %v278, %v412
  %v442 = vadd.f32 %v281, %v415
  %v443 = vadd.f32 %v284, %v418
  %v444 = vadd.f32 %v287, %v421
  %v445 = vadd.f32 %v290, %v424
  %v446 = vadd.f32 %v293, %v427
  %v447 = vadd.f32 %v296, %v430
  %v448 = vld [vmem:[%s2] sm:$0xff]
  %v449 = vld [vmem:[%s2 + $0x10] sm:$0xff]
  %v450 = vld [vmem:[%s2 + $0x20] sm:$0xff]
  %v451 = vld [vmem:[%s2 + $0x30] sm:$0xff]
  %v452 = vld [vmem:[%s2 + $0x40] sm:$0xff]
  %v453 = vld [vmem:[%s2 + $0x50] sm:$0xff]
  %v454 = vld [vmem:[%s2 + $0x60] sm:$0xff]
  %v455 = vld [vmem:[%s2 + $0x70] sm:$0xff]
  %v456 = vld [vmem:[%s2 + $0x90] sm:$0xff]
  %v457 = vld [vmem:[%s2 + $0xa0] sm:$0xff]
  %v458 = vld [vmem:[%s2 + $0xb0] sm:$0xff]
  %v459 = vld [vmem:[%s2 + $0xc0] sm:$0xff]
  %v460 = vld [vmem:[%s2 + $0xd0] sm:$0xff]
  %v461 = vld [vmem:[%s2 + $0xe0] sm:$0xff]
  %v462 = vld [vmem:[%s2 + $0xf0] sm:$0xff]
  %v463 = vld [vmem:[%s2 + $0x100] sm:$0xff]
  %s464 = scalar_lea.vmem %s4, 12
  %v465 = vld [vmem:[%s464] sm:$0xf]
  %v467 = vsel %vm64, %v448, 0
  %v470 = vsel %vm64, %v449, 0
  %v473 = vsel %vm64, %v450, 0
  %v476 = vsel %vm64, %v451, 0
  %v479 = vsel %vm64, %v452, 0
  %v482 = vsel %vm64, %v453, 0
  %v485 = vsel %vm64, %v454, 0
  %v488 = vsel %vm64, %v455, 0
  %v491 = vsel %vm64, %v456, 0
  %v494 = vsel %vm64, %v457, 0
  %v497 = vsel %vm64, %v458, 0
  %v500 = vsel %vm64, %v459, 0
  %v503 = vsel %vm64, %v460, 0
  %v506 = vsel %vm64, %v461, 0
  %v509 = vsel %vm64, %v462, 0
  %v512 = vsel %vm64, %v463, 0
  %v515 = vsel %vm113, %v465, 0
  %517 = vmatpush.msra.mxu0 0.0
  %518 = vmatpush.msra.mxu0 0.0
  %519 = vmatpush.msra.mxu0 0.0
  %520 = vmatpush.msra.mxu0 0.0
  %521 = vmatpush.msra.mxu0 0.0
  %522 = vmatpush.msra.mxu0 0.0
  %523 = vmatpush.msra.mxu0 0.0
  %524 = vmatpush.msra.mxu0 0.0
  %525 = vmatpush.msra.mxu0 0.0
  %526 = vmatpush.msra.mxu0 0.0
  %527 = vmatpush.msra.mxu0 0.0
  %528 = vmatpush.msra.mxu0 0.0
  %529 = vmatpush.msra.mxu0 0.0
  %530 = vmatpush.msra.mxu0 0.0
  %531 = vmatpush.msra.mxu0 0.0
  %532 = vmatpush.msra.mxu0 %v515
  %533 = vmatmul.f32.gmra.mxu0 %v467
  %v534 = vpop.f32.mrf.mxu0
  %v535 = vadd.f32 0.0, %v534
  %536 = vmatmul.f32.gmra.mxu0 %v470
  %v537 = vpop.f32.mrf.mxu0
  %v538 = vadd.f32 0.0, %v537
  %539 = vmatmul.f32.gmra.mxu0 %v473
  %v540 = vpop.f32.mrf.mxu0
  %v541 = vadd.f32 0.0, %v540
  %542 = vmatmul.f32.gmra.mxu0 %v476
  %v543 = vpop.f32.mrf.mxu0
  %v544 = vadd.f32 0.0, %v543
  %545 = vmatmul.f32.gmra.mxu0 %v479
  %v546 = vpop.f32.mrf.mxu0
  %v547 = vadd.f32 0.0, %v546
  %548 = vmatmul.f32.gmra.mxu0 %v482
  %v549 = vpop.f32.mrf.mxu0
  %v550 = vadd.f32 0.0, %v549
  %551 = vmatmul.f32.gmra.mxu0 %v485
  %v552 = vpop.f32.mrf.mxu0
  %v553 = vadd.f32 0.0, %v552
  %554 = vmatmul.f32.gmra.mxu0 %v488
  %v555 = vpop.f32.mrf.mxu0
  %v556 = vadd.f32 0.0, %v555
  %557 = vmatmul.f32.gmra.mxu0 %v491
  %v558 = vpop.f32.mrf.mxu0
  %v559 = vadd.f32 0.0, %v558
  %560 = vmatmul.f32.gmra.mxu0 %v494
  %v561 = vpop.f32.mrf.mxu0
  %v562 = vadd.f32 0.0, %v561
  %563 = vmatmul.f32.gmra.mxu0 %v497
  %v564 = vpop.f32.mrf.mxu0
  %v565 = vadd.f32 0.0, %v564
  %566 = vmatmul.f32.gmra.mxu0 %v500
  %v567 = vpop.f32.mrf.mxu0
  %v568 = vadd.f32 0.0, %v567
  %569 = vmatmul.f32.gmra.mxu0 %v503
  %v570 = vpop.f32.mrf.mxu0
  %v571 = vadd.f32 0.0, %v570
  %572 = vmatmul.f32.gmra.mxu0 %v506
  %v573 = vpop.f32.mrf.mxu0
  %v574 = vadd.f32 0.0, %v573
  %575 = vmatmul.f32.gmra.mxu0 %v509
  %v576 = vpop.f32.mrf.mxu0
  %v577 = vadd.f32 0.0, %v576
  %578 = vmatmul.f32.gmra.mxu0 %v512
  %v579 = vpop.f32.mrf.mxu0
  %v580 = vadd.f32 0.0, %v579
  %581 = vdwg.mxu0
  %v582 = vadd.f32 %v432, %v535
  %v583 = vadd.f32 %v433, %v538
  %v584 = vadd.f32 %v434, %v541
  %v585 = vadd.f32 %v435, %v544
  %v586 = vadd.f32 %v436, %v547
  %v587 = vadd.f32 %v437, %v550
  %v588 = vadd.f32 %v438, %v553
  %v589 = vadd.f32 %v439, %v556
  %v590 = vadd.f32 %v440, %v559
  %v591 = vadd.f32 %v441, %v562
  %v592 = vadd.f32 %v442, %v565
  %v593 = vadd.f32 %v443, %v568
  %v594 = vadd.f32 %v444, %v571
  %v595 = vadd.f32 %v445, %v574
  %v596 = vadd.f32 %v446, %v577
  %v597 = vadd.f32 %v447, %v580
  %v598 = vld [vmem:[%s3] sm:$0xff]
  %v599 = vld [vmem:[%s3 + $0x10] sm:$0xff]
  %v600 = vld [vmem:[%s3 + $0x20] sm:$0xff]
  %v601 = vld [vmem:[%s3 + $0x30] sm:$0xff]
  %v602 = vld [vmem:[%s3 + $0x40] sm:$0xff]
  %v603 = vld [vmem:[%s3 + $0x50] sm:$0xff]
  %v604 = vld [vmem:[%s3 + $0x60] sm:$0xff]
  %v605 = vld [vmem:[%s3 + $0x70] sm:$0xff]
  %v606 = vld [vmem:[%s3 + $0x90] sm:$0xff]
  %v607 = vld [vmem:[%s3 + $0xa0] sm:$0xff]
  %v608 = vld [vmem:[%s3 + $0xb0] sm:$0xff]
  %v609 = vld [vmem:[%s3 + $0xc0] sm:$0xff]
  %v610 = vld [vmem:[%s3 + $0xd0] sm:$0xff]
  %v611 = vld [vmem:[%s3 + $0xe0] sm:$0xff]
  %v612 = vld [vmem:[%s3 + $0xf0] sm:$0xff]
  %v613 = vld [vmem:[%s3 + $0x100] sm:$0xff]
  %s614 = scalar_lea.vmem %s4, 16
  %v615 = vld [vmem:[%s614] sm:$0xf]
  %v617 = vsel %vm64, %v598, 0
  %v620 = vsel %vm64, %v599, 0
  %v623 = vsel %vm64, %v600, 0
  %v626 = vsel %vm64, %v601, 0
  %v629 = vsel %vm64, %v602, 0
  %v632 = vsel %vm64, %v603, 0
  %v635 = vsel %vm64, %v604, 0
  %v638 = vsel %vm64, %v605, 0
  %v641 = vsel %vm64, %v606, 0
  %v644 = vsel %vm64, %v607, 0
  %v647 = vsel %vm64, %v608, 0
  %v650 = vsel %vm64, %v609, 0
  %v653 = vsel %vm64, %v610, 0
  %v656 = vsel %vm64, %v611, 0
  %v659 = vsel %vm64, %v612, 0
  %v662 = vsel %vm64, %v613, 0
  %v665 = vsel %vm113, %v615, 0
  %667 = vmatpush.msra.mxu0 0.0
  %668 = vmatpush.msra.mxu0 0.0
  %669 = vmatpush.msra.mxu0 0.0
  %670 = vmatpush.msra.mxu0 0.0
  %671 = vmatpush.msra.mxu0 0.0
  %672 = vmatpush.msra.mxu0 0.0
  %673 = vmatpush.msra.mxu0 0.0
  %674 = vmatpush.msra.mxu0 0.0
  %675 = vmatpush.msra.mxu0 0.0
  %676 = vmatpush.msra.mxu0 0.0
  %677 = vmatpush.msra.mxu0 0.0
  %678 = vmatpush.msra.mxu0 0.0
  %679 = vmatpush.msra.mxu0 0.0
  %680 = vmatpush.msra.mxu0 0.0
  %681 = vmatpush.msra.mxu0 0.0
  %682 = vmatpush.msra.mxu0 %v665
  %683 = vmatmul.f32.gmra.mxu0 %v617
  %v684 = vpop.f32.mrf.mxu0
  %v685 = vadd.f32 0.0, %v684
  %686 = vmatmul.f32.gmra.mxu0 %v620
  %v687 = vpop.f32.mrf.mxu0
  %v688 = vadd.f32 0.0, %v687
  %689 = vmatmul.f32.gmra.mxu0 %v623
  %v690 = vpop.f32.mrf.mxu0
  %v691 = vadd.f32 0.0, %v690
  %692 = vmatmul.f32.gmra.mxu0 %v626
  %v693 = vpop.f32.mrf.mxu0
  %v694 = vadd.f32 0.0, %v693
  %695 = vmatmul.f32.gmra.mxu0 %v629
  %v696 = vpop.f32.mrf.mxu0
  %v697 = vadd.f32 0.0, %v696
  %698 = vmatmul.f32.gmra.mxu0 %v632
  %v699 = vpop.f32.mrf.mxu0
  %v700 = vadd.f32 0.0, %v699
  %701 = vmatmul.f32.gmra.mxu0 %v635
  %v702 = vpop.f32.mrf.mxu0
  %v703 = vadd.f32 0.0, %v702
  %704 = vmatmul.f32.gmra.mxu0 %v638
  %v705 = vpop.f32.mrf.mxu0
  %v706 = vadd.f32 0.0, %v705
  %707 = vmatmul.f32.gmra.mxu0 %v641
  %v708 = vpop.f32.mrf.mxu0
  %v709 = vadd.f32 0.0, %v708
  %710 = vmatmul.f32.gmra.mxu0 %v644
  %v711 = vpop.f32.mrf.mxu0
  %v712 = vadd.f32 0.0, %v711
  %713 = vmatmul.f32.gmra.mxu0 %v647
  %v714 = vpop.f32.mrf.mxu0
  %v715 = vadd.f32 0.0, %v714
  %716 = vmatmul.f32.gmra.mxu0 %v650
  %v717 = vpop.f32.mrf.mxu0
  %v718 = vadd.f32 0.0, %v717
  %719 = vmatmul.f32.gmra.mxu0 %v653
  %v720 = vpop.f32.mrf.mxu0
  %v721 = vadd.f32 0.0, %v720
  %722 = vmatmul.f32.gmra.mxu0 %v656
  %v723 = vpop.f32.mrf.mxu0
  %v724 = vadd.f32 0.0, %v723
  %725 = vmatmul.f32.gmra.mxu0 %v659
  %v726 = vpop.f32.mrf.mxu0
  %v727 = vadd.f32 0.0, %v726
  %728 = vmatmul.f32.gmra.mxu0 %v662
  %v729 = vpop.f32.mrf.mxu0
  %v730 = vadd.f32 0.0, %v729
  %731 = vdwg.mxu0
  %v732 = vadd.f32 %v582, %v685
  %v733 = vadd.f32 %v583, %v688
  %v734 = vadd.f32 %v584, %v691
  %v735 = vadd.f32 %v585, %v694
  %v736 = vadd.f32 %v586, %v697
  %v737 = vadd.f32 %v587, %v700
  %v738 = vadd.f32 %v588, %v703
  %v739 = vadd.f32 %v589, %v706
  %v740 = vadd.f32 %v590, %v709
  %v741 = vadd.f32 %v591, %v712
  %v742 = vadd.f32 %v592, %v715
  %v743 = vadd.f32 %v593, %v718
  %v744 = vadd.f32 %v594, %v721
  %v745 = vadd.f32 %v595, %v724
  %v746 = vadd.f32 %v596, %v727
  %v747 = vadd.f32 %v597, %v730
  %v748 = vld [vmem:[%s2 + $0x1] sm:$0xff]
  %v749 = vld [vmem:[%s2 + $0x11] sm:$0xff]
  %v750 = vld [vmem:[%s2 + $0x21] sm:$0xff]
  %v751 = vld [vmem:[%s2 + $0x31] sm:$0xff]
  %v752 = vld [vmem:[%s2 + $0x41] sm:$0xff]
  %v753 = vld [vmem:[%s2 + $0x51] sm:$0xff]
  %v754 = vld [vmem:[%s2 + $0x61] sm:$0xff]
  %v755 = vld [vmem:[%s2 + $0x71] sm:$0xff]
  %v756 = vld [vmem:[%s2 + $0x91] sm:$0xff]
  %v757 = vld [vmem:[%s2 + $0xa1] sm:$0xff]
  %v758 = vld [vmem:[%s2 + $0xb1] sm:$0xff]
  %v759 = vld [vmem:[%s2 + $0xc1] sm:$0xff]
  %v760 = vld [vmem:[%s2 + $0xd1] sm:$0xff]
  %v761 = vld [vmem:[%s2 + $0xe1] sm:$0xff]
  %v762 = vld [vmem:[%s2 + $0xf1] sm:$0xff]
  %v763 = vld [vmem:[%s2 + $0x101] sm:$0xff]
  %s764 = scalar_lea.vmem %s4, 20
  %v765 = vld [vmem:[%s764] sm:$0xf]
  %v767 = vsel %vm64, %v748, 0
  %v770 = vsel %vm64, %v749, 0
  %v773 = vsel %vm64, %v750, 0
  %v776 = vsel %vm64, %v751, 0
  %v779 = vsel %vm64, %v752, 0
  %v782 = vsel %vm64, %v753, 0
  %v785 = vsel %vm64, %v754, 0
  %v788 = vsel %vm64, %v755, 0
  %v791 = vsel %vm64, %v756, 0
  %v794 = vsel %vm64, %v757, 0
  %v797 = vsel %vm64, %v758, 0
  %v800 = vsel %vm64, %v759, 0
  %v803 = vsel %vm64, %v760, 0
  %v806 = vsel %vm64, %v761, 0
  %v809 = vsel %vm64, %v762, 0
  %v812 = vsel %vm64, %v763, 0
  %v815 = vsel %vm113, %v765, 0
  %817 = vmatpush.msra.mxu0 0.0
  %818 = vmatpush.msra.mxu0 0.0
  %819 = vmatpush.msra.mxu0 0.0
  %820 = vmatpush.msra.mxu0 0.0
  %821 = vmatpush.msra.mxu0 0.0
  %822 = vmatpush.msra.mxu0 0.0
  %823 = vmatpush.msra.mxu0 0.0
  %824 = vmatpush.msra.mxu0 0.0
  %825 = vmatpush.msra.mxu0 0.0
  %826 = vmatpush.msra.mxu0 0.0
  %827 = vmatpush.msra.mxu0 0.0
  %828 = vmatpush.msra.mxu0 0.0
  %829 = vmatpush.msra.mxu0 0.0
  %830 = vmatpush.msra.mxu0 0.0
  %831 = vmatpush.msra.mxu0 0.0
  %832 = vmatpush.msra.mxu0 %v815
  %833 = vmatmul.f32.gmra.mxu0 %v767
  %v834 = vpop.f32.mrf.mxu0
  %v835 = vadd.f32 0.0, %v834
  %836 = vmatmul.f32.gmra.mxu0 %v770
  %v837 = vpop.f32.mrf.mxu0
  %v838 = vadd.f32 0.0, %v837
  %839 = vmatmul.f32.gmra.mxu0 %v773
  %v840 = vpop.f32.mrf.mxu0
  %v841 = vadd.f32 0.0, %v840
  %842 = vmatmul.f32.gmra.mxu0 %v776
  %v843 = vpop.f32.mrf.mxu0
  %v844 = vadd.f32 0.0, %v843
  %845 = vmatmul.f32.gmra.mxu0 %v779
  %v846 = vpop.f32.mrf.mxu0
  %v847 = vadd.f32 0.0, %v846
  %848 = vmatmul.f32.gmra.mxu0 %v782
  %v849 = vpop.f32.mrf.mxu0
  %v850 = vadd.f32 0.0, %v849
  %851 = vmatmul.f32.gmra.mxu0 %v785
  %v852 = vpop.f32.mrf.mxu0
  %v853 = vadd.f32 0.0, %v852
  %854 = vmatmul.f32.gmra.mxu0 %v788
  %v855 = vpop.f32.mrf.mxu0
  %v856 = vadd.f32 0.0, %v855
  %857 = vmatmul.f32.gmra.mxu0 %v791
  %v858 = vpop.f32.mrf.mxu0
  %v859 = vadd.f32 0.0, %v858
  %860 = vmatmul.f32.gmra.mxu0 %v794
  %v861 = vpop.f32.mrf.mxu0
  %v862 = vadd.f32 0.0, %v861
  %863 = vmatmul.f32.gmra.mxu0 %v797
  %v864 = vpop.f32.mrf.mxu0
  %v865 = vadd.f32 0.0, %v864
  %866 = vmatmul.f32.gmra.mxu0 %v800
  %v867 = vpop.f32.mrf.mxu0
  %v868 = vadd.f32 0.0, %v867
  %869 = vmatmul.f32.gmra.mxu0 %v803
  %v870 = vpop.f32.mrf.mxu0
  %v871 = vadd.f32 0.0, %v870
  %872 = vmatmul.f32.gmra.mxu0 %v806
  %v873 = vpop.f32.mrf.mxu0
  %v874 = vadd.f32 0.0, %v873
  %875 = vmatmul.f32.gmra.mxu0 %v809
  %v876 = vpop.f32.mrf.mxu0
  %v877 = vadd.f32 0.0, %v876
  %878 = vmatmul.f32.gmra.mxu0 %v812
  %v879 = vpop.f32.mrf.mxu0
  %v880 = vadd.f32 0.0, %v879
  %881 = vdwg.mxu0
  %v882 = vadd.f32 %v732, %v835
  %v883 = vadd.f32 %v733, %v838
  %v884 = vadd.f32 %v734, %v841
  %v885 = vadd.f32 %v735, %v844
  %v886 = vadd.f32 %v736, %v847
  %v887 = vadd.f32 %v737, %v850
  %v888 = vadd.f32 %v738, %v853
  %v889 = vadd.f32 %v739, %v856
  %v890 = vadd.f32 %v740, %v859
  %v891 = vadd.f32 %v741, %v862
  %v892 = vadd.f32 %v742, %v865
  %v893 = vadd.f32 %v743, %v868
  %v894 = vadd.f32 %v744, %v871
  %v895 = vadd.f32 %v745, %v874
  %v896 = vadd.f32 %v746, %v877
  %v897 = vadd.f32 %v747, %v880
  %s898 = scalar_lea.vmem %s0, 16
  %v899 = vld [vmem:[%s898] sm:$0xff]
  %v900 = vld [vmem:[%s898 + $0x10] sm:$0xff]
  %v901 = vld [vmem:[%s898 + $0x20] sm:$0xff]
  %v902 = vld [vmem:[%s898 + $0x30] sm:$0xff]
  %v903 = vld [vmem:[%s898 + $0x40] sm:$0xff]
  %v904 = vld [vmem:[%s898 + $0x50] sm:$0xff]
  %v905 = vld [vmem:[%s898 + $0x60] sm:$0xff]
  %v906 = vld [vmem:[%s898 + $0x70] sm:$0xff]
  %v907 = vld [vmem:[%s898 + $0x90] sm:$0xff]
  %v908 = vld [vmem:[%s898 + $0xa0] sm:$0xff]
  %v909 = vld [vmem:[%s898 + $0xb0] sm:$0xff]
  %v910 = vld [vmem:[%s898 + $0xc0] sm:$0xff]
  %v911 = vld [vmem:[%s898 + $0xd0] sm:$0xff]
  %v912 = vld [vmem:[%s898 + $0xe0] sm:$0xff]
  %v913 = vld [vmem:[%s898 + $0xf0] sm:$0xff]
  %v914 = vld [vmem:[%s898 + $0x100] sm:$0xff]
  %s915 = scalar_lea.vmem %s4, 24
  %v916 = vld [vmem:[%s915] sm:$0xf]
  %v918 = vsel %vm64, %v899, 0
  %v921 = vsel %vm64, %v900, 0
  %v924 = vsel %vm64, %v901, 0
  %v927 = vsel %vm64, %v902, 0
  %v930 = vsel %vm64, %v903, 0
  %v933 = vsel %vm64, %v904, 0
  %v936 = vsel %vm64, %v905, 0
  %v939 = vsel %vm64, %v906, 0
  %v942 = vsel %vm64, %v907, 0
  %v945 = vsel %vm64, %v908, 0
  %v948 = vsel %vm64, %v909, 0
  %v951 = vsel %vm64, %v910, 0
  %v954 = vsel %vm64, %v911, 0
  %v957 = vsel %vm64, %v912, 0
  %v960 = vsel %vm64, %v913, 0
  %v963 = vsel %vm64, %v914, 0
  %v966 = vsel %vm113, %v916, 0
  %968 = vmatpush.msra.mxu0 0.0
  %969 = vmatpush.msra.mxu0 0.0
  %970 = vmatpush.msra.mxu0 0.0
  %971 = vmatpush.msra.mxu0 0.0
  %972 = vmatpush.msra.mxu0 0.0
  %973 = vmatpush.msra.mxu0 0.0
  %974 = vmatpush.msra.mxu0 0.0
  %975 = vmatpush.msra.mxu0 0.0
  %976 = vmatpush.msra.mxu0 0.0
  %977 = vmatpush.msra.mxu0 0.0
  %978 = vmatpush.msra.mxu0 0.0
  %979 = vmatpush.msra.mxu0 0.0
  %980 = vmatpush.msra.mxu0 0.0
  %981 = vmatpush.msra.mxu0 0.0
  %982 = vmatpush.msra.mxu0 0.0
  %983 = vmatpush.msra.mxu0 %v966
  %984 = vmatmul.f32.gmra.mxu0 %v918
  %v985 = vpop.f32.mrf.mxu0
  %v986 = vadd.f32 0.0, %v985
  %987 = vmatmul.f32.gmra.mxu0 %v921
  %v988 = vpop.f32.mrf.mxu0
  %v989 = vadd.f32 0.0, %v988
  %990 = vmatmul.f32.gmra.mxu0 %v924
  %v991 = vpop.f32.mrf.mxu0
  %v992 = vadd.f32 0.0, %v991
  %993 = vmatmul.f32.gmra.mxu0 %v927
  %v994 = vpop.f32.mrf.mxu0
  %v995 = vadd.f32 0.0, %v994
  %996 = vmatmul.f32.gmra.mxu0 %v930
  %v997 = vpop.f32.mrf.mxu0
  %v998 = vadd.f32 0.0, %v997
  %999 = vmatmul.f32.gmra.mxu0 %v933
  %v1000 = vpop.f32.mrf.mxu0
  %v1001 = vadd.f32 0.0, %v1000
  %1002 = vmatmul.f32.gmra.mxu0 %v936
  %v1003 = vpop.f32.mrf.mxu0
  %v1004 = vadd.f32 0.0, %v1003
  %1005 = vmatmul.f32.gmra.mxu0 %v939
  %v1006 = vpop.f32.mrf.mxu0
  %v1007 = vadd.f32 0.0, %v1006
  %1008 = vmatmul.f32.gmra.mxu0 %v942
  %v1009 = vpop.f32.mrf.mxu0
  %v1010 = vadd.f32 0.0, %v1009
  %1011 = vmatmul.f32.gmra.mxu0 %v945
  %v1012 = vpop.f32.mrf.mxu0
  %v1013 = vadd.f32 0.0, %v1012
  %1014 = vmatmul.f32.gmra.mxu0 %v948
  %v1015 = vpop.f32.mrf.mxu0
  %v1016 = vadd.f32 0.0, %v1015
  %1017 = vmatmul.f32.gmra.mxu0 %v951
  %v1018 = vpop.f32.mrf.mxu0
  %v1019 = vadd.f32 0.0, %v1018
  %1020 = vmatmul.f32.gmra.mxu0 %v954
  %v1021 = vpop.f32.mrf.mxu0
  %v1022 = vadd.f32 0.0, %v1021
  %1023 = vmatmul.f32.gmra.mxu0 %v957
  %v1024 = vpop.f32.mrf.mxu0
  %v1025 = vadd.f32 0.0, %v1024
  %1026 = vmatmul.f32.gmra.mxu0 %v960
  %v1027 = vpop.f32.mrf.mxu0
  %v1028 = vadd.f32 0.0, %v1027
  %1029 = vmatmul.f32.gmra.mxu0 %v963
  %v1030 = vpop.f32.mrf.mxu0
  %v1031 = vadd.f32 0.0, %v1030
  %1032 = vdwg.mxu0
  %v1033 = vadd.f32 %v882, %v986
  %v1034 = vadd.f32 %v883, %v989
  %v1035 = vadd.f32 %v884, %v992
  %v1036 = vadd.f32 %v885, %v995
  %v1037 = vadd.f32 %v886, %v998
  %v1038 = vadd.f32 %v887, %v1001
  %v1039 = vadd.f32 %v888, %v1004
  %v1040 = vadd.f32 %v889, %v1007
  %v1041 = vadd.f32 %v890, %v1010
  %v1042 = vadd.f32 %v891, %v1013
  %v1043 = vadd.f32 %v892, %v1016
  %v1044 = vadd.f32 %v893, %v1019
  %v1045 = vadd.f32 %v894, %v1022
  %v1046 = vadd.f32 %v895, %v1025
  %v1047 = vadd.f32 %v896, %v1028
  %v1048 = vadd.f32 %v897, %v1031
  %s1049 = scalar_lea.vmem %s1, 16
  %v1050 = vld [vmem:[%s1049] sm:$0xff]
  %v1051 = vld [vmem:[%s1049 + $0x10] sm:$0xff]
  %v1052 = vld [vmem:[%s1049 + $0x20] sm:$0xff]
  %v1053 = vld [vmem:[%s1049 + $0x30] sm:$0xff]
  %v1054 = vld [vmem:[%s1049 + $0x40] sm:$0xff]
  %v1055 = vld [vmem:[%s1049 + $0x50] sm:$0xff]
  %v1056 = vld [vmem:[%s1049 + $0x60] sm:$0xff]
  %v1057 = vld [vmem:[%s1049 + $0x70] sm:$0xff]
  %v1058 = vld [vmem:[%s1049 + $0x90] sm:$0xff]
  %v1059 = vld [vmem:[%s1049 + $0xa0] sm:$0xff]
  %v1060 = vld [vmem:[%s1049 + $0xb0] sm:$0xff]
  %v1061 = vld [vmem:[%s1049 + $0xc0] sm:$0xff]
  %v1062 = vld [vmem:[%s1049 + $0xd0] sm:$0xff]
  %v1063 = vld [vmem:[%s1049 + $0xe0] sm:$0xff]
  %v1064 = vld [vmem:[%s1049 + $0xf0] sm:$0xff]
  %v1065 = vld [vmem:[%s1049 + $0x100] sm:$0xff]
  %s1066 = scalar_lea.vmem %s4, 28
  %v1067 = vld [vmem:[%s1066] sm:$0xf]
  %v1069 = vsel %vm64, %v1050, 0
  %v1072 = vsel %vm64, %v1051, 0
  %v1075 = vsel %vm64, %v1052, 0
  %v1078 = vsel %vm64, %v1053, 0
  %v1081 = vsel %vm64, %v1054, 0
  %v1084 = vsel %vm64, %v1055, 0
  %v1087 = vsel %vm64, %v1056, 0
  %v1090 = vsel %vm64, %v1057, 0
  %v1093 = vsel %vm64, %v1058, 0
  %v1096 = vsel %vm64, %v1059, 0
  %v1099 = vsel %vm64, %v1060, 0
  %v1102 = vsel %vm64, %v1061, 0
  %v1105 = vsel %vm64, %v1062, 0
  %v1108 = vsel %vm64, %v1063, 0
  %v1111 = vsel %vm64, %v1064, 0
  %v1114 = vsel %vm64, %v1065, 0
  %v1117 = vsel %vm113, %v1067, 0
  %1119 = vmatpush.msra.mxu0 0.0
  %1120 = vmatpush.msra.mxu0 0.0
  %1121 = vmatpush.msra.mxu0 0.0
  %1122 = vmatpush.msra.mxu0 0.0
  %1123 = vmatpush.msra.mxu0 0.0
  %1124 = vmatpush.msra.mxu0 0.0
  %1125 = vmatpush.msra.mxu0 0.0
  %1126 = vmatpush.msra.mxu0 0.0
  %1127 = vmatpush.msra.mxu0 0.0
  %1128 = vmatpush.msra.mxu0 0.0
  %1129 = vmatpush.msra.mxu0 0.0
  %1130 = vmatpush.msra.mxu0 0.0
  %1131 = vmatpush.msra.mxu0 0.0
  %1132 = vmatpush.msra.mxu0 0.0
  %1133 = vmatpush.msra.mxu0 0.0
  %1134 = vmatpush.msra.mxu0 %v1117
  %1135 = vmatmul.f32.gmra.mxu0 %v1069
  %v1136 = vpop.f32.mrf.mxu0
  %v1137 = vadd.f32 0.0, %v1136
  %1138 = vmatmul.f32.gmra.mxu0 %v1072
  %v1139 = vpop.f32.mrf.mxu0
  %v1140 = vadd.f32 0.0, %v1139
  %1141 = vmatmul.f32.gmra.mxu0 %v1075
  %v1142 = vpop.f32.mrf.mxu0
  %v1143 = vadd.f32 0.0, %v1142
  %1144 = vmatmul.f32.gmra.mxu0 %v1078
  %v1145 = vpop.f32.mrf.mxu0
  %v1146 = vadd.f32 0.0, %v1145
  %1147 = vmatmul.f32.gmra.mxu0 %v1081
  %v1148 = vpop.f32.mrf.mxu0
  %v1149 = vadd.f32 0.0, %v1148
  %1150 = vmatmul.f32.gmra.mxu0 %v1084
  %v1151 = vpop.f32.mrf.mxu0
  %v1152 = vadd.f32 0.0, %v1151
  %1153 = vmatmul.f32.gmra.mxu0 %v1087
  %v1154 = vpop.f32.mrf.mxu0
  %v1155 = vadd.f32 0.0, %v1154
  %1156 = vmatmul.f32.gmra.mxu0 %v1090
  %v1157 = vpop.f32.mrf.mxu0
  %v1158 = vadd.f32 0.0, %v1157
  %1159 = vmatmul.f32.gmra.mxu0 %v1093
  %v1160 = vpop.f32.mrf.mxu0
  %v1161 = vadd.f32 0.0, %v1160
  %1162 = vmatmul.f32.gmra.mxu0 %v1096
  %v1163 = vpop.f32.mrf.mxu0
  %v1164 = vadd.f32 0.0, %v1163
  %1165 = vmatmul.f32.gmra.mxu0 %v1099
  %v1166 = vpop.f32.mrf.mxu0
  %v1167 = vadd.f32 0.0, %v1166
  %1168 = vmatmul.f32.gmra.mxu0 %v1102
  %v1169 = vpop.f32.mrf.mxu0
  %v1170 = vadd.f32 0.0, %v1169
  %1171 = vmatmul.f32.gmra.mxu0 %v1105
  %v1172 = vpop.f32.mrf.mxu0
  %v1173 = vadd.f32 0.0, %v1172
  %1174 = vmatmul.f32.gmra.mxu0 %v1108
  %v1175 = vpop.f32.mrf.mxu0
  %v1176 = vadd.f32 0.0, %v1175
  %1177 = vmatmul.f32.gmra.mxu0 %v1111
  %v1178 = vpop.f32.mrf.mxu0
  %v1179 = vadd.f32 0.0, %v1178
  %1180 = vmatmul.f32.gmra.mxu0 %v1114
  %v1181 = vpop.f32.mrf.mxu0
  %v1182 = vadd.f32 0.0, %v1181
  %1183 = vdwg.mxu0
  %v1184 = vadd.f32 %v1033, %v1137
  %v1185 = vadd.f32 %v1034, %v1140
  %v1186 = vadd.f32 %v1035, %v1143
  %v1187 = vadd.f32 %v1036, %v1146
  %v1188 = vadd.f32 %v1037, %v1149
  %v1189 = vadd.f32 %v1038, %v1152
  %v1190 = vadd.f32 %v1039, %v1155
  %v1191 = vadd.f32 %v1040, %v1158
  %v1192 = vadd.f32 %v1041, %v1161
  %v1193 = vadd.f32 %v1042, %v1164
  %v1194 = vadd.f32 %v1043, %v1167
  %v1195 = vadd.f32 %v1044, %v1170
  %v1196 = vadd.f32 %v1045, %v1173
  %v1197 = vadd.f32 %v1046, %v1176
  %v1198 = vadd.f32 %v1047, %v1179
  %v1199 = vadd.f32 %v1048, %v1182
  %v1200 = vld [vmem:[%s898 + $0x1] sm:$0xff]
  %v1201 = vld [vmem:[%s898 + $0x11] sm:$0xff]
  %v1202 = vld [vmem:[%s898 + $0x21] sm:$0xff]
  %v1203 = vld [vmem:[%s898 + $0x31] sm:$0xff]
  %v1204 = vld [vmem:[%s898 + $0x41] sm:$0xff]
  %v1205 = vld [vmem:[%s898 + $0x51] sm:$0xff]
  %v1206 = vld [vmem:[%s898 + $0x61] sm:$0xff]
  %v1207 = vld [vmem:[%s898 + $0x71] sm:$0xff]
  %v1208 = vld [vmem:[%s898 + $0x91] sm:$0xff]
  %v1209 = vld [vmem:[%s898 + $0xa1] sm:$0xff]
  %v1210 = vld [vmem:[%s898 + $0xb1] sm:$0xff]
  %v1211 = vld [vmem:[%s898 + $0xc1] sm:$0xff]
  %v1212 = vld [vmem:[%s898 + $0xd1] sm:$0xff]
  %v1213 = vld [vmem:[%s898 + $0xe1] sm:$0xff]
  %v1214 = vld [vmem:[%s898 + $0xf1] sm:$0xff]
  %v1215 = vld [vmem:[%s898 + $0x101] sm:$0xff]
  %s1216 = scalar_lea.vmem %s4, 32
  %v1217 = vld [vmem:[%s1216] sm:$0xf]
  %v1219 = vsel %vm64, %v1200, 0
  %v1222 = vsel %vm64, %v1201, 0
  %v1225 = vsel %vm64, %v1202, 0
  %v1228 = vsel %vm64, %v1203, 0
  %v1231 = vsel %vm64, %v1204, 0
  %v1234 = vsel %vm64, %v1205, 0
  %v1237 = vsel %vm64, %v1206, 0
  %v1240 = vsel %vm64, %v1207, 0
  %v1243 = vsel %vm64, %v1208, 0
  %v1246 = vsel %vm64, %v1209, 0
  %v1249 = vsel %vm64, %v1210, 0
  %v1252 = vsel %vm64, %v1211, 0
  %v1255 = vsel %vm64, %v1212, 0
  %v1258 = vsel %vm64, %v1213, 0
  %v1261 = vsel %vm64, %v1214, 0
  %v1264 = vsel %vm64, %v1215, 0
  %v1267 = vsel %vm113, %v1217, 0
  %1269 = vmatpush.msra.mxu0 0.0
  %1270 = vmatpush.msra.mxu0 0.0
  %1271 = vmatpush.msra.mxu0 0.0
  %1272 = vmatpush.msra.mxu0 0.0
  %1273 = vmatpush.msra.mxu0 0.0
  %1274 = vmatpush.msra.mxu0 0.0
  %1275 = vmatpush.msra.mxu0 0.0
  %1276 = vmatpush.msra.mxu0 0.0
  %1277 = vmatpush.msra.mxu0 0.0
  %1278 = vmatpush.msra.mxu0 0.0
  %1279 = vmatpush.msra.mxu0 0.0
  %1280 = vmatpush.msra.mxu0 0.0
  %1281 = vmatpush.msra.mxu0 0.0
  %1282 = vmatpush.msra.mxu0 0.0
  %1283 = vmatpush.msra.mxu0 0.0
  %1284 = vmatpush.msra.mxu0 %v1267
  %1285 = vmatmul.f32.gmra.mxu0 %v1219
  %v1286 = vpop.f32.mrf.mxu0
  %v1287 = vadd.f32 0.0, %v1286
  %1288 = vmatmul.f32.gmra.mxu0 %v1222
  %v1289 = vpop.f32.mrf.mxu0
  %v1290 = vadd.f32 0.0, %v1289
  %1291 = vmatmul.f32.gmra.mxu0 %v1225
  %v1292 = vpop.f32.mrf.mxu0
  %v1293 = vadd.f32 0.0, %v1292
  %1294 = vmatmul.f32.gmra.mxu0 %v1228
  %v1295 = vpop.f32.mrf.mxu0
  %v1296 = vadd.f32 0.0, %v1295
  %1297 = vmatmul.f32.gmra.mxu0 %v1231
  %v1298 = vpop.f32.mrf.mxu0
  %v1299 = vadd.f32 0.0, %v1298
  %1300 = vmatmul.f32.gmra.mxu0 %v1234
  %v1301 = vpop.f32.mrf.mxu0
  %v1302 = vadd.f32 0.0, %v1301
  %1303 = vmatmul.f32.gmra.mxu0 %v1237
  %v1304 = vpop.f32.mrf.mxu0
  %v1305 = vadd.f32 0.0, %v1304
  %1306 = vmatmul.f32.gmra.mxu0 %v1240
  %v1307 = vpop.f32.mrf.mxu0
  %v1308 = vadd.f32 0.0, %v1307
  %1309 = vmatmul.f32.gmra.mxu0 %v1243
  %v1310 = vpop.f32.mrf.mxu0
  %v1311 = vadd.f32 0.0, %v1310
  %1312 = vmatmul.f32.gmra.mxu0 %v1246
  %v1313 = vpop.f32.mrf.mxu0
  %v1314 = vadd.f32 0.0, %v1313
  %1315 = vmatmul.f32.gmra.mxu0 %v1249
  %v1316 = vpop.f32.mrf.mxu0
  %v1317 = vadd.f32 0.0, %v1316
  %1318 = vmatmul.f32.gmra.mxu0 %v1252
  %v1319 = vpop.f32.mrf.mxu0
  %v1320 = vadd.f32 0.0, %v1319
  %1321 = vmatmul.f32.gmra.mxu0 %v1255
  %v1322 = vpop.f32.mrf.mxu0
  %v1323 = vadd.f32 0.0, %v1322
  %1324 = vmatmul.f32.gmra.mxu0 %v1258
  %v1325 = vpop.f32.mrf.mxu0
  %v1326 = vadd.f32 0.0, %v1325
  %1327 = vmatmul.f32.gmra.mxu0 %v1261
  %v1328 = vpop.f32.mrf.mxu0
  %v1329 = vadd.f32 0.0, %v1328
  %1330 = vmatmul.f32.gmra.mxu0 %v1264
  %v1331 = vpop.f32.mrf.mxu0
  %v1332 = vadd.f32 0.0, %v1331
  %1333 = vdwg.mxu0
  %v1334 = vadd.f32 %v1184, %v1287
  %v1335 = vadd.f32 %v1185, %v1290
  %v1336 = vadd.f32 %v1186, %v1293
  %v1337 = vadd.f32 %v1187, %v1296
  %v1338 = vadd.f32 %v1188, %v1299
  %v1339 = vadd.f32 %v1189, %v1302
  %v1340 = vadd.f32 %v1190, %v1305
  %v1341 = vadd.f32 %v1191, %v1308
  %v1342 = vadd.f32 %v1192, %v1311
  %v1343 = vadd.f32 %v1193, %v1314
  %v1344 = vadd.f32 %v1194, %v1317
  %v1345 = vadd.f32 %v1195, %v1320
  %v1346 = vadd.f32 %v1196, %v1323
  %v1347 = vadd.f32 %v1197, %v1326
  %v1348 = vadd.f32 %v1198, %v1329
  %v1349 = vadd.f32 %v1199, %v1332
  %v1350 = vld [vmem:[%s5] sm:$0x1]
  %v1352 = vperm.slane %v1350, 0
  %v1354 = vadd.f32 %v1334, %v1352
  %v1355 = vadd.f32 %v1335, %v1352
  %v1356 = vadd.f32 %v1336, %v1352
  %v1357 = vadd.f32 %v1337, %v1352
  %v1358 = vadd.f32 %v1338, %v1352
  %v1359 = vadd.f32 %v1339, %v1352
  %v1360 = vadd.f32 %v1340, %v1352
  %v1361 = vadd.f32 %v1341, %v1352
  %v1362 = vadd.f32 %v1342, %v1352
  %v1363 = vadd.f32 %v1343, %v1352
  %v1364 = vadd.f32 %v1344, %v1352
  %v1365 = vadd.f32 %v1345, %v1352
  %v1366 = vadd.f32 %v1346, %v1352
  %v1367 = vadd.f32 %v1347, %v1352
  %v1368 = vadd.f32 %v1348, %v1352
  %v1369 = vadd.f32 %v1349, %v1352
  %v1370 = vmax.f32 %v1354, 0.0
  %v1371 = vmax.f32 %v1355, 0.0
  %v1372 = vmax.f32 %v1356, 0.0
  %v1373 = vmax.f32 %v1357, 0.0
  %v1374 = vmax.f32 %v1358, 0.0
  %v1375 = vmax.f32 %v1359, 0.0
  %v1376 = vmax.f32 %v1360, 0.0
  %v1377 = vmax.f32 %v1361, 0.0
  %v1378 = vmax.f32 %v1362, 0.0
  %v1379 = vmax.f32 %v1363, 0.0
  %v1380 = vmax.f32 %v1364, 0.0
  %v1381 = vmax.f32 %v1365, 0.0
  %v1382 = vmax.f32 %v1366, 0.0
  %v1383 = vmax.f32 %v1367, 0.0
  %v1384 = vmax.f32 %v1368, 0.0
  %v1385 = vmax.f32 %v1369, 0.0
  %v1386 = vld [vmem:[%s6] sm:$0x1]
  %v1387 = vld [vmem:[%s7] sm:$0x1]
  %vm1388 = vcmask 64512
  %v1389 = vsel %vm1388, %v1370, 0.0
  %v1390 = vsel %vm1388, %v1371, 0.0
  %v1391 = vadd.f32 %v1389, %v1390
  %v1392 = vsel %vm1388, %v1372, 0.0
  %v1393 = vadd.f32 %v1391, %v1392
  %v1394 = vsel %vm1388, %v1373, 0.0
  %v1395 = vadd.f32 %v1393, %v1394
  %v1396 = vsel %vm1388, %v1374, 0.0
  %v1397 = vadd.f32 %v1395, %v1396
  %v1398 = vsel %vm1388, %v1375, 0.0
  %v1399 = vadd.f32 %v1397, %v1398
  %v1400 = vsel %vm1388, %v1376, 0.0
  %v1401 = vadd.f32 %v1399, %v1400
  %v1402 = vsel %vm1388, %v1377, 0.0
  %v1403 = vadd.f32 %v1401, %v1402
  %v1404 = vsel %vm1388, %v1378, 0.0
  %v1405 = vadd.f32 %v1403, %v1404
  %v1406 = vsel %vm1388, %v1379, 0.0
  %v1407 = vadd.f32 %v1405, %v1406
  %v1408 = vsel %vm1388, %v1380, 0.0
  %v1409 = vadd.f32 %v1407, %v1408
  %v1410 = vsel %vm1388, %v1381, 0.0
  %v1411 = vadd.f32 %v1409, %v1410
  %v1412 = vsel %vm1388, %v1382, 0.0
  %v1413 = vadd.f32 %v1411, %v1412
  %v1414 = vsel %vm1388, %v1383, 0.0
  %v1415 = vadd.f32 %v1413, %v1414
  %v1416 = vsel %vm1388, %v1384, 0.0
  %v1417 = vadd.f32 %v1415, %v1416
  %v1418 = vsel %vm1388, %v1385, 0.0
  %v1419 = vadd.f32 %v1417, %v1418
  %v1420 = vrot.slane %v1419, 4
  %v1421 = vadd.f32 %v1419, %v1420
  %v1422 = vrot.slane %v1421, 2
  %v1423 = vadd.f32 %v1421, %v1422
  %v1424 = vrot.slane %v1423, 1
  %v1425 = vadd.f32 %v1423, %v1424
  %v1426 = vmul.f32 %v1370, %v1370
  %v1427 = vmul.f32 %v1371, %v1371
  %v1428 = vmul.f32 %v1372, %v1372
  %v1429 = vmul.f32 %v1373, %v1373
  %v1430 = vmul.f32 %v1374, %v1374
  %v1431 = vmul.f32 %v1375, %v1375
  %v1432 = vmul.f32 %v1376, %v1376
  %v1433 = vmul.f32 %v1377, %v1377
  %v1434 = vmul.f32 %v1378, %v1378
  %v1435 = vmul.f32 %v1379, %v1379
  %v1436 = vmul.f32 %v1380, %v1380
  %v1437 = vmul.f32 %v1381, %v1381
  %v1438 = vmul.f32 %v1382, %v1382
  %v1439 = vmul.f32 %v1383, %v1383
  %v1440 = vmul.f32 %v1384, %v1384
  %v1441 = vmul.f32 %v1385, %v1385
  %v1442 = vsel %vm1388, %v1426, 0.0
  %v1443 = vsel %vm1388, %v1427, 0.0
  %v1444 = vadd.f32 %v1442, %v1443
  %v1445 = vsel %vm1388, %v1428, 0.0
  %v1446 = vadd.f32 %v1444, %v1445
  %v1447 = vsel %vm1388, %v1429, 0.0
  %v1448 = vadd.f32 %v1446, %v1447
  %v1449 = vsel %vm1388, %v1430, 0.0
  %v1450 = vadd.f32 %v1448, %v1449
  %v1451 = vsel %vm1388, %v1431, 0.0
  %v1452 = vadd.f32 %v1450, %v1451
  %v1453 = vsel %vm1388, %v1432, 0.0
  %v1454 = vadd.f32 %v1452, %v1453
  %v1455 = vsel %vm1388, %v1433, 0.0
  %v1456 = vadd.f32 %v1454, %v1455
  %v1457 = vsel %vm1388, %v1434, 0.0
  %v1458 = vadd.f32 %v1456, %v1457
  %v1459 = vsel %vm1388, %v1435, 0.0
  %v1460 = vadd.f32 %v1458, %v1459
  %v1461 = vsel %vm1388, %v1436, 0.0
  %v1462 = vadd.f32 %v1460, %v1461
  %v1463 = vsel %vm1388, %v1437, 0.0
  %v1464 = vadd.f32 %v1462, %v1463
  %v1465 = vsel %vm1388, %v1438, 0.0
  %v1466 = vadd.f32 %v1464, %v1465
  %v1467 = vsel %vm1388, %v1439, 0.0
  %v1468 = vadd.f32 %v1466, %v1467
  %v1469 = vsel %vm1388, %v1440, 0.0
  %v1470 = vadd.f32 %v1468, %v1469
  %v1471 = vsel %vm1388, %v1441, 0.0
  %v1472 = vadd.f32 %v1470, %v1471
  %v1473 = vrot.slane %v1472, 4
  %v1474 = vadd.f32 %v1472, %v1473
  %v1475 = vrot.slane %v1474, 2
  %v1476 = vadd.f32 %v1474, %v1475
  %v1477 = vrot.slane %v1476, 1
  %v1478 = vadd.f32 %v1476, %v1477
  %v1479 = vrcp.pop 128.0
  %v1480 = vmul.f32 128.0, %v1479
  %v1481 = vsub.f32 1.0, %v1480
  %v1482 = vmul.f32 %v1479, %v1481
  %v1483 = vadd.f32 %v1479, %v1482
  %vm1484 = vweird.f32 %v1479
  %v1485 = vsel %vm1484, %v1479, %v1483
  %v1486 = vmul.f32 %v1425, %v1485
  %v1487 = vmul.f32 %v1478, %v1485
  %v1488 = vmul.f32 %v1486, %v1486
  %v1489 = vsub.f32 %v1487, %v1488
  %v1490 = vmax.f32 %v1489, 0.0
  %v1491 = vsub.f32 %v1370, %v1486
  %v1492 = vsub.f32 %v1371, %v1486
  %v1493 = vsub.f32 %v1372, %v1486
  %v1494 = vsub.f32 %v1373, %v1486
  %v1495 = vsub.f32 %v1374, %v1486
  %v1496 = vsub.f32 %v1375, %v1486
  %v1497 = vsub.f32 %v1376, %v1486
  %v1498 = vsub.f32 %v1377, %v1486
  %v1499 = vsub.f32 %v1378, %v1486
  %v1500 = vsub.f32 %v1379, %v1486
  %v1501 = vsub.f32 %v1380, %v1486
  %v1502 = vsub.f32 %v1381, %v1486
  %v1503 = vsub.f32 %v1382, %v1486
  %v1504 = vsub.f32 %v1383, %v1486
  %v1505 = vsub.f32 %v1384, %v1486
  %v1506 = vsub.f32 %v1385, %v1486
  %v1507 = vadd.f32 %v1490, 1e-05
  %v1508 = vrsqrt.pop %v1507
  %v1509 = vmul.f32 %v1508, %v1507
  %v1510 = vmul.f32 %v1509, %v1508
  %v1511 = vmul.f32 0.5, %v1510
  %v1512 = vsub.f32 1.5, %v1511
  %v1513 = vmul.f32 %v1508, %v1512
  %vm1514 = vweird.f32 %v1507
  %vm1515 = vweird.f32 %v1508
  %vm1516 = vmor %vm1514, %vm1515
  %v1517 = vsel %vm1516, %v1508, %v1513
  %v1518 = vmul.f32 %v1491, %v1517
  %v1519 = vmul.f32 %v1492, %v1517
  %v1520 = vmul.f32 %v1493, %v1517
  %v1521 = vmul.f32 %v1494, %v1517
  %v1522 = vmul.f32 %v1495, %v1517
  %v1523 = vmul.f32 %v1496, %v1517
  %v1524 = vmul.f32 %v1497, %v1517
  %v1525 = vmul.f32 %v1498, %v1517
  %v1526 = vmul.f32 %v1499, %v1517
  %v1527 = vmul.f32 %v1500, %v1517
  %v1528 = vmul.f32 %v1501, %v1517
  %v1529 = vmul.f32 %v1502, %v1517
  %v1530 = vmul.f32 %v1503, %v1517
  %v1531 = vmul.f32 %v1504, %v1517
  %v1532 = vmul.f32 %v1505, %v1517
  %v1533 = vmul.f32 %v1506, %v1517
  %v1535 = vperm.slane %v1386, 0
  %v1537 = vmul.f32 %v1518, %v1535
  %v1538 = vmul.f32 %v1519, %v1535
  %v1539 = vmul.f32 %v1520, %v1535
  %v1540 = vmul.f32 %v1521, %v1535
  %v1541 = vmul.f32 %v1522, %v1535
  %v1542 = vmul.f32 %v1523, %v1535
  %v1543 = vmul.f32 %v1524, %v1535
  %v1544 = vmul.f32 %v1525, %v1535
  %v1545 = vmul.f32 %v1526, %v1535
  %v1546 = vmul.f32 %v1527, %v1535
  %v1547 = vmul.f32 %v1528, %v1535
  %v1548 = vmul.f32 %v1529, %v1535
  %v1549 = vmul.f32 %v1530, %v1535
  %v1550 = vmul.f32 %v1531, %v1535
  %v1551 = vmul.f32 %v1532, %v1535
  %v1552 = vmul.f32 %v1533, %v1535
  %v1554 = vperm.slane %v1387, 0
  %v1556 = vadd.f32 %v1537, %v1554
  %v1557 = vadd.f32 %v1538, %v1554
  %v1558 = vadd.f32 %v1539, %v1554
  %v1559 = vadd.f32 %v1540, %v1554
  %v1560 = vadd.f32 %v1541, %v1554
  %v1561 = vadd.f32 %v1542, %v1554
  %v1562 = vadd.f32 %v1543, %v1554
  %v1563 = vadd.f32 %v1544, %v1554
  %v1564 = vadd.f32 %v1545, %v1554
  %v1565 = vadd.f32 %v1546, %v1554
  %v1566 = vadd.f32 %v1547, %v1554
  %v1567 = vadd.f32 %v1548, %v1554
  %v1568 = vadd.f32 %v1549, %v1554
  %v1569 = vadd.f32 %v1550, %v1554
  %v1570 = vadd.f32 %v1551, %v1554
  %v1571 = vadd.f32 %v1552, %v1554
  %1572 = vst.msk [vmem:[%s8] sm:$0xff] %vm1388, %v1556
  %1573 = vst.msk [vmem:[%s8 + $0x8] sm:$0xff] %vm1388, %v1557
  %1574 = vst.msk [vmem:[%s8 + $0x10] sm:$0xff] %vm1388, %v1558
  %1575 = vst.msk [vmem:[%s8 + $0x18] sm:$0xff] %vm1388, %v1559
  %1576 = vst.msk [vmem:[%s8 + $0x20] sm:$0xff] %vm1388, %v1560
  %1577 = vst.msk [vmem:[%s8 + $0x28] sm:$0xff] %vm1388, %v1561
  %1578 = vst.msk [vmem:[%s8 + $0x30] sm:$0xff] %vm1388, %v1562
  %1579 = vst.msk [vmem:[%s8 + $0x38] sm:$0xff] %vm1388, %v1563
  %1580 = vst.msk [vmem:[%s8 + $0x40] sm:$0xff] %vm1388, %v1564
  %1581 = vst.msk [vmem:[%s8 + $0x48] sm:$0xff] %vm1388, %v1565
  %1582 = vst.msk [vmem:[%s8 + $0x50] sm:$0xff] %vm1388, %v1566
  %1583 = vst.msk [vmem:[%s8 + $0x58] sm:$0xff] %vm1388, %v1567
  %1584 = vst.msk [vmem:[%s8 + $0x60] sm:$0xff] %vm1388, %v1568
  %1585 = vst.msk [vmem:[%s8 + $0x68] sm:$0xff] %vm1388, %v1569
  %1586 = vst.msk [vmem:[%s8 + $0x70] sm:$0xff] %vm1388, %v1570
  %1587 = vst.msk [vmem:[%s8 + $0x78] sm:$0xff] %vm1388, %v1571
  // Predicated region
  $region34: #{sphereface_block.2} parent=0 // pred_check
    _
  $region35: #{sphereface_block.2} parent=0 // pred_check_branch
    %1589 = sbr.rel (0) target = $region37
  $region36: #{sphereface_block.2} parent=0 // pred_region
    _
  $region37: #{sphereface_block.2} parent=0 // pred_fallthru
    _
  // Predicated region
  $region38: #{sphereface_block.2} parent=0 // pred_check
    _
  $region39: #{sphereface_block.2} parent=0 // pred_check_branch
    %1591 = sbr.rel (0) target = $region41
  $region40: #{sphereface_block.2} parent=0 // pred_region
    _
  $region41: #{sphereface_block.2} parent=0 // pred_fallthru
    _

// kernel: sphereface_block.3
$region0: #{sphereface_block.3}
  #allocation0 [shape = 'u32[]', space=smem, size = 0x4, offset = 0x4, fixed_abs, tag = 'smem constant byte address 0x4 - core index']
  #allocation1 [shape = 'u32[72,128]{1,0:T(1,128)}', space=vmem, size = 0x9000, scoped, tag = 'internal scratch']
  #allocation2 [shape = 'f32[2,10,10,8]{3,2,1,0:T(8,128)}', space=vmem, size = 0x28000, scoped, tag = 'scratch operand']
  %s0 = inlined_call_operand.vmem [shape: f32[128,8], index: 0, kind: input, shape index: {}, may-alias: {0,5}]
  %s1 = inlined_call_operand.vmem [shape: f32[3,9,8,8], index: 1, kind: input, shape index: {}]
  %s2 = inlined_call_operand.vmem [shape: f32[3,1,8], index: 2, kind: input, shape index: {}]
  %s3 = inlined_call_operand.vmem [shape: f32[3,1,8], index: 3, kind: input, shape index: {}]
  %s4 = inlined_call_operand.vmem [shape: f32[3,1,8], index: 4, kind: input, shape index: {}]
  %s5 = inlined_call_operand.vmem [shape: f32[128,8], index: 5, kind: output, shape index: {}, may-alias: {0,5}]
  %s6 = sld [smem:[#allocation0]]
  $region57: #{sphereface_block.3} parent=0
    _
  %s8 = ssub.s32 1, %s6
  %s9 = scalar_select 0, %s8, %s6
  loop: start=0, step=1, limit=4
  $region2: #{sphereface_block.3} parent=0 // loop_pre_header
    _
  $region3: #{sphereface_block.3} parent=0 // loop_header
    %s11 = sphi 0, %s15
    %p12 = scmp.ge.s32.totalorder %s11, 4
    %s19 = sphi 0, %s19
    %s21 = sphi 0, %s19
    %s22 = sphi 0, %s21
    %s36 = sphi 0, %s22
    %s40 = sphi 0, %s40
    %s42 = sphi 0, %s40
    %s43 = sphi 0, %s42
    %s57 = sphi 0, %s43
    %s61 = sphi 0, %s61
    %s63 = sphi 0, %s61
    %s64 = sphi 0, %s63
    %s78 = sphi 0, %s64
    %s82 = sphi 0, %s82
    %s84 = sphi 0, %s82
    %s85 = sphi 0, %s84
    %s99 = sphi 0, %s85
    %s103 = sphi 0, %s103
    %s105 = sphi 0, %s103
    %s106 = sphi 0, %s105
    %s120 = sphi 0, %s106
    %s124 = sphi 0, %s124
    %s126 = sphi 0, %s124
    %s127 = sphi 0, %s126
    %s141 = sphi 0, %s127
  $region4: #{sphereface_block.3} parent=0 // loop_header_branch
    %14 = sbr.rel (%p12) target = $region8
  $region5: #{sphereface_block.3} parent=0 // loop_body
    %s16 = ssub.s32 %s11, 1
    %s17 = ssub.s32 %s11, 2
    %s18 = sadd.s32 %s11, 1
    %s20 = sadd.s32 %s19, 1
    %p23 = scmp.eq.s32.totalorder %s11, 1
    %p24 = scmp.ne.s32.totalorder %s19, %s21
    %p25 = scmp.eq.s32.totalorder %s11, 0
    %p26 = por %p24, %p25
    %p27 = scmp.ne.s32.totalorder %s19, %s21
    %p28 = scmp.eq.s32.totalorder %s16, 1
    %p29 = por %p27, %p28
    %p30 = scmp.ne.s32.totalorder %s21, %s22
    %p31 = scmp.eq.s32.totalorder %s16, 0
    %p32 = por %p30, %p31
    %p33 = scmp.ne.s32.totalorder %s21, %s22
    %p34 = scmp.eq.s32.totalorder %s17, 1
    %p35 = por %p33, %p34
    %p37 = scmp.ne.s32.totalorder %s22, %s36
    %p38 = scmp.eq.s32.totalorder %s17, 0
    %p39 = por %p37, %p38
    %s41 = sadd.s32 %s40, 1
    %p44 = scmp.eq.s32.totalorder %s11, 1
    %p45 = scmp.ne.s32.totalorder %s40, %s42
    %p46 = scmp.eq.s32.totalorder %s11, 0
    %p47 = por %p45, %p46
    %p48 = scmp.ne.s32.totalorder %s40, %s42
    %p49 = scmp.eq.s32.totalorder %s16, 1
    %p50 = por %p48, %p49
    %p51 = scmp.ne.s32.totalorder %s42, %s43
    %p52 = scmp.eq.s32.totalorder %s16, 0
    %p53 = por %p51, %p52
    %p54 = scmp.ne.s32.totalorder %s42, %s43
    %p55 = scmp.eq.s32.totalorder %s17, 1
    %p56 = por %p54, %p55
    %p58 = scmp.ne.s32.totalorder %s43, %s57
    %p59 = scmp.eq.s32.totalorder %s17, 0
    %p60 = por %p58, %p59
    %s62 = sadd.s32 %s61, 1
    %p65 = scmp.eq.s32.totalorder %s11, 1
    %p66 = scmp.ne.s32.totalorder %s61, %s63
    %p67 = scmp.eq.s32.totalorder %s11, 0
    %p68 = por %p66, %p67
    %p69 = scmp.ne.s32.totalorder %s61, %s63
    %p70 = scmp.eq.s32.totalorder %s16, 1
    %p71 = por %p69, %p70
    %p72 = scmp.ne.s32.totalorder %s63, %s64
    %p73 = scmp.eq.s32.totalorder %s16, 0
    %p74 = por %p72, %p73
    %p75 = scmp.ne.s32.totalorder %s63, %s64
    %p76 = scmp.eq.s32.totalorder %s17, 1
    %p77 = por %p75, %p76
    %p79 = scmp.ne.s32.totalorder %s64, %s78
    %p80 = scmp.eq.s32.totalorder %s17, 0
    %p81 = por %p79, %p80
    %s83 = sadd.s32 %s82, 1
    %p86 = scmp.eq.s32.totalorder %s11, 1
    %p87 = scmp.ne.s32.totalorder %s82, %s84
    %p88 = scmp.eq.s32.totalorder %s11, 0
    %p89 = por %p87, %p88
    %p90 = scmp.ne.s32.totalorder %s82, %s84
    %p91 = scmp.eq.s32.totalorder %s16, 1
    %p92 = por %p90, %p91
    %p93 = scmp.ne.s32.totalorder %s84, %s85
    %p94 = scmp.eq.s32.totalorder %s16, 0
    %p95 = por %p93, %p94
    %p96 = scmp.ne.s32.totalorder %s84, %s85
    %p97 = scmp.eq.s32.totalorder %s17, 1
    %p98 = por %p96, %p97
    %p100 = scmp.ne.s32.totalorder %s85, %s99
    %p101 = scmp.eq.s32.totalorder %s17, 0
    %p102 = por %p100, %p101
    %s104 = sadd.s32 %s103, 1
    %p107 = scmp.eq.s32.totalorder %s11, 1
    %p108 = scmp.ne.s32.totalorder %s103, %s105
    %p109 = scmp.eq.s32.totalorder %s11, 0
    %p110 = por %p108, %p109
    %p111 = scmp.ne.s32.totalorder %s103, %s105
    %p112 = scmp.eq.s32.totalorder %s16, 1
    %p113 = por %p111, %p112
    %p114 = scmp.ne.s32.totalorder %s105, %s106
    %p115 = scmp.eq.s32.totalorder %s16, 0
    %p116 = por %p114, %p115
    %p117 = scmp.ne.s32.totalorder %s105, %s106
    %p118 = scmp.eq.s32.totalorder %s17, 1
    %p119 = por %p117, %p118
    %p121 = scmp.ne.s32.totalorder %s106, %s120
    %p122 = scmp.eq.s32.totalorder %s17, 0
    %p123 = por %p121, %p122
    %s125 = sadd.s32 %s124, 1
    %p128 = scmp.eq.s32.totalorder %s11, 1
    %p129 = scmp.ne.s32.totalorder %s124, %s126
    %p130 = scmp.eq.s32.totalorder %s11, 0
    %p131 = por %p129, %p130
    %p132 = scmp.ne.s32.totalorder %s124, %s126
    %p133 = scmp.eq.s32.totalorder %s16, 1
    %p134 = por %p132, %p133
    %p135 = scmp.ne.s32.totalorder %s126, %s127
    %p136 = scmp.eq.s32.totalorder %s16, 0
    %p137 = por %p135, %p136
    %p138 = scmp.ne.s32.totalorder %s126, %s127
    %p139 = scmp.eq.s32.totalorder %s17, 1
    %p140 = por %p138, %p139
    %p142 = scmp.ne.s32.totalorder %s127, %s141
    %p143 = scmp.eq.s32.totalorder %s17, 0
    %p144 = por %p142, %p143
    %p145 = scmp.le.s32.totalorder 1, %s11
    %p146 = scmp.lt.s32.totalorder %s11, 3
    %p147 = pnand %p145, %p146
    %p148 = pneg %p147
    // Predicated region
    $region9: #{sphereface_block.3} parent=5 // pred_check
      _
    $region10: #{sphereface_block.3} parent=5 // pred_check_branch
      %150 = sbr.rel (%p147) target = $region12
    $region11: #{sphereface_block.3} parent=5 // pred_region
      %s151 = ssub.s32 %s11, 1
      // Predicated region
      $region13: #{sphereface_block.3} parent=11 // pred_check
        %p152 = pneg %p32
      $region14: #{sphereface_block.3} parent=11 // pred_check_branch
        %154 = sbr.rel (%p152) target = $region16
      $region15: #{sphereface_block.3} parent=11 // pred_region
        _
      $region16: #{sphereface_block.3} parent=11 // pred_fallthru
        _
      // Predicated region
      $region17: #{sphereface_block.3} parent=11 // pred_check
        %p155 = pneg %p53
      $region18: #{sphereface_block.3} parent=11 // pred_check_branch
        %157 = sbr.rel (%p155) target = $region20
      $region19: #{sphereface_block.3} parent=11 // pred_region
        _
      $region20: #{sphereface_block.3} parent=11 // pred_fallthru
        _
      // Predicated region
      $region21: #{sphereface_block.3} parent=11 // pred_check
        %p158 = pneg %p74
      $region22: #{sphereface_block.3} parent=11 // pred_check_branch
        %160 = sbr.rel (%p158) target = $region24
      $region23: #{sphereface_block.3} parent=11 // pred_region
        _
      $region24: #{sphereface_block.3} parent=11 // pred_fallthru
        _
      // Predicated region
      $region25: #{sphereface_block.3} parent=11 // pred_check
        %p161 = pneg %p95
      $region26: #{sphereface_block.3} parent=11 // pred_check_branch
        %163 = sbr.rel (%p161) target = $region28
      $region27: #{sphereface_block.3} parent=11 // pred_region
        _
      $region28: #{sphereface_block.3} parent=11 // pred_fallthru
        _
      // Predicated region
      $region29: #{sphereface_block.3} parent=11 // pred_check
        %p164 = pneg %p116
      $region30: #{sphereface_block.3} parent=11 // pred_check_branch
        %166 = sbr.rel (%p164) target = $region32
      $region31: #{sphereface_block.3} parent=11 // pred_region
        _
      $region32: #{sphereface_block.3} parent=11 // pred_fallthru
        _
    $region12: #{sphereface_block.3} parent=5 // pred_fallthru
      _
    %p167 = scmp.lt.s32.totalorder %s11, 2
    // Predicated region
    $region33: #{sphereface_block.3} parent=5 // pred_check
      %p168 = pneg %p167
    $region34: #{sphereface_block.3} parent=5 // pred_check_branch
      %170 = sbr.rel (%p168) target = $region36
    $region35: #{sphereface_block.3} parent=5 // pred_region
      _
    $region36: #{sphereface_block.3} parent=5 // pred_fallthru
      _
    %p171 = scmp.le.s32.totalorder 1, %s11
    %p172 = scmp.lt.s32.totalorder %s11, 3
    %p173 = pnand %p171, %p172
    %p174 = pneg %p173
    // Predicated region
    $region37: #{sphereface_block.3} parent=5 // pred_check
      _
    $region38: #{sphereface_block.3} parent=5 // pred_check_branch
      %176 = sbr.rel (%p173) target = $region40
    $region39: #{sphereface_block.3} parent=5 // pred_region
      %s177 = ssub.s32 %s11, 1
      %p178 = pneg %p32
      %p179 = pneg %p29
      %p180 = pneg %p53
      %p181 = pneg %p50
      %p182 = pneg %p74
      %p183 = pneg %p71
      %p184 = pneg %p95
      %p185 = pneg %p92
      %p186 = pneg %p116
      %p187 = pneg %p113
      %p188 = pneg %p137
      %p189 = pneg %p134
      %p190 = scmp.eq.s32.totalorder %s16, 0
      // Predicated region
      $region41: #{sphereface_block.3} parent=39 // pred_check
        %p191 = pneg %p190
      $region42: #{sphereface_block.3} parent=39 // pred_check_branch
        %193 = sbr.rel (%p191) target = $region44
      $region43: #{sphereface_block.3} parent=39 // pred_region
        %v194 = vld [vmem:[%s0] sm:$0xff]
        %v195 = vld [vmem:[%s0 + $0x8] sm:$0xff]
        %v196 = vld [vmem:[%s0 + $0x10] sm:$0xff]
        %v197 = vld [vmem:[%s0 + $0x18] sm:$0xff]
        %v198 = vld [vmem:[%s0 + $0x20] sm:$0xff]
        %v199 = vld [vmem:[%s0 + $0x28] sm:$0xff]
        %v200 = vld [vmem:[%s0 + $0x30] sm:$0xff]
        %v201 = vld [vmem:[%s0 + $0x38] sm:$0xff]
        %v202 = vld [vmem:[%s0 + $0x40] sm:$0xff]
        %v203 = vld [vmem:[%s0 + $0x48] sm:$0xff]
        %v204 = vld [vmem:[%s0 + $0x50] sm:$0xff]
        %v205 = vld [vmem:[%s0 + $0x58] sm:$0xff]
        %v206 = vld [vmem:[%s0 + $0x60] sm:$0xff]
        %v207 = vld [vmem:[%s0 + $0x68] sm:$0xff]
        %v208 = vld [vmem:[%s0 + $0x70] sm:$0xff]
        %v209 = vld [vmem:[%s0 + $0x78] sm:$0xff]
        %vm210 = vcmask 64512
        %211 = vst.msk [vmem:[%s5] sm:$0xff] %vm210, %v194
        %212 = vst.msk [vmem:[%s5 + $0x8] sm:$0xff] %vm210, %v195
        %213 = vst.msk [vmem:[%s5 + $0x10] sm:$0xff] %vm210, %v196
        %214 = vst.msk [vmem:[%s5 + $0x18] sm:$0xff] %vm210, %v197
        %215 = vst.msk [vmem:[%s5 + $0x20] sm:$0xff] %vm210, %v198
        %216 = vst.msk [vmem:[%s5 + $0x28] sm:$0xff] %vm210, %v199
        %217 = vst.msk [vmem:[%s5 + $0x30] sm:$0xff] %vm210, %v200
        %218 = vst.msk [vmem:[%s5 + $0x38] sm:$0xff] %vm210, %v201
        %219 = vst.msk [vmem:[%s5 + $0x40] sm:$0xff] %vm210, %v202
        %220 = vst.msk [vmem:[%s5 + $0x48] sm:$0xff] %vm210, %v203
        %221 = vst.msk [vmem:[%s5 + $0x50] sm:$0xff] %vm210, %v204
        %222 = vst.msk [vmem:[%s5 + $0x58] sm:$0xff] %vm210, %v205
        %223 = vst.msk [vmem:[%s5 + $0x60] sm:$0xff] %vm210, %v206
        %224 = vst.msk [vmem:[%s5 + $0x68] sm:$0xff] %vm210, %v207
        %225 = vst.msk [vmem:[%s5 + $0x70] sm:$0xff] %vm210, %v208
        %226 = vst.msk [vmem:[%s5 + $0x78] sm:$0xff] %vm210, %v209
        %227 = vst.msk [vmem:[#allocation2] sm:$0xff] %vm210, 0.0
        %vm228 = vcmask 58368
        %229 = vst.msk [vmem:[#allocation2 + $0x8] sm:$0x3] %vm228, 0.0
        %230 = vst.msk [vmem:[#allocation2 + $0x10] sm:$0xff] %vm210, 0.0
        %231 = vst.msk [vmem:[#allocation2 + $0x18] sm:$0x3] %vm228, 0.0
        %232 = vst.msk [vmem:[#allocation2 + $0x20] sm:$0xff] %vm210, 0.0
        %233 = vst.msk [vmem:[#allocation2 + $0x28] sm:$0x3] %vm228, 0.0
        %234 = vst.msk [vmem:[#allocation2 + $0x30] sm:$0xff] %vm210, 0.0
        %235 = vst.msk [vmem:[#allocation2 + $0x38] sm:$0x3] %vm228, 0.0
        %236 = vst.msk [vmem:[#allocation2 + $0x40] sm:$0xff] %vm210, 0.0
        %237 = vst.msk [vmem:[#allocation2 + $0x48] sm:$0x3] %vm228, 0.0
        %238 = vst.msk [vmem:[#allocation2 + $0x50] sm:$0xff] %vm210, 0.0
        %239 = vst.msk [vmem:[#allocation2 + $0x58] sm:$0x3] %vm228, 0.0
        %240 = vst.msk [vmem:[#allocation2 + $0x60] sm:$0xff] %vm210, 0.0
        %241 = vst.msk [vmem:[#allocation2 + $0x68] sm:$0x3] %vm228, 0.0
        %242 = vst.msk [vmem:[#allocation2 + $0x70] sm:$0xff] %vm210, 0.0
        %243 = vst.msk [vmem:[#allocation2 + $0x78] sm:$0x3] %vm228, 0.0
        %244 = vst.msk [vmem:[#allocation2 + $0x80] sm:$0xff] %vm210, 0.0
        %245 = vst.msk [vmem:[#allocation2 + $0x88] sm:$0x3] %vm228, 0.0
        %246 = vst.msk [vmem:[#allocation2 + $0x90] sm:$0xff] %vm210, 0.0
        %247 = vst.msk [vmem:[#allocation2 + $0x98] sm:$0x3] %vm228, 0.0
        %248 = vst.msk [vmem:[#allocation2 + $0xa0] sm:$0xff] %vm210, 0.0
        %249 = vst.msk [vmem:[#allocation2 + $0xa8] sm:$0x3] %vm228, 0.0
        %250 = vst.msk [vmem:[#allocation2 + $0xb0] sm:$0xff] %vm210, 0.0
        %251 = vst.msk [vmem:[#allocation2 + $0xb8] sm:$0x3] %vm228, 0.0
        %252 = vst.msk [vmem:[#allocation2 + $0xc0] sm:$0xff] %vm210, 0.0
        %253 = vst.msk [vmem:[#allocation2 + $0xc8] sm:$0x3] %vm228, 0.0
        %254 = vst.msk [vmem:[#allocation2 + $0xd0] sm:$0xff] %vm210, 0.0
        %255 = vst.msk [vmem:[#allocation2 + $0xd8] sm:$0x3] %vm228, 0.0
        %256 = vst.msk [vmem:[#allocation2 + $0xe0] sm:$0xff] %vm210, 0.0
        %257 = vst.msk [vmem:[#allocation2 + $0xe8] sm:$0x3] %vm228, 0.0
        %258 = vst.msk [vmem:[#allocation2 + $0xf0] sm:$0xff] %vm210, 0.0
        %259 = vst.msk [vmem:[#allocation2 + $0xf8] sm:$0x3] %vm228, 0.0
        %260 = vst.msk [vmem:[#allocation2 + $0x100] sm:$0xff] %vm210, 0.0
        %261 = vst.msk [vmem:[#allocation2 + $0x108] sm:$0x3] %vm228, 0.0
        %262 = vst.msk [vmem:[#allocation2 + $0x110] sm:$0xff] %vm210, 0.0
        %263 = vst.msk [vmem:[#allocation2 + $0x118] sm:$0x3] %vm228, 0.0
        %264 = vst.msk [vmem:[#allocation2 + $0x120] sm:$0xff] %vm210, 0.0
        %265 = vst.msk [vmem:[#allocation2 + $0x128] sm:$0x3] %vm228, 0.0
        %266 = vst.msk [vmem:[#allocation2 + $0x130] sm:$0xff] %vm210, 0.0
        %267 = vst.msk [vmem:[#allocation2 + $0x138] sm:$0x3] %vm228, 0.0
      $region44: #{sphereface_block.3} parent=39 // pred_fallthru
        _
      %v268 = vld [vmem:[%s5] sm:$0xff]
      %v269 = vld [vmem:[%s5 + $0x8] sm:$0xff]
      %v270 = vld [vmem:[%s5 + $0x10] sm:$0xff]
      %v271 = vld [vmem:[%s5 + $0x18] sm:$0xff]
      %v272 = vld [vmem:[%s5 + $0x20] sm:$0xff]
      %v273 = vld [vmem:[%s5 + $0x28] sm:$0xff]
      %v274 = vld [vmem:[%s5 + $0x30] sm:$0xff]
      %v275 = vld [vmem:[%s5 + $0x38] sm:$0xff]
      %v276 = vld [vmem:[%s5 + $0x40] sm:$0xff]
      %v277 = vld [vmem:[%s5 + $0x48] sm:$0xff]
      %v278 = vld [vmem:[%s5 + $0x50] sm:$0xff]
      %v279 = vld [vmem:[%s5 + $0x58] sm:$0xff]
      %v280 = vld [vmem:[%s5 + $0x60] sm:$0xff]
      %v281 = vld [vmem:[%s5 + $0x68] sm:$0xff]
      %v282 = vld [vmem:[%s5 + $0x70] sm:$0xff]
      %v283 = vld [vmem:[%s5 + $0x78] sm:$0xff]
      %s284 = scalar_lea.vmem [#allocation2], 16
      %vm285 = vcmask 64512
      %286 = vst.msk [vmem:[%s284 + $0x1] sm:$0xff] %vm285, %v268
      %287 = vst.msk [vmem:[%s284 + $0x11] sm:$0xff] %vm285, %v269
      %288 = vst.msk [vmem:[%s284 + $0x21] sm:$0xff] %vm285, %v270
      %289 = vst.msk [vmem:[%s284 + $0x31] sm:$0xff] %vm285, %v271
      %290 = vst.msk [vmem:[%s284 + $0x41] sm:$0xff] %vm285, %v272
      %291 = vst.msk [vmem:[%s284 + $0x51] sm:$0xff] %vm285, %v273
      %292 = vst.msk [vmem:[%s284 + $0x61] sm:$0xff] %vm285, %v274
      %293 = vst.msk [vmem:[%s284 + $0x71] sm:$0xff] %vm285, %v275
      %294 = vst.msk [vmem:[%s284 + $0xa1] sm:$0xff] %vm285, %v276
      %295 = vst.msk [vmem:[%s284 + $0xb1] sm:$0xff] %vm285, %v277
      %296 = vst.msk [vmem:[%s284 + $0xc1] sm:$0xff] %vm285, %v278
      %297 = vst.msk [vmem:[%s284 + $0xd1] sm:$0xff] %vm285, %v279
      %298 = vst.msk [vmem:[%s284 + $0xe1] sm:$0xff] %vm285, %v280
      %299 = vst.msk [vmem:[%s284 + $0xf1] sm:$0xff] %vm285, %v281
      %300 = vst.msk [vmem:[%s284 + $0x101] sm:$0xff] %vm285, %v282
      %301 = vst.msk [vmem:[%s284 + $0x111] sm:$0xff] %vm285, %v283
      %v302 = vld [vmem:[#allocation2] sm:$0xff]
      %v303 = vld [vmem:[#allocation2 + $0x10] sm:$0xff]
      %v304 = vld [vmem:[#allocation2 + $0x20] sm:$0xff]
      %v305 = vld [vmem:[#allocation2 + $0x30] sm:$0xff]
      %v306 = vld [vmem:[#allocation2 + $0x40] sm:$0xff]
      %v307 = vld [vmem:[#allocation2 + $0x50] sm:$0xff]
      %v308 = vld [vmem:[#allocation2 + $0x60] sm:$0xff]
      %v309 = vld [vmem:[#allocation2 + $0x70] sm:$0xff]
      %v310 = vld [vmem:[#allocation2 + $0xa0] sm:$0xff]
      %v311 = vld [vmem:[#allocation2 + $0xb0] sm:$0xff]
      %v312 = vld [vmem:[#allocation2 + $0xc0] sm:$0xff]
      %v313 = vld [vmem:[#allocation2 + $0xd0] sm:$0xff]
      %v314 = vld [vmem:[#allocation2 + $0xe0] sm:$0xff]
      %v315 = vld [vmem:[#allocation2 + $0xf0] sm:$0xff]
      %v316 = vld [vmem:[#allocation2 + $0x100] sm:$0xff]
      %v317 = vld [vmem:[#allocation2 + $0x110] sm:$0xff]
      %v318 = vld [vmem:[%s1] sm:$0xff]
      %v319 = vld [vmem:[#allocation2 + $0x1] sm:$0xff]
      %v320 = vld [vmem:[#allocation2 + $0x11] sm:$0xff]
      %v321 = vld [vmem:[#allocation2 + $0x21] sm:$0xff]
      %v322 = vld [vmem:[#allocation2 + $0x31] sm:$0xff]
      %v323 = vld [vmem:[#allocation2 + $0x41] sm:$0xff]
      %v324 = vld [vmem:[#allocation2 + $0x51] sm:$0xff]
      %v325 = vld [vmem:[#allocation2 + $0x61] sm:$0xff]
      %v326 = vld [vmem:[#allocation2 + $0x71] sm:$0xff]
      %v327 = vld [vmem:[#allocation2 + $0xa1] sm:$0xff]
      %v328 = vld [vmem:[#allocation2 + $0xb1] sm:$0xff]
      %v329 = vld [vmem:[#allocation2 + $0xc1] sm:$0xff]
      %v330 = vld [vmem:[#allocation2 + $0xd1] sm:$0xff]
      %v331 = vld [vmem:[#allocation2 + $0xe1] sm:$0xff]
      %v332 = vld [vmem:[#allocation2 + $0xf1] sm:$0xff]
      %v333 = vld [vmem:[#allocation2 + $0x101] sm:$0xff]
      %v334 = vld [vmem:[#allocation2 + $0x111] sm:$0xff]
      %s335 = scalar_lea.vmem %s1, 8
      %v336 = vld [vmem:[%s335] sm:$0xff]
      %v338 = vsel %vm285, %v319, 0
      %v341 = vsel %vm285, %v320, 0
      %v344 = vsel %vm285, %v321, 0
      %v347 = vsel %vm285, %v322, 0
      %v350 = vsel %vm285, %v323, 0
      %v353 = vsel %vm285, %v324, 0
      %v356 = vsel %vm285, %v325, 0
      %v359 = vsel %vm285, %v326, 0
      %v362 = vsel %vm285, %v327, 0
      %v365 = vsel %vm285, %v328, 0
      %v368 = vsel %vm285, %v329, 0
      %v371 = vsel %vm285, %v330, 0
      %v374 = vsel %vm285, %v331, 0
      %v377 = vsel %vm285, %v332, 0
      %v380 = vsel %vm285, %v333, 0
      %v383 = vsel %vm285, %v334, 0
      %385 = vmatpush.msra.mxu0 0.0
      %386 = vmatpush.msra.mxu0 0.0
      %387 = vmatpush.msra.mxu0 0.0
      %388 = vmatpush.msra.mxu0 0.0
      %389 = vmatpush.msra.mxu0 0.0
      %390 = vmatpush.msra.mxu0 0.0
      %391 = vmatpush.msra.mxu0 0.0
      %392 = vmatpush.msra.mxu0 0.0
      %393 = vmatpush.msra.mxu0 0.0
      %394 = vmatpush.msra.mxu0 0.0
      %395 = vmatpush.msra.mxu0 0.0
      %396 = vmatpush.msra.mxu0 0.0
      %397 = vmatpush.msra.mxu0 0.0
      %398 = vmatpush.msra.mxu0 0.0
      %399 = vmatpush.msra.mxu0 0.0
      %400 = vmatpush.msra.mxu0 %v336
      %401 = vmatmul.f32.gmra.mxu0 %v338
      %v402 = vpop.f32.mrf.mxu0
      %v403 = vadd.f32 0.0, %v402
      %404 = vmatmul.f32.gmra.mxu0 %v341
      %v405 = vpop.f32.mrf.mxu0
      %v406 = vadd.f32 0.0, %v405
      %407 = vmatmul.f32.gmra.mxu0 %v344
      %v408 = vpop.f32.mrf.mxu0
      %v409 = vadd.f32 0.0, %v408
      %410 = vmatmul.f32.gmra.mxu0 %v347
      %v411 = vpop.f32.mrf.mxu0
      %v412 = vadd.f32 0.0, %v411
      %413 = vmatmul.f32.gmra.mxu0 %v350
      %v414 = vpop.f32.mrf.mxu0
      %v415 = vadd.f32 0.0, %v414
      %416 = vmatmul.f32.gmra.mxu0 %v353
      %v417 = vpop.f32.mrf.mxu0
      %v418 = vadd.f32 0.0, %v417
      %419 = vmatmul.f32.gmra.mxu0 %v356
      %v420 = vpop.f32.mrf.mxu0
      %v421 = vadd.f32 0.0, %v420
      %422 = vmatmul.f32.gmra.mxu0 %v359
      %v423 = vpop.f32.mrf.mxu0
      %v424 = vadd.f32 0.0, %v423
      %425 = vmatmul.f32.gmra.mxu0 %v362
      %v426 = vpop.f32.mrf.mxu0
      %v427 = vadd.f32 0.0, %v426
      %428 = vmatmul.f32.gmra.mxu0 %v365
      %v429 = vpop.f32.mrf.mxu0
      %v430 = vadd.f32 0.0, %v429
      %431 = vmatmul.f32.gmra.mxu0 %v368
      %v432 = vpop.f32.mrf.mxu0
      %v433 = vadd.f32 0.0, %v432
      %434 = vmatmul.f32.gmra.mxu0 %v371
      %v435 = vpop.f32.mrf.mxu0
      %v436 = vadd.f32 0.0, %v435
      %437 = vmatmul.f32.gmra.mxu0 %v374
      %v438 = vpop.f32.mrf.mxu0
      %v439 = vadd.f32 0.0, %v438
      %440 = vmatmul.f32.gmra.mxu0 %v377
      %v441 = vpop.f32.mrf.mxu0
      %v442 = vadd.f32 0.0, %v441
      %443 = vmatmul.f32.gmra.mxu0 %v380
      %v444 = vpop.f32.mrf.mxu0
      %v445 = vadd.f32 0.0, %v444
      %446 = vmatmul.f32.gmra.mxu0 %v383
      %v447 = vpop.f32.mrf.mxu0
      %v448 = vadd.f32 0.0, %v447
      %449 = vdwg.mxu0
      %v451 = vsel %vm285, %v302, 0
      %v454 = vsel %vm285, %v303, 0
      %v457 = vsel %vm285, %v304, 0
      %v460 = vsel %vm285, %v305, 0
      %v463 = vsel %vm285, %v306, 0
      %v466 = vsel %vm285, %v307, 0
      %v469 = vsel %vm285, %v308, 0
      %v472 = vsel %vm285, %v309, 0
      %v475 = vsel %vm285, %v310, 0
      %v478 = vsel %vm285, %v311, 0
      %v481 = vsel %vm285, %v312, 0
      %v484 = vsel %vm285, %v313, 0
      %v487 = vsel %vm285, %v314, 0
      %v490 = vsel %vm285, %v315, 0
      %v493 = vsel %vm285, %v316, 0
      %v496 = vsel %vm285, %v317, 0
      %498 = vmatpush.msra.mxu0 0.0
      %499 = vmatpush.msra.mxu0 0.0
      %500 = vmatpush.msra.mxu0 0.0
      %501 = vmatpush.msra.mxu0 0.0
      %502 = vmatpush.msra.mxu0 0.0
      %503 = vmatpush.msra.mxu0 0.0
      %504 = vmatpush.msra.mxu0 0.0
      %505 = vmatpush.msra.mxu0 0.0
      %506 = vmatpush.msra.mxu0 0.0
      %507 = vmatpush.msra.mxu0 0.0
      %508 = vmatpush.msra.mxu0 0.0
      %509 = vmatpush.msra.mxu0 0.0
      %510 = vmatpush.msra.mxu0 0.0
      %511 = vmatpush.msra.mxu0 0.0
      %512 = vmatpush.msra.mxu0 0.0
      %513 = vmatpush.msra.mxu0 %v318
      %514 = vmatmul.f32.gmra.mxu0 %v451
      %v515 = vpop.f32.mrf.mxu0
      %v516 = vadd.f32 %v403, %v515
      %517 = vmatmul.f32.gmra.mxu0 %v454
      %v518 = vpop.f32.mrf.mxu0
      %v519 = vadd.f32 %v406, %v518
      %520 = vmatmul.f32.gmra.mxu0 %v457
      %v521 = vpop.f32.mrf.mxu0
      %v522 = vadd.f32 %v409, %v521
      %523 = vmatmul.f32.gmra.mxu0 %v460
      %v524 = vpop.f32.mrf.mxu0
      %v525 = vadd.f32 %v412, %v524
      %526 = vmatmul.f32.gmra.mxu0 %v463
      %v527 = vpop.f32.mrf.mxu0
      %v528 = vadd.f32 %v415, %v527
      %529 = vmatmul.f32.gmra.mxu0 %v466
      %v530 = vpop.f32.mrf.mxu0
      %v531 = vadd.f32 %v418, %v530
      %532 = vmatmul.f32.gmra.mxu0 %v469
      %v533 = vpop.f32.mrf.mxu0
      %v534 = vadd.f32 %v421, %v533
      %535 = vmatmul.f32.gmra.mxu0 %v472
      %v536 = vpop.f32.mrf.mxu0
      %v537 = vadd.f32 %v424, %v536
      %538 = vmatmul.f32.gmra.mxu0 %v475
      %v539 = vpop.f32.mrf.mxu0
      %v540 = vadd.f32 %v427, %v539
      %541 = vmatmul.f32.gmra.mxu0 %v478
      %v542 = vpop.f32.mrf.mxu0
      %v543 = vadd.f32 %v430, %v542
      %544 = vmatmul.f32.gmra.mxu0 %v481
      %v545 = vpop.f32.mrf.mxu0
      %v546 = vadd.f32 %v433, %v545
      %547 = vmatmul.f32.gmra.mxu0 %v484
      %v548 = vpop.f32.mrf.mxu0
      %v549 = vadd.f32 %v436, %v548
      %550 = vmatmul.f32.gmra.mxu0 %v487
      %v551 = vpop.f32.mrf.mxu0
      %v552 = vadd.f32 %v439, %v551
      %553 = vmatmul.f32.gmra.mxu0 %v490
      %v554 = vpop.f32.mrf.mxu0
      %v555 = vadd.f32 %v442, %v554
      %556 = vmatmul.f32.gmra.mxu0 %v493
      %v557 = vpop.f32.mrf.mxu0
      %v558 = vadd.f32 %v445, %v557
      %559 = vmatmul.f32.gmra.mxu0 %v496
      %v560 = vpop.f32.mrf.mxu0
      %v561 = vadd.f32 %v448, %v560
      %562 = vdwg.mxu0
      %v563 = vld [vmem:[#allocation2 + $0x2] sm:$0xff]
      %v564 = vld [vmem:[#allocation2 + $0x12] sm:$0xff]
      %v565 = vld [vmem:[#allocation2 + $0x22] sm:$0xff]
      %v566 = vld [vmem:[#allocation2 + $0x32] sm:$0xff]
      %v567 = vld [vmem:[#allocation2 + $0x42] sm:$0xff]
      %v568 = vld [vmem:[#allocation2 + $0x52] sm:$0xff]
      %v569 = vld [vmem:[#allocation2 + $0x62] sm:$0xff]
      %v570 = vld [vmem:[#allocation2 + $0x72] sm:$0xff]
      %v571 = vld [vmem:[#allocation2 + $0xa2] sm:$0xff]
      %v572 = vld [vmem:[#allocation2 + $0xb2] sm:$0xff]
      %v573 = vld [vmem:[#allocation2 + $0xc2] sm:$0xff]
      %v574 = vld [vmem:[#allocation2 + $0xd2] sm:$0xff]
      %v575 = vld [vmem:[#allocation2 + $0xe2] sm:$0xff]
      %v576 = vld [vmem:[#allocation2 + $0xf2] sm:$0xff]
      %v577 = vld [vmem:[#allocation2 + $0x102] sm:$0xff]
      %v578 = vld [vmem:[#allocation2 + $0x112] sm:$0xff]
      %s579 = scalar_lea.vmem %s1, 16
      %v580 = vld [vmem:[%s579] sm:$0xff]
      %v582 = vsel %vm285, %v563, 0
      %v585 = vsel %vm285, %v564, 0
      %v588 = vsel %vm285, %v565, 0
      %v591 = vsel %vm285, %v566, 0
      %v594 = vsel %vm285, %v567, 0
      %v597 = vsel %vm285, %v568, 0
      %v600 = vsel %vm285, %v569, 0
      %v603 = vsel %vm285, %v570, 0
      %v606 = vsel %vm285, %v571, 0
      %v609 = vsel %vm285, %v572, 0
      %v612 = vsel %vm285, %v573, 0
      %v615 = vsel %vm285, %v574, 0
      %v618 = vsel %vm285, %v575, 0
      %v621 = vsel %vm285, %v576, 0
      %v624 = vsel %vm285, %v577, 0
      %v627 = vsel %vm285, %v578, 0
      %629 = vmatpush.msra.mxu0 0.0
      %630 = vmatpush.msra.mxu0 0.0
      %631 = vmatpush.msra.mxu0 0.0
      %632 = vmatpush.msra.mxu0 0.0
      %633 = vmatpush.msra.mxu0 0.0
      %634 = vmatpush.msra.mxu0 0.0
      %635 = vmatpush.msra.mxu0 0.0
      %636 = vmatpush.msra.mxu0 0.0
      %637 = vmatpush.msra.mxu0 0.0
      %638 = vmatpush.msra.mxu0 0.0
      %639 = vmatpush.msra.mxu0 0.0
      %640 = vmatpush.msra.mxu0 0.0
      %641 = vmatpush.msra.mxu0 0.0
      %642 = vmatpush.msra.mxu0 0.0
      %643 = vmatpush.msra.mxu0 0.0
      %644 = vmatpush.msra.mxu0 %v580
      %645 = vmatmul.f32.gmra.mxu0 %v582
      %v646 = vpop.f32.mrf.mxu0
      %v647 = vadd.f32 0.0, %v646
      %648 = vmatmul.f32.gmra.mxu0 %v585
      %v649 = vpop.f32.mrf.mxu0
      %v650 = vadd.f32 0.0, %v649
      %651 = vmatmul.f32.gmra.mxu0 %v588
      %v652 = vpop.f32.mrf.mxu0
      %v653 = vadd.f32 0.0, %v652
      %654 = vmatmul.f32.gmra.mxu0 %v591
      %v655 = vpop.f32.mrf.mxu0
      %v656 = vadd.f32 0.0, %v655
      %657 = vmatmul.f32.gmra.mxu0 %v594
      %v658 = vpop.f32.mrf.mxu0
      %v659 = vadd.f32 0.0, %v658
      %660 = vmatmul.f32.gmra.mxu0 %v597
      %v661 = vpop.f32.mrf.mxu0
      %v662 = vadd.f32 0.0, %v661
      %663 = vmatmul.f32.gmra.mxu0 %v600
      %v664 = vpop.f32.mrf.mxu0
      %v665 = vadd.f32 0.0, %v664
      %666 = vmatmul.f32.gmra.mxu0 %v603
      %v667 = vpop.f32.mrf.mxu0
      %v668 = vadd.f32 0.0, %v667
      %669 = vmatmul.f32.gmra.mxu0 %v606
      %v670 = vpop.f32.mrf.mxu0
      %v671 = vadd.f32 0.0, %v670
      %672 = vmatmul.f32.gmra.mxu0 %v609
      %v673 = vpop.f32.mrf.mxu0
      %v674 = vadd.f32 0.0, %v673
      %675 = vmatmul.f32.gmra.mxu0 %v612
      %v676 = vpop.f32.mrf.mxu0
      %v677 = vadd.f32 0.0, %v676
      %678 = vmatmul.f32.gmra.mxu0 %v615
      %v679 = vpop.f32.mrf.mxu0
      %v680 = vadd.f32 0.0, %v679
      %681 = vmatmul.f32.gmra.mxu0 %v618
      %v682 = vpop.f32.mrf.mxu0
      %v683 = vadd.f32 0.0, %v682
      %684 = vmatmul.f32.gmra.mxu0 %v621
      %v685 = vpop.f32.mrf.mxu0
      %v686 = vadd.f32 0.0, %v685
      %687 = vmatmul.f32.gmra.mxu0 %v624
      %v688 = vpop.f32.mrf.mxu0
      %v689 = vadd.f32 0.0, %v688
      %690 = vmatmul.f32.gmra.mxu0 %v627
      %v691 = vpop.f32.mrf.mxu0
      %v692 = vadd.f32 0.0, %v691
      %693 = vdwg.mxu0
      %v694 = vadd.f32 %v516, %v647
      %v695 = vadd.f32 %v519, %v650
      %v696 = vadd.f32 %v522, %v653
      %v697 = vadd.f32 %v525, %v656
      %v698 = vadd.f32 %v528, %v659
      %v699 = vadd.f32 %v531, %v662
      %v700 = vadd.f32 %v534, %v665
      %v701 = vadd.f32 %v537, %v668
      %v702 = vadd.f32 %v540, %v671
      %v703 = vadd.f32 %v543, %v674
      %v704 = vadd.f32 %v546, %v677
      %v705 = vadd.f32 %v549, %v680
      %v706 = vadd.f32 %v552, %v683
      %v707 = vadd.f32 %v555, %v686
      %v708 = vadd.f32 %v558, %v689
      %v709 = vadd.f32 %v561, %v692
      %v710 = vld [vmem:[%s284] sm:$0xff]
      %v711 = vld [vmem:[%s284 + $0x10] sm:$0xff]
      %v712 = vld [vmem:[%s284 + $0x20] sm:$0xff]
      %v713 = vld [vmem:[%s284 + $0x30] sm:$0xff]
      %v714 = vld [vmem:[%s284 + $0x40] sm:$0xff]
      %v715 = vld [vmem:[%s284 + $0x50] sm:$0xff]
      %v716 = vld [vmem:[%s284 + $0x60] sm:$0xff]
      %v717 = vld [vmem:[%s284 + $0x70] sm:$0xff]
      %v718 = vld [vmem:[%s284 + $0xa0] sm:$0xff]
      %v719 = vld [vmem:[%s284 + $0xb0] sm:$0xff]
      %v720 = vld [vmem:[%s284 + $0xc0] sm:$0xff]
      %v721 = vld [vmem:[%s284 + $0xd0] sm:$0xff]
      %v722 = vld [vmem:[%s284 + $0xe0] sm:$0xff]
      %v723 = vld [vmem:[%s284 + $0xf0] sm:$0xff]
      %v724 = vld [vmem:[%s284 + $0x100] sm:$0xff]
      %v725 = vld [vmem:[%s284 + $0x110] sm:$0xff]
      %s726 = scalar_lea.vmem %s1, 24
      %v727 = vld [vmem:[%s726] sm:$0xff]
      %v729 = vsel %vm285, %v710, 0
      %v732 = vsel %vm285, %v711, 0
      %v735 = vsel %vm285, %v712, 0
      %v738 = vsel %vm285, %v713, 0
      %v741 = vsel %vm285, %v714, 0
      %v744 = vsel %vm285, %v715, 0
      %v747 = vsel %vm285, %v716, 0
      %v750 = vsel %vm285, %v717, 0
      %v753 = vsel %vm285, %v718, 0
      %v756 = vsel %vm285, %v719, 0
      %v759 = vsel %vm285, %v720, 0
      %v762 = vsel %vm285, %v721, 0
      %v765 = vsel %vm285, %v722, 0
      %v768 = vsel %vm285, %v723, 0
      %v771 = vsel %vm285, %v724, 0
      %v774 = vsel %vm285, %v725, 0
      %776 = vmatpush.msra.mxu0 0.0
      %777 = vmatpush.msra.mxu0 0.0
      %778 = vmatpush.msra.mxu0 0.0
      %779 = vmatpush.msra.mxu0 0.0
      %780 = vmatpush.msra.mxu0 0.0
      %781 = vmatpush.msra.mxu0 0.0
      %782 = vmatpush.msra.mxu0 0.0
      %783 = vmatpush.msra.mxu0 0.0
      %784 = vmatpush.msra.mxu0 0.0
      %785 = vmatpush.msra.mxu0 0.0
      %786 = vmatpush.msra.mxu0 0.0
      %787 = vmatpush.msra.mxu0 0.0
      %788 = vmatpush.msra.mxu0 0.0
      %789 = vmatpush.msra.mxu0 0.0
      %790 = vmatpush.msra.mxu0 0.0
      %791 = vmatpush.msra.mxu0 %v727
      %792 = vmatmul.f32.gmra.mxu0 %v729
      %v793 = vpop.f32.mrf.mxu0
      %v794 = vadd.f32 0.0, %v793
      %795 = vmatmul.f32.gmra.mxu0 %v732
      %v796 = vpop.f32.mrf.mxu0
      %v797 = vadd.f32 0.0, %v796
      %798 = vmatmul.f32.gmra.mxu0 %v735
      %v799 = vpop.f32.mrf.mxu0
      %v800 = vadd.f32 0.0, %v799
      %801 = vmatmul.f32.gmra.mxu0 %v738
      %v802 = vpop.f32.mrf.mxu0
      %v803 = vadd.f32 0.0, %v802
      %804 = vmatmul.f32.gmra.mxu0 %v741
      %v805 = vpop.f32.mrf.mxu0
      %v806 = vadd.f32 0.0, %v805
      %807 = vmatmul.f32.gmra.mxu0 %v744
      %v808 = vpop.f32.mrf.mxu0
      %v809 = vadd.f32 0.0, %v808
      %810 = vmatmul.f32.gmra.mxu0 %v747
      %v811 = vpop.f32.mrf.mxu0
      %v812 = vadd.f32 0.0, %v811
      %813 = vmatmul.f32.gmra.mxu0 %v750
      %v814 = vpop.f32.mrf.mxu0
      %v815 = vadd.f32 0.0, %v814
      %816 = vmatmul.f32.gmra.mxu0 %v753
      %v817 = vpop.f32.mrf.mxu0
      %v818 = vadd.f32 0.0, %v817
      %819 = vmatmul.f32.gmra.mxu0 %v756
      %v820 = vpop.f32.mrf.mxu0
      %v821 = vadd.f32 0.0, %v820
      %822 = vmatmul.f32.gmra.mxu0 %v759
      %v823 = vpop.f32.mrf.mxu0
      %v824 = vadd.f32 0.0, %v823
      %825 = vmatmul.f32.gmra.mxu0 %v762
      %v826 = vpop.f32.mrf.mxu0
      %v827 = vadd.f32 0.0, %v826
      %828 = vmatmul.f32.gmra.mxu0 %v765
      %v829 = vpop.f32.mrf.mxu0
      %v830 = vadd.f32 0.0, %v829
      %831 = vmatmul.f32.gmra.mxu0 %v768
      %v832 = vpop.f32.mrf.mxu0
      %v833 = vadd.f32 0.0, %v832
      %834 = vmatmul.f32.gmra.mxu0 %v771
      %v835 = vpop.f32.mrf.mxu0
      %v836 = vadd.f32 0.0, %v835
      %837 = vmatmul.f32.gmra.mxu0 %v774
      %v838 = vpop.f32.mrf.mxu0
      %v839 = vadd.f32 0.0, %v838
      %840 = vdwg.mxu0
      %v841 = vadd.f32 %v694, %v794
      %v842 = vadd.f32 %v695, %v797
      %v843 = vadd.f32 %v696, %v800
      %v844 = vadd.f32 %v697, %v803
      %v845 = vadd.f32 %v698, %v806
      %v846 = vadd.f32 %v699, %v809
      %v847 = vadd.f32 %v700, %v812
      %v848 = vadd.f32 %v701, %v815
      %v849 = vadd.f32 %v702, %v818
      %v850 = vadd.f32 %v703, %v821
      %v851 = vadd.f32 %v704, %v824
      %v852 = vadd.f32 %v705, %v827
      %v853 = vadd.f32 %v706, %v830
      %v854 = vadd.f32 %v707, %v833
      %v855 = vadd.f32 %v708, %v836
      %v856 = vadd.f32 %v709, %v839
      %v857 = vld [vmem:[%s284 + $0x1] sm:$0xff]
      %v858 = vld [vmem:[%s284 + $0x11] sm:$0xff]
      %v859 = vld [vmem:[%s284 + $0x21] sm:$0xff]
      %v860 = vld [vmem:[%s284 + $0x31] sm:$0xff]
      %v861 = vld [vmem:[%s284 + $0x41] sm:$0xff]
      %v862 = vld [vmem:[%s284 + $0x51] sm:$0xff]
      %v863 = vld [vmem:[%s284 + $0x61] sm:$0xff]
      %v864 = vld [vmem:[%s284 + $0x71] sm:$0xff]
      %v865 = vld [vmem:[%s284 + $0xa1] sm:$0xff]
      %v866 = vld [vmem:[%s284 + $0xb1] sm:$0xff]
      %v867 = vld [vmem:[%s284 + $0xc1] sm:$0xff]
      %v868 = vld [vmem:[%s284 + $0xd1] sm:$0xff]
      %v869 = vld [vmem:[%s284 + $0xe1] sm:$0xff]
      %v870 = vld [vmem:[%s284 + $0xf1] sm:$0xff]
      %v871 = vld [vmem:[%s284 + $0x101] sm:$0xff]
      %v872 = vld [vmem:[%s284 + $0x111] sm:$0xff]
      %s873 = scalar_lea.vmem %s1, 32
      %v874 = vld [vmem:[%s873] sm:$0xff]
      %v876 = vsel %vm285, %v857, 0
      %v879 = vsel %vm285, %v858, 0
      %v882 = vsel %vm285, %v859, 0
      %v885 = vsel %vm285, %v860, 0
      %v888 = vsel %vm285, %v861, 0
      %v891 = vsel %vm285, %v862, 0
      %v894 = vsel %vm285, %v863, 0
      %v897 = vsel %vm285, %v864, 0
      %v900 = vsel %vm285, %v865, 0
      %v903 = vsel %vm285, %v866, 0
      %v906 = vsel %vm285, %v867, 0
      %v909 = vsel %vm285, %v868, 0
      %v912 = vsel %vm285, %v869, 0
      %v915 = vsel %vm285, %v870, 0
      %v918 = vsel %vm285, %v871, 0
      %v921 = vsel %vm285, %v872, 0
      %923 = vmatpush.msra.mxu0 0.0
      %924 = vmatpush.msra.mxu0 0.0
      %925 = vmatpush.msra.mxu0 0.0
      %926 = vmatpush.msra.mxu0 0.0
      %927 = vmatpush.msra.mxu0 0.0
      %928 = vmatpush.msra.mxu0 0.0
      %929 = vmatpush.msra.mxu0 0.0
      %930 = vmatpush.msra.mxu0 0.0
      %931 = vmatpush.msra.mxu0 0.0
      %932 = vmatpush.msra.mxu0 0.0
      %933 = vmatpush.msra.mxu0 0.0
      %934 = vmatpush.msra.mxu0 0.0
      %935 = vmatpush.msra.mxu0 0.0
      %936 = vmatpush.msra.mxu0 0.0
      %937 = vmatpush.msra.mxu0 0.0
      %938 = vmatpush.msra.mxu0 %v874
      %939 = vmatmul.f32.gmra.mxu0 %v876
      %v940 = vpop.f32.mrf.mxu0
      %v941 = vadd.f32 0.0, %v940
      %942 = vmatmul.f32.gmra.mxu0 %v879
      %v943 = vpop.f32.mrf.mxu0
      %v944 = vadd.f32 0.0, %v943
      %945 = vmatmul.f32.gmra.mxu0 %v882
      %v946 = vpop.f32.mrf.mxu0
      %v947 = vadd.f32 0.0, %v946
      %948 = vmatmul.f32.gmra.mxu0 %v885
      %v949 = vpop.f32.mrf.mxu0
      %v950 = vadd.f32 0.0, %v949
      %951 = vmatmul.f32.gmra.mxu0 %v888
      %v952 = vpop.f32.mrf.mxu0
      %v953 = vadd.f32 0.0, %v952
      %954 = vmatmul.f32.gmra.mxu0 %v891
      %v955 = vpop.f32.mrf.mxu0
      %v956 = vadd.f32 0.0, %v955
      %957 = vmatmul.f32.gmra.mxu0 %v894
      %v958 = vpop.f32.mrf.mxu0
      %v959 = vadd.f32 0.0, %v958
      %960 = vmatmul.f32.gmra.mxu0 %v897
      %v961 = vpop.f32.mrf.mxu0
      %v962 = vadd.f32 0.0, %v961
      %963 = vmatmul.f32.gmra.mxu0 %v900
      %v964 = vpop.f32.mrf.mxu0
      %v965 = vadd.f32 0.0, %v964
      %966 = vmatmul.f32.gmra.mxu0 %v903
      %v967 = vpop.f32.mrf.mxu0
      %v968 = vadd.f32 0.0, %v967
      %969 = vmatmul.f32.gmra.mxu0 %v906
      %v970 = vpop.f32.mrf.mxu0
      %v971 = vadd.f32 0.0, %v970
      %972 = vmatmul.f32.gmra.mxu0 %v909
      %v973 = vpop.f32.mrf.mxu0
      %v974 = vadd.f32 0.0, %v973
      %975 = vmatmul.f32.gmra.mxu0 %v912
      %v976 = vpop.f32.mrf.mxu0
      %v977 = vadd.f32 0.0, %v976
      %978 = vmatmul.f32.gmra.mxu0 %v915
      %v979 = vpop.f32.mrf.mxu0
      %v980 = vadd.f32 0.0, %v979
      %981 = vmatmul.f32.gmra.mxu0 %v918
      %v982 = vpop.f32.mrf.mxu0
      %v983 = vadd.f32 0.0, %v982
      %984 = vmatmul.f32.gmra.mxu0 %v921
      %v985 = vpop.f32.mrf.mxu0
      %v986 = vadd.f32 0.0, %v985
      %987 = vdwg.mxu0
      %v988 = vadd.f32 %v841, %v941
      %v989 = vadd.f32 %v842, %v944
      %v990 = vadd.f32 %v843, %v947
      %v991 = vadd.f32 %v844, %v950
      %v992 = vadd.f32 %v845, %v953
      %v993 = vadd.f32 %v846, %v956
      %v994 = vadd.f32 %v847, %v959
      %v995 = vadd.f32 %v848, %v962
      %v996 = vadd.f32 %v849, %v965
      %v997 = vadd.f32 %v850, %v968
      %v998 = vadd.f32 %v851, %v971
      %v999 = vadd.f32 %v852, %v974
      %v1000 = vadd.f32 %v853, %v977
      %v1001 = vadd.f32 %v854, %v980
      %v1002 = vadd.f32 %v855, %v983
      %v1003 = vadd.f32 %v856, %v986
      %v1004 = vld [vmem:[%s284 + $0x2] sm:$0xff]
      %v1005 = vld [vmem:[%s284 + $0x12] sm:$0xff]
      %v1006 = vld [vmem:[%s284 + $0x22] sm:$0xff]
      %v1007 = vld [vmem:[%s284 + $0x32] sm:$0xff]
      %v1008 = vld [vmem:[%s284 + $0x42] sm:$0xff]
      %v1009 = vld [vmem:[%s284 + $0x52] sm:$0xff]
      %v1010 = vld [vmem:[%s284 + $0x62] sm:$0xff]
      %v1011 = vld [vmem:[%s284 + $0x72] sm:$0xff]
      %v1012 = vld [vmem:[%s284 + $0xa2] sm:$0xff]
      %v1013 = vld [vmem:[%s284 + $0xb2] sm:$0xff]
      %v1014 = vld [vmem:[%s284 + $0xc2] sm:$0xff]
      %v1015 = vld [vmem:[%s284 + $0xd2] sm:$0xff]
      %v1016 = vld [vmem:[%s284 + $0xe2] sm:$0xff]
      %v1017 = vld [vmem:[%s284 + $0xf2] sm:$0xff]
      %v1018 = vld [vmem:[%s284 + $0x102] sm:$0xff]
      %v1019 = vld [vmem:[%s284 + $0x112] sm:$0xff]
      %s1020 = scalar_lea.vmem %s1, 40
      %v1021 = vld [vmem:[%s1020] sm:$0xff]
      %v1023 = vsel %vm285, %v1004, 0
      %v1026 = vsel %vm285, %v1005, 0
      %v1029 = vsel %vm285, %v1006, 0
      %v1032 = vsel %vm285, %v1007, 0
      %v1035 = vsel %vm285, %v1008, 0
      %v1038 = vsel %vm285, %v1009, 0
      %v1041 = vsel %vm285, %v1010, 0
      %v1044 = vsel %vm285, %v1011, 0
      %v1047 = vsel %vm285, %v1012, 0
      %v1050 = vsel %vm285, %v1013, 0
      %v1053 = vsel %vm285, %v1014, 0
      %v1056 = vsel %vm285, %v1015, 0
      %v1059 = vsel %vm285, %v1016, 0
      %v1062 = vsel %vm285, %v1017, 0
      %v1065 = vsel %vm285, %v1018, 0
      %v1068 = vsel %vm285, %v1019, 0
      %1070 = vmatpush.msra.mxu0 0.0
      %1071 = vmatpush.msra.mxu0 0.0
      %1072 = vmatpush.msra.mxu0 0.0
      %1073 = vmatpush.msra.mxu0 0.0
      %1074 = vmatpush.msra.mxu0 0.0
      %1075 = vmatpush.msra.mxu0 0.0
      %1076 = vmatpush.msra.mxu0 0.0
      %1077 = vmatpush.msra.mxu0 0.0
      %1078 = vmatpush.msra.mxu0 0.0
      %1079 = vmatpush.msra.mxu0 0.0
      %1080 = vmatpush.msra.mxu0 0.0
      %1081 = vmatpush.msra.mxu0 0.0
      %1082 = vmatpush.msra.mxu0 0.0
      %1083 = vmatpush.msra.mxu0 0.0
      %1084 = vmatpush.msra.mxu0 0.0
      %1085 = vmatpush.msra.mxu0 %v1021
      %1086 = vmatmul.f32.gmra.mxu0 %v1023
      %v1087 = vpop.f32.mrf.mxu0
      %v1088 = vadd.f32 0.0, %v1087
      %1089 = vmatmul.f32.gmra.mxu0 %v1026
      %v1090 = vpop.f32.mrf.mxu0
      %v1091 = vadd.f32 0.0, %v1090
      %1092 = vmatmul.f32.gmra.mxu0 %v1029
      %v1093 = vpop.f32.mrf.mxu0
      %v1094 = vadd.f32 0.0, %v1093
      %1095 = vmatmul.f32.gmra.mxu0 %v1032
      %v1096 = vpop.f32.mrf.mxu0
      %v1097 = vadd.f32 0.0, %v1096
      %1098 = vmatmul.f32.gmra.mxu0 %v1035
      %v1099 = vpop.f32.mrf.mxu0
      %v1100 = vadd.f32 0.0, %v1099
      %1101 = vmatmul.f32.gmra.mxu0 %v1038
      %v1102 = vpop.f32.mrf.mxu0
      %v1103 = vadd.f32 0.0, %v1102
      %1104 = vmatmul.f32.gmra.mxu0 %v1041
      %v1105 = vpop.f32.mrf.mxu0
      %v1106 = vadd.f32 0.0, %v1105
      %1107 = vmatmul.f32.gmra.mxu0 %v1044
      %v1108 = vpop.f32.mrf.mxu0
      %v1109 = vadd.f32 0.0, %v1108
      %1110 = vmatmul.f32.gmra.mxu0 %v1047
      %v1111 = vpop.f32.mrf.mxu0
      %v1112 = vadd.f32 0.0, %v1111
      %1113 = vmatmul.f32.gmra.mxu0 %v1050
      %v1114 = vpop.f32.mrf.mxu0
      %v1115 = vadd.f32 0.0, %v1114
      %1116 = vmatmul.f32.gmra.mxu0 %v1053
      %v1117 = vpop.f32.mrf.mxu0
      %v1118 = vadd.f32 0.0, %v1117
      %1119 = vmatmul.f32.gmra.mxu0 %v1056
      %v1120 = vpop.f32.mrf.mxu0
      %v1121 = vadd.f32 0.0, %v1120
      %1122 = vmatmul.f32.gmra.mxu0 %v1059
      %v1123 = vpop.f32.mrf.mxu0
      %v1124 = vadd.f32 0.0, %v1123
      %1125 = vmatmul.f32.gmra.mxu0 %v1062
      %v1126 = vpop.f32.mrf.mxu0
      %v1127 = vadd.f32 0.0, %v1126
      %1128 = vmatmul.f32.gmra.mxu0 %v1065
      %v1129 = vpop.f32.mrf.mxu0
      %v1130 = vadd.f32 0.0, %v1129
      %1131 = vmatmul.f32.gmra.mxu0 %v1068
      %v1132 = vpop.f32.mrf.mxu0
      %v1133 = vadd.f32 0.0, %v1132
      %1134 = vdwg.mxu0
      %v1135 = vadd.f32 %v988, %v1088
      %v1136 = vadd.f32 %v989, %v1091
      %v1137 = vadd.f32 %v990, %v1094
      %v1138 = vadd.f32 %v991, %v1097
      %v1139 = vadd.f32 %v992, %v1100
      %v1140 = vadd.f32 %v993, %v1103
      %v1141 = vadd.f32 %v994, %v1106
      %v1142 = vadd.f32 %v995, %v1109
      %v1143 = vadd.f32 %v996, %v1112
      %v1144 = vadd.f32 %v997, %v1115
      %v1145 = vadd.f32 %v998, %v1118
      %v1146 = vadd.f32 %v999, %v1121
      %v1147 = vadd.f32 %v1000, %v1124
      %v1148 = vadd.f32 %v1001, %v1127
      %v1149 = vadd.f32 %v1002, %v1130
      %v1150 = vadd.f32 %v1003, %v1133
      %s1151 = scalar_lea.vmem [#allocation2], 32
      %v1152 = vld [vmem:[%s1151] sm:$0xff]
      %v1153 = vld [vmem:[%s1151 + $0x10] sm:$0xff]
      %v1154 = vld [vmem:[%s1151 + $0x20] sm:$0xff]
      %v1155 = vld [vmem:[%s1151 + $0x30] sm:$0xff]
      %v1156 = vld [vmem:[%s1151 + $0x40] sm:$0xff]
      %v1157 = vld [vmem:[%s1151 + $0x50] sm:$0xff]
      %v1158 = vld [vmem:[%s1151 + $0x60] sm:$0xff]
      %v1159 = vld [vmem:[%s1151 + $0x70] sm:$0xff]
      %v1160 = vld [vmem:[%s1151 + $0xa0] sm:$0xff]
      %v1161 = vld [vmem:[%s1151 + $0xb0] sm:$0xff]
      %v1162 = vld [vmem:[%s1151 + $0xc0] sm:$0xff]
      %v1163 = vld [vmem:[%s1151 + $0xd0] sm:$0xff]
      %v1164 = vld [vmem:[%s1151 + $0xe0] sm:$0xff]
      %v1165 = vld [vmem:[%s1151 + $0xf0] sm:$0xff]
      %v1166 = vld [vmem:[%s1151 + $0x100] sm:$0xff]
      %v1167 = vld [vmem:[%s1151 + $0x110] sm:$0xff]
      %s1168 = scalar_lea.vmem %s1, 48
      %v1169 = vld [vmem:[%s1168] sm:$0xff]
      %v1171 = vsel %vm285, %v1152, 0
      %v1174 = vsel %vm285, %v1153, 0
      %v1177 = vsel %vm285, %v1154, 0
      %v1180 = vsel %vm285, %v1155, 0
      %v1183 = vsel %vm285, %v1156, 0
      %v1186 = vsel %vm285, %v1157, 0
      %v1189 = vsel %vm285, %v1158, 0
      %v1192 = vsel %vm285, %v1159, 0
      %v1195 = vsel %vm285, %v1160, 0
      %v1198 = vsel %vm285, %v1161, 0
      %v1201 = vsel %vm285, %v1162, 0
      %v1204 = vsel %vm285, %v1163, 0
      %v1207 = vsel %vm285, %v1164, 0
      %v1210 = vsel %vm285, %v1165, 0
      %v1213 = vsel %vm285, %v1166, 0
      %v1216 = vsel %vm285, %v1167, 0
      %1218 = vmatpush.msra.mxu0 0.0
      %1219 = vmatpush.msra.mxu0 0.0
      %1220 = vmatpush.msra.mxu0 0.0
      %1221 = vmatpush.msra.mxu0 0.0
      %1222 = vmatpush.msra.mxu0 0.0
      %1223 = vmatpush.msra.mxu0 0.0
      %1224 = vmatpush.msra.mxu0 0.0
      %1225 = vmatpush.msra.mxu0 0.0
      %1226 = vmatpush.msra.mxu0 0.0
      %1227 = vmatpush.msra.mxu0 0.0
      %1228 = vmatpush.msra.mxu0 0.0
      %1229 = vmatpush.msra.mxu0 0.0
      %1230 = vmatpush.msra.mxu0 0.0
      %1231 = vmatpush.msra.mxu0 0.0
      %1232 = vmatpush.msra.mxu0 0.0
      %1233 = vmatpush.msra.mxu0 %v1169
      %1234 = vmatmul.f32.gmra.mxu0 %v1171
      %v1235 = vpop.f32.mrf.mxu0
      %v1236 = vadd.f32 0.0, %v1235
      %1237 = vmatmul.f32.gmra.mxu0 %v1174
      %v1238 = vpop.f32.mrf.mxu0
      %v1239 = vadd.f32 0.0, %v1238
      %1240 = vmatmul.f32.gmra.mxu0 %v1177
      %v1241 = vpop.f32.mrf.mxu0
      %v1242 = vadd.f32 0.0, %v1241
      %1243 = vmatmul.f32.gmra.mxu0 %v1180
      %v1244 = vpop.f32.mrf.mxu0
      %v1245 = vadd.f32 0.0, %v1244
      %1246 = vmatmul.f32.gmra.mxu0 %v1183
      %v1247 = vpop.f32.mrf.mxu0
      %v1248 = vadd.f32 0.0, %v1247
      %1249 = vmatmul.f32.gmra.mxu0 %v1186
      %v1250 = vpop.f32.mrf.mxu0
      %v1251 = vadd.f32 0.0, %v1250
      %1252 = vmatmul.f32.gmra.mxu0 %v1189
      %v1253 = vpop.f32.mrf.mxu0
      %v1254 = vadd.f32 0.0, %v1253
      %1255 = vmatmul.f32.gmra.mxu0 %v1192
      %v1256 = vpop.f32.mrf.mxu0
      %v1257 = vadd.f32 0.0, %v1256
      %1258 = vmatmul.f32.gmra.mxu0 %v1195
      %v1259 = vpop.f32.mrf.mxu0
      %v1260 = vadd.f32 0.0, %v1259
      %1261 = vmatmul.f32.gmra.mxu0 %v1198
      %v1262 = vpop.f32.mrf.mxu0
      %v1263 = vadd.f32 0.0, %v1262
      %1264 = vmatmul.f32.gmra.mxu0 %v1201
      %v1265 = vpop.f32.mrf.mxu0
      %v1266 = vadd.f32 0.0, %v1265
      %1267 = vmatmul.f32.gmra.mxu0 %v1204
      %v1268 = vpop.f32.mrf.mxu0
      %v1269 = vadd.f32 0.0, %v1268
      %1270 = vmatmul.f32.gmra.mxu0 %v1207
      %v1271 = vpop.f32.mrf.mxu0
      %v1272 = vadd.f32 0.0, %v1271
      %1273 = vmatmul.f32.gmra.mxu0 %v1210
      %v1274 = vpop.f32.mrf.mxu0
      %v1275 = vadd.f32 0.0, %v1274
      %1276 = vmatmul.f32.gmra.mxu0 %v1213
      %v1277 = vpop.f32.mrf.mxu0
      %v1278 = vadd.f32 0.0, %v1277
      %1279 = vmatmul.f32.gmra.mxu0 %v1216
      %v1280 = vpop.f32.mrf.mxu0
      %v1281 = vadd.f32 0.0, %v1280
      %1282 = vdwg.mxu0
      %v1283 = vadd.f32 %v1135, %v1236
      %v1284 = vadd.f32 %v1136, %v1239
      %v1285 = vadd.f32 %v1137, %v1242
      %v1286 = vadd.f32 %v1138, %v1245
      %v1287 = vadd.f32 %v1139, %v1248
      %v1288 = vadd.f32 %v1140, %v1251
      %v1289 = vadd.f32 %v1141, %v1254
      %v1290 = vadd.f32 %v1142, %v1257
      %v1291 = vadd.f32 %v1143, %v1260
      %v1292 = vadd.f32 %v1144, %v1263
      %v1293 = vadd.f32 %v1145, %v1266
      %v1294 = vadd.f32 %v1146, %v1269
      %v1295 = vadd.f32 %v1147, %v1272
      %v1296 = vadd.f32 %v1148, %v1275
      %v1297 = vadd.f32 %v1149, %v1278
      %v1298 = vadd.f32 %v1150, %v1281
      %v1299 = vld [vmem:[%s1151 + $0x1] sm:$0xff]
      %v1300 = vld [vmem:[%s1151 + $0x11] sm:$0xff]
      %v1301 = vld [vmem:[%s1151 + $0x21] sm:$0xff]
      %v1302 = vld [vmem:[%s1151 + $0x31] sm:$0xff]
      %v1303 = vld [vmem:[%s1151 + $0x41] sm:$0xff]
      %v1304 = vld [vmem:[%s1151 + $0x51] sm:$0xff]
      %v1305 = vld [vmem:[%s1151 + $0x61] sm:$0xff]
      %v1306 = vld [vmem:[%s1151 + $0x71] sm:$0xff]
      %v1307 = vld [vmem:[%s1151 + $0xa1] sm:$0xff]
      %v1308 = vld [vmem:[%s1151 + $0xb1] sm:$0xff]
      %v1309 = vld [vmem:[%s1151 + $0xc1] sm:$0xff]
      %v1310 = vld [vmem:[%s1151 + $0xd1] sm:$0xff]
      %v1311 = vld [vmem:[%s1151 + $0xe1] sm:$0xff]
      %v1312 = vld [vmem:[%s1151 + $0xf1] sm:$0xff]
      %v1313 = vld [vmem:[%s1151 + $0x101] sm:$0xff]
      %v1314 = vld [vmem:[%s1151 + $0x111] sm:$0xff]
      %s1315 = scalar_lea.vmem %s1, 56
      %v1316 = vld [vmem:[%s1315] sm:$0xff]
      %v1318 = vsel %vm285, %v1299, 0
      %v1321 = vsel %vm285, %v1300, 0
      %v1324 = vsel %vm285, %v1301, 0
      %v1327 = vsel %vm285, %v1302, 0
      %v1330 = vsel %vm285, %v1303, 0
      %v1333 = vsel %vm285, %v1304, 0
      %v1336 = vsel %vm285, %v1305, 0
      %v1339 = vsel %vm285, %v1306, 0
      %v1342 = vsel %vm285, %v1307, 0
      %v1345 = vsel %vm285, %v1308, 0
      %v1348 = vsel %vm285, %v1309, 0
      %v1351 = vsel %vm285, %v1310, 0
      %v1354 = vsel %vm285, %v1311, 0
      %v1357 = vsel %vm285, %v1312, 0
      %v1360 = vsel %vm285, %v1313, 0
      %v1363 = vsel %vm285, %v1314, 0
      %1365 = vmatpush.msra.mxu0 0.0
      %1366 = vmatpush.msra.mxu0 0.0
      %1367 = vmatpush.msra.mxu0 0.0
      %1368 = vmatpush.msra.mxu0 0.0
      %1369 = vmatpush.msra.mxu0 0.0
      %1370 = vmatpush.msra.mxu0 0.0
      %1371 = vmatpush.msra.mxu0 0.0
      %1372 = vmatpush.msra.mxu0 0.0
      %1373 = vmatpush.msra.mxu0 0.0
      %1374 = vmatpush.msra.mxu0 0.0
      %1375 = vmatpush.msra.mxu0 0.0
      %1376 = vmatpush.msra.mxu0 0.0
      %1377 = vmatpush.msra.mxu0 0.0
      %1378 = vmatpush.msra.mxu0 0.0
      %1379 = vmatpush.msra.mxu0 0.0
      %1380 = vmatpush.msra.mxu0 %v1316
      %1381 = vmatmul.f32.gmra.mxu0 %v1318
      %v1382 = vpop.f32.mrf.mxu0
      %v1383 = vadd.f32 0.0, %v1382
      %1384 = vmatmul.f32.gmra.mxu0 %v1321
      %v1385 = vpop.f32.mrf.mxu0
      %v1386 = vadd.f32 0.0, %v1385
      %1387 = vmatmul.f32.gmra.mxu0 %v1324
      %v1388 = vpop.f32.mrf.mxu0
      %v1389 = vadd.f32 0.0, %v1388
      %1390 = vmatmul.f32.gmra.mxu0 %v1327
      %v1391 = vpop.f32.mrf.mxu0
      %v1392 = vadd.f32 0.0, %v1391
      %1393 = vmatmul.f32.gmra.mxu0 %v1330
      %v1394 = vpop.f32.mrf.mxu0
      %v1395 = vadd.f32 0.0, %v1394
      %1396 = vmatmul.f32.gmra.mxu0 %v1333
      %v1397 = vpop.f32.mrf.mxu0
      %v1398 = vadd.f32 0.0, %v1397
      %1399 = vmatmul.f32.gmra.mxu0 %v1336
      %v1400 = vpop.f32.mrf.mxu0
      %v1401 = vadd.f32 0.0, %v1400
      %1402 = vmatmul.f32.gmra.mxu0 %v1339
      %v1403 = vpop.f32.mrf.mxu0
      %v1404 = vadd.f32 0.0, %v1403
      %1405 = vmatmul.f32.gmra.mxu0 %v1342
      %v1406 = vpop.f32.mrf.mxu0
      %v1407 = vadd.f32 0.0, %v1406
      %1408 = vmatmul.f32.gmra.mxu0 %v1345
      %v1409 = vpop.f32.mrf.mxu0
      %v1410 = vadd.f32 0.0, %v1409
      %1411 = vmatmul.f32.gmra.mxu0 %v1348
      %v1412 = vpop.f32.mrf.mxu0
      %v1413 = vadd.f32 0.0, %v1412
      %1414 = vmatmul.f32.gmra.mxu0 %v1351
      %v1415 = vpop.f32.mrf.mxu0
      %v1416 = vadd.f32 0.0, %v1415
      %1417 = vmatmul.f32.gmra.mxu0 %v1354
      %v1418 = vpop.f32.mrf.mxu0
      %v1419 = vadd.f32 0.0, %v1418
      %1420 = vmatmul.f32.gmra.mxu0 %v1357
      %v1421 = vpop.f32.mrf.mxu0
      %v1422 = vadd.f32 0.0, %v1421
      %1423 = vmatmul.f32.gmra.mxu0 %v1360
      %v1424 = vpop.f32.mrf.mxu0
      %v1425 = vadd.f32 0.0, %v1424
      %1426 = vmatmul.f32.gmra.mxu0 %v1363
      %v1427 = vpop.f32.mrf.mxu0
      %v1428 = vadd.f32 0.0, %v1427
      %1429 = vdwg.mxu0
      %v1430 = vadd.f32 %v1283, %v1383
      %v1431 = vadd.f32 %v1284, %v1386
      %v1432 = vadd.f32 %v1285, %v1389
      %v1433 = vadd.f32 %v1286, %v1392
      %v1434 = vadd.f32 %v1287, %v1395
      %v1435 = vadd.f32 %v1288, %v1398
      %v1436 = vadd.f32 %v1289, %v1401
      %v1437 = vadd.f32 %v1290, %v1404
      %v1438 = vadd.f32 %v1291, %v1407
      %v1439 = vadd.f32 %v1292, %v1410
      %v1440 = vadd.f32 %v1293, %v1413
      %v1441 = vadd.f32 %v1294, %v1416
      %v1442 = vadd.f32 %v1295, %v1419
      %v1443 = vadd.f32 %v1296, %v1422
      %v1444 = vadd.f32 %v1297, %v1425
      %v1445 = vadd.f32 %v1298, %v1428
      %v1446 = vld [vmem:[%s1151 + $0x2] sm:$0xff]
      %v1447 = vld [vmem:[%s1151 + $0x12] sm:$0xff]
      %v1448 = vld [vmem:[%s1151 + $0x22] sm:$0xff]
      %v1449 = vld [vmem:[%s1151 + $0x32] sm:$0xff]
      %v1450 = vld [vmem:[%s1151 + $0x42] sm:$0xff]
      %v1451 = vld [vmem:[%s1151 + $0x52] sm:$0xff]
      %v1452 = vld [vmem:[%s1151 + $0x62] sm:$0xff]
      %v1453 = vld [vmem:[%s1151 + $0x72] sm:$0xff]
      %v1454 = vld [vmem:[%s1151 + $0xa2] sm:$0xff]
      %v1455 = vld [vmem:[%s1151 + $0xb2] sm:$0xff]
      %v1456 = vld [vmem:[%s1151 + $0xc2] sm:$0xff]
      %v1457 = vld [vmem:[%s1151 + $0xd2] sm:$0xff]
      %v1458 = vld [vmem:[%s1151 + $0xe2] sm:$0xff]
      %v1459 = vld [vmem:[%s1151 + $0xf2] sm:$0xff]
      %v1460 = vld [vmem:[%s1151 + $0x102] sm:$0xff]
      %v1461 = vld [vmem:[%s1151 + $0x112] sm:$0xff]
      %s1462 = scalar_lea.vmem %s1, 64
      %v1463 = vld [vmem:[%s1462] sm:$0xff]
      %v1465 = vsel %vm285, %v1446, 0
      %v1468 = vsel %vm285, %v1447, 0
      %v1471 = vsel %vm285, %v1448, 0
      %v1474 = vsel %vm285, %v1449, 0
      %v1477 = vsel %vm285, %v1450, 0
      %v1480 = vsel %vm285, %v1451, 0
      %v1483 = vsel %vm285, %v1452, 0
      %v1486 = vsel %vm285, %v1453, 0
      %v1489 = vsel %vm285, %v1454, 0
      %v1492 = vsel %vm285, %v1455, 0
      %v1495 = vsel %vm285, %v1456, 0
      %v1498 = vsel %vm285, %v1457, 0
      %v1501 = vsel %vm285, %v1458, 0
      %v1504 = vsel %vm285, %v1459, 0
      %v1507 = vsel %vm285, %v1460, 0
      %v1510 = vsel %vm285, %v1461, 0
      %1512 = vmatpush.msra.mxu0 0.0
      %1513 = vmatpush.msra.mxu0 0.0
      %1514 = vmatpush.msra.mxu0 0.0
      %1515 = vmatpush.msra.mxu0 0.0
      %1516 = vmatpush.msra.mxu0 0.0
      %1517 = vmatpush.msra.mxu0 0.0
      %1518 = vmatpush.msra.mxu0 0.0
      %1519 = vmatpush.msra.mxu0 0.0
      %1520 = vmatpush.msra.mxu0 0.0
      %1521 = vmatpush.msra.mxu0 0.0
      %1522 = vmatpush.msra.mxu0 0.0
      %1523 = vmatpush.msra.mxu0 0.0
      %1524 = vmatpush.msra.mxu0 0.0
      %1525 = vmatpush.msra.mxu0 0.0
      %1526 = vmatpush.msra.mxu0 0.0
      %1527 = vmatpush.msra.mxu0 %v1463
      %1528 = vmatmul.f32.gmra.mxu0 %v1465
      %v1529 = vpop.f32.mrf.mxu0
      %v1530 = vadd.f32 0.0, %v1529
      %1531 = vmatmul.f32.gmra.mxu0 %v1468
      %v1532 = vpop.f32.mrf.mxu0
      %v1533 = vadd.f32 0.0, %v1532
      %1534 = vmatmul.f32.gmra.mxu0 %v1471
      %v1535 = vpop.f32.mrf.mxu0
      %v1536 = vadd.f32 0.0, %v1535
      %1537 = vmatmul.f32.gmra.mxu0 %v1474
      %v1538 = vpop.f32.mrf.mxu0
      %v1539 = vadd.f32 0.0, %v1538
      %1540 = vmatmul.f32.gmra.mxu0 %v1477
      %v1541 = vpop.f32.mrf.mxu0
      %v1542 = vadd.f32 0.0, %v1541
      %1543 = vmatmul.f32.gmra.mxu0 %v1480
      %v1544 = vpop.f32.mrf.mxu0
      %v1545 = vadd.f32 0.0, %v1544
      %1546 = vmatmul.f32.gmra.mxu0 %v1483
      %v1547 = vpop.f32.mrf.mxu0
      %v1548 = vadd.f32 0.0, %v1547
      %1549 = vmatmul.f32.gmra.mxu0 %v1486
      %v1550 = vpop.f32.mrf.mxu0
      %v1551 = vadd.f32 0.0, %v1550
      %1552 = vmatmul.f32.gmra.mxu0 %v1489
      %v1553 = vpop.f32.mrf.mxu0
      %v1554 = vadd.f32 0.0, %v1553
      %1555 = vmatmul.f32.gmra.mxu0 %v1492
      %v1556 = vpop.f32.mrf.mxu0
      %v1557 = vadd.f32 0.0, %v1556
      %1558 = vmatmul.f32.gmra.mxu0 %v1495
      %v1559 = vpop.f32.mrf.mxu0
      %v1560 = vadd.f32 0.0, %v1559
      %1561 = vmatmul.f32.gmra.mxu0 %v1498
      %v1562 = vpop.f32.mrf.mxu0
      %v1563 = vadd.f32 0.0, %v1562
      %1564 = vmatmul.f32.gmra.mxu0 %v1501
      %v1565 = vpop.f32.mrf.mxu0
      %v1566 = vadd.f32 0.0, %v1565
      %1567 = vmatmul.f32.gmra.mxu0 %v1504
      %v1568 = vpop.f32.mrf.mxu0
      %v1569 = vadd.f32 0.0, %v1568
      %1570 = vmatmul.f32.gmra.mxu0 %v1507
      %v1571 = vpop.f32.mrf.mxu0
      %v1572 = vadd.f32 0.0, %v1571
      %1573 = vmatmul.f32.gmra.mxu0 %v1510
      %v1574 = vpop.f32.mrf.mxu0
      %v1575 = vadd.f32 0.0, %v1574
      %1576 = vdwg.mxu0
      %v1577 = vadd.f32 %v1430, %v1530
      %v1578 = vadd.f32 %v1431, %v1533
      %v1579 = vadd.f32 %v1432, %v1536
      %v1580 = vadd.f32 %v1433, %v1539
      %v1581 = vadd.f32 %v1434, %v1542
      %v1582 = vadd.f32 %v1435, %v1545
      %v1583 = vadd.f32 %v1436, %v1548
      %v1584 = vadd.f32 %v1437, %v1551
      %v1585 = vadd.f32 %v1438, %v1554
      %v1586 = vadd.f32 %v1439, %v1557
      %v1587 = vadd.f32 %v1440, %v1560
      %v1588 = vadd.f32 %v1441, %v1563
      %v1589 = vadd.f32 %v1442, %v1566
      %v1590 = vadd.f32 %v1443, %v1569
      %v1591 = vadd.f32 %v1444, %v1572
      %v1592 = vadd.f32 %v1445, %v1575
      %v1593 = vld [vmem:[%s2] sm:$0x1]
      %v1595 = vperm.slane %v1593, 0
      %v1597 = vadd.f32 %v1577, %v1595
      %v1598 = vadd.f32 %v1578, %v1595
      %v1599 = vadd.f32 %v1579, %v1595
      %v1600 = vadd.f32 %v1580, %v1595
      %v1601 = vadd.f32 %v1581, %v1595
      %v1602 = vadd.f32 %v1582, %v1595
      %v1603 = vadd.f32 %v1583, %v1595
      %v1604 = vadd.f32 %v1584, %v1595
      %v1605 = vadd.f32 %v1585, %v1595
      %v1606 = vadd.f32 %v1586, %v1595
      %v1607 = vadd.f32 %v1587, %v1595
      %v1608 = vadd.f32 %v1588, %v1595
      %v1609 = vadd.f32 %v1589, %v1595
      %v1610 = vadd.f32 %v1590, %v1595
      %v1611 = vadd.f32 %v1591, %v1595
      %v1612 = vadd.f32 %v1592, %v1595
      %v1613 = vld [vmem:[%s3] sm:$0x1]
      %v1614 = vld [vmem:[%s4] sm:$0x1]
      %v1615 = vsel %vm285, %v1597, 0.0
      %v1616 = vsel %vm285, %v1598, 0.0
      %v1617 = vadd.f32 %v1615, %v1616
      %v1618 = vsel %vm285, %v1599, 0.0
      %v1619 = vadd.f32 %v1617, %v1618
      %v1620 = vsel %vm285, %v1600, 0.0
      %v1621 = vadd.f32 %v1619, %v1620
      %v1622 = vsel %vm285, %v1601, 0.0
      %v1623 = vadd.f32 %v1621, %v1622
      %v1624 = vsel %vm285, %v1602, 0.0
      %v1625 = vadd.f32 %v1623, %v1624
      %v1626 = vsel %vm285, %v1603, 0.0
      %v1627 = vadd.f32 %v1625, %v1626
      %v1628 = vsel %vm285, %v1604, 0.0
      %v1629 = vadd.f32 %v1627, %v1628
      %v1630 = vsel %vm285, %v1605, 0.0
      %v1631 = vadd.f32 %v1629, %v1630
      %v1632 = vsel %vm285, %v1606, 0.0
      %v1633 = vadd.f32 %v1631, %v1632
      %v1634 = vsel %vm285, %v1607, 0.0
      %v1635 = vadd.f32 %v1633, %v1634
      %v1636 = vsel %vm285, %v1608, 0.0
      %v1637 = vadd.f32 %v1635, %v1636
      %v1638 = vsel %vm285, %v1609, 0.0
      %v1639 = vadd.f32 %v1637, %v1638
      %v1640 = vsel %vm285, %v1610, 0.0
      %v1641 = vadd.f32 %v1639, %v1640
      %v1642 = vsel %vm285, %v1611, 0.0
      %v1643 = vadd.f32 %v1641, %v1642
      %v1644 = vsel %vm285, %v1612, 0.0
      %v1645 = vadd.f32 %v1643, %v1644
      %v1646 = vrot.slane %v1645, 4
      %v1647 = vadd.f32 %v1645, %v1646
      %v1648 = vrot.slane %v1647, 2
      %v1649 = vadd.f32 %v1647, %v1648
      %v1650 = vrot.slane %v1649, 1
      %v1651 = vadd.f32 %v1649, %v1650
      %v1652 = vmul.f32 %v1597, %v1597
      %v1653 = vmul.f32 %v1598, %v1598
      %v1654 = vmul.f32 %v1599, %v1599
      %v1655 = vmul.f32 %v1600, %v1600
      %v1656 = vmul.f32 %v1601, %v1601
      %v1657 = vmul.f32 %v1602, %v1602
      %v1658 = vmul.f32 %v1603, %v1603
      %v1659 = vmul.f32 %v1604, %v1604
      %v1660 = vmul.f32 %v1605, %v1605
      %v1661 = vmul.f32 %v1606, %v1606
      %v1662 = vmul.f32 %v1607, %v1607
      %v1663 = vmul.f32 %v1608, %v1608
      %v1664 = vmul.f32 %v1609, %v1609
      %v1665 = vmul.f32 %v1610, %v1610
      %v1666 = vmul.f32 %v1611, %v1611
      %v1667 = vmul.f32 %v1612, %v1612
      %v1668 = vsel %vm285, %v1652, 0.0
      %v1669 = vsel %vm285, %v1653, 0.0
      %v1670 = vadd.f32 %v1668, %v1669
      %v1671 = vsel %vm285, %v1654, 0.0
      %v1672 = vadd.f32 %v1670, %v1671
      %v1673 = vsel %vm285, %v1655, 0.0
      %v1674 = vadd.f32 %v1672, %v1673
      %v1675 = vsel %vm285, %v1656, 0.0
      %v1676 = vadd.f32 %v1674, %v1675
      %v1677 = vsel %vm285, %v1657, 0.0
      %v1678 = vadd.f32 %v1676, %v1677
      %v1679 = vsel %vm285, %v1658, 0.0
      %v1680 = vadd.f32 %v1678, %v1679
      %v1681 = vsel %vm285, %v1659, 0.0
      %v1682 = vadd.f32 %v1680, %v1681
      %v1683 = vsel %vm285, %v1660, 0.0
      %v1684 = vadd.f32 %v1682, %v1683
      %v1685 = vsel %vm285, %v1661, 0.0
      %v1686 = vadd.f32 %v1684, %v1685
      %v1687 = vsel %vm285, %v1662, 0.0
      %v1688 = vadd.f32 %v1686, %v1687
      %v1689 = vsel %vm285, %v1663, 0.0
      %v1690 = vadd.f32 %v1688, %v1689
      %v1691 = vsel %vm285, %v1664, 0.0
      %v1692 = vadd.f32 %v1690, %v1691
      %v1693 = vsel %vm285, %v1665, 0.0
      %v1694 = vadd.f32 %v1692, %v1693
      %v1695 = vsel %vm285, %v1666, 0.0
      %v1696 = vadd.f32 %v1694, %v1695
      %v1697 = vsel %vm285, %v1667, 0.0
      %v1698 = vadd.f32 %v1696, %v1697
      %v1699 = vrot.slane %v1698, 4
      %v1700 = vadd.f32 %v1698, %v1699
      %v1701 = vrot.slane %v1700, 2
      %v1702 = vadd.f32 %v1700, %v1701
      %v1703 = vrot.slane %v1702, 1
      %v1704 = vadd.f32 %v1702, %v1703
      %v1705 = vrcp.pop 128.0
      %v1706 = vmul.f32 128.0, %v1705
      %v1707 = vsub.f32 1.0, %v1706
      %v1708 = vmul.f32 %v1705, %v1707
      %v1709 = vadd.f32 %v1705, %v1708
      %vm1710 = vweird.f32 %v1705
      %v1711 = vsel %vm1710, %v1705, %v1709
      %v1712 = vmul.f32 %v1651, %v1711
      %v1713 = vmul.f32 %v1704, %v1711
      %v1714 = vmul.f32 %v1712, %v1712
      %v1715 = vsub.f32 %v1713, %v1714
      %v1716 = vmax.f32 %v1715, 0.0
      %v1717 = vsub.f32 %v1597, %v1712
      %v1718 = vsub.f32 %v1598, %v1712
      %v1719 = vsub.f32 %v1599, %v1712
      %v1720 = vsub.f32 %v1600, %v1712
      %v1721 = vsub.f32 %v1601, %v1712
      %v1722 = vsub.f32 %v1602, %v1712
      %v1723 = vsub.f32 %v1603, %v1712
      %v1724 = vsub.f32 %v1604, %v1712
      %v1725 = vsub.f32 %v1605, %v1712
      %v1726 = vsub.f32 %v1606, %v1712
      %v1727 = vsub.f32 %v1607, %v1712
      %v1728 = vsub.f32 %v1608, %v1712
      %v1729 = vsub.f32 %v1609, %v1712
      %v1730 = vsub.f32 %v1610, %v1712
      %v1731 = vsub.f32 %v1611, %v1712
      %v1732 = vsub.f32 %v1612, %v1712
      %v1733 = vadd.f32 %v1716, 1e-05
      %v1734 = vrsqrt.pop %v1733
      %v1735 = vmul.f32 %v1734, %v1733
      %v1736 = vmul.f32 %v1735, %v1734
      %v1737 = vmul.f32 0.5, %v1736
      %v1738 = vsub.f32 1.5, %v1737
      %v1739 = vmul.f32 %v1734, %v1738
      %vm1740 = vweird.f32 %v1733
      %vm1741 = vweird.f32 %v1734
      %vm1742 = vmor %vm1740, %vm1741
      %v1743 = vsel %vm1742, %v1734, %v1739
      %v1744 = vmul.f32 %v1717, %v1743
      %v1745 = vmul.f32 %v1718, %v1743
      %v1746 = vmul.f32 %v1719, %v1743
      %v1747 = vmul.f32 %v1720, %v1743
      %v1748 = vmul.f32 %v1721, %v1743
      %v1749 = vmul.f32 %v1722, %v1743
      %v1750 = vmul.f32 %v1723, %v1743
      %v1751 = vmul.f32 %v1724, %v1743
      %v1752 = vmul.f32 %v1725, %v1743
      %v1753 = vmul.f32 %v1726, %v1743
      %v1754 = vmul.f32 %v1727, %v1743
      %v1755 = vmul.f32 %v1728, %v1743
      %v1756 = vmul.f32 %v1729, %v1743
      %v1757 = vmul.f32 %v1730, %v1743
      %v1758 = vmul.f32 %v1731, %v1743
      %v1759 = vmul.f32 %v1732, %v1743
      %v1761 = vperm.slane %v1613, 0
      %v1763 = vmul.f32 %v1744, %v1761
      %v1764 = vmul.f32 %v1745, %v1761
      %v1765 = vmul.f32 %v1746, %v1761
      %v1766 = vmul.f32 %v1747, %v1761
      %v1767 = vmul.f32 %v1748, %v1761
      %v1768 = vmul.f32 %v1749, %v1761
      %v1769 = vmul.f32 %v1750, %v1761
      %v1770 = vmul.f32 %v1751, %v1761
      %v1771 = vmul.f32 %v1752, %v1761
      %v1772 = vmul.f32 %v1753, %v1761
      %v1773 = vmul.f32 %v1754, %v1761
      %v1774 = vmul.f32 %v1755, %v1761
      %v1775 = vmul.f32 %v1756, %v1761
      %v1776 = vmul.f32 %v1757, %v1761
      %v1777 = vmul.f32 %v1758, %v1761
      %v1778 = vmul.f32 %v1759, %v1761
      %v1780 = vperm.slane %v1614, 0
      %v1782 = vadd.f32 %v1763, %v1780
      %v1783 = vadd.f32 %v1764, %v1780
      %v1784 = vadd.f32 %v1765, %v1780
      %v1785 = vadd.f32 %v1766, %v1780
      %v1786 = vadd.f32 %v1767, %v1780
      %v1787 = vadd.f32 %v1768, %v1780
      %v1788 = vadd.f32 %v1769, %v1780
      %v1789 = vadd.f32 %v1770, %v1780
      %v1790 = vadd.f32 %v1771, %v1780
      %v1791 = vadd.f32 %v1772, %v1780
      %v1792 = vadd.f32 %v1773, %v1780
      %v1793 = vadd.f32 %v1774, %v1780
      %v1794 = vadd.f32 %v1775, %v1780
      %v1795 = vadd.f32 %v1776, %v1780
      %v1796 = vadd.f32 %v1777, %v1780
      %v1797 = vadd.f32 %v1778, %v1780
      %v1798 = vmax.f32 %v1782, 0.0
      %v1799 = vmax.f32 %v1783, 0.0
      %v1800 = vmax.f32 %v1784, 0.0
      %v1801 = vmax.f32 %v1785, 0.0
      %v1802 = vmax.f32 %v1786, 0.0
      %v1803 = vmax.f32 %v1787, 0.0
      %v1804 = vmax.f32 %v1788, 0.0
      %v1805 = vmax.f32 %v1789, 0.0
      %v1806 = vmax.f32 %v1790, 0.0
      %v1807 = vmax.f32 %v1791, 0.0
      %v1808 = vmax.f32 %v1792, 0.0
      %v1809 = vmax.f32 %v1793, 0.0
      %v1810 = vmax.f32 %v1794, 0.0
      %v1811 = vmax.f32 %v1795, 0.0
      %v1812 = vmax.f32 %v1796, 0.0
      %v1813 = vmax.f32 %v1797, 0.0
      %1814 = vst.msk [vmem:[%s284 + $0x1] sm:$0xff] %vm285, %v1798
      %1815 = vst.msk [vmem:[%s284 + $0x11] sm:$0xff] %vm285, %v1799
      %1816 = vst.msk [vmem:[%s284 + $0x21] sm:$0xff] %vm285, %v1800
      %1817 = vst.msk [vmem:[%s284 + $0x31] sm:$0xff] %vm285, %v1801
      %1818 = vst.msk [vmem:[%s284 + $0x41] sm:$0xff] %vm285, %v1802
      %1819 = vst.msk [vmem:[%s284 + $0x51] sm:$0xff] %vm285, %v1803
      %1820 = vst.msk [vmem:[%s284 + $0x61] sm:$0xff] %vm285, %v1804
      %1821 = vst.msk [vmem:[%s284 + $0x71] sm:$0xff] %vm285, %v1805
      %1822 = vst.msk [vmem:[%s284 + $0xa1] sm:$0xff] %vm285, %v1806
      %1823 = vst.msk [vmem:[%s284 + $0xb1] sm:$0xff] %vm285, %v1807
      %1824 = vst.msk [vmem:[%s284 + $0xc1] sm:$0xff] %vm285, %v1808
      %1825 = vst.msk [vmem:[%s284 + $0xd1] sm:$0xff] %vm285, %v1809
      %1826 = vst.msk [vmem:[%s284 + $0xe1] sm:$0xff] %vm285, %v1810
      %1827 = vst.msk [vmem:[%s284 + $0xf1] sm:$0xff] %vm285, %v1811
      %1828 = vst.msk [vmem:[%s284 + $0x101] sm:$0xff] %vm285, %v1812
      %1829 = vst.msk [vmem:[%s284 + $0x111] sm:$0xff] %vm285, %v1813
      %v1830 = vld [vmem:[#allocation2] sm:$0xff]
      %v1831 = vld [vmem:[#allocation2 + $0x10] sm:$0xff]
      %v1832 = vld [vmem:[#allocation2 + $0x20] sm:$0xff]
      %v1833 = vld [vmem:[#allocation2 + $0x30] sm:$0xff]
      %v1834 = vld [vmem:[#allocation2 + $0x40] sm:$0xff]
      %v1835 = vld [vmem:[#allocation2 + $0x50] sm:$0xff]
      %v1836 = vld [vmem:[#allocation2 + $0x60] sm:$0xff]
      %v1837 = vld [vmem:[#allocation2 + $0x70] sm:$0xff]
      %v1838 = vld [vmem:[#allocation2 + $0xa0] sm:$0xff]
      %v1839 = vld [vmem:[#allocation2 + $0xb0] sm:$0xff]
      %v1840 = vld [vmem:[#allocation2 + $0xc0] sm:$0xff]
      %v1841 = vld [vmem:[#allocation2 + $0xd0] sm:$0xff]
      %v1842 = vld [vmem:[#allocation2 + $0xe0] sm:$0xff]
      %v1843 = vld [vmem:[#allocation2 + $0xf0] sm:$0xff]
      %v1844 = vld [vmem:[#allocation2 + $0x100] sm:$0xff]
      %v1845 = vld [vmem:[#allocation2 + $0x110] sm:$0xff]
      %s1846 = scalar_lea.vmem %s1, 72
      %v1847 = vld [vmem:[%s1846] sm:$0xff]
      %v1848 = vld [vmem:[#allocation2 + $0x1] sm:$0xff]
      %v1849 = vld [vmem:[#allocation2 + $0x11] sm:$0xff]
      %v1850 = vld [vmem:[#allocation2 + $0x21] sm:$0xff]
      %v1851 = vld [vmem:[#allocation2 + $0x31] sm:$0xff]
      %v1852 = vld [vmem:[#allocation2 + $0x41] sm:$0xff]
      %v1853 = vld [vmem:[#allocation2 + $0x51] sm:$0xff]
      %v1854 = vld [vmem:[#allocation2 + $0x61] sm:$0xff]
      %v1855 = vld [vmem:[#allocation2 + $0x71] sm:$0xff]
      %v1856 = vld [vmem:[#allocation2 + $0xa1] sm:$0xff]
      %v1857 = vld [vmem:[#allocation2 + $0xb1] sm:$0xff]
      %v1858 = vld [vmem:[#allocation2 + $0xc1] sm:$0xff]
      %v1859 = vld [vmem:[#allocation2 + $0xd1] sm:$0xff]
      %v1860 = vld [vmem:[#allocation2 + $0xe1] sm:$0xff]
      %v1861 = vld [vmem:[#allocation2 + $0xf1] sm:$0xff]
      %v1862 = vld [vmem:[#allocation2 + $0x101] sm:$0xff]
      %v1863 = vld [vmem:[#allocation2 + $0x111] sm:$0xff]
      %s1864 = scalar_lea.vmem %s1, 80
      %v1865 = vld [vmem:[%s1864] sm:$0xff]
      %v1867 = vsel %vm285, %v1848, 0
      %v1870 = vsel %vm285, %v1849, 0
      %v1873 = vsel %vm285, %v1850, 0
      %v1876 = vsel %vm285, %v1851, 0
      %v1879 = vsel %vm285, %v1852, 0
      %v1882 = vsel %vm285, %v1853, 0
      %v1885 = vsel %vm285, %v1854, 0
      %v1888 = vsel %vm285, %v1855, 0
      %v1891 = vsel %vm285, %v1856, 0
      %v1894 = vsel %vm285, %v1857, 0
      %v1897 = vsel %vm285, %v1858, 0
      %v1900 = vsel %vm285, %v1859, 0
      %v1903 = vsel %vm285, %v1860, 0
      %v1906 = vsel %vm285, %v1861, 0
      %v1909 = vsel %vm285, %v1862, 0
      %v1912 = vsel %vm285, %v1863, 0
      %1914 = vmatpush.msra.mxu0 0.0
      %1915 = vmatpush.msra.mxu0 0.0
      %1916 = vmatpush.msra.mxu0 0.0
      %1917 = vmatpush.msra.mxu0 0.0
      %1918 = vmatpush.msra.mxu0 0.0
      %1919 = vmatpush.msra.mxu0 0.0
      %1920 = vmatpush.msra.mxu0 0.0
      %1921 = vmatpush.msra.mxu0 0.0
      %1922 = vmatpush.msra.mxu0 0.0
      %1923 = vmatpush.msra.mxu0 0.0
      %1924 = vmatpush.msra.mxu0 0.0
      %1925 = vmatpush.msra.mxu0 0.0
      %1926 = vmatpush.msra.mxu0 0.0
      %1927 = vmatpush.msra.mxu0 0.0
      %1928 = vmatpush.msra.mxu0 0.0
      %1929 = vmatpush.msra.mxu0 %v1865
      %1930 = vmatmul.f32.gmra.mxu0 %v1867
      %v1931 = vpop.f32.mrf.mxu0
      %v1932 = vadd.f32 0.0, %v1931
      %1933 = vmatmul.f32.gmra.mxu0 %v1870
      %v1934 = vpop.f32.mrf.mxu0
      %v1935 = vadd.f32 0.0, %v1934
      %1936 = vmatmul.f32.gmra.mxu0 %v1873
      %v1937 = vpop.f32.mrf.mxu0
      %v1938 = vadd.f32 0.0, %v1937
      %1939 = vmatmul.f32.gmra.mxu0 %v1876
      %v1940 = vpop.f32.mrf.mxu0
      %v1941 = vadd.f32 0.0, %v1940
      %1942 = vmatmul.f32.gmra.mxu0 %v1879
      %v1943 = vpop.f32.mrf.mxu0
      %v1944 = vadd.f32 0.0, %v1943
      %1945 = vmatmul.f32.gmra.mxu0 %v1882
      %v1946 = vpop.f32.mrf.mxu0
      %v1947 = vadd.f32 0.0, %v1946
      %1948 = vmatmul.f32.gmra.mxu0 %v1885
      %v1949 = vpop.f32.mrf.mxu0
      %v1950 = vadd.f32 0.0, %v1949
      %1951 = vmatmul.f32.gmra.mxu0 %v1888
      %v1952 = vpop.f32.mrf.mxu0
      %v1953 = vadd.f32 0.0, %v1952
      %1954 = vmatmul.f32.gmra.mxu0 %v1891
      %v1955 = vpop.f32.mrf.mxu0
      %v1956 = vadd.f32 0.0, %v1955
      %1957 = vmatmul.f32.gmra.mxu0 %v1894
      %v1958 = vpop.f32.mrf.mxu0
      %v1959 = vadd.f32 0.0, %v1958
      %1960 = vmatmul.f32.gmra.mxu0 %v1897
      %v1961 = vpop.f32.mrf.mxu0
      %v1962 = vadd.f32 0.0, %v1961
      %1963 = vmatmul.f32.gmra.mxu0 %v1900
      %v1964 = vpop.f32.mrf.mxu0
      %v1965 = vadd.f32 0.0, %v1964
      %1966 = vmatmul.f32.gmra.mxu0 %v1903
      %v1967 = vpop.f32.mrf.mxu0
      %v1968 = vadd.f32 0.0, %v1967
      %1969 = vmatmul.f32.gmra.mxu0 %v1906
      %v1970 = vpop.f32.mrf.mxu0
      %v1971 = vadd.f32 0.0, %v1970
      %1972 = vmatmul.f32.gmra.mxu0 %v1909
      %v1973 = vpop.f32.mrf.mxu0
      %v1974 = vadd.f32 0.0, %v1973
      %1975 = vmatmul.f32.gmra.mxu0 %v1912
      %v1976 = vpop.f32.mrf.mxu0
      %v1977 = vadd.f32 0.0, %v1976
      %1978 = vdwg.mxu0
      %v1980 = vsel %vm285, %v1830, 0
      %v1983 = vsel %vm285, %v1831, 0
      %v1986 = vsel %vm285, %v1832, 0
      %v1989 = vsel %vm285, %v1833, 0
      %v1992 = vsel %vm285, %v1834, 0
      %v1995 = vsel %vm285, %v1835, 0
      %v1998 = vsel %vm285, %v1836, 0
      %v2001 = vsel %vm285, %v1837, 0
      %v2004 = vsel %vm285, %v1838, 0
      %v2007 = vsel %vm285, %v1839, 0
      %v2010 = vsel %vm285, %v1840, 0
      %v2013 = vsel %vm285, %v1841, 0
      %v2016 = vsel %vm285, %v1842, 0
      %v2019 = vsel %vm285, %v1843, 0
      %v2022 = vsel %vm285, %v1844, 0
      %v2025 = vsel %vm285, %v1845, 0
      %2027 = vmatpush.msra.mxu0 0.0
      %2028 = vmatpush.msra.mxu0 0.0
      %2029 = vmatpush.msra.mxu0 0.0
      %2030 = vmatpush.msra.mxu0 0.0
      %2031 = vmatpush.msra.mxu0 0.0
      %2032 = vmatpush.msra.mxu0 0.0
      %2033 = vmatpush.msra.mxu0 0.0
      %2034 = vmatpush.msra.mxu0 0.0
      %2035 = vmatpush.msra.mxu0 0.0
      %2036 = vmatpush.msra.mxu0 0.0
      %2037 = vmatpush.msra.mxu0 0.0
      %2038 = vmatpush.msra.mxu0 0.0
      %2039 = vmatpush.msra.mxu0 0.0
      %2040 = vmatpush.msra.mxu0 0.0
      %2041 = vmatpush.msra.mxu0 0.0
      %2042 = vmatpush.msra.mxu0 %v1847
      %2043 = vmatmul.f32.gmra.mxu0 %v1980
      %v2044 = vpop.f32.mrf.mxu0
      %v2045 = vadd.f32 %v1932, %v2044
      %2046 = vmatmul.f32.gmra.mxu0 %v1983
      %v2047 = vpop.f32.mrf.mxu0
      %v2048 = vadd.f32 %v1935, %v2047
      %2049 = vmatmul.f32.gmra.mxu0 %v1986
      %v2050 = vpop.f32.mrf.mxu0
      %v2051 = vadd.f32 %v1938, %v2050
      %2052 = vmatmul.f32.gmra.mxu0 %v1989
      %v2053 = vpop.f32.mrf.mxu0
      %v2054 = vadd.f32 %v1941, %v2053
      %2055 = vmatmul.f32.gmra.mxu0 %v1992
      %v2056 = vpop.f32.mrf.mxu0
      %v2057 = vadd.f32 %v1944, %v2056
      %2058 = vmatmul.f32.gmra.mxu0 %v1995
      %v2059 = vpop.f32.mrf.mxu0
      %v2060 = vadd.f32 %v1947, %v2059
      %2061 = vmatmul.f32.gmra.mxu0 %v1998
      %v2062 = vpop.f32.mrf.mxu0
      %v2063 = vadd.f32 %v1950, %v2062
      %2064 = vmatmul.f32.gmra.mxu0 %v2001
      %v2065 = vpop.f32.mrf.mxu0
      %v2066 = vadd.f32 %v1953, %v2065
      %2067 = vmatmul.f32.gmra.mxu0 %v2004
      %v2068 = vpop.f32.mrf.mxu0
      %v2069 = vadd.f32 %v1956, %v2068
      %2070 = vmatmul.f32.gmra.mxu0 %v2007
      %v2071 = vpop.f32.mrf.mxu0
      %v2072 = vadd.f32 %v1959, %v2071
      %2073 = vmatmul.f32.gmra.mxu0 %v2010
      %v2074 = vpop.f32.mrf.mxu0
      %v2075 = vadd.f32 %v1962, %v2074
      %2076 = vmatmul.f32.gmra.mxu0 %v2013
      %v2077 = vpop.f32.mrf.mxu0
      %v2078 = vadd.f32 %v1965, %v2077
      %2079 = vmatmul.f32.gmra.mxu0 %v2016
      %v2080 = vpop.f32.mrf.mxu0
      %v2081 = vadd.f32 %v1968, %v2080
      %2082 = vmatmul.f32.gmra.mxu0 %v2019
      %v2083 = vpop.f32.mrf.mxu0
      %v2084 = vadd.f32 %v1971, %v2083
      %2085 = vmatmul.f32.gmra.mxu0 %v2022
      %v2086 = vpop.f32.mrf.mxu0
      %v2087 = vadd.f32 %v1974, %v2086
      %2088 = vmatmul.f32.gmra.mxu0 %v2025
      %v2089 = vpop.f32.mrf.mxu0
      %v2090 = vadd.f32 %v1977, %v2089
      %2091 = vdwg.mxu0
      %v2092 = vld [vmem:[#allocation2 + $0x2] sm:$0xff]
      %v2093 = vld [vmem:[#allocation2 + $0x12] sm:$0xff]
      %v2094 = vld [vmem:[#allocation2 + $0x22] sm:$0xff]
      %v2095 = vld [vmem:[#allocation2 + $0x32] sm:$0xff]
      %v2096 = vld [vmem:[#allocation2 + $0x42] sm:$0xff]
      %v2097 = vld [vmem:[#allocation2 + $0x52] sm:$0xff]
      %v2098 = vld [vmem:[#allocation2 + $0x62] sm:$0xff]
      %v2099 = vld [vmem:[#allocation2 + $0x72] sm:$0xff]
      %v2100 = vld [vmem:[#allocation2 + $0xa2] sm:$0xff]
      %v2101 = vld [vmem:[#allocation2 + $0xb2] sm:$0xff]
      %v2102 = vld [vmem:[#allocation2 + $0xc2] sm:$0xff]
      %v2103 = vld [vmem:[#allocation2 + $0xd2] sm:$0xff]
      %v2104 = vld [vmem:[#allocation2 + $0xe2] sm:$0xff]
      %v2105 = vld [vmem:[#allocation2 + $0xf2] sm:$0xff]
      %v2106 = vld [vmem:[#allocation2 + $0x102] sm:$0xff]
      %v2107 = vld [vmem:[#allocation2 + $0x112] sm:$0xff]
      %s2108 = scalar_lea.vmem %s1, 88
      %v2109 = vld [vmem:[%s2108] sm:$0xff]
      %v2111 = vsel %vm285, %v2092, 0
      %v2114 = vsel %vm285, %v2093, 0
      %v2117 = vsel %vm285, %v2094, 0
      %v2120 = vsel %vm285, %v2095, 0
      %v2123 = vsel %vm285, %v2096, 0
      %v2126 = vsel %vm285, %v2097, 0
      %v2129 = vsel %vm285, %v2098, 0
      %v2132 = vsel %vm285, %v2099, 0
      %v2135 = vsel %vm285, %v2100, 0
      %v2138 = vsel %vm285, %v2101, 0
      %v2141 = vsel %vm285, %v2102, 0
      %v2144 = vsel %vm285, %v2103, 0
      %v2147 = vsel %vm285, %v2104, 0
      %v2150 = vsel %vm285, %v2105, 0
      %v2153 = vsel %vm285, %v2106, 0
      %v2156 = vsel %vm285, %v2107, 0
      %2158 = vmatpush.msra.mxu0 0.0
      %2159 = vmatpush.msra.mxu0 0.0
      %2160 = vmatpush.msra.mxu0 0.0
      %2161 = vmatpush.msra.mxu0 0.0
      %2162 = vmatpush.msra.mxu0 0.0
      %2163 = vmatpush.msra.mxu0 0.0
      %2164 = vmatpush.msra.mxu0 0.0
      %2165 = vmatpush.msra.mxu0 0.0
      %2166 = vmatpush.msra.mxu0 0.0
      %2167 = vmatpush.msra.mxu0 0.0
      %2168 = vmatpush.msra.mxu0 0.0
      %2169 = vmatpush.msra.mxu0 0.0
      %2170 = vmatpush.msra.mxu0 0.0
      %2171 = vmatpush.msra.mxu0 0.0
      %2172 = vmatpush.msra.mxu0 0.0
      %2173 = vmatpush.msra.mxu0 %v2109
      %2174 = vmatmul.f32.gmra.mxu0 %v2111
      %v2175 = vpop.f32.mrf.mxu0
      %v2176 = vadd.f32 0.0, %v2175
      %2177 = vmatmul.f32.gmra.mxu0 %v2114
      %v2178 = vpop.f32.mrf.mxu0
      %v2179 = vadd.f32 0.0, %v2178
      %2180 = vmatmul.f32.gmra.mxu0 %v2117
      %v2181 = vpop.f32.mrf.mxu0
      %v2182 = vadd.f32 0.0, %v2181
      %2183 = vmatmul.f32.gmra.mxu0 %v2120
      %v2184 = vpop.f32.mrf.mxu0
      %v2185 = vadd.f32 0.0, %v2184
      %2186 = vmatmul.f32.gmra.mxu0 %v2123
      %v2187 = vpop.f32.mrf.mxu0
      %v2188 = vadd.f32 0.0, %v2187
      %2189 = vmatmul.f32.gmra.mxu0 %v2126
      %v2190 = vpop.f32.mrf.mxu0
      %v2191 = vadd.f32 0.0, %v2190
      %2192 = vmatmul.f32.gmra.mxu0 %v2129
      %v2193 = vpop.f32.mrf.mxu0
      %v2194 = vadd.f32 0.0, %v2193
      %2195 = vmatmul.f32.gmra.mxu0 %v2132
      %v2196 = vpop.f32.mrf.mxu0
      %v2197 = vadd.f32 0.0, %v2196
      %2198 = vmatmul.f32.gmra.mxu0 %v2135
      %v2199 = vpop.f32.mrf.mxu0
      %v2200 = vadd.f32 0.0, %v2199
      %2201 = vmatmul.f32.gmra.mxu0 %v2138
      %v2202 = vpop.f32.mrf.mxu0
      %v2203 = vadd.f32 0.0, %v2202
      %2204 = vmatmul.f32.gmra.mxu0 %v2141
      %v2205 = vpop.f32.mrf.mxu0
      %v2206 = vadd.f32 0.0, %v2205
      %2207 = vmatmul.f32.gmra.mxu0 %v2144
      %v2208 = vpop.f32.mrf.mxu0
      %v2209 = vadd.f32 0.0, %v2208
      %2210 = vmatmul.f32.gmra.mxu0 %v2147
      %v2211 = vpop.f32.mrf.mxu0
      %v2212 = vadd.f32 0.0, %v2211
      %2213 = vmatmul.f32.gmra.mxu0 %v2150
      %v2214 = vpop.f32.mrf.mxu0
      %v2215 = vadd.f32 0.0, %v2214
      %2216 = vmatmul.f32.gmra.mxu0 %v2153
      %v2217 = vpop.f32.mrf.mxu0
      %v2218 = vadd.f32 0.0, %v2217
      %2219 = vmatmul.f32.gmra.mxu0 %v2156
      %v2220 = vpop.f32.mrf.mxu0
      %v2221 = vadd.f32 0.0, %v2220
      %2222 = vdwg.mxu0
      %v2223 = vadd.f32 %v2045, %v2176
      %v2224 = vadd.f32 %v2048, %v2179
      %v2225 = vadd.f32 %v2051, %v2182
      %v2226 = vadd.f32 %v2054, %v2185
      %v2227 = vadd.f32 %v2057, %v2188
      %v2228 = vadd.f32 %v2060, %v2191
      %v2229 = vadd.f32 %v2063, %v2194
      %v2230 = vadd.f32 %v2066, %v2197
      %v2231 = vadd.f32 %v2069, %v2200
      %v2232 = vadd.f32 %v2072, %v2203
      %v2233 = vadd.f32 %v2075, %v2206
      %v2234 = vadd.f32 %v2078, %v2209
      %v2235 = vadd.f32 %v2081, %v2212
      %v2236 = vadd.f32 %v2084, %v2215
      %v2237 = vadd.f32 %v2087, %v2218
      %v2238 = vadd.f32 %v2090, %v2221
      %v2239 = vld [vmem:[%s284] sm:$0xff]
      %v2240 = vld [vmem:[%s284 + $0x10] sm:$0xff]
      %v2241 = vld [vmem:[%s284 + $0x20] sm:$0xff]
      %v2242 = vld [vmem:[%s284 + $0x30] sm:$0xff]
      %v2243 = vld [vmem:[%s284 + $0x40] sm:$0xff]
      %v2244 = vld [vmem:[%s284 + $0x50] sm:$0xff]
      %v2245 = vld [vmem:[%s284 + $0x60] sm:$0xff]
      %v2246 = vld [vmem:[%s284 + $0x70] sm:$0xff]
      %v2247 = vld [vmem:[%s284 + $0xa0] sm:$0xff]
      %v2248 = vld [vmem:[%s284 + $0xb0] sm:$0xff]
      %v2249 = vld [vmem:[%s284 + $0xc0] sm:$0xff]
      %v2250 = vld [vmem:[%s284 + $0xd0] sm:$0xff]
      %v2251 = vld [vmem:[%s284 + $0xe0] sm:$0xff]
      %v2252 = vld [vmem:[%s284 + $0xf0] sm:$0xff]
      %v2253 = vld [vmem:[%s284 + $0x100] sm:$0xff]
      %v2254 = vld [vmem:[%s284 + $0x110] sm:$0xff]
      %s2255 = scalar_lea.vmem %s1, 96
      %v2256 = vld [vmem:[%s2255] sm:$0xff]
      %v2258 = vsel %vm285, %v2239, 0
      %v2261 = vsel %vm285, %v2240, 0
      %v2264 = vsel %vm285, %v2241, 0
      %v2267 = vsel %vm285, %v2242, 0
      %v2270 = vsel %vm285, %v2243, 0
      %v2273 = vsel %vm285, %v2244, 0
      %v2276 = vsel %vm285, %v2245, 0
      %v2279 = vsel %vm285, %v2246, 0
      %v2282 = vsel %vm285, %v2247, 0
      %v2285 = vsel %vm285, %v2248, 0
      %v2288 = vsel %vm285, %v2249, 0
      %v2291 = vsel %vm285, %v2250, 0
      %v2294 = vsel %vm285, %v2251, 0
      %v2297 = vsel %vm285, %v2252, 0
      %v2300 = vsel %vm285, %v2253, 0
      %v2303 = vsel %vm285, %v2254, 0
      %2305 = vmatpush.msra.mxu0 0.0
      %2306 = vmatpush.msra.mxu0 0.0
      %2307 = vmatpush.msra.mxu0 0.0
      %2308 = vmatpush.msra.mxu0 0.0
      %2309 = vmatpush.msra.mxu0 0.0
      %2310 = vmatpush.msra.mxu0 0.0
      %2311 = vmatpush.msra.mxu0 0.0
      %2312 = vmatpush.msra.mxu0 0.0
      %2313 = vmatpush.msra.mxu0 0.0
      %2314 = vmatpush.msra.mxu0 0.0
      %2315 = vmatpush.msra.mxu0 0.0
      %2316 = vmatpush.msra.mxu0 0.0
      %2317 = vmatpush.msra.mxu0 0.0
      %2318 = vmatpush.msra.mxu0 0.0
      %2319 = vmatpush.msra.mxu0 0.0
      %2320 = vmatpush.msra.mxu0 %v2256
      %2321 = vmatmul.f32.gmra.mxu0 %v2258
      %v2322 = vpop.f32.mrf.mxu0
      %v2323 = vadd.f32 0.0, %v2322
      %2324 = vmatmul.f32.gmra.mxu0 %v2261
      %v2325 = vpop.f32.mrf.mxu0
      %v2326 = vadd.f32 0.0, %v2325
      %2327 = vmatmul.f32.gmra.mxu0 %v2264
      %v2328 = vpop.f32.mrf.mxu0
      %v2329 = vadd.f32 0.0, %v2328
      %2330 = vmatmul.f32.gmra.mxu0 %v2267
      %v2331 = vpop.f32.mrf.mxu0
      %v2332 = vadd.f32 0.0, %v2331
      %2333 = vmatmul.f32.gmra.mxu0 %v2270
      %v2334 = vpop.f32.mrf.mxu0
      %v2335 = vadd.f32 0.0, %v2334
      %2336 = vmatmul.f32.gmra.mxu0 %v2273
      %v2337 = vpop.f32.mrf.mxu0
      %v2338 = vadd.f32 0.0, %v2337
      %2339 = vmatmul.f32.gmra.mxu0 %v2276
      %v2340 = vpop.f32.mrf.mxu0
      %v2341 = vadd.f32 0.0, %v2340
      %2342 = vmatmul.f32.gmra.mxu0 %v2279
      %v2343 = vpop.f32.mrf.mxu0
      %v2344 = vadd.f32 0.0, %v2343
      %2345 = vmatmul.f32.gmra.mxu0 %v2282
      %v2346 = vpop.f32.mrf.mxu0
      %v2347 = vadd.f32 0.0, %v2346
      %2348 = vmatmul.f32.gmra.mxu0 %v2285
      %v2349 = vpop.f32.mrf.mxu0
      %v2350 = vadd.f32 0.0, %v2349
      %2351 = vmatmul.f32.gmra.mxu0 %v2288
      %v2352 = vpop.f32.mrf.mxu0
      %v2353 = vadd.f32 0.0, %v2352
      %2354 = vmatmul.f32.gmra.mxu0 %v2291
      %v2355 = vpop.f32.mrf.mxu0
      %v2356 = vadd.f32 0.0, %v2355
      %2357 = vmatmul.f32.gmra.mxu0 %v2294
      %v2358 = vpop.f32.mrf.mxu0
      %v2359 = vadd.f32 0.0, %v2358
      %2360 = vmatmul.f32.gmra.mxu0 %v2297
      %v2361 = vpop.f32.mrf.mxu0
      %v2362 = vadd.f32 0.0, %v2361
      %2363 = vmatmul.f32.gmra.mxu0 %v2300
      %v2364 = vpop.f32.mrf.mxu0
      %v2365 = vadd.f32 0.0, %v2364
      %2366 = vmatmul.f32.gmra.mxu0 %v2303
      %v2367 = vpop.f32.mrf.mxu0
      %v2368 = vadd.f32 0.0, %v2367
      %2369 = vdwg.mxu0
      %v2370 = vadd.f32 %v2223, %v2323
      %v2371 = vadd.f32 %v2224, %v2326
      %v2372 = vadd.f32 %v2225, %v2329
      %v2373 = vadd.f32 %v2226, %v2332
      %v2374 = vadd.f32 %v2227, %v2335
      %v2375 = vadd.f32 %v2228, %v2338
      %v2376 = vadd.f32 %v2229, %v2341
      %v2377 = vadd.f32 %v2230, %v2344
      %v2378 = vadd.f32 %v2231, %v2347
      %v2379 = vadd.f32 %v2232, %v2350
      %v2380 = vadd.f32 %v2233, %v2353
      %v2381 = vadd.f32 %v2234, %v2356
      %v2382 = vadd.f32 %v2235, %v2359
      %v2383 = vadd.f32 %v2236, %v2362
      %v2384 = vadd.f32 %v2237, %v2365
      %v2385 = vadd.f32 %v2238, %v2368
      %v2386 = vld [vmem:[%s284 + $0x1] sm:$0xff]
      %v2387 = vld [vmem:[%s284 + $0x11] sm:$0xff]
      %v2388 = vld [vmem:[%s284 + $0x21] sm:$0xff]
      %v2389 = vld [vmem:[%s284 + $0x31] sm:$0xff]
      %v2390 = vld [vmem:[%s284 + $0x41] sm:$0xff]
      %v2391 = vld [vmem:[%s284 + $0x51] sm:$0xff]
      %v2392 = vld [vmem:[%s284 + $0x61] sm:$0xff]
      %v2393 = vld [vmem:[%s284 + $0x71] sm:$0xff]
      %v2394 = vld [vmem:[%s284 + $0xa1] sm:$0xff]
      %v2395 = vld [vmem:[%s284 + $0xb1] sm:$0xff]
      %v2396 = vld [vmem:[%s284 + $0xc1] sm:$0xff]
      %v2397 = vld [vmem:[%s284 + $0xd1] sm:$0xff]
      %v2398 = vld [vmem:[%s284 + $0xe1] sm:$0xff]
      %v2399 = vld [vmem:[%s284 + $0xf1] sm:$0xff]
      %v2400 = vld [vmem:[%s284 + $0x101] sm:$0xff]
      %v2401 = vld [vmem:[%s284 + $0x111] sm:$0xff]
      %s2402 = scalar_lea.vmem %s1, 104
      %v2403 = vld [vmem:[%s2402] sm:$0xff]
      %v2405 = vsel %vm285, %v2386, 0
      %v2408 = vsel %vm285, %v2387, 0
      %v2411 = vsel %vm285, %v2388, 0
      %v2414 = vsel %vm285, %v2389, 0
      %v2417 = vsel %vm285, %v2390, 0
      %v2420 = vsel %vm285, %v2391, 0
      %v2423 = vsel %vm285, %v2392, 0
      %v2426 = vsel %vm285, %v2393, 0
      %v2429 = vsel %vm285, %v2394, 0
      %v2432 = vsel %vm285, %v2395, 0
      %v2435 = vsel %vm285, %v2396, 0
      %v2438 = vsel %vm285, %v2397, 0
      %v2441 = vsel %vm285, %v2398, 0
      %v2444 = vsel %vm285, %v2399, 0
      %v2447 = vsel %vm285, %v2400, 0
      %v2450 = vsel %vm285, %v2401, 0
      %2452 = vmatpush.msra.mxu0 0.0
      %2453 = vmatpush.msra.mxu0 0.0
      %2454 = vmatpush.msra.mxu0 0.0
      %2455 = vmatpush.msra.mxu0 0.0
      %2456 = vmatpush.msra.mxu0 0.0
      %2457 = vmatpush.msra.mxu0 0.0
      %2458 = vmatpush.msra.mxu0 0.0
      %2459 = vmatpush.msra.mxu0 0.0
      %2460 = vmatpush.msra.mxu0 0.0
      %2461 = vmatpush.msra.mxu0 0.0
      %2462 = vmatpush.msra.mxu0 0.0
      %2463 = vmatpush.msra.mxu0 0.0
      %2464 = vmatpush.msra.mxu0 0.0
      %2465 = vmatpush.msra.mxu0 0.0
      %2466 = vmatpush.msra.mxu0 0.0
      %2467 = vmatpush.msra.mxu0 %v2403
      %2468 = vmatmul.f32.gmra.mxu0 %v2405
      %v2469 = vpop.f32.mrf.mxu0
      %v2470 = vadd.f32 0.0, %v2469
      %2471 = vmatmul.f32.gmra.mxu0 %v2408
      %v2472 = vpop.f32.mrf.mxu0
      %v2473 = vadd.f32 0.0, %v2472
      %2474 = vmatmul.f32.gmra.mxu0 %v2411
      %v2475 = vpop.f32.mrf.mxu0
      %v2476 = vadd.f32 0.0, %v2475
      %2477 = vmatmul.f32.gmra.mxu0 %v2414
      %v2478 = vpop.f32.mrf.mxu0
      %v2479 = vadd.f32 0.0, %v2478
      %2480 = vmatmul.f32.gmra.mxu0 %v2417
      %v2481 = vpop.f32.mrf.mxu0
      %v2482 = vadd.f32 0.0, %v2481
      %2483 = vmatmul.f32.gmra.mxu0 %v2420
      %v2484 = vpop.f32.mrf.mxu0
      %v2485 = vadd.f32 0.0, %v2484
      %2486 = vmatmul.f32.gmra.mxu0 %v2423
      %v2487 = vpop.f32.mrf.mxu0
      %v2488 = vadd.f32 0.0, %v2487
      %2489 = vmatmul.f32.gmra.mxu0 %v2426
      %v2490 = vpop.f32.mrf.mxu0
      %v2491 = vadd.f32 0.0, %v2490
      %2492 = vmatmul.f32.gmra.mxu0 %v2429
      %v2493 = vpop.f32.mrf.mxu0
      %v2494 = vadd.f32 0.0, %v2493
      %2495 = vmatmul.f32.gmra.mxu0 %v2432
      %v2496 = vpop.f32.mrf.mxu0
      %v2497 = vadd.f32 0.0, %v2496
      %2498 = vmatmul.f32.gmra.mxu0 %v2435
      %v2499 = vpop.f32.mrf.mxu0
      %v2500 = vadd.f32 0.0, %v2499
      %2501 = vmatmul.f32.gmra.mxu0 %v2438
      %v2502 = vpop.f32.mrf.mxu0
      %v2503 = vadd.f32 0.0, %v2502
      %2504 = vmatmul.f32.gmra.mxu0 %v2441
      %v2505 = vpop.f32.mrf.mxu0
      %v2506 = vadd.f32 0.0, %v2505
      %2507 = vmatmul.f32.gmra.mxu0 %v2444
      %v2508 = vpop.f32.mrf.mxu0
      %v2509 = vadd.f32 0.0, %v2508
      %2510 = vmatmul.f32.gmra.mxu0 %v2447
      %v2511 = vpop.f32.mrf.mxu0
      %v2512 = vadd.f32 0.0, %v2511
      %2513 = vmatmul.f32.gmra.mxu0 %v2450
      %v2514 = vpop.f32.mrf.mxu0
      %v2515 = vadd.f32 0.0, %v2514
      %2516 = vdwg.mxu0
      %v2517 = vadd.f32 %v2370, %v2470
      %v2518 = vadd.f32 %v2371, %v2473
      %v2519 = vadd.f32 %v2372, %v2476
      %v2520 = vadd.f32 %v2373, %v2479
      %v2521 = vadd.f32 %v2374, %v2482
      %v2522 = vadd.f32 %v2375, %v2485
      %v2523 = vadd.f32 %v2376, %v2488
      %v2524 = vadd.f32 %v2377, %v2491
      %v2525 = vadd.f32 %v2378, %v2494
      %v2526 = vadd.f32 %v2379, %v2497
      %v2527 = vadd.f32 %v2380, %v2500
      %v2528 = vadd.f32 %v2381, %v2503
      %v2529 = vadd.f32 %v2382, %v2506
      %v2530 = vadd.f32 %v2383, %v2509
      %v2531 = vadd.f32 %v2384, %v2512
      %v2532 = vadd.f32 %v2385, %v2515
      %v2533 = vld [vmem:[%s284 + $0x2] sm:$0xff]
      %v2534 = vld [vmem:[%s284 + $0x12] sm:$0xff]
      %v2535 = vld [vmem:[%s284 + $0x22] sm:$0xff]
      %v2536 = vld [vmem:[%s284 + $0x32] sm:$0xff]
      %v2537 = vld [vmem:[%s284 + $0x42] sm:$0xff]
      %v2538 = vld [vmem:[%s284 + $0x52] sm:$0xff]
      %v2539 = vld [vmem:[%s284 + $0x62] sm:$0xff]
      %v2540 = vld [vmem:[%s284 + $0x72] sm:$0xff]
      %v2541 = vld [vmem:[%s284 + $0xa2] sm:$0xff]
      %v2542 = vld [vmem:[%s284 + $0xb2] sm:$0xff]
      %v2543 = vld [vmem:[%s284 + $0xc2] sm:$0xff]
      %v2544 = vld [vmem:[%s284 + $0xd2] sm:$0xff]
      %v2545 = vld [vmem:[%s284 + $0xe2] sm:$0xff]
      %v2546 = vld [vmem:[%s284 + $0xf2] sm:$0xff]
      %v2547 = vld [vmem:[%s284 + $0x102] sm:$0xff]
      %v2548 = vld [vmem:[%s284 + $0x112] sm:$0xff]
      %s2549 = scalar_lea.vmem %s1, 112
      %v2550 = vld [vmem:[%s2549] sm:$0xff]
      %v2552 = vsel %vm285, %v2533, 0
      %v2555 = vsel %vm285, %v2534, 0
      %v2558 = vsel %vm285, %v2535, 0
      %v2561 = vsel %vm285, %v2536, 0
      %v2564 = vsel %vm285, %v2537, 0
      %v2567 = vsel %vm285, %v2538, 0
      %v2570 = vsel %vm285, %v2539, 0
      %v2573 = vsel %vm285, %v2540, 0
      %v2576 = vsel %vm285, %v2541, 0
      %v2579 = vsel %vm285, %v2542, 0
      %v2582 = vsel %vm285, %v2543, 0
      %v2585 = vsel %vm285, %v2544, 0
      %v2588 = vsel %vm285, %v2545, 0
      %v2591 = vsel %vm285, %v2546, 0
      %v2594 = vsel %vm285, %v2547, 0
      %v2597 = vsel %vm285, %v2548, 0
      %2599 = vmatpush.msra.mxu0 0.0
      %2600 = vmatpush.msra.mxu0 0.0
      %2601 = vmatpush.msra.mxu0 0.0
      %2602 = vmatpush.msra.mxu0 0.0
      %2603 = vmatpush.msra.mxu0 0.0
      %2604 = vmatpush.msra.mxu0 0.0
      %2605 = vmatpush.msra.mxu0 0.0
      %2606 = vmatpush.msra.mxu0 0.0
      %2607 = vmatpush.msra.mxu0 0.0
      %2608 = vmatpush.msra.mxu0 0.0
      %2609 = vmatpush.msra.mxu0 0.0
      %2610 = vmatpush.msra.mxu0 0.0
      %2611 = vmatpush.msra.mxu0 0.0
      %2612 = vmatpush.msra.mxu0 0.0
      %2613 = vmatpush.msra.mxu0 0.0
      %2614 = vmatpush.msra.mxu0 %v2550
      %2615 = vmatmul.f32.gmra.mxu0 %v2552
      %v2616 = vpop.f32.mrf.mxu0
      %v2617 = vadd.f32 0.0, %v2616
      %2618 = vmatmul.f32.gmra.mxu0 %v2555
      %v2619 = vpop.f32.mrf.mxu0
      %v2620 = vadd.f32 0.0, %v2619
      %2621 = vmatmul.f32.gmra.mxu0 %v2558
      %v2622 = vpop.f32.mrf.mxu0
      %v2623 = vadd.f32 0.0, %v2622
      %2624 = vmatmul.f32.gmra.mxu0 %v2561
      %v2625 = vpop.f32.mrf.mxu0
      %v2626 = vadd.f32 0.0, %v2625
      %2627 = vmatmul.f32.gmra.mxu0 %v2564
      %v2628 = vpop.f32.mrf.mxu0
      %v2629 = vadd.f32 0.0, %v2628
      %2630 = vmatmul.f32.gmra.mxu0 %v2567
      %v2631 = vpop.f32.mrf.mxu0
      %v2632 = vadd.f32 0.0, %v2631
      %2633 = vmatmul.f32.gmra.mxu0 %v2570
      %v2634 = vpop.f32.mrf.mxu0
      %v2635 = vadd.f32 0.0, %v2634
      %2636 = vmatmul.f32.gmra.mxu0 %v2573
      %v2637 = vpop.f32.mrf.mxu0
      %v2638 = vadd.f32 0.0, %v2637
      %2639 = vmatmul.f32.gmra.mxu0 %v2576
      %v2640 = vpop.f32.mrf.mxu0
      %v2641 = vadd.f32 0.0, %v2640
      %2642 = vmatmul.f32.gmra.mxu0 %v2579
      %v2643 = vpop.f32.mrf.mxu0
      %v2644 = vadd.f32 0.0, %v2643
      %2645 = vmatmul.f32.gmra.mxu0 %v2582
      %v2646 = vpop.f32.mrf.mxu0
      %v2647 = vadd.f32 0.0, %v2646
      %2648 = vmatmul.f32.gmra.mxu0 %v2585
      %v2649 = vpop.f32.mrf.mxu0
      %v2650 = vadd.f32 0.0, %v2649
      %2651 = vmatmul.f32.gmra.mxu0 %v2588
      %v2652 = vpop.f32.mrf.mxu0
      %v2653 = vadd.f32 0.0, %v2652
      %2654 = vmatmul.f32.gmra.mxu0 %v2591
      %v2655 = vpop.f32.mrf.mxu0
      %v2656 = vadd.f32 0.0, %v2655
      %2657 = vmatmul.f32.gmra.mxu0 %v2594
      %v2658 = vpop.f32.mrf.mxu0
      %v2659 = vadd.f32 0.0, %v2658
      %2660 = vmatmul.f32.gmra.mxu0 %v2597
      %v2661 = vpop.f32.mrf.mxu0
      %v2662 = vadd.f32 0.0, %v2661
      %2663 = vdwg.mxu0
      %v2664 = vadd.f32 %v2517, %v2617
      %v2665 = vadd.f32 %v2518, %v2620
      %v2666 = vadd.f32 %v2519, %v2623
      %v2667 = vadd.f32 %v2520, %v2626
      %v2668 = vadd.f32 %v2521, %v2629
      %v2669 = vadd.f32 %v2522, %v2632
      %v2670 = vadd.f32 %v2523, %v2635
      %v2671 = vadd.f32 %v2524, %v2638
      %v2672 = vadd.f32 %v2525, %v2641
      %v2673 = vadd.f32 %v2526, %v2644
      %v2674 = vadd.f32 %v2527, %v2647
      %v2675 = vadd.f32 %v2528, %v2650
      %v2676 = vadd.f32 %v2529, %v2653
      %v2677 = vadd.f32 %v2530, %v2656
      %v2678 = vadd.f32 %v2531, %v2659
      %v2679 = vadd.f32 %v2532, %v2662
      %v2680 = vld [vmem:[%s1151] sm:$0xff]
      %v2681 = vld [vmem:[%s1151 + $0x10] sm:$0xff]
      %v2682 = vld [vmem:[%s1151 + $0x20] sm:$0xff]
      %v2683 = vld [vmem:[%s1151 + $0x30] sm:$0xff]
      %v2684 = vld [vmem:[%s1151 + $0x40] sm:$0xff]
      %v2685 = vld [vmem:[%s1151 + $0x50] sm:$0xff]
      %v2686 = vld [vmem:[%s1151 + $0x60] sm:$0xff]
      %v2687 = vld [vmem:[%s1151 + $0x70] sm:$0xff]
      %v2688 = vld [vmem:[%s1151 + $0xa0] sm:$0xff]
      %v2689 = vld [vmem:[%s1151 + $0xb0] sm:$0xff]
      %v2690 = vld [vmem:[%s1151 + $0xc0] sm:$0xff]
      %v2691 = vld [vmem:[%s1151 + $0xd0] sm:$0xff]
      %v2692 = vld [vmem:[%s1151 + $0xe0] sm:$0xff]
      %v2693 = vld [vmem:[%s1151 + $0xf0] sm:$0xff]
      %v2694 = vld [vmem:[%s1151 + $0x100] sm:$0xff]
      %v2695 = vld [vmem:[%s1151 + $0x110] sm:$0xff]
      %s2696 = scalar_lea.vmem %s1, 120
      %v2697 = vld [vmem:[%s2696] sm:$0xff]
      %v2699 = vsel %vm285, %v2680, 0
      %v2702 = vsel %vm285, %v2681, 0
      %v2705 = vsel %vm285, %v2682, 0
      %v2708 = vsel %vm285, %v2683, 0
      %v2711 = vsel %vm285, %v2684, 0
      %v2714 = vsel %vm285, %v2685, 0
      %v2717 = vsel %vm285, %v2686, 0
      %v2720 = vsel %vm285, %v2687, 0
      %v2723 = vsel %vm285, %v2688, 0
      %v2726 = vsel %vm285, %v2689, 0
      %v2729 = vsel %vm285, %v2690, 0
      %v2732 = vsel %vm285, %v2691, 0
      %v2735 = vsel %vm285, %v2692, 0
      %v2738 = vsel %vm285, %v2693, 0
      %v2741 = vsel %vm285, %v2694, 0
      %v2744 = vsel %vm285, %v2695, 0
      %2746 = vmatpush.msra.mxu0 0.0
      %2747 = vmatpush.msra.mxu0 0.0
      %2748 = vmatpush.msra.mxu0 0.0
      %2749 = vmatpush.msra.mxu0 0.0
      %2750 = vmatpush.msra.mxu0 0.0
      %2751 = vmatpush.msra.mxu0 0.0
      %2752 = vmatpush.msra.mxu0 0.0
      %2753 = vmatpush.msra.mxu0 0.0
      %2754 = vmatpush.msra.mxu0 0.0
      %2755 = vmatpush.msra.mxu0 0.0
      %2756 = vmatpush.msra.mxu0 0.0
      %2757 = vmatpush.msra.mxu0 0.0
      %2758 = vmatpush.msra.mxu0 0.0
      %2759 = vmatpush.msra.mxu0 0.0
      %2760 = vmatpush.msra.mxu0 0.0
      %2761 = vmatpush.msra.mxu0 %v2697
      %2762 = vmatmul.f32.gmra.mxu0 %v2699
      %v2763 = vpop.f32.mrf.mxu0
      %v2764 = vadd.f32 0.0, %v2763
      %2765 = vmatmul.f32.gmra.mxu0 %v2702
      %v2766 = vpop.f32.mrf.mxu0
      %v2767 = vadd.f32 0.0, %v2766
      %2768 = vmatmul.f32.gmra.mxu0 %v2705
      %v2769 = vpop.f32.mrf.mxu0
      %v2770 = vadd.f32 0.0, %v2769
      %2771 = vmatmul.f32.gmra.mxu0 %v2708
      %v2772 = vpop.f32.mrf.mxu0
      %v2773 = vadd.f32 0.0, %v2772
      %2774 = vmatmul.f32.gmra.mxu0 %v2711
      %v2775 = vpop.f32.mrf.mxu0
      %v2776 = vadd.f32 0.0, %v2775
      %2777 = vmatmul.f32.gmra.mxu0 %v2714
      %v2778 = vpop.f32.mrf.mxu0
      %v2779 = vadd.f32 0.0, %v2778
      %2780 = vmatmul.f32.gmra.mxu0 %v2717
      %v2781 = vpop.f32.mrf.mxu0
      %v2782 = vadd.f32 0.0, %v2781
      %2783 = vmatmul.f32.gmra.mxu0 %v2720
      %v2784 = vpop.f32.mrf.mxu0
      %v2785 = vadd.f32 0.0, %v2784
      %2786 = vmatmul.f32.gmra.mxu0 %v2723
      %v2787 = vpop.f32.mrf.mxu0
      %v2788 = vadd.f32 0.0, %v2787
      %2789 = vmatmul.f32.gmra.mxu0 %v2726
      %v2790 = vpop.f32.mrf.mxu0
      %v2791 = vadd.f32 0.0, %v2790
      %2792 = vmatmul.f32.gmra.mxu0 %v2729
      %v2793 = vpop.f32.mrf.mxu0
      %v2794 = vadd.f32 0.0, %v2793
      %2795 = vmatmul.f32.gmra.mxu0 %v2732
      %v2796 = vpop.f32.mrf.mxu0
      %v2797 = vadd.f32 0.0, %v2796
      %2798 = vmatmul.f32.gmra.mxu0 %v2735
      %v2799 = vpop.f32.mrf.mxu0
      %v2800 = vadd.f32 0.0, %v2799
      %2801 = vmatmul.f32.gmra.mxu0 %v2738
      %v2802 = vpop.f32.mrf.mxu0
      %v2803 = vadd.f32 0.0, %v2802
      %2804 = vmatmul.f32.gmra.mxu0 %v2741
      %v2805 = vpop.f32.mrf.mxu0
      %v2806 = vadd.f32 0.0, %v2805
      %2807 = vmatmul.f32.gmra.mxu0 %v2744
      %v2808 = vpop.f32.mrf.mxu0
      %v2809 = vadd.f32 0.0, %v2808
      %2810 = vdwg.mxu0
      %v2811 = vadd.f32 %v2664, %v2764
      %v2812 = vadd.f32 %v2665, %v2767
      %v2813 = vadd.f32 %v2666, %v2770
      %v2814 = vadd.f32 %v2667, %v2773
      %v2815 = vadd.f32 %v2668, %v2776
      %v2816 = vadd.f32 %v2669, %v2779
      %v2817 = vadd.f32 %v2670, %v2782
      %v2818 = vadd.f32 %v2671, %v2785
      %v2819 = vadd.f32 %v2672, %v2788
      %v2820 = vadd.f32 %v2673, %v2791
      %v2821 = vadd.f32 %v2674, %v2794
      %v2822 = vadd.f32 %v2675, %v2797
      %v2823 = vadd.f32 %v2676, %v2800
      %v2824 = vadd.f32 %v2677, %v2803
      %v2825 = vadd.f32 %v2678, %v2806
      %v2826 = vadd.f32 %v2679, %v2809
      %v2827 = vld [vmem:[%s1151 + $0x1] sm:$0xff]
      %v2828 = vld [vmem:[%s1151 + $0x11] sm:$0xff]
      %v2829 = vld [vmem:[%s1151 + $0x21] sm:$0xff]
      %v2830 = vld [vmem:[%s1151 + $0x31] sm:$0xff]
      %v2831 = vld [vmem:[%s1151 + $0x41] sm:$0xff]
      %v2832 = vld [vmem:[%s1151 + $0x51] sm:$0xff]
      %v2833 = vld [vmem:[%s1151 + $0x61] sm:$0xff]
      %v2834 = vld [vmem:[%s1151 + $0x71] sm:$0xff]
      %v2835 = vld [vmem:[%s1151 + $0xa1] sm:$0xff]
      %v2836 = vld [vmem:[%s1151 + $0xb1] sm:$0xff]
      %v2837 = vld [vmem:[%s1151 + $0xc1] sm:$0xff]
      %v2838 = vld [vmem:[%s1151 + $0xd1] sm:$0xff]
      %v2839 = vld [vmem:[%s1151 + $0xe1] sm:$0xff]
      %v2840 = vld [vmem:[%s1151 + $0xf1] sm:$0xff]
      %v2841 = vld [vmem:[%s1151 + $0x101] sm:$0xff]
      %v2842 = vld [vmem:[%s1151 + $0x111] sm:$0xff]
      %s2843 = scalar_lea.vmem %s1, 128
      %v2844 = vld [vmem:[%s2843] sm:$0xff]
      %v2846 = vsel %vm285, %v2827, 0
      %v2849 = vsel %vm285, %v2828, 0
      %v2852 = vsel %vm285, %v2829, 0
      %v2855 = vsel %vm285, %v2830, 0
      %v2858 = vsel %vm285, %v2831, 0
      %v2861 = vsel %vm285, %v2832, 0
      %v2864 = vsel %vm285, %v2833, 0
      %v2867 = vsel %vm285, %v2834, 0
      %v2870 = vsel %vm285, %v2835, 0
      %v2873 = vsel %vm285, %v2836, 0
      %v2876 = vsel %vm285, %v2837, 0
      %v2879 = vsel %vm285, %v2838, 0
      %v2882 = vsel %vm285, %v2839, 0
      %v2885 = vsel %vm285, %v2840, 0
      %v2888 = vsel %vm285, %v2841, 0
      %v2891 = vsel %vm285, %v2842, 0
      %2893 = vmatpush.msra.mxu0 0.0
      %2894 = vmatpush.msra.mxu0 0.0
      %2895 = vmatpush.msra.mxu0 0.0
      %2896 = vmatpush.msra.mxu0 0.0
      %2897 = vmatpush.msra.mxu0 0.0
      %2898 = vmatpush.msra.mxu0 0.0
      %2899 = vmatpush.msra.mxu0 0.0
      %2900 = vmatpush.msra.mxu0 0.0
      %2901 = vmatpush.msra.mxu0 0.0
      %2902 = vmatpush.msra.mxu0 0.0
      %2903 = vmatpush.msra.mxu0 0.0
      %2904 = vmatpush.msra.mxu0 0.0
      %2905 = vmatpush.msra.mxu0 0.0
      %2906 = vmatpush.msra.mxu0 0.0
      %2907 = vmatpush.msra.mxu0 0.0
      %2908 = vmatpush.msra.mxu0 %v2844
      %2909 = vmatmul.f32.gmra.mxu0 %v2846
      %v2910 = vpop.f32.mrf.mxu0
      %v2911 = vadd.f32 0.0, %v2910
      %2912 = vmatmul.f32.gmra.mxu0 %v2849
      %v2913 = vpop.f32.mrf.mxu0
      %v2914 = vadd.f32 0.0, %v2913
      %2915 = vmatmul.f32.gmra.mxu0 %v2852
      %v2916 = vpop.f32.mrf.mxu0
      %v2917 = vadd.f32 0.0, %v2916
      %2918 = vmatmul.f32.gmra.mxu0 %v2855
      %v2919 = vpop.f32.mrf.mxu0
      %v2920 = vadd.f32 0.0, %v2919
      %2921 = vmatmul.f32.gmra.mxu0 %v2858
      %v2922 = vpop.f32.mrf.mxu0
      %v2923 = vadd.f32 0.0, %v2922
      %2924 = vmatmul.f32.gmra.mxu0 %v2861
      %v2925 = vpop.f32.mrf.mxu0
      %v2926 = vadd.f32 0.0, %v2925
      %2927 = vmatmul.f32.gmra.mxu0 %v2864
      %v2928 = vpop.f32.mrf.mxu0
      %v2929 = vadd.f32 0.0, %v2928
      %2930 = vmatmul.f32.gmra.mxu0 %v2867
      %v2931 = vpop.f32.mrf.mxu0
      %v2932 = vadd.f32 0.0, %v2931
      %2933 = vmatmul.f32.gmra.mxu0 %v2870
      %v2934 = vpop.f32.mrf.mxu0
      %v2935 = vadd.f32 0.0, %v2934
      %2936 = vmatmul.f32.gmra.mxu0 %v2873
      %v2937 = vpop.f32.mrf.mxu0
      %v2938 = vadd.f32 0.0, %v2937
      %2939 = vmatmul.f32.gmra.mxu0 %v2876
      %v2940 = vpop.f32.mrf.mxu0
      %v2941 = vadd.f32 0.0, %v2940
      %2942 = vmatmul.f32.gmra.mxu0 %v2879
      %v2943 = vpop.f32.mrf.mxu0
      %v2944 = vadd.f32 0.0, %v2943
      %2945 = vmatmul.f32.gmra.mxu0 %v2882
      %v2946 = vpop.f32.mrf.mxu0
      %v2947 = vadd.f32 0.0, %v2946
      %2948 = vmatmul.f32.gmra.mxu0 %v2885
      %v2949 = vpop.f32.mrf.mxu0
      %v2950 = vadd.f32 0.0, %v2949
      %2951 = vmatmul.f32.gmra.mxu0 %v2888
      %v2952 = vpop.f32.mrf.mxu0
      %v2953 = vadd.f32 0.0, %v2952
      %2954 = vmatmul.f32.gmra.mxu0 %v2891
      %v2955 = vpop.f32.mrf.mxu0
      %v2956 = vadd.f32 0.0, %v2955
      %2957 = vdwg.mxu0
      %v2958 = vadd.f32 %v2811, %v2911
      %v2959 = vadd.f32 %v2812, %v2914
      %v2960 = vadd.f32 %v2813, %v2917
      %v2961 = vadd.f32 %v2814, %v2920
      %v2962 = vadd.f32 %v2815, %v2923
      %v2963 = vadd.f32 %v2816, %v2926
      %v2964 = vadd.f32 %v2817, %v2929
      %v2965 = vadd.f32 %v2818, %v2932
      %v2966 = vadd.f32 %v2819, %v2935
      %v2967 = vadd.f32 %v2820, %v2938
      %v2968 = vadd.f32 %v2821, %v2941
      %v2969 = vadd.f32 %v2822, %v2944
      %v2970 = vadd.f32 %v2823, %v2947
      %v2971 = vadd.f32 %v2824, %v2950
      %v2972 = vadd.f32 %v2825, %v2953
      %v2973 = vadd.f32 %v2826, %v2956
      %v2974 = vld [vmem:[%s1151 + $0x2] sm:$0xff]
      %v2975 = vld [vmem:[%s1151 + $0x12] sm:$0xff]
      %v2976 = vld [vmem:[%s1151 + $0x22] sm:$0xff]
      %v2977 = vld [vmem:[%s1151 + $0x32] sm:$0xff]
      %v2978 = vld [vmem:[%s1151 + $0x42] sm:$0xff]
      %v2979 = vld [vmem:[%s1151 + $0x52] sm:$0xff]
      %v2980 = vld [vmem:[%s1151 + $0x62] sm:$0xff]
      %v2981 = vld [vmem:[%s1151 + $0x72] sm:$0xff]
      %v2982 = vld [vmem:[%s1151 + $0xa2] sm:$0xff]
      %v2983 = vld [vmem:[%s1151 + $0xb2] sm:$0xff]
      %v2984 = vld [vmem:[%s1151 + $0xc2] sm:$0xff]
      %v2985 = vld [vmem:[%s1151 + $0xd2] sm:$0xff]
      %v2986 = vld [vmem:[%s1151 + $0xe2] sm:$0xff]
      %v2987 = vld [vmem:[%s1151 + $0xf2] sm:$0xff]
      %v2988 = vld [vmem:[%s1151 + $0x102] sm:$0xff]
      %v2989 = vld [vmem:[%s1151 + $0x112] sm:$0xff]
      %s2990 = scalar_lea.vmem %s1, 136
      %v2991 = vld [vmem:[%s2990] sm:$0xff]
      %v2993 = vsel %vm285, %v2974, 0
      %v2996 = vsel %vm285, %v2975, 0
      %v2999 = vsel %vm285, %v2976, 0
      %v3002 = vsel %vm285, %v2977, 0
      %v3005 = vsel %vm285, %v2978, 0
      %v3008 = vsel %vm285, %v2979, 0
      %v3011 = vsel %vm285, %v2980, 0
      %v3014 = vsel %vm285, %v2981, 0
      %v3017 = vsel %vm285, %v2982, 0
      %v3020 = vsel %vm285, %v2983, 0
      %v3023 = vsel %vm285, %v2984, 0
      %v3026 = vsel %vm285, %v2985, 0
      %v3029 = vsel %vm285, %v2986, 0
      %v3032 = vsel %vm285, %v2987, 0
      %v3035 = vsel %vm285, %v2988, 0
      %v3038 = vsel %vm285, %v2989, 0
      %3040 = vmatpush.msra.mxu0 0.0
      %3041 = vmatpush.msra.mxu0 0.0
      %3042 = vmatpush.msra.mxu0 0.0
      %3043 = vmatpush.msra.mxu0 0.0
      %3044 = vmatpush.msra.mxu0 0.0
      %3045 = vmatpush.msra.mxu0 0.0
      %3046 = vmatpush.msra.mxu0 0.0
      %3047 = vmatpush.msra.mxu0 0.0
      %3048 = vmatpush.msra.mxu0 0.0
      %3049 = vmatpush.msra.mxu0 0.0
      %3050 = vmatpush.msra.mxu0 0.0
      %3051 = vmatpush.msra.mxu0 0.0
      %3052 = vmatpush.msra.mxu0 0.0
      %3053 = vmatpush.msra.mxu0 0.0
      %3054 = vmatpush.msra.mxu0 0.0
      %3055 = vmatpush.msra.mxu0 %v2991
      %3056 = vmatmul.f32.gmra.mxu0 %v2993
      %v3057 = vpop.f32.mrf.mxu0
      %v3058 = vadd.f32 0.0, %v3057
      %3059 = vmatmul.f32.gmra.mxu0 %v2996
      %v3060 = vpop.f32.mrf.mxu0
      %v3061 = vadd.f32 0.0, %v3060
      %3062 = vmatmul.f32.gmra.mxu0 %v2999
      %v3063 = vpop.f32.mrf.mxu0
      %v3064 = vadd.f32 0.0, %v3063
      %3065 = vmatmul.f32.gmra.mxu0 %v3002
      %v3066 = vpop.f32.mrf.mxu0
      %v3067 = vadd.f32 0.0, %v3066
      %3068 = vmatmul.f32.gmra.mxu0 %v3005
      %v3069 = vpop.f32.mrf.mxu0
      %v3070 = vadd.f32 0.0, %v3069
      %3071 = vmatmul.f32.gmra.mxu0 %v3008
      %v3072 = vpop.f32.mrf.mxu0
      %v3073 = vadd.f32 0.0, %v3072
      %3074 = vmatmul.f32.gmra.mxu0 %v3011
      %v3075 = vpop.f32.mrf.mxu0
      %v3076 = vadd.f32 0.0, %v3075
      %3077 = vmatmul.f32.gmra.mxu0 %v3014
      %v3078 = vpop.f32.mrf.mxu0
      %v3079 = vadd.f32 0.0, %v3078
      %3080 = vmatmul.f32.gmra.mxu0 %v3017
      %v3081 = vpop.f32.mrf.mxu0
      %v3082 = vadd.f32 0.0, %v3081
      %3083 = vmatmul.f32.gmra.mxu0 %v3020
      %v3084 = vpop.f32.mrf.mxu0
      %v3085 = vadd.f32 0.0, %v3084
      %3086 = vmatmul.f32.gmra.mxu0 %v3023
      %v3087 = vpop.f32.mrf.mxu0
      %v3088 = vadd.f32 0.0, %v3087
      %3089 = vmatmul.f32.gmra.mxu0 %v3026
      %v3090 = vpop.f32.mrf.mxu0
      %v3091 = vadd.f32 0.0, %v3090
      %3092 = vmatmul.f32.gmra.mxu0 %v3029
      %v3093 = vpop.f32.mrf.mxu0
      %v3094 = vadd.f32 0.0, %v3093
      %3095 = vmatmul.f32.gmra.mxu0 %v3032
      %v3096 = vpop.f32.mrf.mxu0
      %v3097 = vadd.f32 0.0, %v3096
      %3098 = vmatmul.f32.gmra.mxu0 %v3035
      %v3099 = vpop.f32.mrf.mxu0
      %v3100 = vadd.f32 0.0, %v3099
      %3101 = vmatmul.f32.gmra.mxu0 %v3038
      %v3102 = vpop.f32.mrf.mxu0
      %v3103 = vadd.f32 0.0, %v3102
      %3104 = vdwg.mxu0
      %v3105 = vadd.f32 %v2958, %v3058
      %v3106 = vadd.f32 %v2959, %v3061
      %v3107 = vadd.f32 %v2960, %v3064
      %v3108 = vadd.f32 %v2961, %v3067
      %v3109 = vadd.f32 %v2962, %v3070
      %v3110 = vadd.f32 %v2963, %v3073
      %v3111 = vadd.f32 %v2964, %v3076
      %v3112 = vadd.f32 %v2965, %v3079
      %v3113 = vadd.f32 %v2966, %v3082
      %v3114 = vadd.f32 %v2967, %v3085
      %v3115 = vadd.f32 %v2968, %v3088
      %v3116 = vadd.f32 %v2969, %v3091
      %v3117 = vadd.f32 %v2970, %v3094
      %v3118 = vadd.f32 %v2971, %v3097
      %v3119 = vadd.f32 %v2972, %v3100
      %v3120 = vadd.f32 %v2973, %v3103
      %s3121 = scalar_lea.vmem %s2, 1
      %v3122 = vld [vmem:[%s3121] sm:$0x1]
      %v3124 = vperm.slane %v3122, 0
      %v3126 = vadd.f32 %v3105, %v3124
      %v3127 = vadd.f32 %v3106, %v3124
      %v3128 = vadd.f32 %v3107, %v3124
      %v3129 = vadd.f32 %v3108, %v3124
      %v3130 = vadd.f32 %v3109, %v3124
      %v3131 = vadd.f32 %v3110, %v3124
      %v3132 = vadd.f32 %v3111, %v3124
      %v3133 = vadd.f32 %v3112, %v3124
      %v3134 = vadd.f32 %v3113, %v3124
      %v3135 = vadd.f32 %v3114, %v3124
      %v3136 = vadd.f32 %v3115, %v3124
      %v3137 = vadd.f32 %v3116, %v3124
      %v3138 = vadd.f32 %v3117, %v3124
      %v3139 = vadd.f32 %v3118, %v3124
      %v3140 = vadd.f32 %v3119, %v3124
      %v3141 = vadd.f32 %v3120, %v3124
      %s3142 = scalar_lea.vmem %s3, 1
      %v3143 = vld [vmem:[%s3142] sm:$0x1]
      %s3144 = scalar_lea.vmem %s4, 1
      %v3145 = vld [vmem:[%s3144] sm:$0x1]
      %v3146 = vsel %vm285, %v3126, 0.0
      %v3147 = vsel %vm285, %v3127, 0.0
      %v3148 = vadd.f32 %v3146, %v3147
      %v3149 = vsel %vm285, %v3128, 0.0
      %v3150 = vadd.f32 %v3148, %v3149
      %v3151 = vsel %vm285, %v3129, 0.0
      %v3152 = vadd.f32 %v3150, %v3151
      %v3153 = vsel %vm285, %v3130, 0.0
      %v3154 = vadd.f32 %v3152, %v3153
      %v3155 = vsel %vm285, %v3131, 0.0
      %v3156 = vadd.f32 %v3154, %v3155
      %v3157 = vsel %vm285, %v3132, 0.0
      %v3158 = vadd.f32 %v3156, %v3157
      %v3159 = vsel %vm285, %v3133, 0.0
      %v3160 = vadd.f32 %v3158, %v3159
      %v3161 = vsel %vm285, %v3134, 0.0
      %v3162 = vadd.f32 %v3160, %v3161
      %v3163 = vsel %vm285, %v3135, 0.0
      %v3164 = vadd.f32 %v3162, %v3163
      %v3165 = vsel %vm285, %v3136, 0.0
      %v3166 = vadd.f32 %v3164, %v3165
      %v3167 = vsel %vm285, %v3137, 0.0
      %v3168 = vadd.f32 %v3166, %v3167
      %v3169 = vsel %vm285, %v3138, 0.0
      %v3170 = vadd.f32 %v3168, %v3169
      %v3171 = vsel %vm285, %v3139, 0.0
      %v3172 = vadd.f32 %v3170, %v3171
      %v3173 = vsel %vm285, %v3140, 0.0
      %v3174 = vadd.f32 %v3172, %v3173
      %v3175 = vsel %vm285, %v3141, 0.0
      %v3176 = vadd.f32 %v3174, %v3175
      %v3177 = vrot.slane %v3176, 4
      %v3178 = vadd.f32 %v3176, %v3177
      %v3179 = vrot.slane %v3178, 2
      %v3180 = vadd.f32 %v3178, %v3179
      %v3181 = vrot.slane %v3180, 1
      %v3182 = vadd.f32 %v3180, %v3181
      %v3183 = vmul.f32 %v3126, %v3126
      %v3184 = vmul.f32 %v3127, %v3127
      %v3185 = vmul.f32 %v3128, %v3128
      %v3186 = vmul.f32 %v3129, %v3129
      %v3187 = vmul.f32 %v3130, %v3130
      %v3188 = vmul.f32 %v3131, %v3131
      %v3189 = vmul.f32 %v3132, %v3132
      %v3190 = vmul.f32 %v3133, %v3133
      %v3191 = vmul.f32 %v3134, %v3134
      %v3192 = vmul.f32 %v3135, %v3135
      %v3193 = vmul.f32 %v3136, %v3136
      %v3194 = vmul.f32 %v3137, %v3137
      %v3195 = vmul.f32 %v3138, %v3138
      %v3196 = vmul.f32 %v3139, %v3139
      %v3197 = vmul.f32 %v3140, %v3140
      %v3198 = vmul.f32 %v3141, %v3141
      %v3199 = vsel %vm285, %v3183, 0.0
      %v3200 = vsel %vm285, %v3184, 0.0
      %v3201 = vadd.f32 %v3199, %v3200
      %v3202 = vsel %vm285, %v3185, 0.0
      %v3203 = vadd.f32 %v3201, %v3202
      %v3204 = vsel %vm285, %v3186, 0.0
      %v3205 = vadd.f32 %v3203, %v3204
      %v3206 = vsel %vm285, %v3187, 0.0
      %v3207 = vadd.f32 %v3205, %v3206
      %v3208 = vsel %vm285, %v3188, 0.0
      %v3209 = vadd.f32 %v3207, %v3208
      %v3210 = vsel %vm285, %v3189, 0.0
      %v3211 = vadd.f32 %v3209, %v3210
      %v3212 = vsel %vm285, %v3190, 0.0
      %v3213 = vadd.f32 %v3211, %v3212
      %v3214 = vsel %vm285, %v3191, 0.0
      %v3215 = vadd.f32 %v3213, %v3214
      %v3216 = vsel %vm285, %v3192, 0.0
      %v3217 = vadd.f32 %v3215, %v3216
      %v3218 = vsel %vm285, %v3193, 0.0
      %v3219 = vadd.f32 %v3217, %v3218
      %v3220 = vsel %vm285, %v3194, 0.0
      %v3221 = vadd.f32 %v3219, %v3220
      %v3222 = vsel %vm285, %v3195, 0.0
      %v3223 = vadd.f32 %v3221, %v3222
      %v3224 = vsel %vm285, %v3196, 0.0
      %v3225 = vadd.f32 %v3223, %v3224
      %v3226 = vsel %vm285, %v3197, 0.0
      %v3227 = vadd.f32 %v3225, %v3226
      %v3228 = vsel %vm285, %v3198, 0.0
      %v3229 = vadd.f32 %v3227, %v3228
      %v3230 = vrot.slane %v3229, 4
      %v3231 = vadd.f32 %v3229, %v3230
      %v3232 = vrot.slane %v3231, 2
      %v3233 = vadd.f32 %v3231, %v3232
      %v3234 = vrot.slane %v3233, 1
      %v3235 = vadd.f32 %v3233, %v3234
      %v3236 = vmul.f32 %v3182, %v1711
      %v3237 = vmul.f32 %v3235, %v1711
      %v3238 = vmul.f32 %v3236, %v3236
      %v3239 = vsub.f32 %v3237, %v3238
      %v3240 = vmax.f32 %v3239, 0.0
      %v3241 = vsub.f32 %v3126, %v3236
      %v3242 = vsub.f32 %v3127, %v3236
      %v3243 = vsub.f32 %v3128, %v3236
      %v3244 = vsub.f32 %v3129, %v3236
      %v3245 = vsub.f32 %v3130, %v3236
      %v3246 = vsub.f32 %v3131, %v3236
      %v3247 = vsub.f32 %v3132, %v3236
      %v3248 = vsub.f32 %v3133, %v3236
      %v3249 = vsub.f32 %v3134, %v3236
      %v3250 = vsub.f32 %v3135, %v3236
      %v3251 = vsub.f32 %v3136, %v3236
      %v3252 = vsub.f32 %v3137, %v3236
      %v3253 = vsub.f32 %v3138, %v3236
      %v3254 = vsub.f32 %v3139, %v3236
      %v3255 = vsub.f32 %v3140, %v3236
      %v3256 = vsub.f32 %v3141, %v3236
      %v3257 = vadd.f32 %v3240, 1e-05
      %v3258 = vrsqrt.pop %v3257
      %v3259 = vmul.f32 %v3258, %v3257
      %v3260 = vmul.f32 %v3259, %v3258
      %v3261 = vmul.f32 0.5, %v3260
      %v3262 = vsub.f32 1.5, %v3261
      %v3263 = vmul.f32 %v3258, %v3262
      %vm3264 = vweird.f32 %v3257
      %vm3265 = vweird.f32 %v3258
      %vm3266 = vmor %vm3264, %vm3265
      %v3267 = vsel %vm3266, %v3258, %v3263
      %v3268 = vmul.f32 %v3241, %v3267
      %v3269 = vmul.f32 %v3242, %v3267
      %v3270 = vmul.f32 %v3243, %v3267
      %v3271 = vmul.f32 %v3244, %v3267
      %v3272 = vmul.f32 %v3245, %v3267
      %v3273 = vmul.f32 %v3246, %v3267
      %v3274 = vmul.f32 %v3247, %v3267
      %v3275 = vmul.f32 %v3248, %v3267
      %v3276 = vmul.f32 %v3249, %v3267
      %v3277 = vmul.f32 %v3250, %v3267
      %v3278 = vmul.f32 %v3251, %v3267
      %v3279 = vmul.f32 %v3252, %v3267
      %v3280 = vmul.f32 %v3253, %v3267
      %v3281 = vmul.f32 %v3254, %v3267
      %v3282 = vmul.f32 %v3255, %v3267
      %v3283 = vmul.f32 %v3256, %v3267
      %v3285 = vperm.slane %v3143, 0
      %v3287 = vmul.f32 %v3268, %v3285
      %v3288 = vmul.f32 %v3269, %v3285
      %v3289 = vmul.f32 %v3270, %v3285
      %v3290 = vmul.f32 %v3271, %v3285
      %v3291 = vmul.f32 %v3272, %v3285
      %v3292 = vmul.f32 %v3273, %v3285
      %v3293 = vmul.f32 %v3274, %v3285
      %v3294 = vmul.f32 %v3275, %v3285
      %v3295 = vmul.f32 %v3276, %v3285
      %v3296 = vmul.f32 %v3277, %v3285
      %v3297 = vmul.f32 %v3278, %v3285
      %v3298 = vmul.f32 %v3279, %v3285
      %v3299 = vmul.f32 %v3280, %v3285
      %v3300 = vmul.f32 %v3281, %v3285
      %v3301 = vmul.f32 %v3282, %v3285
      %v3302 = vmul.f32 %v3283, %v3285
      %v3304 = vperm.slane %v3145, 0
      %v3306 = vadd.f32 %v3287, %v3304
      %v3307 = vadd.f32 %v3288, %v3304
      %v3308 = vadd.f32 %v3289, %v3304
      %v3309 = vadd.f32 %v3290, %v3304
      %v3310 = vadd.f32 %v3291, %v3304
      %v3311 = vadd.f32 %v3292, %v3304
      %v3312 = vadd.f32 %v3293, %v3304
      %v3313 = vadd.f32 %v3294, %v3304
      %v3314 = vadd.f32 %v3295, %v3304
      %v3315 = vadd.f32 %v3296, %v3304
      %v3316 = vadd.f32 %v3297, %v3304
      %v3317 = vadd.f32 %v3298, %v3304
      %v3318 = vadd.f32 %v3299, %v3304
      %v3319 = vadd.f32 %v3300, %v3304
      %v3320 = vadd.f32 %v3301, %v3304
      %v3321 = vadd.f32 %v3302, %v3304
      %v3322 = vmax.f32 %v3306, 0.0
      %v3323 = vmax.f32 %v3307, 0.0
      %v3324 = vmax.f32 %v3308, 0.0
      %v3325 = vmax.f32 %v3309, 0.0
      %v3326 = vmax.f32 %v3310, 0.0
      %v3327 = vmax.f32 %v3311, 0.0
      %v3328 = vmax.f32 %v3312, 0.0
      %v3329 = vmax.f32 %v3313, 0.0
      %v3330 = vmax.f32 %v3314, 0.0
      %v3331 = vmax.f32 %v3315, 0.0
      %v3332 = vmax.f32 %v3316, 0.0
      %v3333 = vmax.f32 %v3317, 0.0
      %v3334 = vmax.f32 %v3318, 0.0
      %v3335 = vmax.f32 %v3319, 0.0
      %v3336 = vmax.f32 %v3320, 0.0
      %v3337 = vmax.f32 %v3321, 0.0
      %3338 = vst.msk [vmem:[%s284 + $0x1] sm:$0xff] %vm285, %v3322
      %3339 = vst.msk [vmem:[%s284 + $0x11] sm:$0xff] %vm285, %v3323
      %3340 = vst.msk [vmem:[%s284 + $0x21] sm:$0xff] %vm285, %v3324
      %3341 = vst.msk [vmem:[%s284 + $0x31] sm:$0xff] %vm285, %v3325
      %3342 = vst.msk [vmem:[%s284 + $0x41] sm:$0xff] %vm285, %v3326
      %3343 = vst.msk [vmem:[%s284 + $0x51] sm:$0xff] %vm285, %v3327
      %3344 = vst.msk [vmem:[%s284 + $0x61] sm:$0xff] %vm285, %v3328
      %3345 = vst.msk [vmem:[%s284 + $0x71] sm:$0xff] %vm285, %v3329
      %3346 = vst.msk [vmem:[%s284 + $0xa1] sm:$0xff] %vm285, %v3330
      %3347 = vst.msk [vmem:[%s284 + $0xb1] sm:$0xff] %vm285, %v3331
      %3348 = vst.msk [vmem:[%s284 + $0xc1] sm:$0xff] %vm285, %v3332
      %3349 = vst.msk [vmem:[%s284 + $0xd1] sm:$0xff] %vm285, %v3333
      %3350 = vst.msk [vmem:[%s284 + $0xe1] sm:$0xff] %vm285, %v3334
      %3351 = vst.msk [vmem:[%s284 + $0xf1] sm:$0xff] %vm285, %v3335
      %3352 = vst.msk [vmem:[%s284 + $0x101] sm:$0xff] %vm285, %v3336
      %3353 = vst.msk [vmem:[%s284 + $0x111] sm:$0xff] %vm285, %v3337
      %v3354 = vld [vmem:[#allocation2] sm:$0xff]
      %v3355 = vld [vmem:[#allocation2 + $0x10] sm:$0xff]
      %v3356 = vld [vmem:[#allocation2 + $0x20] sm:$0xff]
      %v3357 = vld [vmem:[#allocation2 + $0x30] sm:$0xff]
      %v3358 = vld [vmem:[#allocation2 + $0x40] sm:$0xff]
      %v3359 = vld [vmem:[#allocation2 + $0x50] sm:$0xff]
      %v3360 = vld [vmem:[#allocation2 + $0x60] sm:$0xff]
      %v3361 = vld [vmem:[#allocation2 + $0x70] sm:$0xff]
      %v3362 = vld [vmem:[#allocation2 + $0xa0] sm:$0xff]
      %v3363 = vld [vmem:[#allocation2 + $0xb0] sm:$0xff]
      %v3364 = vld [vmem:[#allocation2 + $0xc0] sm:$0xff]
      %v3365 = vld [vmem:[#allocation2 + $0xd0] sm:$0xff]
      %v3366 = vld [vmem:[#allocation2 + $0xe0] sm:$0xff]
      %v3367 = vld [vmem:[#allocation2 + $0xf0] sm:$0xff]
      %v3368 = vld [vmem:[#allocation2 + $0x100] sm:$0xff]
      %v3369 = vld [vmem:[#allocation2 + $0x110] sm:$0xff]
      %s3370 = scalar_lea.vmem %s1, 144
      %v3371 = vld [vmem:[%s3370] sm:$0xff]
      %v3372 = vld [vmem:[#allocation2 + $0x1] sm:$0xff]
      %v3373 = vld [vmem:[#allocation2 + $0x11] sm:$0xff]
      %v3374 = vld [vmem:[#allocation2 + $0x21] sm:$0xff]
      %v3375 = vld [vmem:[#allocation2 + $0x31] sm:$0xff]
      %v3376 = vld [vmem:[#allocation2 + $0x41] sm:$0xff]
      %v3377 = vld [vmem:[#allocation2 + $0x51] sm:$0xff]
      %v3378 = vld [vmem:[#allocation2 + $0x61] sm:$0xff]
      %v3379 = vld [vmem:[#allocation2 + $0x71] sm:$0xff]
      %v3380 = vld [vmem:[#allocation2 + $0xa1] sm:$0xff]
      %v3381 = vld [vmem:[#allocation2 + $0xb1] sm:$0xff]
      %v3382 = vld [vmem:[#allocation2 + $0xc1] sm:$0xff]
      %v3383 = vld [vmem:[#allocation2 + $0xd1] sm:$0xff]
      %v3384 = vld [vmem:[#allocation2 + $0xe1] sm:$0xff]
      %v3385 = vld [vmem:[#allocation2 + $0xf1] sm:$0xff]
      %v3386 = vld [vmem:[#allocation2 + $0x101] sm:$0xff]
      %v3387 = vld [vmem:[#allocation2 + $0x111] sm:$0xff]
      %s3388 = scalar_lea.vmem %s1, 152
      %v3389 = vld [vmem:[%s3388] sm:$0xff]
      %v3391 = vsel %vm285, %v3372, 0
      %v3394 = vsel %vm285, %v3373, 0
      %v3397 = vsel %vm285, %v3374, 0
      %v3400 = vsel %vm285, %v3375, 0
      %v3403 = vsel %vm285, %v3376, 0
      %v3406 = vsel %vm285, %v3377, 0
      %v3409 = vsel %vm285, %v3378, 0
      %v3412 = vsel %vm285, %v3379, 0
      %v3415 = vsel %vm285, %v3380, 0
      %v3418 = vsel %vm285, %v3381, 0
      %v3421 = vsel %vm285, %v3382, 0
      %v3424 = vsel %vm285, %v3383, 0
      %v3427 = vsel %vm285, %v3384, 0
      %v3430 = vsel %vm285, %v3385, 0
      %v3433 = vsel %vm285, %v3386, 0
      %v3436 = vsel %vm285, %v3387, 0
      %3438 = vmatpush.msra.mxu0 0.0
      %3439 = vmatpush.msra.mxu0 0.0
      %3440 = vmatpush.msra.mxu0 0.0
      %3441 = vmatpush.msra.mxu0 0.0
      %3442 = vmatpush.msra.mxu0 0.0
      %3443 = vmatpush.msra.mxu0 0.0
      %3444 = vmatpush.msra.mxu0 0.0
      %3445 = vmatpush.msra.mxu0 0.0
      %3446 = vmatpush.msra.mxu0 0.0
      %3447 = vmatpush.msra.mxu0 0.0
      %3448 = vmatpush.msra.mxu0 0.0
      %3449 = vmatpush.msra.mxu0 0.0
      %3450 = vmatpush.msra.mxu0 0.0
      %3451 = vmatpush.msra.mxu0 0.0
      %3452 = vmatpush.msra.mxu0 0.0
      %3453 = vmatpush.msra.mxu0 %v3389
      %3454 = vmatmul.f32.gmra.mxu0 %v3391
      %v3455 = vpop.f32.mrf.mxu0
      %v3456 = vadd.f32 0.0, %v3455
      %3457 = vmatmul.f32.gmra.mxu0 %v3394
      %v3458 = vpop.f32.mrf.mxu0
      %v3459 = vadd.f32 0.0, %v3458
      %3460 = vmatmul.f32.gmra.mxu0 %v3397
      %v3461 = vpop.f32.mrf.mxu0
      %v3462 = vadd.f32 0.0, %v3461
      %3463 = vmatmul.f32.gmra.mxu0 %v3400
      %v3464 = vpop.f32.mrf.mxu0
      %v3465 = vadd.f32 0.0, %v3464
      %3466 = vmatmul.f32.gmra.mxu0 %v3403
      %v3467 = vpop.f32.mrf.mxu0
      %v3468 = vadd.f32 0.0, %v3467
      %3469 = vmatmul.f32.gmra.mxu0 %v3406
      %v3470 = vpop.f32.mrf.mxu0
      %v3471 = vadd.f32 0.0, %v3470
      %3472 = vmatmul.f32.gmra.mxu0 %v3409
      %v3473 = vpop.f32.mrf.mxu0
      %v3474 = vadd.f32 0.0, %v3473
      %3475 = vmatmul.f32.gmra.mxu0 %v3412
      %v3476 = vpop.f32.mrf.mxu0
      %v3477 = vadd.f32 0.0, %v3476
      %3478 = vmatmul.f32.gmra.mxu0 %v3415
      %v3479 = vpop.f32.mrf.mxu0
      %v3480 = vadd.f32 0.0, %v3479
      %3481 = vmatmul.f32.gmra.mxu0 %v3418
      %v3482 = vpop.f32.mrf.mxu0
      %v3483 = vadd.f32 0.0, %v3482
      %3484 = vmatmul.f32.gmra.mxu0 %v3421
      %v3485 = vpop.f32.mrf.mxu0
      %v3486 = vadd.f32 0.0, %v3485
      %3487 = vmatmul.f32.gmra.mxu0 %v3424
      %v3488 = vpop.f32.mrf.mxu0
      %v3489 = vadd.f32 0.0, %v3488
      %3490 = vmatmul.f32.gmra.mxu0 %v3427
      %v3491 = vpop.f32.mrf.mxu0
      %v3492 = vadd.f32 0.0, %v3491
      %3493 = vmatmul.f32.gmra.mxu0 %v3430
      %v3494 = vpop.f32.mrf.mxu0
      %v3495 = vadd.f32 0.0, %v3494
      %3496 = vmatmul.f32.gmra.mxu0 %v3433
      %v3497 = vpop.f32.mrf.mxu0
      %v3498 = vadd.f32 0.0, %v3497
      %3499 = vmatmul.f32.gmra.mxu0 %v3436
      %v3500 = vpop.f32.mrf.mxu0
      %v3501 = vadd.f32 0.0, %v3500
      %3502 = vdwg.mxu0
      %v3504 = vsel %vm285, %v3354, 0
      %v3507 = vsel %vm285, %v3355, 0
      %v3510 = vsel %vm285, %v3356, 0
      %v3513 = vsel %vm285, %v3357, 0
      %v3516 = vsel %vm285, %v3358, 0
      %v3519 = vsel %vm285, %v3359, 0
      %v3522 = vsel %vm285, %v3360, 0
      %v3525 = vsel %vm285, %v3361, 0
      %v3528 = vsel %vm285, %v3362, 0
      %v3531 = vsel %vm285, %v3363, 0
      %v3534 = vsel %vm285, %v3364, 0
      %v3537 = vsel %vm285, %v3365, 0
      %v3540 = vsel %vm285, %v3366, 0
      %v3543 = vsel %vm285, %v3367, 0
      %v3546 = vsel %vm285, %v3368, 0
      %v3549 = vsel %vm285, %v3369, 0
      %3551 = vmatpush.msra.mxu0 0.0
      %3552 = vmatpush.msra.mxu0 0.0
      %3553 = vmatpush.msra.mxu0 0.0
      %3554 = vmatpush.msra.mxu0 0.0
      %3555 = vmatpush.msra.mxu0 0.0
      %3556 = vmatpush.msra.mxu0 0.0
      %3557 = vmatpush.msra.mxu0 0.0
      %3558 = vmatpush.msra.mxu0 0.0
      %3559 = vmatpush.msra.mxu0 0.0
      %3560 = vmatpush.msra.mxu0 0.0
      %3561 = vmatpush.msra.mxu0 0.0
      %3562 = vmatpush.msra.mxu0 0.0
      %3563 = vmatpush.msra.mxu0 0.0
      %3564 = vmatpush.msra.mxu0 0.0
      %3565 = vmatpush.msra.mxu0 0.0
      %3566 = vmatpush.msra.mxu0 %v3371
      %3567 = vmatmul.f32.gmra.mxu0 %v3504
      %v3568 = vpop.f32.mrf.mxu0
      %v3569 = vadd.f32 %v3456, %v3568
      %3570 = vmatmul.f32.gmra.mxu0 %v3507
      %v3571 = vpop.f32.mrf.mxu0
      %v3572 = vadd.f32 %v3459, %v3571
      %3573 = vmatmul.f32.gmra.mxu0 %v3510
      %v3574 = vpop.f32.mrf.mxu0
      %v3575 = vadd.f32 %v3462, %v3574
      %3576 = vmatmul.f32.gmra.mxu0 %v3513
      %v3577 = vpop.f32.mrf.mxu0
      %v3578 = vadd.f32 %v3465, %v3577
      %3579 = vmatmul.f32.gmra.mxu0 %v3516
      %v3580 = vpop.f32.mrf.mxu0
      %v3581 = vadd.f32 %v3468, %v3580
      %3582 = vmatmul.f32.gmra.mxu0 %v3519
      %v3583 = vpop.f32.mrf.mxu0
      %v3584 = vadd.f32 %v3471, %v3583
      %3585 = vmatmul.f32.gmra.mxu0 %v3522
      %v3586 = vpop.f32.mrf.mxu0
      %v3587 = vadd.f32 %v3474, %v3586
      %3588 = vmatmul.f32.gmra.mxu0 %v3525
      %v3589 = vpop.f32.mrf.mxu0
      %v3590 = vadd.f32 %v3477, %v3589
      %3591 = vmatmul.f32.gmra.mxu0 %v3528
      %v3592 = vpop.f32.mrf.mxu0
      %v3593 = vadd.f32 %v3480, %v3592
      %3594 = vmatmul.f32.gmra.mxu0 %v3531
      %v3595 = vpop.f32.mrf.mxu0
      %v3596 = vadd.f32 %v3483, %v3595
      %3597 = vmatmul.f32.gmra.mxu0 %v3534
      %v3598 = vpop.f32.mrf.mxu0
      %v3599 = vadd.f32 %v3486, %v3598
      %3600 = vmatmul.f32.gmra.mxu0 %v3537
      %v3601 = vpop.f32.mrf.mxu0
      %v3602 = vadd.f32 %v3489, %v3601
      %3603 = vmatmul.f32.gmra.mxu0 %v3540
      %v3604 = vpop.f32.mrf.mxu0
      %v3605 = vadd.f32 %v3492, %v3604
      %3606 = vmatmul.f32.gmra.mxu0 %v3543
      %v3607 = vpop.f32.mrf.mxu0
      %v3608 = vadd.f32 %v3495, %v3607
      %3609 = vmatmul.f32.gmra.mxu0 %v3546
      %v3610 = vpop.f32.mrf.mxu0
      %v3611 = vadd.f32 %v3498, %v3610
      %3612 = vmatmul.f32.gmra.mxu0 %v3549
      %v3613 = vpop.f32.mrf.mxu0
      %v3614 = vadd.f32 %v3501, %v3613
      %3615 = vdwg.mxu0
      %v3616 = vld [vmem:[#allocation2 + $0x2] sm:$0xff]
      %v3617 = vld [vmem:[#allocation2 + $0x12] sm:$0xff]
      %v3618 = vld [vmem:[#allocation2 + $0x22] sm:$0xff]
      %v3619 = vld [vmem:[#allocation2 + $0x32] sm:$0xff]
      %v3620 = vld [vmem:[#allocation2 + $0x42] sm:$0xff]
      %v3621 = vld [vmem:[#allocation2 + $0x52] sm:$0xff]
      %v3622 = vld [vmem:[#allocation2 + $0x62] sm:$0xff]
      %v3623 = vld [vmem:[#allocation2 + $0x72] sm:$0xff]
      %v3624 = vld [vmem:[#allocation2 + $0xa2] sm:$0xff]
      %v3625 = vld [vmem:[#allocation2 + $0xb2] sm:$0xff]
      %v3626 = vld [vmem:[#allocation2 + $0xc2] sm:$0xff]
      %v3627 = vld [vmem:[#allocation2 + $0xd2] sm:$0xff]
      %v3628 = vld [vmem:[#allocation2 + $0xe2] sm:$0xff]
      %v3629 = vld [vmem:[#allocation2 + $0xf2] sm:$0xff]
      %v3630 = vld [vmem:[#allocation2 + $0x102] sm:$0xff]
      %v3631 = vld [vmem:[#allocation2 + $0x112] sm:$0xff]
      %s3632 = scalar_lea.vmem %s1, 160
      %v3633 = vld [vmem:[%s3632] sm:$0xff]
      %v3635 = vsel %vm285, %v3616, 0
      %v3638 = vsel %vm285, %v3617, 0
      %v3641 = vsel %vm285, %v3618, 0
      %v3644 = vsel %vm285, %v3619, 0
      %v3647 = vsel %vm285, %v3620, 0
      %v3650 = vsel %vm285, %v3621, 0
      %v3653 = vsel %vm285, %v3622, 0
      %v3656 = vsel %vm285, %v3623, 0
      %v3659 = vsel %vm285, %v3624, 0
      %v3662 = vsel %vm285, %v3625, 0
      %v3665 = vsel %vm285, %v3626, 0
      %v3668 = vsel %vm285, %v3627, 0
      %v3671 = vsel %vm285, %v3628, 0
      %v3674 = vsel %vm285, %v3629, 0
      %v3677 = vsel %vm285, %v3630, 0
      %v3680 = vsel %vm285, %v3631, 0
      %3682 = vmatpush.msra.mxu0 0.0
      %3683 = vmatpush.msra.mxu0 0.0
      %3684 = vmatpush.msra.mxu0 0.0
      %3685 = vmatpush.msra.mxu0 0.0
      %3686 = vmatpush.msra.mxu0 0.0
      %3687 = vmatpush.msra.mxu0 0.0
      %3688 = vmatpush.msra.mxu0 0.0
      %3689 = vmatpush.msra.mxu0 0.0
      %3690 = vmatpush.msra.mxu0 0.0
      %3691 = vmatpush.msra.mxu0 0.0
      %3692 = vmatpush.msra.mxu0 0.0
      %3693 = vmatpush.msra.mxu0 0.0
      %3694 = vmatpush.msra.mxu0 0.0
      %3695 = vmatpush.msra.mxu0 0.0
      %3696 = vmatpush.msra.mxu0 0.0
      %3697 = vmatpush.msra.mxu0 %v3633
      %3698 = vmatmul.f32.gmra.mxu0 %v3635
      %v3699 = vpop.f32.mrf.mxu0
      %v3700 = vadd.f32 0.0, %v3699
      %3701 = vmatmul.f32.gmra.mxu0 %v3638
      %v3702 = vpop.f32.mrf.mxu0
      %v3703 = vadd.f32 0.0, %v3702
      %3704 = vmatmul.f32.gmra.mxu0 %v3641
      %v3705 = vpop.f32.mrf.mxu0
      %v3706 = vadd.f32 0.0, %v3705
      %3707 = vmatmul.f32.gmra.mxu0 %v3644
      %v3708 = vpop.f32.mrf.mxu0
      %v3709 = vadd.f32 0.0, %v3708
      %3710 = vmatmul.f32.gmra.mxu0 %v3647
      %v3711 = vpop.f32.mrf.mxu0
      %v3712 = vadd.f32 0.0, %v3711
      %3713 = vmatmul.f32.gmra.mxu0 %v3650
      %v3714 = vpop.f32.mrf.mxu0
      %v3715 = vadd.f32 0.0, %v3714
      %3716 = vmatmul.f32.gmra.mxu0 %v3653
      %v3717 = vpop.f32.mrf.mxu0
      %v3718 = vadd.f32 0.0, %v3717
      %3719 = vmatmul.f32.gmra.mxu0 %v3656
      %v3720 = vpop.f32.mrf.mxu0
      %v3721 = vadd.f32 0.0, %v3720
      %3722 = vmatmul.f32.gmra.mxu0 %v3659
      %v3723 = vpop.f32.mrf.mxu0
      %v3724 = vadd.f32 0.0, %v3723
      %3725 = vmatmul.f32.gmra.mxu0 %v3662
      %v3726 = vpop.f32.mrf.mxu0
      %v3727 = vadd.f32 0.0, %v3726
      %3728 = vmatmul.f32.gmra.mxu0 %v3665
      %v3729 = vpop.f32.mrf.mxu0
      %v3730 = vadd.f32 0.0, %v3729
      %3731 = vmatmul.f32.gmra.mxu0 %v3668
      %v3732 = vpop.f32.mrf.mxu0
      %v3733 = vadd.f32 0.0, %v3732
      %3734 = vmatmul.f32.gmra.mxu0 %v3671
      %v3735 = vpop.f32.mrf.mxu0
      %v3736 = vadd.f32 0.0, %v3735
      %3737 = vmatmul.f32.gmra.mxu0 %v3674
      %v3738 = vpop.f32.mrf.mxu0
      %v3739 = vadd.f32 0.0, %v3738
      %3740 = vmatmul.f32.gmra.mxu0 %v3677
      %v3741 = vpop.f32.mrf.mxu0
      %v3742 = vadd.f32 0.0, %v3741
      %3743 = vmatmul.f32.gmra.mxu0 %v3680
      %v3744 = vpop.f32.mrf.mxu0
      %v3745 = vadd.f32 0.0, %v3744
      %3746 = vdwg.mxu0
      %v3747 = vadd.f32 %v3569, %v3700
      %v3748 = vadd.f32 %v3572, %v3703
      %v3749 = vadd.f32 %v3575, %v3706
      %v3750 = vadd.f32 %v3578, %v3709
      %v3751 = vadd.f32 %v3581, %v3712
      %v3752 = vadd.f32 %v3584, %v3715
      %v3753 = vadd.f32 %v3587, %v3718
      %v3754 = vadd.f32 %v3590, %v3721
      %v3755 = vadd.f32 %v3593, %v3724
      %v3756 = vadd.f32 %v3596, %v3727
      %v3757 = vadd.f32 %v3599, %v3730
      %v3758 = vadd.f32 %v3602, %v3733
      %v3759 = vadd.f32 %v3605, %v3736
      %v3760 = vadd.f32 %v3608, %v3739
      %v3761 = vadd.f32 %v3611, %v3742
      %v3762 = vadd.f32 %v3614, %v3745
      %v3763 = vld [vmem:[%s284] sm:$0xff]
      %v3764 = vld [vmem:[%s284 + $0x10] sm:$0xff]
      %v3765 = vld [vmem:[%s284 + $0x20] sm:$0xff]
      %v3766 = vld [vmem:[%s284 + $0x30] sm:$0xff]
      %v3767 = vld [vmem:[%s284 + $0x40] sm:$0xff]
      %v3768 = vld [vmem:[%s284 + $0x50] sm:$0xff]
      %v3769 = vld [vmem:[%s284 + $0x60] sm:$0xff]
      %v3770 = vld [vmem:[%s284 + $0x70] sm:$0xff]
      %v3771 = vld [vmem:[%s284 + $0xa0] sm:$0xff]
      %v3772 = vld [vmem:[%s284 + $0xb0] sm:$0xff]
      %v3773 = vld [vmem:[%s284 + $0xc0] sm:$0xff]
      %v3774 = vld [vmem:[%s284 + $0xd0] sm:$0xff]
      %v3775 = vld [vmem:[%s284 + $0xe0] sm:$0xff]
      %v3776 = vld [vmem:[%s284 + $0xf0] sm:$0xff]
      %v3777 = vld [vmem:[%s284 + $0x100] sm:$0xff]
      %v3778 = vld [vmem:[%s284 + $0x110] sm:$0xff]
      %s3779 = scalar_lea.vmem %s1, 168
      %v3780 = vld [vmem:[%s3779] sm:$0xff]
      %v3782 = vsel %vm285, %v3763, 0
      %v3785 = vsel %vm285, %v3764, 0
      %v3788 = vsel %vm285, %v3765, 0
      %v3791 = vsel %vm285, %v3766, 0
      %v3794 = vsel %vm285, %v3767, 0
      %v3797 = vsel %vm285, %v3768, 0
      %v3800 = vsel %vm285, %v3769, 0
      %v3803 = vsel %vm285, %v3770, 0
      %v3806 = vsel %vm285, %v3771, 0
      %v3809 = vsel %vm285, %v3772, 0
      %v3812 = vsel %vm285, %v3773, 0
      %v3815 = vsel %vm285, %v3774, 0
      %v3818 = vsel %vm285, %v3775, 0
      %v3821 = vsel %vm285, %v3776, 0
      %v3824 = vsel %vm285, %v3777, 0
      %v3827 = vsel %vm285, %v3778, 0
      %3829 = vmatpush.msra.mxu0 0.0
      %3830 = vmatpush.msra.mxu0 0.0
      %3831 = vmatpush.msra.mxu0 0.0
      %3832 = vmatpush.msra.mxu0 0.0
      %3833 = vmatpush.msra.mxu0 0.0
      %3834 = vmatpush.msra.mxu0 0.0
      %3835 = vmatpush.msra.mxu0 0.0
      %3836 = vmatpush.msra.mxu0 0.0
      %3837 = vmatpush.msra.mxu0 0.0
      %3838 = vmatpush.msra.mxu0 0.0
      %3839 = vmatpush.msra.mxu0 0.0
      %3840 = vmatpush.msra.mxu0 0.0
      %3841 = vmatpush.msra.mxu0 0.0
      %3842 = vmatpush.msra.mxu0 0.0
      %3843 = vmatpush.msra.mxu0 0.0
      %3844 = vmatpush.msra.mxu0 %v3780
      %3845 = vmatmul.f32.gmra.mxu0 %v3782
      %v3846 = vpop.f32.mrf.mxu0
      %v3847 = vadd.f32 0.0, %v3846
      %3848 = vmatmul.f32.gmra.mxu0 %v3785
      %v3849 = vpop.f32.mrf.mxu0
      %v3850 = vadd.f32 0.0, %v3849
      %3851 = vmatmul.f32.gmra.mxu0 %v3788
      %v3852 = vpop.f32.mrf.mxu0
      %v3853 = vadd.f32 0.0, %v3852
      %3854 = vmatmul.f32.gmra.mxu0 %v3791
      %v3855 = vpop.f32.mrf.mxu0
      %v3856 = vadd.f32 0.0, %v3855
      %3857 = vmatmul.f32.gmra.mxu0 %v3794
      %v3858 = vpop.f32.mrf.mxu0
      %v3859 = vadd.f32 0.0, %v3858
      %3860 = vmatmul.f32.gmra.mxu0 %v3797
      %v3861 = vpop.f32.mrf.mxu0
      %v3862 = vadd.f32 0.0, %v3861
      %3863 = vmatmul.f32.gmra.mxu0 %v3800
      %v3864 = vpop.f32.mrf.mxu0
      %v3865 = vadd.f32 0.0, %v3864
      %3866 = vmatmul.f32.gmra.mxu0 %v3803
      %v3867 = vpop.f32.mrf.mxu0
      %v3868 = vadd.f32 0.0, %v3867
      %3869 = vmatmul.f32.gmra.mxu0 %v3806
      %v3870 = vpop.f32.mrf.mxu0
      %v3871 = vadd.f32 0.0, %v3870
      %3872 = vmatmul.f32.gmra.mxu0 %v3809
      %v3873 = vpop.f32.mrf.mxu0
      %v3874 = vadd.f32 0.0, %v3873
      %3875 = vmatmul.f32.gmra.mxu0 %v3812
      %v3876 = vpop.f32.mrf.mxu0
      %v3877 = vadd.f32 0.0, %v3876
      %3878 = vmatmul.f32.gmra.mxu0 %v3815
      %v3879 = vpop.f32.mrf.mxu0
      %v3880 = vadd.f32 0.0, %v3879
      %3881 = vmatmul.f32.gmra.mxu0 %v3818
      %v3882 = vpop.f32.mrf.mxu0
      %v3883 = vadd.f32 0.0, %v3882
      %3884 = vmatmul.f32.gmra.mxu0 %v3821
      %v3885 = vpop.f32.mrf.mxu0
      %v3886 = vadd.f32 0.0, %v3885
      %3887 = vmatmul.f32.gmra.mxu0 %v3824
      %v3888 = vpop.f32.mrf.mxu0
      %v3889 = vadd.f32 0.0, %v3888
      %3890 = vmatmul.f32.gmra.mxu0 %v3827
      %v3891 = vpop.f32.mrf.mxu0
      %v3892 = vadd.f32 0.0, %v3891
      %3893 = vdwg.mxu0
      %v3894 = vadd.f32 %v3747, %v3847
      %v3895 = vadd.f32 %v3748, %v3850
      %v3896 = vadd.f32 %v3749, %v3853
      %v3897 = vadd.f32 %v3750, %v3856
      %v3898 = vadd.f32 %v3751, %v3859
      %v3899 = vadd.f32 %v3752, %v3862
      %v3900 = vadd.f32 %v3753, %v3865
      %v3901 = vadd.f32 %v3754, %v3868
      %v3902 = vadd.f32 %v3755, %v3871
      %v3903 = vadd.f32 %v3756, %v3874
      %v3904 = vadd.f32 %v3757, %v3877
      %v3905 = vadd.f32 %v3758, %v3880
      %v3906 = vadd.f32 %v3759, %v3883
      %v3907 = vadd.f32 %v3760, %v3886
      %v3908 = vadd.f32 %v3761, %v3889
      %v3909 = vadd.f32 %v3762, %v3892
      %v3910 = vld [vmem:[%s284 + $0x1] sm:$0xff]
      %v3911 = vld [vmem:[%s284 + $0x11] sm:$0xff]
      %v3912 = vld [vmem:[%s284 + $0x21] sm:$0xff]
      %v3913 = vld [vmem:[%s284 + $0x31] sm:$0xff]
      %v3914 = vld [vmem:[%s284 + $0x41] sm:$0xff]
      %v3915 = vld [vmem:[%s284 + $0x51] sm:$0xff]
      %v3916 = vld [vmem:[%s284 + $0x61] sm:$0xff]
      %v3917 = vld [vmem:[%s284 + $0x71] sm:$0xff]
      %v3918 = vld [vmem:[%s284 + $0xa1] sm:$0xff]
      %v3919 = vld [vmem:[%s284 + $0xb1] sm:$0xff]
      %v3920 = vld [vmem:[%s284 + $0xc1] sm:$0xff]
      %v3921 = vld [vmem:[%s284 + $0xd1] sm:$0xff]
      %v3922 = vld [vmem:[%s284 + $0xe1] sm:$0xff]
      %v3923 = vld [vmem:[%s284 + $0xf1] sm:$0xff]
      %v3924 = vld [vmem:[%s284 + $0x101] sm:$0xff]
      %v3925 = vld [vmem:[%s284 + $0x111] sm:$0xff]
      %s3926 = scalar_lea.vmem %s1, 176
      %v3927 = vld [vmem:[%s3926] sm:$0xff]
      %v3929 = vsel %vm285, %v3910, 0
      %v3932 = vsel %vm285, %v3911, 0
      %v3935 = vsel %vm285, %v3912, 0
      %v3938 = vsel %vm285, %v3913, 0
      %v3941 = vsel %vm285, %v3914, 0
      %v3944 = vsel %vm285, %v3915, 0
      %v3947 = vsel %vm285, %v3916, 0
      %v3950 = vsel %vm285, %v3917, 0
      %v3953 = vsel %vm285, %v3918, 0
      %v3956 = vsel %vm285, %v3919, 0
      %v3959 = vsel %vm285, %v3920, 0
      %v3962 = vsel %vm285, %v3921, 0
      %v3965 = vsel %vm285, %v3922, 0
      %v3968 = vsel %vm285, %v3923, 0
      %v3971 = vsel %vm285, %v3924, 0
      %v3974 = vsel %vm285, %v3925, 0
      %3976 = vmatpush.msra.mxu0 0.0
      %3977 = vmatpush.msra.mxu0 0.0
      %3978 = vmatpush.msra.mxu0 0.0
      %3979 = vmatpush.msra.mxu0 0.0
      %3980 = vmatpush.msra.mxu0 0.0
      %3981 = vmatpush.msra.mxu0 0.0
      %3982 = vmatpush.msra.mxu0 0.0
      %3983 = vmatpush.msra.mxu0 0.0
      %3984 = vmatpush.msra.mxu0 0.0
      %3985 = vmatpush.msra.mxu0 0.0
      %3986 = vmatpush.msra.mxu0 0.0
      %3987 = vmatpush.msra.mxu0 0.0
      %3988 = vmatpush.msra.mxu0 0.0
      %3989 = vmatpush.msra.mxu0 0.0
      %3990 = vmatpush.msra.mxu0 0.0
      %3991 = vmatpush.msra.mxu0 %v3927
      %3992 = vmatmul.f32.gmra.mxu0 %v3929
      %v3993 = vpop.f32.mrf.mxu0
      %v3994 = vadd.f32 0.0, %v3993
      %3995 = vmatmul.f32.gmra.mxu0 %v3932
      %v3996 = vpop.f32.mrf.mxu0
      %v3997 = vadd.f32 0.0, %v3996
      %3998 = vmatmul.f32.gmra.mxu0 %v3935
      %v3999 = vpop.f32.mrf.mxu0
      %v4000 = vadd.f32 0.0, %v3999
      %4001 = vmatmul.f32.gmra.mxu0 %v3938
      %v4002 = vpop.f32.mrf.mxu0
      %v4003 = vadd.f32 0.0, %v4002
      %4004 = vmatmul.f32.gmra.mxu0 %v3941
      %v4005 = vpop.f32.mrf.mxu0
      %v4006 = vadd.f32 0.0, %v4005
      %4007 = vmatmul.f32.gmra.mxu0 %v3944
      %v4008 = vpop.f32.mrf.mxu0
      %v4009 = vadd.f32 0.0, %v4008
      %4010 = vmatmul.f32.gmra.mxu0 %v3947
      %v4011 = vpop.f32.mrf.mxu0
      %v4012 = vadd.f32 0.0, %v4011
      %4013 = vmatmul.f32.gmra.mxu0 %v3950
      %v4014 = vpop.f32.mrf.mxu0
      %v4015 = vadd.f32 0.0, %v4014
      %4016 = vmatmul.f32.gmra.mxu0 %v3953
      %v4017 = vpop.f32.mrf.mxu0
      %v4018 = vadd.f32 0.0, %v4017
      %4019 = vmatmul.f32.gmra.mxu0 %v3956
      %v4020 = vpop.f32.mrf.mxu0
      %v4021 = vadd.f32 0.0, %v4020
      %4022 = vmatmul.f32.gmra.mxu0 %v3959
      %v4023 = vpop.f32.mrf.mxu0
      %v4024 = vadd.f32 0.0, %v4023
      %4025 = vmatmul.f32.gmra.mxu0 %v3962
      %v4026 = vpop.f32.mrf.mxu0
      %v4027 = vadd.f32 0.0, %v4026
      %4028 = vmatmul.f32.gmra.mxu0 %v3965
      %v4029 = vpop.f32.mrf.mxu0
      %v4030 = vadd.f32 0.0, %v4029
      %4031 = vmatmul.f32.gmra.mxu0 %v3968
      %v4032 = vpop.f32.mrf.mxu0
      %v4033 = vadd.f32 0.0, %v4032
      %4034 = vmatmul.f32.gmra.mxu0 %v3971
      %v4035 = vpop.f32.mrf.mxu0
      %v4036 = vadd.f32 0.0, %v4035
      %4037 = vmatmul.f32.gmra.mxu0 %v3974
      %v4038 = vpop.f32.mrf.mxu0
      %v4039 = vadd.f32 0.0, %v4038
      %4040 = vdwg.mxu0
      %v4041 = vadd.f32 %v3894, %v3994
      %v4042 = vadd.f32 %v3895, %v3997
      %v4043 = vadd.f32 %v3896, %v4000
      %v4044 = vadd.f32 %v3897, %v4003
      %v4045 = vadd.f32 %v3898, %v4006
      %v4046 = vadd.f32 %v3899, %v4009
      %v4047 = vadd.f32 %v3900, %v4012
      %v4048 = vadd.f32 %v3901, %v4015
      %v4049 = vadd.f32 %v3902, %v4018
      %v4050 = vadd.f32 %v3903, %v4021
      %v4051 = vadd.f32 %v3904, %v4024
      %v4052 = vadd.f32 %v3905, %v4027
      %v4053 = vadd.f32 %v3906, %v4030
      %v4054 = vadd.f32 %v3907, %v4033
      %v4055 = vadd.f32 %v3908, %v4036
      %v4056 = vadd.f32 %v3909, %v4039
      %v4057 = vld [vmem:[%s284 + $0x2] sm:$0xff]
      %v4058 = vld [vmem:[%s284 + $0x12] sm:$0xff]
      %v4059 = vld [vmem:[%s284 + $0x22] sm:$0xff]
      %v4060 = vld [vmem:[%s284 + $0x32] sm:$0xff]
      %v4061 = vld [vmem:[%s284 + $0x42] sm:$0xff]
      %v4062 = vld [vmem:[%s284 + $0x52] sm:$0xff]
      %v4063 = vld [vmem:[%s284 + $0x62] sm:$0xff]
      %v4064 = vld [vmem:[%s284 + $0x72] sm:$0xff]
      %v4065 = vld [vmem:[%s284 + $0xa2] sm:$0xff]
      %v4066 = vld [vmem:[%s284 + $0xb2] sm:$0xff]
      %v4067 = vld [vmem:[%s284 + $0xc2] sm:$0xff]
      %v4068 = vld [vmem:[%s284 + $0xd2] sm:$0xff]
      %v4069 = vld [vmem:[%s284 + $0xe2] sm:$0xff]
      %v4070 = vld [vmem:[%s284 + $0xf2] sm:$0xff]
      %v4071 = vld [vmem:[%s284 + $0x102] sm:$0xff]
      %v4072 = vld [vmem:[%s284 + $0x112] sm:$0xff]
      %s4073 = scalar_lea.vmem %s1, 184
      %v4074 = vld [vmem:[%s4073] sm:$0xff]
      %v4076 = vsel %vm285, %v4057, 0
      %v4079 = vsel %vm285, %v4058, 0
      %v4082 = vsel %vm285, %v4059, 0
      %v4085 = vsel %vm285, %v4060, 0
      %v4088 = vsel %vm285, %v4061, 0
      %v4091 = vsel %vm285, %v4062, 0
      %v4094 = vsel %vm285, %v4063, 0
      %v4097 = vsel %vm285, %v4064, 0
      %v4100 = vsel %vm285, %v4065, 0
      %v4103 = vsel %vm285, %v4066, 0
      %v4106 = vsel %vm285, %v4067, 0
      %v4109 = vsel %vm285, %v4068, 0
      %v4112 = vsel %vm285, %v4069, 0
      %v4115 = vsel %vm285, %v4070, 0
      %v4118 = vsel %vm285, %v4071, 0
      %v4121 = vsel %vm285, %v4072, 0
      %4123 = vmatpush.msra.mxu0 0.0
      %4124 = vmatpush.msra.mxu0 0.0
      %4125 = vmatpush.msra.mxu0 0.0
      %4126 = vmatpush.msra.mxu0 0.0
      %4127 = vmatpush.msra.mxu0 0.0
      %4128 = vmatpush.msra.mxu0 0.0
      %4129 = vmatpush.msra.mxu0 0.0
      %4130 = vmatpush.msra.mxu0 0.0
      %4131 = vmatpush.msra.mxu0 0.0
      %4132 = vmatpush.msra.mxu0 0.0
      %4133 = vmatpush.msra.mxu0 0.0
      %4134 = vmatpush.msra.mxu0 0.0
      %4135 = vmatpush.msra.mxu0 0.0
      %4136 = vmatpush.msra.mxu0 0.0
      %4137 = vmatpush.msra.mxu0 0.0
      %4138 = vmatpush.msra.mxu0 %v4074
      %4139 = vmatmul.f32.gmra.mxu0 %v4076
      %v4140 = vpop.f32.mrf.mxu0
      %v4141 = vadd.f32 0.0, %v4140
      %4142 = vmatmul.f32.gmra.mxu0 %v4079
      %v4143 = vpop.f32.mrf.mxu0
      %v4144 = vadd.f32 0.0, %v4143
      %4145 = vmatmul.f32.gmra.mxu0 %v4082
      %v4146 = vpop.f32.mrf.mxu0
      %v4147 = vadd.f32 0.0, %v4146
      %4148 = vmatmul.f32.gmra.mxu0 %v4085
      %v4149 = vpop.f32.mrf.mxu0
      %v4150 = vadd.f32 0.0, %v4149
      %4151 = vmatmul.f32.gmra.mxu0 %v4088
      %v4152 = vpop.f32.mrf.mxu0
      %v4153 = vadd.f32 0.0, %v4152
      %4154 = vmatmul.f32.gmra.mxu0 %v4091
      %v4155 = vpop.f32.mrf.mxu0
      %v4156 = vadd.f32 0.0, %v4155
      %4157 = vmatmul.f32.gmra.mxu0 %v4094
      %v4158 = vpop.f32.mrf.mxu0
      %v4159 = vadd.f32 0.0, %v4158
      %4160 = vmatmul.f32.gmra.mxu0 %v4097
      %v4161 = vpop.f32.mrf.mxu0
      %v4162 = vadd.f32 0.0, %v4161
      %4163 = vmatmul.f32.gmra.mxu0 %v4100
      %v4164 = vpop.f32.mrf.mxu0
      %v4165 = vadd.f32 0.0, %v4164
      %4166 = vmatmul.f32.gmra.mxu0 %v4103
      %v4167 = vpop.f32.mrf.mxu0
      %v4168 = vadd.f32 0.0, %v4167
      %4169 = vmatmul.f32.gmra.mxu0 %v4106
      %v4170 = vpop.f32.mrf.mxu0
      %v4171 = vadd.f32 0.0, %v4170
      %4172 = vmatmul.f32.gmra.mxu0 %v4109
      %v4173 = vpop.f32.mrf.mxu0
      %v4174 = vadd.f32 0.0, %v4173
      %4175 = vmatmul.f32.gmra.mxu0 %v4112
      %v4176 = vpop.f32.mrf.mxu0
      %v4177 = vadd.f32 0.0, %v4176
      %4178 = vmatmul.f32.gmra.mxu0 %v4115
      %v4179 = vpop.f32.mrf.mxu0
      %v4180 = vadd.f32 0.0, %v4179
      %4181 = vmatmul.f32.gmra.mxu0 %v4118
      %v4182 = vpop.f32.mrf.mxu0
      %v4183 = vadd.f32 0.0, %v4182
      %4184 = vmatmul.f32.gmra.mxu0 %v4121
      %v4185 = vpop.f32.mrf.mxu0
      %v4186 = vadd.f32 0.0, %v4185
      %4187 = vdwg.mxu0
      %v4188 = vadd.f32 %v4041, %v4141
      %v4189 = vadd.f32 %v4042, %v4144
      %v4190 = vadd.f32 %v4043, %v4147
      %v4191 = vadd.f32 %v4044, %v4150
      %v4192 = vadd.f32 %v4045, %v4153
      %v4193 = vadd.f32 %v4046, %v4156
      %v4194 = vadd.f32 %v4047, %v4159
      %v4195 = vadd.f32 %v4048, %v4162
      %v4196 = vadd.f32 %v4049, %v4165
      %v4197 = vadd.f32 %v4050, %v4168
      %v4198 = vadd.f32 %v4051, %v4171
      %v4199 = vadd.f32 %v4052, %v4174
      %v4200 = vadd.f32 %v4053, %v4177
      %v4201 = vadd.f32 %v4054, %v4180
      %v4202 = vadd.f32 %v4055, %v4183
      %v4203 = vadd.f32 %v4056, %v4186
      %v4204 = vld [vmem:[%s1151] sm:$0xff]
      %v4205 = vld [vmem:[%s1151 + $0x10] sm:$0xff]
      %v4206 = vld [vmem:[%s1151 + $0x20] sm:$0xff]
      %v4207 = vld [vmem:[%s1151 + $0x30] sm:$0xff]
      %v4208 = vld [vmem:[%s1151 + $0x40] sm:$0xff]
      %v4209 = vld [vmem:[%s1151 + $0x50] sm:$0xff]
      %v4210 = vld [vmem:[%s1151 + $0x60] sm:$0xff]
      %v4211 = vld [vmem:[%s1151 + $0x70] sm:$0xff]
      %v4212 = vld [vmem:[%s1151 + $0xa0] sm:$0xff]
      %v4213 = vld [vmem:[%s1151 + $0xb0] sm:$0xff]
      %v4214 = vld [vmem:[%s1151 + $0xc0] sm:$0xff]
      %v4215 = vld [vmem:[%s1151 + $0xd0] sm:$0xff]
      %v4216 = vld [vmem:[%s1151 + $0xe0] sm:$0xff]
      %v4217 = vld [vmem:[%s1151 + $0xf0] sm:$0xff]
      %v4218 = vld [vmem:[%s1151 + $0x100] sm:$0xff]
      %v4219 = vld [vmem:[%s1151 + $0x110] sm:$0xff]
      %s4220 = scalar_lea.vmem %s1, 192
      %v4221 = vld [vmem:[%s4220] sm:$0xff]
      %v4223 = vsel %vm285, %v4204, 0
      %v4226 = vsel %vm285, %v4205, 0
      %v4229 = vsel %vm285, %v4206, 0
      %v4232 = vsel %vm285, %v4207, 0
      %v4235 = vsel %vm285, %v4208, 0
      %v4238 = vsel %vm285, %v4209, 0
      %v4241 = vsel %vm285, %v4210, 0
      %v4244 = vsel %vm285, %v4211, 0
      %v4247 = vsel %vm285, %v4212, 0
      %v4250 = vsel %vm285, %v4213, 0
      %v4253 = vsel %vm285, %v4214, 0
      %v4256 = vsel %vm285, %v4215, 0
      %v4259 = vsel %vm285, %v4216, 0
      %v4262 = vsel %vm285, %v4217, 0
      %v4265 = vsel %vm285, %v4218, 0
      %v4268 = vsel %vm285, %v4219, 0
      %4270 = vmatpush.msra.mxu0 0.0
      %4271 = vmatpush.msra.mxu0 0.0
      %4272 = vmatpush.msra.mxu0 0.0
      %4273 = vmatpush.msra.mxu0 0.0
      %4274 = vmatpush.msra.mxu0 0.0
      %4275 = vmatpush.msra.mxu0 0.0
      %4276 = vmatpush.msra.mxu0 0.0
      %4277 = vmatpush.msra.mxu0 0.0
      %4278 = vmatpush.msra.mxu0 0.0
      %4279 = vmatpush.msra.mxu0 0.0
      %4280 = vmatpush.msra.mxu0 0.0
      %4281 = vmatpush.msra.mxu0 0.0
      %4282 = vmatpush.msra.mxu0 0.0
      %4283 = vmatpush.msra.mxu0 0.0
      %4284 = vmatpush.msra.mxu0 0.0
      %4285 = vmatpush.msra.mxu0 %v4221
      %4286 = vmatmul.f32.gmra.mxu0 %v4223
      %v4287 = vpop.f32.mrf.mxu0
      %v4288 = vadd.f32 0.0, %v4287
      %4289 = vmatmul.f32.gmra.mxu0 %v4226
      %v4290 = vpop.f32.mrf.mxu0
      %v4291 = vadd.f32 0.0, %v4290
      %4292 = vmatmul.f32.gmra.mxu0 %v4229
      %v4293 = vpop.f32.mrf.mxu0
      %v4294 = vadd.f32 0.0, %v4293
      %4295 = vmatmul.f32.gmra.mxu0 %v4232
      %v4296 = vpop.f32.mrf.mxu0
      %v4297 = vadd.f32 0.0, %v4296
      %4298 = vmatmul.f32.gmra.mxu0 %v4235
      %v4299 = vpop.f32.mrf.mxu0
      %v4300 = vadd.f32 0.0, %v4299
      %4301 = vmatmul.f32.gmra.mxu0 %v4238
      %v4302 = vpop.f32.mrf.mxu0
      %v4303 = vadd.f32 0.0, %v4302
      %4304 = vmatmul.f32.gmra.mxu0 %v4241
      %v4305 = vpop.f32.mrf.mxu0
      %v4306 = vadd.f32 0.0, %v4305
      %4307 = vmatmul.f32.gmra.mxu0 %v4244
      %v4308 = vpop.f32.mrf.mxu0
      %v4309 = vadd.f32 0.0, %v4308
      %4310 = vmatmul.f32.gmra.mxu0 %v4247
      %v4311 = vpop.f32.mrf.mxu0
      %v4312 = vadd.f32 0.0, %v4311
      %4313 = vmatmul.f32.gmra.mxu0 %v4250
      %v4314 = vpop.f32.mrf.mxu0
      %v4315 = vadd.f32 0.0, %v4314
      %4316 = vmatmul.f32.gmra.mxu0 %v4253
      %v4317 = vpop.f32.mrf.mxu0
      %v4318 = vadd.f32 0.0, %v4317
      %4319 = vmatmul.f32.gmra.mxu0 %v4256
      %v4320 = vpop.f32.mrf.mxu0
      %v4321 = vadd.f32 0.0, %v4320
      %4322 = vmatmul.f32.gmra.mxu0 %v4259
      %v4323 = vpop.f32.mrf.mxu0
      %v4324 = vadd.f32 0.0, %v4323
      %4325 = vmatmul.f32.gmra.mxu0 %v4262
      %v4326 = vpop.f32.mrf.mxu0
      %v4327 = vadd.f32 0.0, %v4326
      %4328 = vmatmul.f32.gmra.mxu0 %v4265
      %v4329 = vpop.f32.mrf.mxu0
      %v4330 = vadd.f32 0.0, %v4329
      %4331 = vmatmul.f32.gmra.mxu0 %v4268
      %v4332 = vpop.f32.mrf.mxu0
      %v4333 = vadd.f32 0.0, %v4332
      %4334 = vdwg.mxu0
      %v4335 = vadd.f32 %v4188, %v4288
      %v4336 = vadd.f32 %v4189, %v4291
      %v4337 = vadd.f32 %v4190, %v4294
      %v4338 = vadd.f32 %v4191, %v4297
      %v4339 = vadd.f32 %v4192, %v4300
      %v4340 = vadd.f32 %v4193, %v4303
      %v4341 = vadd.f32 %v4194, %v4306
      %v4342 = vadd.f32 %v4195, %v4309
      %v4343 = vadd.f32 %v4196, %v4312
      %v4344 = vadd.f32 %v4197, %v4315
      %v4345 = vadd.f32 %v4198, %v4318
      %v4346 = vadd.f32 %v4199, %v4321
      %v4347 = vadd.f32 %v4200, %v4324
      %v4348 = vadd.f32 %v4201, %v4327
      %v4349 = vadd.f32 %v4202, %v4330
      %v4350 = vadd.f32 %v4203, %v4333
      %v4351 = vld [vmem:[%s1151 + $0x1] sm:$0xff]
      %v4352 = vld [vmem:[%s1151 + $0x11] sm:$0xff]
      %v4353 = vld [vmem:[%s1151 + $0x21] sm:$0xff]
      %v4354 = vld [vmem:[%s1151 + $0x31] sm:$0xff]
      %v4355 = vld [vmem:[%s1151 + $0x41] sm:$0xff]
      %v4356 = vld [vmem:[%s1151 + $0x51] sm:$0xff]
      %v4357 = vld [vmem:[%s1151 + $0x61] sm:$0xff]
      %v4358 = vld [vmem:[%s1151 + $0x71] sm:$0xff]
      %v4359 = vld [vmem:[%s1151 + $0xa1] sm:$0xff]
      %v4360 = vld [vmem:[%s1151 + $0xb1] sm:$0xff]
      %v4361 = vld [vmem:[%s1151 + $0xc1] sm:$0xff]
      %v4362 = vld [vmem:[%s1151 + $0xd1] sm:$0xff]
      %v4363 = vld [vmem:[%s1151 + $0xe1] sm:$0xff]
      %v4364 = vld [vmem:[%s1151 + $0xf1] sm:$0xff]
      %v4365 = vld [vmem:[%s1151 + $0x101] sm:$0xff]
      %v4366 = vld [vmem:[%s1151 + $0x111] sm:$0xff]
      %s4367 = scalar_lea.vmem %s1, 200
      %v4368 = vld [vmem:[%s4367] sm:$0xff]
      %v4370 = vsel %vm285, %v4351, 0
      %v4373 = vsel %vm285, %v4352, 0
      %v4376 = vsel %vm285, %v4353, 0
      %v4379 = vsel %vm285, %v4354, 0
      %v4382 = vsel %vm285, %v4355, 0
      %v4385 = vsel %vm285, %v4356, 0
      %v4388 = vsel %vm285, %v4357, 0
      %v4391 = vsel %vm285, %v4358, 0
      %v4394 = vsel %vm285, %v4359, 0
      %v4397 = vsel %vm285, %v4360, 0
      %v4400 = vsel %vm285, %v4361, 0
      %v4403 = vsel %vm285, %v4362, 0
      %v4406 = vsel %vm285, %v4363, 0
      %v4409 = vsel %vm285, %v4364, 0
      %v4412 = vsel %vm285, %v4365, 0
      %v4415 = vsel %vm285, %v4366, 0
      %4417 = vmatpush.msra.mxu0 0.0
      %4418 = vmatpush.msra.mxu0 0.0
      %4419 = vmatpush.msra.mxu0 0.0
      %4420 = vmatpush.msra.mxu0 0.0
      %4421 = vmatpush.msra.mxu0 0.0
      %4422 = vmatpush.msra.mxu0 0.0
      %4423 = vmatpush.msra.mxu0 0.0
      %4424 = vmatpush.msra.mxu0 0.0
      %4425 = vmatpush.msra.mxu0 0.0
      %4426 = vmatpush.msra.mxu0 0.0
      %4427 = vmatpush.msra.mxu0 0.0
      %4428 = vmatpush.msra.mxu0 0.0
      %4429 = vmatpush.msra.mxu0 0.0
      %4430 = vmatpush.msra.mxu0 0.0
      %4431 = vmatpush.msra.mxu0 0.0
      %4432 = vmatpush.msra.mxu0 %v4368
      %4433 = vmatmul.f32.gmra.mxu0 %v4370
      %v4434 = vpop.f32.mrf.mxu0
      %v4435 = vadd.f32 0.0, %v4434
      %4436 = vmatmul.f32.gmra.mxu0 %v4373
      %v4437 = vpop.f32.mrf.mxu0
      %v4438 = vadd.f32 0.0, %v4437
      %4439 = vmatmul.f32.gmra.mxu0 %v4376
      %v4440 = vpop.f32.mrf.mxu0
      %v4441 = vadd.f32 0.0, %v4440
      %4442 = vmatmul.f32.gmra.mxu0 %v4379
      %v4443 = vpop.f32.mrf.mxu0
      %v4444 = vadd.f32 0.0, %v4443
      %4445 = vmatmul.f32.gmra.mxu0 %v4382
      %v4446 = vpop.f32.mrf.mxu0
      %v4447 = vadd.f32 0.0, %v4446
      %4448 = vmatmul.f32.gmra.mxu0 %v4385
      %v4449 = vpop.f32.mrf.mxu0
      %v4450 = vadd.f32 0.0, %v4449
      %4451 = vmatmul.f32.gmra.mxu0 %v4388
      %v4452 = vpop.f32.mrf.mxu0
      %v4453 = vadd.f32 0.0, %v4452
      %4454 = vmatmul.f32.gmra.mxu0 %v4391
      %v4455 = vpop.f32.mrf.mxu0
      %v4456 = vadd.f32 0.0, %v4455
      %4457 = vmatmul.f32.gmra.mxu0 %v4394
      %v4458 = vpop.f32.mrf.mxu0
      %v4459 = vadd.f32 0.0, %v4458
      %4460 = vmatmul.f32.gmra.mxu0 %v4397
      %v4461 = vpop.f32.mrf.mxu0
      %v4462 = vadd.f32 0.0, %v4461
      %4463 = vmatmul.f32.gmra.mxu0 %v4400
      %v4464 = vpop.f32.mrf.mxu0
      %v4465 = vadd.f32 0.0, %v4464
      %4466 = vmatmul.f32.gmra.mxu0 %v4403
      %v4467 = vpop.f32.mrf.mxu0
      %v4468 = vadd.f32 0.0, %v4467
      %4469 = vmatmul.f32.gmra.mxu0 %v4406
      %v4470 = vpop.f32.mrf.mxu0
      %v4471 = vadd.f32 0.0, %v4470
      %4472 = vmatmul.f32.gmra.mxu0 %v4409
      %v4473 = vpop.f32.mrf.mxu0
      %v4474 = vadd.f32 0.0, %v4473
      %4475 = vmatmul.f32.gmra.mxu0 %v4412
      %v4476 = vpop.f32.mrf.mxu0
      %v4477 = vadd.f32 0.0, %v4476
      %4478 = vmatmul.f32.gmra.mxu0 %v4415
      %v4479 = vpop.f32.mrf.mxu0
      %v4480 = vadd.f32 0.0, %v4479
      %4481 = vdwg.mxu0
      %v4482 = vadd.f32 %v4335, %v4435
      %v4483 = vadd.f32 %v4336, %v4438
      %v4484 = vadd.f32 %v4337, %v4441
      %v4485 = vadd.f32 %v4338, %v4444
      %v4486 = vadd.f32 %v4339, %v4447
      %v4487 = vadd.f32 %v4340, %v4450
      %v4488 = vadd.f32 %v4341, %v4453
      %v4489 = vadd.f32 %v4342, %v4456
      %v4490 = vadd.f32 %v4343, %v4459
      %v4491 = vadd.f32 %v4344, %v4462
      %v4492 = vadd.f32 %v4345, %v4465
      %v4493 = vadd.f32 %v4346, %v4468
      %v4494 = vadd.f32 %v4347, %v4471
      %v4495 = vadd.f32 %v4348, %v4474
      %v4496 = vadd.f32 %v4349, %v4477
      %v4497 = vadd.f32 %v4350, %v4480
      %v4498 = vld [vmem:[%s1151 + $0x2] sm:$0xff]
      %v4499 = vld [vmem:[%s1151 + $0x12] sm:$0xff]
      %v4500 = vld [vmem:[%s1151 + $0x22] sm:$0xff]
      %v4501 = vld [vmem:[%s1151 + $0x32] sm:$0xff]
      %v4502 = vld [vmem:[%s1151 + $0x42] sm:$0xff]
      %v4503 = vld [vmem:[%s1151 + $0x52] sm:$0xff]
      %v4504 = vld [vmem:[%s1151 + $0x62] sm:$0xff]
      %v4505 = vld [vmem:[%s1151 + $0x72] sm:$0xff]
      %v4506 = vld [vmem:[%s1151 + $0xa2] sm:$0xff]
      %v4507 = vld [vmem:[%s1151 + $0xb2] sm:$0xff]
      %v4508 = vld [vmem:[%s1151 + $0xc2] sm:$0xff]
      %v4509 = vld [vmem:[%s1151 + $0xd2] sm:$0xff]
      %v4510 = vld [vmem:[%s1151 + $0xe2] sm:$0xff]
      %v4511 = vld [vmem:[%s1151 + $0xf2] sm:$0xff]
      %v4512 = vld [vmem:[%s1151 + $0x102] sm:$0xff]
      %v4513 = vld [vmem:[%s1151 + $0x112] sm:$0xff]
      %s4514 = scalar_lea.vmem %s1, 208
      %v4515 = vld [vmem:[%s4514] sm:$0xff]
      %v4517 = vsel %vm285, %v4498, 0
      %v4520 = vsel %vm285, %v4499, 0
      %v4523 = vsel %vm285, %v4500, 0
      %v4526 = vsel %vm285, %v4501, 0
      %v4529 = vsel %vm285, %v4502, 0
      %v4532 = vsel %vm285, %v4503, 0
      %v4535 = vsel %vm285, %v4504, 0
      %v4538 = vsel %vm285, %v4505, 0
      %v4541 = vsel %vm285, %v4506, 0
      %v4544 = vsel %vm285, %v4507, 0
      %v4547 = vsel %vm285, %v4508, 0
      %v4550 = vsel %vm285, %v4509, 0
      %v4553 = vsel %vm285, %v4510, 0
      %v4556 = vsel %vm285, %v4511, 0
      %v4559 = vsel %vm285, %v4512, 0
      %v4562 = vsel %vm285, %v4513, 0
      %4564 = vmatpush.msra.mxu0 0.0
      %4565 = vmatpush.msra.mxu0 0.0
      %4566 = vmatpush.msra.mxu0 0.0
      %4567 = vmatpush.msra.mxu0 0.0
      %4568 = vmatpush.msra.mxu0 0.0
      %4569 = vmatpush.msra.mxu0 0.0
      %4570 = vmatpush.msra.mxu0 0.0
      %4571 = vmatpush.msra.mxu0 0.0
      %4572 = vmatpush.msra.mxu0 0.0
      %4573 = vmatpush.msra.mxu0 0.0
      %4574 = vmatpush.msra.mxu0 0.0
      %4575 = vmatpush.msra.mxu0 0.0
      %4576 = vmatpush.msra.mxu0 0.0
      %4577 = vmatpush.msra.mxu0 0.0
      %4578 = vmatpush.msra.mxu0 0.0
      %4579 = vmatpush.msra.mxu0 %v4515
      %4580 = vmatmul.f32.gmra.mxu0 %v4517
      %v4581 = vpop.f32.mrf.mxu0
      %v4582 = vadd.f32 0.0, %v4581
      %4583 = vmatmul.f32.gmra.mxu0 %v4520
      %v4584 = vpop.f32.mrf.mxu0
      %v4585 = vadd.f32 0.0, %v4584
      %4586 = vmatmul.f32.gmra.mxu0 %v4523
      %v4587 = vpop.f32.mrf.mxu0
      %v4588 = vadd.f32 0.0, %v4587
      %4589 = vmatmul.f32.gmra.mxu0 %v4526
      %v4590 = vpop.f32.mrf.mxu0
      %v4591 = vadd.f32 0.0, %v4590
      %4592 = vmatmul.f32.gmra.mxu0 %v4529
      %v4593 = vpop.f32.mrf.mxu0
      %v4594 = vadd.f32 0.0, %v4593
      %4595 = vmatmul.f32.gmra.mxu0 %v4532
      %v4596 = vpop.f32.mrf.mxu0
      %v4597 = vadd.f32 0.0, %v4596
      %4598 = vmatmul.f32.gmra.mxu0 %v4535
      %v4599 = vpop.f32.mrf.mxu0
      %v4600 = vadd.f32 0.0, %v4599
      %4601 = vmatmul.f32.gmra.mxu0 %v4538
      %v4602 = vpop.f32.mrf.mxu0
      %v4603 = vadd.f32 0.0, %v4602
      %4604 = vmatmul.f32.gmra.mxu0 %v4541
      %v4605 = vpop.f32.mrf.mxu0
      %v4606 = vadd.f32 0.0, %v4605
      %4607 = vmatmul.f32.gmra.mxu0 %v4544
      %v4608 = vpop.f32.mrf.mxu0
      %v4609 = vadd.f32 0.0, %v4608
      %4610 = vmatmul.f32.gmra.mxu0 %v4547
      %v4611 = vpop.f32.mrf.mxu0
      %v4612 = vadd.f32 0.0, %v4611
      %4613 = vmatmul.f32.gmra.mxu0 %v4550
      %v4614 = vpop.f32.mrf.mxu0
      %v4615 = vadd.f32 0.0, %v4614
      %4616 = vmatmul.f32.gmra.mxu0 %v4553
      %v4617 = vpop.f32.mrf.mxu0
      %v4618 = vadd.f32 0.0, %v4617
      %4619 = vmatmul.f32.gmra.mxu0 %v4556
      %v4620 = vpop.f32.mrf.mxu0
      %v4621 = vadd.f32 0.0, %v4620
      %4622 = vmatmul.f32.gmra.mxu0 %v4559
      %v4623 = vpop.f32.mrf.mxu0
      %v4624 = vadd.f32 0.0, %v4623
      %4625 = vmatmul.f32.gmra.mxu0 %v4562
      %v4626 = vpop.f32.mrf.mxu0
      %v4627 = vadd.f32 0.0, %v4626
      %4628 = vdwg.mxu0
      %v4629 = vadd.f32 %v4482, %v4582
      %v4630 = vadd.f32 %v4483, %v4585
      %v4631 = vadd.f32 %v4484, %v4588
      %v4632 = vadd.f32 %v4485, %v4591
      %v4633 = vadd.f32 %v4486, %v4594
      %v4634 = vadd.f32 %v4487, %v4597
      %v4635 = vadd.f32 %v4488, %v4600
      %v4636 = vadd.f32 %v4489, %v4603
      %v4637 = vadd.f32 %v4490, %v4606
      %v4638 = vadd.f32 %v4491, %v4609
      %v4639 = vadd.f32 %v4492, %v4612
      %v4640 = vadd.f32 %v4493, %v4615
      %v4641 = vadd.f32 %v4494, %v4618
      %v4642 = vadd.f32 %v4495, %v4621
      %v4643 = vadd.f32 %v4496, %v4624
      %v4644 = vadd.f32 %v4497, %v4627
      %s4645 = scalar_lea.vmem %s2, 2
      %v4646 = vld [vmem:[%s4645] sm:$0x1]
      %v4648 = vperm.slane %v4646, 0
      %v4650 = vadd.f32 %v4629, %v4648
      %v4651 = vadd.f32 %v4630, %v4648
      %v4652 = vadd.f32 %v4631, %v4648
      %v4653 = vadd.f32 %v4632, %v4648
      %v4654 = vadd.f32 %v4633, %v4648
      %v4655 = vadd.f32 %v4634, %v4648
      %v4656 = vadd.f32 %v4635, %v4648
      %v4657 = vadd.f32 %v4636, %v4648
      %v4658 = vadd.f32 %v4637, %v4648
      %v4659 = vadd.f32 %v4638, %v4648
      %v4660 = vadd.f32 %v4639, %v4648
      %v4661 = vadd.f32 %v4640, %v4648
      %v4662 = vadd.f32 %v4641, %v4648
      %v4663 = vadd.f32 %v4642, %v4648
      %v4664 = vadd.f32 %v4643, %v4648
      %v4665 = vadd.f32 %v4644, %v4648
      %s4666 = scalar_lea.vmem %s3, 2
      %v4667 = vld [vmem:[%s4666] sm:$0x1]
      %s4668 = scalar_lea.vmem %s4, 2
      %v4669 = vld [vmem:[%s4668] sm:$0x1]
      %v4670 = vsel %vm285, %v4650, 0.0
      %v4671 = vsel %vm285, %v4651, 0.0
      %v4672 = vadd.f32 %v4670, %v4671
      %v4673 = vsel %vm285, %v4652, 0.0
      %v4674 = vadd.f32 %v4672, %v4673
      %v4675 = vsel %vm285, %v4653, 0.0
      %v4676 = vadd.f32 %v4674, %v4675
      %v4677 = vsel %vm285, %v4654, 0.0
      %v4678 = vadd.f32 %v4676, %v4677
      %v4679 = vsel %vm285, %v4655, 0.0
      %v4680 = vadd.f32 %v4678, %v4679
      %v4681 = vsel %vm285, %v4656, 0.0
      %v4682 = vadd.f32 %v4680, %v4681
      %v4683 = vsel %vm285, %v4657, 0.0
      %v4684 = vadd.f32 %v4682, %v4683
      %v4685 = vsel %vm285, %v4658, 0.0
      %v4686 = vadd.f32 %v4684, %v4685
      %v4687 = vsel %vm285, %v4659, 0.0
      %v4688 = vadd.f32 %v4686, %v4687
      %v4689 = vsel %vm285, %v4660, 0.0
      %v4690 = vadd.f32 %v4688, %v4689
      %v4691 = vsel %vm285, %v4661, 0.0
      %v4692 = vadd.f32 %v4690, %v4691
      %v4693 = vsel %vm285, %v4662, 0.0
      %v4694 = vadd.f32 %v4692, %v4693
      %v4695 = vsel %vm285, %v4663, 0.0
      %v4696 = vadd.f32 %v4694, %v4695
      %v4697 = vsel %vm285, %v4664, 0.0
      %v4698 = vadd.f32 %v4696, %v4697
      %v4699 = vsel %vm285, %v4665, 0.0
      %v4700 = vadd.f32 %v4698, %v4699
      %v4701 = vrot.slane %v4700, 4
      %v4702 = vadd.f32 %v4700, %v4701
      %v4703 = vrot.slane %v4702, 2
      %v4704 = vadd.f32 %v4702, %v4703
      %v4705 = vrot.slane %v4704, 1
      %v4706 = vadd.f32 %v4704, %v4705
      %v4707 = vmul.f32 %v4650, %v4650
      %v4708 = vmul.f32 %v4651, %v4651
      %v4709 = vmul.f32 %v4652, %v4652
      %v4710 = vmul.f32 %v4653, %v4653
      %v4711 = vmul.f32 %v4654, %v4654
      %v4712 = vmul.f32 %v4655, %v4655
      %v4713 = vmul.f32 %v4656, %v4656
      %v4714 = vmul.f32 %v4657, %v4657
      %v4715 = vmul.f32 %v4658, %v4658
      %v4716 = vmul.f32 %v4659, %v4659
      %v4717 = vmul.f32 %v4660, %v4660
      %v4718 = vmul.f32 %v4661, %v4661
      %v4719 = vmul.f32 %v4662, %v4662
      %v4720 = vmul.f32 %v4663, %v4663
      %v4721 = vmul.f32 %v4664, %v4664
      %v4722 = vmul.f32 %v4665, %v4665
      %v4723 = vsel %vm285, %v4707, 0.0
      %v4724 = vsel %vm285, %v4708, 0.0
      %v4725 = vadd.f32 %v4723, %v4724
      %v4726 = vsel %vm285, %v4709, 0.0
      %v4727 = vadd.f32 %v4725, %v4726
      %v4728 = vsel %vm285, %v4710, 0.0
      %v4729 = vadd.f32 %v4727, %v4728
      %v4730 = vsel %vm285, %v4711, 0.0
      %v4731 = vadd.f32 %v4729, %v4730
      %v4732 = vsel %vm285, %v4712, 0.0
      %v4733 = vadd.f32 %v4731, %v4732
      %v4734 = vsel %vm285, %v4713, 0.0
      %v4735 = vadd.f32 %v4733, %v4734
      %v4736 = vsel %vm285, %v4714, 0.0
      %v4737 = vadd.f32 %v4735, %v4736
      %v4738 = vsel %vm285, %v4715, 0.0
      %v4739 = vadd.f32 %v4737, %v4738
      %v4740 = vsel %vm285, %v4716, 0.0
      %v4741 = vadd.f32 %v4739, %v4740
      %v4742 = vsel %vm285, %v4717, 0.0
      %v4743 = vadd.f32 %v4741, %v4742
      %v4744 = vsel %vm285, %v4718, 0.0
      %v4745 = vadd.f32 %v4743, %v4744
      %v4746 = vsel %vm285, %v4719, 0.0
      %v4747 = vadd.f32 %v4745, %v4746
      %v4748 = vsel %vm285, %v4720, 0.0
      %v4749 = vadd.f32 %v4747, %v4748
      %v4750 = vsel %vm285, %v4721, 0.0
      %v4751 = vadd.f32 %v4749, %v4750
      %v4752 = vsel %vm285, %v4722, 0.0
      %v4753 = vadd.f32 %v4751, %v4752
      %v4754 = vrot.slane %v4753, 4
      %v4755 = vadd.f32 %v4753, %v4754
      %v4756 = vrot.slane %v4755, 2
      %v4757 = vadd.f32 %v4755, %v4756
      %v4758 = vrot.slane %v4757, 1
      %v4759 = vadd.f32 %v4757, %v4758
      %v4760 = vmul.f32 %v4706, %v1711
      %v4761 = vmul.f32 %v4759, %v1711
      %v4762 = vmul.f32 %v4760, %v4760
      %v4763 = vsub.f32 %v4761, %v4762
      %v4764 = vmax.f32 %v4763, 0.0
      %v4765 = vsub.f32 %v4650, %v4760
      %v4766 = vsub.f32 %v4651, %v4760
      %v4767 = vsub.f32 %v4652, %v4760
      %v4768 = vsub.f32 %v4653, %v4760
      %v4769 = vsub.f32 %v4654, %v4760
      %v4770 = vsub.f32 %v4655, %v4760
      %v4771 = vsub.f32 %v4656, %v4760
      %v4772 = vsub.f32 %v4657, %v4760
      %v4773 = vsub.f32 %v4658, %v4760
      %v4774 = vsub.f32 %v4659, %v4760
      %v4775 = vsub.f32 %v4660, %v4760
      %v4776 = vsub.f32 %v4661, %v4760
      %v4777 = vsub.f32 %v4662, %v4760
      %v4778 = vsub.f32 %v4663, %v4760
      %v4779 = vsub.f32 %v4664, %v4760
      %v4780 = vsub.f32 %v4665, %v4760
      %v4781 = vadd.f32 %v4764, 1e-05
      %v4782 = vrsqrt.pop %v4781
      %v4783 = vmul.f32 %v4782, %v4781
      %v4784 = vmul.f32 %v4783, %v4782
      %v4785 = vmul.f32 0.5, %v4784
      %v4786 = vsub.f32 1.5, %v4785
      %v4787 = vmul.f32 %v4782, %v4786
      %vm4788 = vweird.f32 %v4781
      %vm4789 = vweird.f32 %v4782
      %vm4790 = vmor %vm4788, %vm4789
      %v4791 = vsel %vm4790, %v4782, %v4787
      %v4792 = vmul.f32 %v4765, %v4791
      %v4793 = vmul.f32 %v4766, %v4791
      %v4794 = vmul.f32 %v4767, %v4791
      %v4795 = vmul.f32 %v4768, %v4791
      %v4796 = vmul.f32 %v4769, %v4791
      %v4797 = vmul.f32 %v4770, %v4791
      %v4798 = vmul.f32 %v4771, %v4791
      %v4799 = vmul.f32 %v4772, %v4791
      %v4800 = vmul.f32 %v4773, %v4791
      %v4801 = vmul.f32 %v4774, %v4791
      %v4802 = vmul.f32 %v4775, %v4791
      %v4803 = vmul.f32 %v4776, %v4791
      %v4804 = vmul.f32 %v4777, %v4791
      %v4805 = vmul.f32 %v4778, %v4791
      %v4806 = vmul.f32 %v4779, %v4791
      %v4807 = vmul.f32 %v4780, %v4791
      %v4809 = vperm.slane %v4667, 0
      %v4811 = vmul.f32 %v4792, %v4809
      %v4812 = vmul.f32 %v4793, %v4809
      %v4813 = vmul.f32 %v4794, %v4809
      %v4814 = vmul.f32 %v4795, %v4809
      %v4815 = vmul.f32 %v4796, %v4809
      %v4816 = vmul.f32 %v4797, %v4809
      %v4817 = vmul.f32 %v4798, %v4809
      %v4818 = vmul.f32 %v4799, %v4809
      %v4819 = vmul.f32 %v4800, %v4809
      %v4820 = vmul.f32 %v4801, %v4809
      %v4821 = vmul.f32 %v4802, %v4809
      %v4822 = vmul.f32 %v4803, %v4809
      %v4823 = vmul.f32 %v4804, %v4809
      %v4824 = vmul.f32 %v4805, %v4809
      %v4825 = vmul.f32 %v4806, %v4809
      %v4826 = vmul.f32 %v4807, %v4809
      %v4828 = vperm.slane %v4669, 0
      %v4830 = vadd.f32 %v4811, %v4828
      %v4831 = vadd.f32 %v4812, %v4828
      %v4832 = vadd.f32 %v4813, %v4828
      %v4833 = vadd.f32 %v4814, %v4828
      %v4834 = vadd.f32 %v4815, %v4828
      %v4835 = vadd.f32 %v4816, %v4828
      %v4836 = vadd.f32 %v4817, %v4828
      %v4837 = vadd.f32 %v4818, %v4828
      %v4838 = vadd.f32 %v4819, %v4828
      %v4839 = vadd.f32 %v4820, %v4828
      %v4840 = vadd.f32 %v4821, %v4828
      %v4841 = vadd.f32 %v4822, %v4828
      %v4842 = vadd.f32 %v4823, %v4828
      %v4843 = vadd.f32 %v4824, %v4828
      %v4844 = vadd.f32 %v4825, %v4828
      %v4845 = vadd.f32 %v4826, %v4828
      %v4846 = vmax.f32 %v4830, 0.0
      %v4847 = vmax.f32 %v4831, 0.0
      %v4848 = vmax.f32 %v4832, 0.0
      %v4849 = vmax.f32 %v4833, 0.0
      %v4850 = vmax.f32 %v4834, 0.0
      %v4851 = vmax.f32 %v4835, 0.0
      %v4852 = vmax.f32 %v4836, 0.0
      %v4853 = vmax.f32 %v4837, 0.0
      %v4854 = vmax.f32 %v4838, 0.0
      %v4855 = vmax.f32 %v4839, 0.0
      %v4856 = vmax.f32 %v4840, 0.0
      %v4857 = vmax.f32 %v4841, 0.0
      %v4858 = vmax.f32 %v4842, 0.0
      %v4859 = vmax.f32 %v4843, 0.0
      %v4860 = vmax.f32 %v4844, 0.0
      %v4861 = vmax.f32 %v4845, 0.0
      %v4862 = vadd.f32 %v4846, %v268
      %v4863 = vadd.f32 %v4847, %v269
      %v4864 = vadd.f32 %v4848, %v270
      %v4865 = vadd.f32 %v4849, %v271
      %v4866 = vadd.f32 %v4850, %v272
      %v4867 = vadd.f32 %v4851, %v273
      %v4868 = vadd.f32 %v4852, %v274
      %v4869 = vadd.f32 %v4853, %v275
      %v4870 = vadd.f32 %v4854, %v276
      %v4871 = vadd.f32 %v4855, %v277
      %v4872 = vadd.f32 %v4856, %v278
      %v4873 = vadd.f32 %v4857, %v279
      %v4874 = vadd.f32 %v4858, %v280
      %v4875 = vadd.f32 %v4859, %v281
      %v4876 = vadd.f32 %v4860, %v282
      %v4877 = vadd.f32 %v4861, %v283
      %4878 = vst.msk [vmem:[%s5] sm:$0xff] %vm285, %v4862
      %4879 = vst.msk [vmem:[%s5 + $0x8] sm:$0xff] %vm285, %v4863
      %4880 = vst.msk [vmem:[%s5 + $0x10] sm:$0xff] %vm285, %v4864
      %4881 = vst.msk [vmem:[%s5 + $0x18] sm:$0xff] %vm285, %v4865
      %4882 = vst.msk [vmem:[%s5 + $0x20] sm:$0xff] %vm285, %v4866
      %4883 = vst.msk [vmem:[%s5 + $0x28] sm:$0xff] %vm285, %v4867
      %4884 = vst.msk [vmem:[%s5 + $0x30] sm:$0xff] %vm285, %v4868
      %4885 = vst.msk [vmem:[%s5 + $0x38] sm:$0xff] %vm285, %v4869
      %4886 = vst.msk [vmem:[%s5 + $0x40] sm:$0xff] %vm285, %v4870
      %4887 = vst.msk [vmem:[%s5 + $0x48] sm:$0xff] %vm285, %v4871
      %4888 = vst.msk [vmem:[%s5 + $0x50] sm:$0xff] %vm285, %v4872
      %4889 = vst.msk [vmem:[%s5 + $0x58] sm:$0xff] %vm285, %v4873
      %4890 = vst.msk [vmem:[%s5 + $0x60] sm:$0xff] %vm285, %v4874
      %4891 = vst.msk [vmem:[%s5 + $0x68] sm:$0xff] %vm285, %v4875
      %4892 = vst.msk [vmem:[%s5 + $0x70] sm:$0xff] %vm285, %v4876
      %4893 = vst.msk [vmem:[%s5 + $0x78] sm:$0xff] %vm285, %v4877
      // Predicated region
      $region45: #{sphereface_block.3} parent=39 // pred_check
        %p4894 = pneg %p134
      $region46: #{sphereface_block.3} parent=39 // pred_check_branch
        %4896 = sbr.rel (%p4894) target = $region48
      $region47: #{sphereface_block.3} parent=39 // pred_region
        _
      $region48: #{sphereface_block.3} parent=39 // pred_fallthru
        _
      // Predicated region
      $region49: #{sphereface_block.3} parent=39 // pred_check
        %p4897 = pneg %p134
      $region50: #{sphereface_block.3} parent=39 // pred_check_branch
        %4899 = sbr.rel (%p4897) target = $region52
      $region51: #{sphereface_block.3} parent=39 // pred_region
        _
      $region52: #{sphereface_block.3} parent=39 // pred_fallthru
        _
    $region40: #{sphereface_block.3} parent=5 // pred_fallthru
      _
    %p4900 = scmp.le.s32.totalorder 2, %s11
    // Predicated region
    $region53: #{sphereface_block.3} parent=5 // pred_check
      %p4901 = pneg %p4900
    $region54: #{sphereface_block.3} parent=5 // pred_check_branch
      %4903 = sbr.rel (%p4901) target = $region56
    $region55: #{sphereface_block.3} parent=5 // pred_region
      %s4904 = ssub.s32 %s11, 2
    $region56: #{sphereface_block.3} parent=5 // pred_fallthru
      _
  $region6: #{sphereface_block.3} parent=0 // loop_footer
    %s15 = sadd.s32 1, %s11
  $region7: #{sphereface_block.3} parent=0 // loop_footer_branch
    %10 = sbr.rel target = $region3
  $region8: #{sphereface_block.3} parent=0 // loop_exit
    _

</llo_original>
